<compile_context>
chip_gen: v7x
topology: tpu7x:2x2x1
jax: 0.10.0
libtpu: 0.0.40
codegen_flags: <defaults>
</compile_context>

<pallas_src>
import numpy as np
import jax
import jax.numpy as jnp
from jax import lax
from jax.experimental import pallas as pl
from jax.experimental.pallas import tpu as pltpu

EPS = 1e-5


def _bn_affine(gamma, beta, mean, var):
    scale = gamma / jnp.sqrt(var + EPS)
    shift = beta - mean * scale
    return scale, shift


# ------------------------- fused feature-extraction kernel -------------------------

def feature_kernel(er_ref, w1_ref, cb_ref, wA_ref, bA_ref, wB_ref, bB_ref,
                   wC_ref, bC_ref, fcw_ref, fcb_ref, prelu_ref, h_ref):
    """Whole feature chain in a flat, lane-dense (B, HW*C) layout.
    Every conv block is a single MXU matmul against a spatially-folded dense weight
    built at load time -- no rolls, no concats, no reshapes inside the kernel."""
    # conv1 (Conv1d(2, HW, k=1)) with bn0 and block-0 BN folded:  (B, 2D) @ (2D, HW*D), f32
    x = jnp.dot(er_ref[...], w1_ref[...],
                preferred_element_type=jnp.float32) + cb_ref[...]

    def conv_block(x, w_ref, b_ref):
        # block-k: ReLU -> circular 3x3 conv; the FOLLOWING BN is folded into w/b.
        xa = jnp.maximum(x, 0.0).astype(jnp.bfloat16)
        return jnp.dot(xa, w_ref[...], preferred_element_type=jnp.float32) + b_ref[...]

    x = conv_block(x, wA_ref, bA_ref)      # (B, HW*D)  -> (B, HW*D)
    x = conv_block(x, wB_ref, bB_ref)      # (B, HW*D)  -> (B, HW*2D)
    x = conv_block(x, wC_ref, bC_ref)      # (B, HW*2D) -> (B, HW*2D)   (bn1 folded in)
    # bn1 -> ReLU -> spatial mean -> fc : the mean (1/HW) is folded into fcw -> one matmul
    xa = jnp.maximum(x, 0.0).astype(jnp.bfloat16)
    h = jnp.dot(xa, fcw_ref[...], preferred_element_type=jnp.float32) + fcb_ref[...]
    h_ref[...] = jnp.where(h > 0, h, prelu_ref[...] * h)          # PReLU(D)


# ------------------------------ tiled score kernel ---------------------------------

def score_kernel(h_ref, et_ref, b_ref, o_ref):
    """scores tile = h @ E^T[:, tile] + b[tile]   (bf16 MXU operands, f32 accumulate)."""
    s = jnp.dot(h_ref[...].astype(jnp.bfloat16), et_ref[...],
                preferred_element_type=jnp.float32)
    o_ref[...] = s + b_ref[...]


# --------------------------- one-time weight preparation ----------------------------

def choose_tile_n(num_entities, max_tile=4096, min_parallel_steps=2):
    """Large lane-dense entity tile (multiple of 128) to amortize grid-step overhead,
    capped so the 'parallel' entity axis keeps >= 2 steps (v7x megacore)."""
    t = -(-num_entities // min_parallel_steps)
    t = -(-t // 128) * 128
    return int(max(128, min(max_tile, t)))


def fold_params(params, R, tile_n):
    """Load-time preparation (runs ONCE, outside the jitted forward):
      * fold every BatchNorm into the adjacent conv,
      * spatially fold each circular 3x3 conv into a dense (HW*Cin, HW*Cout) bf16 matrix,
      * fold conv1 + bn0 + block-0 BN into one (2D, HW*D) matrix,
      * fold the spatial mean (1/HW) into fc,
      * build the bf16 transposed entity table, padded once to a multiple of tile_n."""
    D = params['rel_emb'].shape[1]
    N = params['ent_emb'].shape[0]
    HW, C2 = R * R, 2 * D
    # Lane-dense flat feature layout (holds for reshape_len=4, D=32 -> 512/1024 lanes).
    assert (HW * D) % 128 == 0, "HW*D should be a multiple of 128 for lane-dense layout"

    s0, sh0 = _bn_affine(params['bn0_gamma'], params['bn0_beta'],
                         params['bn0_mean'], params['bn0_var'])
    blk_bn = [_bn_affine(b['bn_gamma'], b['bn_beta'], b['bn_mean'], b['bn_var'])
              for b in params['blocks']]
    bn1 = _bn_affine(params['bn1_gamma'], params['bn1_beta'],
                     params['bn1_mean'], params['bn1_var'])
    follow = [blk_bn[1], blk_bn[2], bn1]          # the BN applied to conv_k's OUTPUT
    sA, shA = blk_bn[0]                           # the BN applied to conv1's output

    # ---- conv1 (Conv1d(2, HW, k=1)) + bn0 + block-0 BN -> one (2D, HW*D) matrix ------
    c1w, c1b = params['conv1_w'], params['conv1_b']                 # (HW, 2), (HW,)
    WE = (c1w[:, 0] * s0[0])[:, None] * sA[None, :]                 # (HW, D) ent weight
    WR = (c1w[:, 1] * s0[1])[:, None] * sA[None, :]                 # (HW, D) rel weight
    cb = sA[None, :] * (c1b + c1w @ sh0)[:, None] + shA[None, :]    # (HW, D) bias
    eye = jnp.eye(D, dtype=jnp.float32)
    w1 = jnp.concatenate(
        [(eye[:, None, :] * WE[None, :, :]).reshape(D, HW * D),
         (eye[:, None, :] * WR[None, :, :]).reshape(D, HW * D)], axis=0)   # (2D, HW*D)

    # ---- circular 3x3 spatial fold: one-hot shift matrices P[tap, p_out, p_in] -------
    yy = np.arange(R)[:, None]
    xx = np.arange(R)[None, :]
    P = np.zeros((9, HW, HW), np.float32)
    t = 0
    for dy in (-1, 0, 1):                 # dy = ky - 1  (PyTorch circular padding = 1)
        for dx in (-1, 0, 1):
            p_in = (((yy + dy) % R) * R + ((xx + dx) % R)).reshape(HW)
            P[t, np.arange(HW), p_in] = 1.0
            t += 1
    P = jnp.asarray(P)

    w_full, b_full = [], []
    for blk, (sn, shn) in zip(params['blocks'], follow):
        cout, cin = blk['w'].shape[0], blk['w'].shape[1]
        # OIHW -> (tap = ky*3+kx, cin, cout); fold the following BN's scale into weights.
        wt = jnp.transpose(blk['w'], (2, 3, 1, 0)).reshape(9, cin, cout) * sn[None, None, :]
        # W[p_in*cin+ci, p_out*cout+co] = sum_t P[t, p_out, p_in] * wt[t, ci, co]
        wf = jnp.einsum('tqp,tio->piqo', P, wt).reshape(HW * cin, HW * cout)
        w_full.append(wf.astype(jnp.bfloat16))
        b_full.append(jnp.tile(blk['b'] * sn + shn, (HW,)).reshape(1, HW * cout))

    # ---- fc with the spatial mean (1/HW) folded in: (HW*2D, D) -----------------------
    fcw = jnp.tile(params['fc_w'].T / HW, (HW, 1)).astype(jnp.bfloat16)

    # ---- bf16 transposed entity table + bias, padded ONCE to a multiple of tile_n ----
    n_pad = -(-N // tile_n) * tile_n
    et = params['ent_emb'].T.astype(jnp.bfloat16)                   # (D, N)
    bent = params['b_ent'].reshape(1, N).astype(jnp.float32)
    if n_pad != N:
        et = jnp.pad(et, ((0, 0), (0, n_pad - N)))
        bent = jnp.pad(bent, ((0, 0), (0, n_pad - N)))

    return dict(
        ent_emb=params['ent_emb'], rel_emb=params['rel_emb'], num_entities=N,
        w1=w1, cb=cb.reshape(1, HW * D),
        wA=w_full[0], bA=b_full[0], wB=w_full[1], bB=b_full[1],
        wC=w_full[2], bC=b_full[2],
        fcw=fcw, fcb=params['fc_b'].reshape(1, D),
        prelu=params['prelu_a'].reshape(1, D),
        et=et, bent=bent)


# --------------------------------- glue / wrapper -----------------------------------

def pretrained_bert_deepconv_forward(queries, folded, tile_n):
    B = queries.shape[0]
    D = folded['rel_emb'].shape[1]
    N = folded['num_entities']

    # Embedding row gathers are data-dependent -> left to XLA in the wrapper.
    # TODO(synk): a Pallas scalar-prefetched row-DMA gather only pays off at much larger D/B.
    ent = folded['ent_emb'][queries[:, 0]]                          # (B, D)
    rel = folded['rel_emb'][queries[:, 1]]                          # (B, D)
    er = jnp.concatenate([ent, rel], axis=-1)                       # (B, 2D)

    vmem = pl.BlockSpec(memory_space=pltpu.MemorySpace.VMEM)
    h = pl.pallas_call(
        feature_kernel,
        out_shape=jax.ShapeDtypeStruct((B, D), jnp.float32),
        in_specs=[vmem] * 12,
        out_specs=vmem,
    )(er, folded['w1'], folded['cb'],
      folded['wA'], folded['bA'], folded['wB'], folded['bB'],
      folded['wC'], folded['bC'],
      folded['fcw'], folded['fcb'], folded['prelu'])

    # scores = h @ E^T + b, tiled over entities (large lane-dense tiles, pipelined,
    # 'parallel' so the entity axis shards across both TensorCores on v7x).
    et, bent = folded['et'], folded['bent']
    n_pad = et.shape[1]
    scores = pl.pallas_call(
        score_kernel,
        out_shape=jax.ShapeDtypeStruct((B, n_pad), jnp.float32),
        grid=(n_pad // tile_n,),
        in_specs=[pl.BlockSpec((B, D), lambda j: (0, 0)),
                  pl.BlockSpec((D, tile_n), lambda j: (0, j)),
                  pl.BlockSpec((1, tile_n), lambda j: (0, j))],
        out_specs=pl.BlockSpec((B, tile_n), lambda j: (0, j)),
        compiler_params=pltpu.CompilerParams(
            dimension_semantics=("parallel",)),
    )(h, et, bent)
    return scores[:, :N] if n_pad != N else scores


# --------------------------------- parameters ---------------------------------------

def init_params(key, num_entities, num_relations, D, R):
    HW, C2 = R * R, 2 * D
    keys = iter(jax.random.split(key, 64))

    def nrm(shape, s):
        return s * jax.random.normal(next(keys), shape, jnp.float32)

    p = {}
    p['ent_emb'] = nrm((num_entities, D), 0.1)                      # synthetic "bert_emb.pt"
    p['rel_emb'] = nrm((num_relations, D), 0.1)
    # bn0 = BatchNorm1d(2) (running stats)
    p['bn0_gamma'] = 1.0 + nrm((2,), 0.1)
    p['bn0_beta'] = nrm((2,), 0.1)
    p['bn0_mean'] = nrm((2,), 0.05)
    p['bn0_var'] = 1.0 + 0.1 * jnp.abs(nrm((2,), 1.0))
    # conv1 = Conv1d(2, R^2, kernel_size=1)
    p['conv1_w'] = nrm((HW, 2), 0.3)
    p['conv1_b'] = nrm((HW,), 0.1)
    # three ConvBlocks: (D->D), (D->2D), (2D->2D)
    p['blocks'] = []
    for cin, cout in [(D, D), (D, C2), (C2, C2)]:
        p['blocks'].append(dict(
            bn_gamma=1.0 + nrm((cin,), 0.1),
            bn_beta=nrm((cin,), 0.1),
            bn_mean=nrm((cin,), 0.05),
            bn_var=1.0 + 0.1 * jnp.abs(nrm((cin,), 1.0)),
            w=nrm((cout, cin, 3, 3), 0.05),                         # PyTorch OIHW layout
            b=nrm((cout,), 0.05),
        ))
    # bn1 = BatchNorm2d(2D)   (args.gn = False)
    p['bn1_gamma'] = 1.0 + nrm((C2,), 0.1)
    p['bn1_beta'] = nrm((C2,), 0.1)
    p['bn1_mean'] = nrm((C2,), 0.05)
    p['bn1_var'] = 1.0 + 0.1 * jnp.abs(nrm((C2,), 1.0))
    # fc = Linear(2D, D), PReLU(D), entity bias b
    p['fc_w'] = nrm((D, C2), 0.1)
    p['fc_b'] = nrm((D,), 0.05)
    p['prelu_a'] = 0.25 * jnp.ones((D,), jnp.float32)
    p['b_ent'] = jnp.zeros((num_entities,), jnp.float32)
    return p


# ------------------------------ pure-JAX reference -----------------------------------

def reference_forward(queries, params, R):
    B = queries.shape[0]
    D = params['ent_emb'].shape[1]
    C2 = 2 * D
    ent = params['ent_emb'][queries[:, 0]]
    rl = params['rel_emb'][queries[:, 1]]
    x = jnp.stack([ent, rl], axis=1)                                   # (B, 2, D)
    s0, sh0 = _bn_affine(params['bn0_gamma'], params['bn0_beta'],
                         params['bn0_mean'], params['bn0_var'])
    x = x * s0[None, :, None] + sh0[None, :, None]
    x = jnp.einsum('oc,bcd->bod', params['conv1_w'], x) + params['conv1_b'][None, :, None]
    x = jnp.transpose(x, (0, 2, 1)).reshape(B, D, R, R)                # NCHW
    for blk in params['blocks']:
        bs, bsh = _bn_affine(blk['bn_gamma'], blk['bn_beta'], blk['bn_mean'], blk['bn_var'])
        x = jnp.maximum(x * bs[None, :, None, None] + bsh[None, :, None, None], 0.0)
        xp = jnp.pad(x, ((0, 0), (0, 0), (1, 1), (1, 1)), mode='wrap')  # circular padding
        x = lax.conv_general_dilated(xp, blk['w'], (1, 1), 'VALID',
                                     dimension_numbers=('NCHW', 'OIHW', 'NCHW'))
        x = x + blk['b'][None, :, None, None]
    bs1, bsh1 = _bn_affine(params['bn1_gamma'], params['bn1_beta'],
                           params['bn1_mean'], params['bn1_var'])
    x = jnp.maximum(x * bs1[None, :, None, None] + bsh1[None, :, None, None], 0.0)
    x = x.reshape(B, C2, -1).mean(axis=2)
    x = x @ params['fc_w'].T + params['fc_b']
    x = jnp.where(x > 0, x, params['prelu_a'] * x)
    return x @ params['ent_emb'].T + params['b_ent'][None, :]


# -------------------------------------- main -----------------------------------------

if __name__ == "__main__":
    B, D, R = 16, 32, 4                # batch, embedding_dim, reshape_len
    NUM_ENTITIES, NUM_RELATIONS = 512, 8

    key = jax.random.PRNGKey(0)
    kp, kq1, kq2 = jax.random.split(key, 3)
    params = init_params(kp, NUM_ENTITIES, NUM_RELATIONS, D, R)

    tile_n = choose_tile_n(NUM_ENTITIES)          # 256 here -> 2 'parallel' grid steps
    folded = fold_params(params, R, tile_n)       # ONCE, outside the jitted forward

    e1 = jax.random.randint(kq1, (B,), 0, NUM_ENTITIES)
    rel = jax.random.randint(kq2, (B,), 0, NUM_RELATIONS)
    queries = jnp.stack([e1, rel], axis=1).astype(jnp.int32)           # (B, 2)

    fwd = jax.jit(lambda q: pretrained_bert_deepconv_forward(q, folded, tile_n))
    scores = jax.block_until_ready(fwd(queries))

    assert scores.shape == (B, NUM_ENTITIES)
    ref = reference_forward(queries, params, R)
    # bf16 MXU operands with f32 accumulation -> small deviation vs pure-f32 reference.
    if not jnp.allclose(scores, ref, atol=2e-2, rtol=2e-2):
        raise AssertionError(
            f"mismatch vs reference, max abs diff = {float(jnp.max(jnp.abs(scores - ref)))}")
    print("KERNEL_OK")
</pallas_src>

<mosaic_0001>
module attributes {stable_mosaic.version = 11 : i64} {
  func.func @feature_kernel(%arg0: memref<16x64xf32, #tpu.memory_space<vmem>>, %arg1: memref<64x512xf32, #tpu.memory_space<vmem>>, %arg2: memref<1x512xf32, #tpu.memory_space<vmem>>, %arg3: memref<512x512xbf16, #tpu.memory_space<vmem>>, %arg4: memref<1x512xf32, #tpu.memory_space<vmem>>, %arg5: memref<512x1024xbf16, #tpu.memory_space<vmem>>, %arg6: memref<1x1024xf32, #tpu.memory_space<vmem>>, %arg7: memref<1024x1024xbf16, #tpu.memory_space<vmem>>, %arg8: memref<1x1024xf32, #tpu.memory_space<vmem>>, %arg9: memref<1024x32xbf16, #tpu.memory_space<vmem>>, %arg10: memref<1x32xf32, #tpu.memory_space<vmem>>, %arg11: memref<1x32xf32, #tpu.memory_space<vmem>>, %arg12: memref<16x32xf32, #tpu.memory_space<vmem>>) attributes {dimension_semantics = [], scalar_prefetch = 0 : i64, scratch_operands = 0 : i64, tpu.core_type = #tpu.core_type<tc>} {
    %c0 = arith.constant 0 : index
    %c0_0 = arith.constant 0 : index
    %0 = vector.load %arg0[%c0, %c0_0] : memref<16x64xf32, #tpu.memory_space<vmem>>, vector<16x64xf32>
    %c0_1 = arith.constant 0 : index
    %c0_2 = arith.constant 0 : index
    %1 = vector.load %arg1[%c0_1, %c0_2] : memref<64x512xf32, #tpu.memory_space<vmem>>, vector<64x512xf32>
    %cst = arith.constant dense<0.000000e+00> : vector<16x512xf32>
    %2 = tpu.matmul %0, %1, %cst {dimension_numbers = #tpu.dot_dimension_numbers<[1], [0], [0], [1], [0, 0, 1, 1], [], []>} : vector<16x64xf32>, vector<64x512xf32>, vector<16x512xf32> -> vector<16x512xf32>
    %c0_3 = arith.constant 0 : index
    %c0_4 = arith.constant 0 : index
    %3 = vector.load %arg2[%c0_3, %c0_4] : memref<1x512xf32, #tpu.memory_space<vmem>>, vector<1x512xf32>
    %4 = vector.broadcast %3 : vector<1x512xf32> to vector<16x512xf32>
    %5 = arith.addf %2, %4 : vector<16x512xf32>
    %cst_5 = arith.constant 0.000000e+00 : f32
    %6 = vector.broadcast %cst_5 : f32 to vector<16x512xf32>
    %7 = arith.maximumf %5, %6 : vector<16x512xf32>
    %8 = arith.truncf %7 : vector<16x512xf32> to vector<16x512xbf16>
    %c0_6 = arith.constant 0 : index
    %c0_7 = arith.constant 0 : index
    %9 = vector.load %arg3[%c0_6, %c0_7] : memref<512x512xbf16, #tpu.memory_space<vmem>>, vector<512x512xbf16>
    %cst_8 = arith.constant dense<0.000000e+00> : vector<16x512xf32>
    %10 = tpu.matmul %8, %9, %cst_8 {dimension_numbers = #tpu.dot_dimension_numbers<[1], [0], [0], [1], [0, 0, 1, 1], [], []>} : vector<16x512xbf16>, vector<512x512xbf16>, vector<16x512xf32> -> vector<16x512xf32>
    %c0_9 = arith.constant 0 : index
    %c0_10 = arith.constant 0 : index
    %11 = vector.load %arg4[%c0_9, %c0_10] : memref<1x512xf32, #tpu.memory_space<vmem>>, vector<1x512xf32>
    %12 = vector.broadcast %11 : vector<1x512xf32> to vector<16x512xf32>
    %13 = arith.addf %10, %12 : vector<16x512xf32>
    %cst_11 = arith.constant 0.000000e+00 : f32
    %14 = vector.broadcast %cst_11 : f32 to vector<16x512xf32>
    %15 = arith.maximumf %13, %14 : vector<16x512xf32>
    %16 = arith.truncf %15 : vector<16x512xf32> to vector<16x512xbf16>
    %c0_12 = arith.constant 0 : index
    %c0_13 = arith.constant 0 : index
    %17 = vector.load %arg5[%c0_12, %c0_13] : memref<512x1024xbf16, #tpu.memory_space<vmem>>, vector<512x1024xbf16>
    %cst_14 = arith.constant dense<0.000000e+00> : vector<16x1024xf32>
    %18 = tpu.matmul %16, %17, %cst_14 {dimension_numbers = #tpu.dot_dimension_numbers<[1], [0], [0], [1], [0, 0, 1, 1], [], []>} : vector<16x512xbf16>, vector<512x1024xbf16>, vector<16x1024xf32> -> vector<16x1024xf32>
    %c0_15 = arith.constant 0 : index
    %c0_16 = arith.constant 0 : index
    %19 = vector.load %arg6[%c0_15, %c0_16] : memref<1x1024xf32, #tpu.memory_space<vmem>>, vector<1x1024xf32>
    %20 = vector.broadcast %19 : vector<1x1024xf32> to vector<16x1024xf32>
    %21 = arith.addf %18, %20 : vector<16x1024xf32>
    %cst_17 = arith.constant 0.000000e+00 : f32
    %22 = vector.broadcast %cst_17 : f32 to vector<16x1024xf32>
    %23 = arith.maximumf %21, %22 : vector<16x1024xf32>
    %24 = arith.truncf %23 : vector<16x1024xf32> to vector<16x1024xbf16>
    %c0_18 = arith.constant 0 : index
    %c0_19 = arith.constant 0 : index
    %25 = vector.load %arg7[%c0_18, %c0_19] : memref<1024x1024xbf16, #tpu.memory_space<vmem>>, vector<1024x1024xbf16>
    %cst_20 = arith.constant dense<0.000000e+00> : vector<16x1024xf32>
    %26 = tpu.matmul %24, %25, %cst_20 {dimension_numbers = #tpu.dot_dimension_numbers<[1], [0], [0], [1], [0, 0, 1, 1], [], []>} : vector<16x1024xbf16>, vector<1024x1024xbf16>, vector<16x1024xf32> -> vector<16x1024xf32>
    %c0_21 = arith.constant 0 : index
    %c0_22 = arith.constant 0 : index
    %27 = vector.load %arg8[%c0_21, %c0_22] : memref<1x1024xf32, #tpu.memory_space<vmem>>, vector<1x1024xf32>
    %28 = vector.broadcast %27 : vector<1x1024xf32> to vector<16x1024xf32>
    %29 = arith.addf %26, %28 : vector<16x1024xf32>
    %cst_23 = arith.constant 0.000000e+00 : f32
    %30 = vector.broadcast %cst_23 : f32 to vector<16x1024xf32>
    %31 = arith.maximumf %29, %30 : vector<16x1024xf32>
    %32 = arith.truncf %31 : vector<16x1024xf32> to vector<16x1024xbf16>
    %c0_24 = arith.constant 0 : index
    %c0_25 = arith.constant 0 : index
    %33 = vector.load %arg9[%c0_24, %c0_25] : memref<1024x32xbf16, #tpu.memory_space<vmem>>, vector<1024x32xbf16>
    %cst_26 = arith.constant dense<0.000000e+00> : vector<16x32xf32>
    %34 = tpu.matmul %32, %33, %cst_26 {dimension_numbers = #tpu.dot_dimension_numbers<[1], [0], [0], [1], [0, 0, 1, 1], [], []>} : vector<16x1024xbf16>, vector<1024x32xbf16>, vector<16x32xf32> -> vector<16x32xf32>
    %c0_27 = arith.constant 0 : index
    %c0_28 = arith.constant 0 : index
    %35 = vector.load %arg10[%c0_27, %c0_28] : memref<1x32xf32, #tpu.memory_space<vmem>>, vector<1x32xf32>
    %36 = vector.broadcast %35 : vector<1x32xf32> to vector<16x32xf32>
    %37 = arith.addf %34, %36 : vector<16x32xf32>
    %cst_29 = arith.constant 0.000000e+00 : f32
    %38 = vector.broadcast %cst_29 : f32 to vector<16x32xf32>
    %39 = arith.cmpf ogt, %37, %38 : vector<16x32xf32>
    %c0_30 = arith.constant 0 : index
    %c0_31 = arith.constant 0 : index
    %40 = vector.load %arg11[%c0_30, %c0_31] : memref<1x32xf32, #tpu.memory_space<vmem>>, vector<1x32xf32>
    %41 = vector.broadcast %40 : vector<1x32xf32> to vector<16x32xf32>
    %42 = arith.mulf %41, %37 : vector<16x32xf32>
    %43 = arith.select %39, %37, %42 : vector<16x32xi1>, vector<16x32xf32>
    %c0_32 = arith.constant 0 : index
    %c0_33 = arith.constant 0 : index
    %44 = vector.load %arg12[%c0_32, %c0_33] : memref<16x32xf32, #tpu.memory_space<vmem>>, vector<16x32xf32>
    tpu.vector_store %arg12[%c0_32, %c0_33], %43 {strides = array<i32>} : memref<16x32xf32, #tpu.memory_space<vmem>>, vector<16x32xf32>,
    return
  }
}

module attributes {stable_mosaic.version = 11 : i64} {
  func.func @score_kernel(%arg0: i32, %arg1: memref<16x32xf32, #tpu.memory_space<vmem>>, %arg2: memref<32x256xbf16, #tpu.memory_space<vmem>>, %arg3: memref<1x256xf32, #tpu.memory_space<vmem>>, %arg4: memref<16x256xf32, #tpu.memory_space<vmem>>) attributes {dimension_semantics = [#tpu.dimension_semantics<parallel>], iteration_bounds = array<i64: 2>, scalar_prefetch = 0 : i64, scratch_operands = 0 : i64, tpu.core_type = #tpu.core_type<tc>, window_params = [{pipeline_mode = #tpu.pipeline_mode<synchronous>, transform_indices = @transform_0, window_bounds = array<i64: 16, 32>}, {transform_indices = @transform_1, window_bounds = array<i64: 32, 256>}, {transform_indices = @transform_2, window_bounds = array<i64: 1, 256>}, {transform_indices = @transform_3, window_bounds = array<i64: 16, 256>}]} {
    %c0 = arith.constant 0 : index
    %c0_0 = arith.constant 0 : index
    %0 = vector.load %arg1[%c0, %c0_0] : memref<16x32xf32, #tpu.memory_space<vmem>>, vector<16x32xf32>
    %1 = arith.truncf %0 : vector<16x32xf32> to vector<16x32xbf16>
    %c0_1 = arith.constant 0 : index
    %c0_2 = arith.constant 0 : index
    %2 = vector.load %arg2[%c0_1, %c0_2] : memref<32x256xbf16, #tpu.memory_space<vmem>>, vector<32x256xbf16>
    %cst = arith.constant dense<0.000000e+00> : vector<16x256xf32>
    %3 = tpu.matmul %1, %2, %cst {dimension_numbers = #tpu.dot_dimension_numbers<[1], [0], [0], [1], [0, 0, 1, 1], [], []>} : vector<16x32xbf16>, vector<32x256xbf16>, vector<16x256xf32> -> vector<16x256xf32>
    %c0_3 = arith.constant 0 : index
    %c0_4 = arith.constant 0 : index
    %4 = vector.load %arg3[%c0_3, %c0_4] : memref<1x256xf32, #tpu.memory_space<vmem>>, vector<1x256xf32>
    %5 = vector.broadcast %4 : vector<1x256xf32> to vector<16x256xf32>
    %6 = arith.addf %3, %5 : vector<16x256xf32>
    %c0_5 = arith.constant 0 : index
    %c0_6 = arith.constant 0 : index
    %7 = vector.load %arg4[%c0_5, %c0_6] : memref<16x256xf32, #tpu.memory_space<vmem>>, vector<16x256xf32>
    tpu.vector_store %arg4[%c0_5, %c0_6], %6 {strides = array<i32>} : memref<16x256xf32, #tpu.memory_space<vmem>>, vector<16x256xf32>,
    return
  }
  func.func @transform_0(%arg0: i32) -> (i32, i32) {
    %c0_i32 = arith.constant 0 : i32
    %c0_i32_0 = arith.constant 0 : i32
    %c0_i32_1 = arith.constant 0 : i32
    return %c0_i32, %c0_i32_0 : i32, i32
  }
  func.func @transform_1(%arg0: i32) -> (i32, i32) {
    %c0_i32 = arith.constant 0 : i32
    %c0_i32_0 = arith.constant 0 : i32
    return %c0_i32, %arg0 : i32, i32
  }
  func.func @transform_2(%arg0: i32) -> (i32, i32) {
    %c0_i32 = arith.constant 0 : i32
    %c0_i32_0 = arith.constant 0 : i32
    return %c0_i32, %arg0 : i32, i32
  }
  func.func @transform_3(%arg0: i32) -> (i32, i32) {
    %c0_i32 = arith.constant 0 : i32
    %c0_i32_0 = arith.constant 0 : i32
    return %c0_i32, %arg0 : i32, i32
  }
}

</mosaic_0001>

<llo_original>
// kernel: _lambda_.3
$region0: #{_lambda_.3}
  #allocation0 [shape = 'u32[]', space=smem, size = 0x4, offset = 0x4, fixed_abs, tag = 'smem constant byte address 0x4 - core index']
  #allocation1 [shape = 'u32[144,128]{1,0:T(1,128)}', space=vmem, size = 0x12000, scoped, tag = 'internal scratch']
  %s0 = inlined_call_operand.vmem [shape: f32[16,32], index: 0, kind: input, shape index: {}]
  %s1 = inlined_call_operand.vmem [shape: bf16[32,512], index: 1, kind: input, shape index: {}]
  %s2 = inlined_call_operand.vmem [shape: f32[1,512], index: 2, kind: input, shape index: {}]
  %s3 = inlined_call_operand.hbm [shape: f32[16,512], index: 3, kind: output, shape index: {}]
  %s4 = sld [smem:[#allocation0]]
  $region83: #{_lambda_.3} parent=0
    _
  %s6 = ssub.s32 1, %s4
  %s7 = scalar_select 0, %s6, %s4
  $region1: #{_lambda_.3} parent=0
    #allocation2 [shape = 'u8[32768]{0}', space=vmem, size = 0x8000, scoped, tag = 'input window, operand 1']
    #allocation3 [shape = 'u8[32768]{0}', space=vmem, size = 0x8000, scoped, tag = 'output window, operand 0']
    #allocation4 [shape = 's32[2]{0}', space=sflag, size = 0x8, scoped, tag = 'scoped memory for _lambda_.3']
    %8 = vsyncpa [#allocation4], 0
    %s9 = scalar_lea.sflag [#allocation4], 1
    %10 = vsyncpa %s9, 0
    loop: start=0, step=1, limit=4
    $region2: #{_lambda_.3} parent=1 // loop_pre_header
      _
    $region3: #{_lambda_.3} parent=1 // loop_header
      %s12 = sphi 0, %s16
      %p13 = scmp.ge.s32.totalorder %s12, 4
      %s20 = sphi 0, %s20
      %s22 = sphi 0, %s20
      %s23 = sphi 0, %s22
      %s37 = sphi 0, %s23
      %s43 = sphi 0, %s45
      %s46 = sphi 0, %s43
      %s47 = sphi 0, %s46
      %s63 = sphi 0, %s47
      %s69 = sphi 0, %s71
      %s72 = sphi 0, %s69
      %s73 = sphi 0, %s72
      %s89 = sphi 0, %s73
      %s95 = sphi 0, %s97
      %s98 = sphi 0, %s95
      %s99 = sphi 0, %s98
      %s115 = sphi 0, %s99
    $region4: #{_lambda_.3} parent=1 // loop_header_branch
      %15 = sbr.rel (%p13) target = $region8
    $region5: #{_lambda_.3} parent=1 // loop_body
      %s17 = ssub.s32 %s12, 1
      %s18 = ssub.s32 %s12, 2
      %s19 = sadd.s32 %s12, 1
      %s21 = sadd.s32 %s20, 1
      %p24 = scmp.eq.s32.totalorder %s12, 1
      %p25 = scmp.ne.s32.totalorder %s20, %s22
      %p26 = scmp.eq.s32.totalorder %s12, 0
      %p27 = por %p25, %p26
      %p28 = scmp.ne.s32.totalorder %s20, %s22
      %p29 = scmp.eq.s32.totalorder %s17, 1
      %p30 = por %p28, %p29
      %p31 = scmp.ne.s32.totalorder %s22, %s23
      %p32 = scmp.eq.s32.totalorder %s17, 0
      %p33 = por %p31, %p32
      %p34 = scmp.ne.s32.totalorder %s22, %s23
      %p35 = scmp.eq.s32.totalorder %s18, 1
      %p36 = por %p34, %p35
      %p38 = scmp.ne.s32.totalorder %s23, %s37
      %p39 = scmp.eq.s32.totalorder %s18, 0
      %p40 = por %p38, %p39
      %s41 = ssub.s32 %s12, %s19
      %p42 = scmp.eq.s32.totalorder %s41, 0
      %s44 = sadd.s32 %s43, 1
      %s45 = scalar_select %p42, %s43, %s44
      %p48 = pneg %p42
      %p49 = scmp.eq.s32.totalorder %s12, 1
      %p50 = por %p48, %p49
      %p51 = scmp.ne.s32.totalorder %s43, %s46
      %p52 = scmp.eq.s32.totalorder %s12, 0
      %p53 = por %p51, %p52
      %p54 = scmp.ne.s32.totalorder %s43, %s46
      %p55 = scmp.eq.s32.totalorder %s17, 1
      %p56 = por %p54, %p55
      %p57 = scmp.ne.s32.totalorder %s46, %s47
      %p58 = scmp.eq.s32.totalorder %s17, 0
      %p59 = por %p57, %p58
      %p60 = scmp.ne.s32.totalorder %s46, %s47
      %p61 = scmp.eq.s32.totalorder %s18, 1
      %p62 = por %p60, %p61
      %p64 = scmp.ne.s32.totalorder %s47, %s63
      %p65 = scmp.eq.s32.totalorder %s18, 0
      %p66 = por %p64, %p65
      %s67 = ssub.s32 %s12, %s19
      %p68 = scmp.eq.s32.totalorder %s67, 0
      %s70 = sadd.s32 %s69, 1
      %s71 = scalar_select %p68, %s69, %s70
      %p74 = pneg %p68
      %p75 = scmp.eq.s32.totalorder %s12, 1
      %p76 = por %p74, %p75
      %p77 = scmp.ne.s32.totalorder %s69, %s72
      %p78 = scmp.eq.s32.totalorder %s12, 0
      %p79 = por %p77, %p78
      %p80 = scmp.ne.s32.totalorder %s69, %s72
      %p81 = scmp.eq.s32.totalorder %s17, 1
      %p82 = por %p80, %p81
      %p83 = scmp.ne.s32.totalorder %s72, %s73
      %p84 = scmp.eq.s32.totalorder %s17, 0
      %p85 = por %p83, %p84
      %p86 = scmp.ne.s32.totalorder %s72, %s73
      %p87 = scmp.eq.s32.totalorder %s18, 1
      %p88 = por %p86, %p87
      %p90 = scmp.ne.s32.totalorder %s73, %s89
      %p91 = scmp.eq.s32.totalorder %s18, 0
      %p92 = por %p90, %p91
      %s93 = ssub.s32 %s12, %s19
      %p94 = scmp.eq.s32.totalorder %s93, 0
      %s96 = sadd.s32 %s95, 1
      %s97 = scalar_select %p94, %s95, %s96
      %p100 = pneg %p94
      %p101 = scmp.eq.s32.totalorder %s12, 1
      %p102 = por %p100, %p101
      %p103 = scmp.ne.s32.totalorder %s95, %s98
      %p104 = scmp.eq.s32.totalorder %s12, 0
      %p105 = por %p103, %p104
      %p106 = scmp.ne.s32.totalorder %s95, %s98
      %p107 = scmp.eq.s32.totalorder %s17, 1
      %p108 = por %p106, %p107
      %p109 = scmp.ne.s32.totalorder %s98, %s99
      %p110 = scmp.eq.s32.totalorder %s17, 0
      %p111 = por %p109, %p110
      %p112 = scmp.ne.s32.totalorder %s98, %s99
      %p113 = scmp.eq.s32.totalorder %s18, 1
      %p114 = por %p112, %p113
      %p116 = scmp.ne.s32.totalorder %s99, %s115
      %p117 = scmp.eq.s32.totalorder %s18, 0
      %p118 = por %p116, %p117
      %p119 = scmp.le.s32.totalorder 1, %s12
      %p120 = scmp.lt.s32.totalorder %s12, 3
      %p121 = pnand %p119, %p120
      %p122 = pneg %p121
      // Predicated region
      $region9: #{_lambda_.3} parent=5 // pred_check
        _
      $region10: #{_lambda_.3} parent=5 // pred_check_branch
        %124 = sbr.rel (%p121) target = $region12
      $region11: #{_lambda_.3} parent=5 // pred_region
        %s125 = ssub.s32 %s12, 1
        // Predicated region
        $region13: #{_lambda_.3} parent=11 // pred_check
          %p126 = pneg %p33
        $region14: #{_lambda_.3} parent=11 // pred_check_branch
          %128 = sbr.rel (%p126) target = $region16
        $region15: #{_lambda_.3} parent=11 // pred_region
          _
        $region16: #{_lambda_.3} parent=11 // pred_fallthru
          _
      $region12: #{_lambda_.3} parent=5 // pred_fallthru
        _
      %p129 = scmp.lt.s32.totalorder %s12, 2
      // Predicated region
      $region17: #{_lambda_.3} parent=5 // pred_check
        %p130 = pneg %p129
      $region18: #{_lambda_.3} parent=5 // pred_check_branch
        %132 = sbr.rel (%p130) target = $region20
      $region19: #{_lambda_.3} parent=5 // pred_region
        // Predicated region
        $region21: #{_lambda_.3} parent=19 // pred_check
          %p133 = pneg %p53
        $region22: #{_lambda_.3} parent=19 // pred_check_branch
          %135 = sbr.rel (%p133) target = $region24
        $region23: #{_lambda_.3} parent=19 // pred_region
          %s136 = sand.u32 %s43, 1
          %s137 = sand.u32 %s43, 1
          %s138 = smul.addr %s137, 32
          %s139 = scalar_lea.vmem [#allocation2], %s138
          %s140 = smul.u32 2, %s12
          %s141 = smul.addr %s140, 4
          %s142 = scalar_lea.vmem %s1, %s141
          // Predicated region
          $region25: #{_lambda_.3} parent=23 // pred_check
            _
          $region26: #{_lambda_.3} parent=23 // pred_check_branch
            %144 = sbr.rel (0) target = $region28
          $region27: #{_lambda_.3} parent=23 // pred_region
            // Predicated region
            $region29: #{_lambda_.3} parent=27 // pred_check
              _
            $region30: #{_lambda_.3} parent=27 // pred_check_branch
              %146 = sbr.rel (0) target = $region32
            $region31: #{_lambda_.3} parent=27 // pred_region
              // Predicated region
              $region44: #{_lambda_.3} parent=31 // pred_check
                _
              $region45: #{_lambda_.3} parent=31 // pred_check_branch
                %167 = sbr.rel (0) target = $region47
              $region46: #{_lambda_.3} parent=31 // pred_region
                loop: start=0, step=1, limit=1
                $region48: #{_lambda_.3} parent=46 // loop_pre_header
                  _
                $region49: #{_lambda_.3} parent=46 // loop_header
                  %s169 = sphi 0, %s173
                  %p170 = scmp.ge.s32.totalorder %s169, 1
                  %s174 = sphi %s142, %s142
                  %s175 = sphi %s139, %s139
                $region50: #{_lambda_.3} parent=46 // loop_header_branch
                  %172 = sbr.rel (%p170) target = $region54
                $region51: #{_lambda_.3} parent=46 // loop_body
                  %v176 = vld [vmem:[%s174] sm:$0xff]
                  %177 = vst [vmem:[%s175] sm:$0xff] %v176
                  %v178 = vld [vmem:[%s174 + $0x10] sm:$0xff]
                  %179 = vst [vmem:[%s175 + $0x8] sm:$0xff] %v178
                  %v180 = vld [vmem:[%s174 + $0x20] sm:$0xff]
                  %181 = vst [vmem:[%s175 + $0x10] sm:$0xff] %v180
                  %v182 = vld [vmem:[%s174 + $0x30] sm:$0xff]
                  %183 = vst [vmem:[%s175 + $0x18] sm:$0xff] %v182
                $region52: #{_lambda_.3} parent=46 // loop_footer
                  %s173 = sadd.s32 1, %s169
                $region53: #{_lambda_.3} parent=46 // loop_footer_branch
                  %168 = sbr.rel target = $region49
                $region54: #{_lambda_.3} parent=46 // loop_exit
                  _
              $region47: #{_lambda_.3} parent=31 // pred_fallthru
                _
              // Predicated region
              $region55: #{_lambda_.3} parent=31 // pred_check
                _
              $region56: #{_lambda_.3} parent=31 // pred_check_branch
                %185 = sbr.rel target = $region58
              $region57: #{_lambda_.3} parent=31 // pred_region
                _
              $region58: #{_lambda_.3} parent=31 // pred_fallthru
                _
            $region32: #{_lambda_.3} parent=27 // pred_fallthru
              _
            // Predicated region
            $region33: #{_lambda_.3} parent=27 // pred_check
              _
            $region34: #{_lambda_.3} parent=27 // pred_check_branch
              %148 = sbr.rel target = $region36
            $region35: #{_lambda_.3} parent=27 // pred_region
              loop: start=0, step=1, limit=1
              $region37: #{_lambda_.3} parent=35 // loop_pre_header
                _
              $region38: #{_lambda_.3} parent=35 // loop_header
                %s151 = sphi 0, %s155
                %p152 = scmp.ge.s32.totalorder %s151, 1
                %s156 = sphi %s142, %s142
                %s157 = sphi %s139, %s139
              $region39: #{_lambda_.3} parent=35 // loop_header_branch
                %154 = sbr.rel (%p152) target = $region43
              $region40: #{_lambda_.3} parent=35 // loop_body
                %v158 = vld [vmem:[%s156] sm:$0xff]
                %159 = vst [vmem:[%s157] sm:$0xff] %v158
                %v160 = vld [vmem:[%s156 + $0x10] sm:$0xff]
                %161 = vst [vmem:[%s157 + $0x8] sm:$0xff] %v160
                %v162 = vld [vmem:[%s156 + $0x20] sm:$0xff]
                %163 = vst [vmem:[%s157 + $0x10] sm:$0xff] %v162
                %v164 = vld [vmem:[%s156 + $0x30] sm:$0xff]
                %165 = vst [vmem:[%s157 + $0x18] sm:$0xff] %v164
              $region41: #{_lambda_.3} parent=35 // loop_footer
                %s155 = sadd.s32 1, %s151
              $region42: #{_lambda_.3} parent=35 // loop_footer_branch
                %150 = sbr.rel target = $region38
              $region43: #{_lambda_.3} parent=35 // loop_exit
                _
            $region36: #{_lambda_.3} parent=27 // pred_fallthru
              _
          $region28: #{_lambda_.3} parent=23 // pred_fallthru
            _
          %186 = vnop
        $region24: #{_lambda_.3} parent=19 // pred_fallthru
          _
        // Predicated region
        $region59: #{_lambda_.3} parent=19 // pred_check
          %p187 = pneg %p79
        $region60: #{_lambda_.3} parent=19 // pred_check_branch
          %189 = sbr.rel (%p187) target = $region62
        $region61: #{_lambda_.3} parent=19 // pred_region
          %s190 = smul.u32 2, %s12
          %p191 = scmp.lt.s32.totalorder %s190, 3
          %s192 = scalar_select %p191, %s190, 3
          %s193 = scalar_lea.vmem %s2, %s192
          %s194 = smul.u32 2, %s12
        $region62: #{_lambda_.3} parent=19 // pred_fallthru
          _
      $region20: #{_lambda_.3} parent=5 // pred_fallthru
        _
      %p195 = scmp.le.s32.totalorder 1, %s12
      %p196 = scmp.lt.s32.totalorder %s12, 3
      %p197 = pnand %p195, %p196
      %p198 = pneg %p197
      // Predicated region
      $region63: #{_lambda_.3} parent=5 // pred_check
        _
      $region64: #{_lambda_.3} parent=5 // pred_check_branch
        %200 = sbr.rel (%p197) target = $region66
      $region65: #{_lambda_.3} parent=5 // pred_region
        %s201 = ssub.s32 %s12, 1
        %s202 = sand.u32 %s46, 1
        %s203 = sand.u32 %s46, 1
        %s204 = smul.addr %s203, 32
        %s205 = scalar_lea.vmem [#allocation2], %s204
        // Predicated region
        $region67: #{_lambda_.3} parent=65 // pred_check
          %p206 = pneg %p59
        $region68: #{_lambda_.3} parent=65 // pred_check_branch
          %208 = sbr.rel (%p206) target = $region70
        $region69: #{_lambda_.3} parent=65 // pred_region
          _
        $region70: #{_lambda_.3} parent=65 // pred_fallthru
          _
        %p209 = pneg %p33
        %p210 = pneg %p30
        %s211 = sand.u32 %s46, 1
        %s212 = sand.u32 %s46, 1
        %s213 = smul.addr %s212, 32
        %s214 = scalar_lea.vmem [#allocation2], %s213
        %p215 = pneg %p59
        %p216 = pneg %p56
        %s217 = smul.u32 2, %s17
        %p218 = scmp.lt.s32.totalorder %s217, 3
        %s219 = scalar_select %p218, %s217, 3
        %s220 = scalar_lea.vmem %s2, %s219
        %p221 = pneg %p85
        %p222 = pneg %p82
        %p223 = pneg %p111
        %p224 = pneg %p108
        %s225 = sand.u32 %s98, 1
        %s226 = scalar_lea.sflag [#allocation4], %s225
        %s227 = sand.u32 %s98, 1
        %s228 = smul.addr %s227, 32
        %s229 = scalar_lea.vmem [#allocation3], %s228
        %s230 = smul.u32 2, %s17
        %s231 = smul.u32 2, %s17
        %p232 = scmp.lt.s32.totalorder %s231, 3
        %s233 = scalar_select %p232, %s231, 3
        %s234 = scalar_lea.vmem %s2, %s233
        %s235 = smul.u32 2, %s17
        %s236 = smul.u32 2, %s17
        %v238 = vld [vmem:[%s0] sm:$0xff]
        %v239 = vld [vmem:[%s0 + $0x8] sm:$0xff]
        %v240 = vpack.c.bf16 %v239, %v238
        %v241 = vld [vmem:[%s205] sm:$0xff]
        %v242 = vld [vmem:[%s205 + $0x8] sm:$0xff]
        %v243 = vld [vmem:[%s205 + $0x10] sm:$0xff]
        %v244 = vld [vmem:[%s205 + $0x18] sm:$0xff]
        %v245 = vld [vmem:[%s234] sm:$0x3]
        %v247 = vlaneseq
        %v248 = vshrl.u32 %v247, 7
        %v249 = vsub.s32 0, %v248
        %v250 = vrot.slane %v245, %v249
        %v251 = vlaneseq
        %v252 = vshrl.u32 %v251, 7
        %v253 = vsub.s32 1, %v252
        %v254 = vrot.slane %v245, %v253
        %v261 = vunpack.c.l.b16 %v241
        %v262 = vunpack.c.h.b16 %v241
        %v263 = vunpack.c.l.b16 %v242
        %v264 = vunpack.c.h.b16 %v242
        %v265 = vunpack.c.l.b16 %v243
        %v266 = vunpack.c.h.b16 %v243
        %v267 = vunpack.c.l.b16 %v244
        %v268 = vunpack.c.h.b16 %v244
        %v269 = vpack.c.b16 %v263, %v261
        %v270 = vpack.c.b16 %v264, %v262
        %v271 = vpack.c.b16 %v267, %v265
        %v272 = vpack.c.b16 %v268, %v266
        %vm277 = vcmask 261120
        %v279 = vsel %vm277, %v240, 0
        %281 = vmatprep.subr.bf16.mxu0 %v270
        %282 = vmatpush1.bf16.msra.mxu0 %v269
        %283 = vmatprep.subr.bf16.mxu0 %v272
        %284 = vmatpush1.bf16.msra.mxu0 %v271
        %285 = vmatprep.subr.bf16.mxu0 0
        %286 = vmatpush1.bf16.msra.mxu0 0
        %287 = vmatprep.subr.bf16.mxu0 0
        %288 = vmatpush1.bf16.msra.mxu0 0
        %289 = vmatprep.subr.bf16.mxu0 0
        %290 = vmatpush1.bf16.msra.mxu0 0
        %291 = vmatprep.subr.bf16.mxu0 0
        %292 = vmatpush1.bf16.msra.mxu0 0
        %293 = vmatprep.subr.bf16.mxu0 0
        %294 = vmatpush1.bf16.msra.mxu0 0
        %295 = vmatprep.subr.bf16.mxu0 0
        %296 = vmatpush1.bf16.msra.mxu0 0
        %297 = vmatprep.subr.bf16.mxu0 0
        %298 = vmatpush1.bf16.msra.mxu0 0
        %299 = vmatprep.subr.bf16.mxu0 0
        %300 = vmatpush1.bf16.msra.mxu0 0
        %301 = vmatprep.subr.bf16.mxu0 0
        %302 = vmatpush1.bf16.msra.mxu0 0
        %303 = vmatprep.subr.bf16.mxu0 0
        %304 = vmatpush1.bf16.msra.mxu0 0
        %305 = vmatprep.subr.bf16.mxu0 0
        %306 = vmatpush1.bf16.msra.mxu0 0
        %307 = vmatprep.subr.bf16.mxu0 0
        %308 = vmatpush1.bf16.msra.mxu0 0
        %309 = vmatprep.subr.bf16.mxu0 0
        %310 = vmatpush1.bf16.msra.mxu0 0
        %311 = vmatprep.subr.bf16.mxu0 0
        %312 = vmatpush1.bf16.msra.mxu0 0
        %313 = vmatprep.mubr.bf16.mxu0 0
        %314 = vmatmul.mubr.bf16.gmra.mrb[0].mxu0 %v279
        %v315 = vpop.f32.mrb[0].mxu0
        %v316 = vadd.f32 %v250, %v315
        %v317 = vpop.f32.mrb[0].mxu0
        %v318 = vadd.f32 %v254, %v317
        %v319 = vpop.f32.mrb[0].mxu0
        %v320 = vadd.f32 %v250, %v319
        %v321 = vpop.f32.mrb[0].mxu0
        %v322 = vadd.f32 %v254, %v321
        %323 = vdwg.mxu0
        %324 = vst [vmem:[%s229] sm:$0xff] %v316
        %325 = vst [vmem:[%s229 + $0x8] sm:$0xff] %v318
        %326 = vst [vmem:[%s229 + $0x10] sm:$0xff] %v320
        %327 = vst [vmem:[%s229 + $0x18] sm:$0xff] %v322
        %s328 = sand.u32 %s98, 1
        %s329 = scalar_lea.sflag [#allocation4], %s328
        %s330 = sand.u32 %s98, 1
        %s331 = smul.addr %s330, 32
        %s332 = scalar_lea.vmem [#allocation3], %s331
        // Predicated region
        $region71: #{_lambda_.3} parent=65 // pred_check
          %p333 = pneg %p108
        $region72: #{_lambda_.3} parent=65 // pred_check_branch
          %335 = sbr.rel (%p333) target = $region74
        $region73: #{_lambda_.3} parent=65 // pred_region
          %s336 = smul.u32 2, %s17
          %s338 = ssub.s32 512, 512
          %339 = vsyncadd %s329, %s338
          %s340 = smul.addr %s336, 128
          %s341 = scalar_lea.hbm %s3, %s340
          %s342 = sshll.u32 %s332, 4
          %s343 = int_to_ptr.vmem [resolvable:$true] %s342
          %348 = dma.vmem_to_hbm [thread:$0]  %s343, 512, %s341, %s329, 256, 512, 16
        $region74: #{_lambda_.3} parent=65 // pred_fallthru
          _
      $region66: #{_lambda_.3} parent=5 // pred_fallthru
        _
      %p349 = scmp.le.s32.totalorder 2, %s12
      // Predicated region
      $region75: #{_lambda_.3} parent=5 // pred_check
        %p350 = pneg %p349
      $region76: #{_lambda_.3} parent=5 // pred_check_branch
        %352 = sbr.rel (%p350) target = $region78
      $region77: #{_lambda_.3} parent=5 // pred_region
        %s353 = ssub.s32 %s12, 2
        // Predicated region
        $region79: #{_lambda_.3} parent=77 // pred_check
          %p354 = pneg %p114
        $region80: #{_lambda_.3} parent=77 // pred_check_branch
          %356 = sbr.rel (%p354) target = $region82
        $region81: #{_lambda_.3} parent=77 // pred_region
          %s357 = sand.u32 %s99, 1
          %s358 = scalar_lea.sflag [#allocation4], %s357
          %s359 = sand.u32 %s99, 1
          %s360 = smul.addr %s359, 32
          %s361 = scalar_lea.vmem [#allocation3], %s360
          %362 = dma.done %s358, 512
        $region82: #{_lambda_.3} parent=77 // pred_fallthru
          _
      $region78: #{_lambda_.3} parent=5 // pred_fallthru
        _
    $region6: #{_lambda_.3} parent=1 // loop_footer
      %s16 = sadd.s32 1, %s12
    $region7: #{_lambda_.3} parent=1 // loop_footer_branch
      %11 = sbr.rel target = $region3
    $region8: #{_lambda_.3} parent=1 // loop_exit
      _
    %363 = vsyncpa [#allocation4], 1
    %s364 = scalar_lea.sflag [#allocation4], 1
    %365 = vsyncpa %s364, 1

// kernel: _lambda_.2
$region0: #{_lambda_.2}
  #allocation0 [shape = 'u32[]', space=smem, size = 0x4, offset = 0x4, fixed_abs, tag = 'smem constant byte address 0x4 - core index']
  #allocation1 [shape = 'u32[144,128]{1,0:T(1,128)}', space=vmem, size = 0x12000, scoped, tag = 'internal scratch']
  %s0 = inlined_call_operand.vmem [shape: f32[16,64], index: 0, kind: input, shape index: {}]
  %s1 = inlined_call_operand.vmem [shape: f32[64,512], index: 1, kind: input, shape index: {}]
  %s2 = inlined_call_operand.vmem [shape: f32[1,512], index: 2, kind: input, shape index: {}]
  %s3 = inlined_call_operand.vmem [shape: bf16[512,512], index: 3, kind: input, shape index: {}]
  %s4 = inlined_call_operand.vmem [shape: f32[1,512], index: 4, kind: input, shape index: {}]
  %s5 = inlined_call_operand.vmem [shape: bf16[512,1024], index: 5, kind: input, shape index: {}]
  %s6 = inlined_call_operand.vmem [shape: f32[1,1024], index: 6, kind: input, shape index: {}]
  %s7 = inlined_call_operand.vmem [shape: bf16[1024,1024], index: 7, kind: input, shape index: {}]
  %s8 = inlined_call_operand.vmem [shape: f32[1,1024], index: 8, kind: input, shape index: {}]
  %s9 = inlined_call_operand.vmem [shape: bf16[1024,32], index: 9, kind: input, shape index: {}]
  %s10 = inlined_call_operand.vmem [shape: f32[1,32], index: 10, kind: input, shape index: {}]
  %s11 = inlined_call_operand.vmem [shape: f32[1,32], index: 11, kind: input, shape index: {}]
  %s12 = inlined_call_operand.vmem [shape: f32[16,32], index: 12, kind: output, shape index: {}]
  %s13 = sld [smem:[#allocation0]]
  $region58: #{_lambda_.2} parent=0
    _
  %s15 = ssub.s32 1, %s13
  %s16 = scalar_select 0, %s15, %s13
  // Predicated region
  $region2: #{_lambda_.2} parent=0 // pred_check
    _
  $region3: #{_lambda_.2} parent=0 // pred_check_branch
    %18 = sbr.rel (0) target = $region5
  $region4: #{_lambda_.2} parent=0 // pred_region
    _
  $region5: #{_lambda_.2} parent=0 // pred_fallthru
    _
  // Predicated region
  $region6: #{_lambda_.2} parent=0 // pred_check
    _
  $region7: #{_lambda_.2} parent=0 // pred_check_branch
    %20 = sbr.rel (0) target = $region9
  $region8: #{_lambda_.2} parent=0 // pred_region
    _
  $region9: #{_lambda_.2} parent=0 // pred_fallthru
    _
  // Predicated region
  $region10: #{_lambda_.2} parent=0 // pred_check
    _
  $region11: #{_lambda_.2} parent=0 // pred_check_branch
    %22 = sbr.rel (0) target = $region13
  $region12: #{_lambda_.2} parent=0 // pred_region
    _
  $region13: #{_lambda_.2} parent=0 // pred_fallthru
    _
  // Predicated region
  $region14: #{_lambda_.2} parent=0 // pred_check
    _
  $region15: #{_lambda_.2} parent=0 // pred_check_branch
    %24 = sbr.rel (0) target = $region17
  $region16: #{_lambda_.2} parent=0 // pred_region
    _
  $region17: #{_lambda_.2} parent=0 // pred_fallthru
    _
  // Predicated region
  $region18: #{_lambda_.2} parent=0 // pred_check
    _
  $region19: #{_lambda_.2} parent=0 // pred_check_branch
    %26 = sbr.rel (0) target = $region21
  $region20: #{_lambda_.2} parent=0 // pred_region
    _
  $region21: #{_lambda_.2} parent=0 // pred_fallthru
    _
  // Predicated region
  $region22: #{_lambda_.2} parent=0 // pred_check
    _
  $region23: #{_lambda_.2} parent=0 // pred_check_branch
    %28 = sbr.rel (0) target = $region25
  $region24: #{_lambda_.2} parent=0 // pred_region
    _
  $region25: #{_lambda_.2} parent=0 // pred_fallthru
    _
  // Predicated region
  $region26: #{_lambda_.2} parent=0 // pred_check
    _
  $region27: #{_lambda_.2} parent=0 // pred_check_branch
    %30 = sbr.rel (0) target = $region29
  $region28: #{_lambda_.2} parent=0 // pred_region
    _
  $region29: #{_lambda_.2} parent=0 // pred_fallthru
    _
  // Predicated region
  $region30: #{_lambda_.2} parent=0 // pred_check
    _
  $region31: #{_lambda_.2} parent=0 // pred_check_branch
    %32 = sbr.rel (0) target = $region33
  $region32: #{_lambda_.2} parent=0 // pred_region
    _
  $region33: #{_lambda_.2} parent=0 // pred_fallthru
    _
  // Predicated region
  $region34: #{_lambda_.2} parent=0 // pred_check
    _
  $region35: #{_lambda_.2} parent=0 // pred_check_branch
    %34 = sbr.rel (0) target = $region37
  $region36: #{_lambda_.2} parent=0 // pred_region
    _
  $region37: #{_lambda_.2} parent=0 // pred_fallthru
    _
  // Predicated region
  $region38: #{_lambda_.2} parent=0 // pred_check
    _
  $region39: #{_lambda_.2} parent=0 // pred_check_branch
    %36 = sbr.rel (0) target = $region41
  $region40: #{_lambda_.2} parent=0 // pred_region
    _
  $region41: #{_lambda_.2} parent=0 // pred_fallthru
    _
  // Predicated region
  $region42: #{_lambda_.2} parent=0 // pred_check
    _
  $region43: #{_lambda_.2} parent=0 // pred_check_branch
    %38 = sbr.rel (0) target = $region45
  $region44: #{_lambda_.2} parent=0 // pred_region
    _
  $region45: #{_lambda_.2} parent=0 // pred_fallthru
    _
  // Predicated region
  $region46: #{_lambda_.2} parent=0 // pred_check
    _
  $region47: #{_lambda_.2} parent=0 // pred_check_branch
    %40 = sbr.rel (0) target = $region49
  $region48: #{_lambda_.2} parent=0 // pred_region
    _
  $region49: #{_lambda_.2} parent=0 // pred_fallthru
    _
  %v42 = vld [vmem:[%s0] sm:$0xff]
  %v43 = vld [vmem:[%s0 + $0x8] sm:$0xff]
  %v44 = vld [vmem:[%s1] sm:$0xff]
  %v45 = vld [vmem:[%s1 + $0x8] sm:$0xff]
  %v46 = vld [vmem:[%s1 + $0x10] sm:$0xff]
  %v47 = vld [vmem:[%s1 + $0x18] sm:$0xff]
  %v48 = vld [vmem:[%s1 + $0x20] sm:$0xff]
  %v49 = vld [vmem:[%s1 + $0x28] sm:$0xff]
  %v50 = vld [vmem:[%s1 + $0x30] sm:$0xff]
  %v51 = vld [vmem:[%s1 + $0x38] sm:$0xff]
  %v52 = vld [vmem:[%s1 + $0x40] sm:$0xff]
  %v53 = vld [vmem:[%s1 + $0x48] sm:$0xff]
  %v54 = vld [vmem:[%s1 + $0x50] sm:$0xff]
  %v55 = vld [vmem:[%s1 + $0x58] sm:$0xff]
  %v56 = vld [vmem:[%s1 + $0x60] sm:$0xff]
  %v57 = vld [vmem:[%s1 + $0x68] sm:$0xff]
  %v58 = vld [vmem:[%s1 + $0x70] sm:$0xff]
  %v59 = vld [vmem:[%s1 + $0x78] sm:$0xff]
  %v60 = vld [vmem:[%s1 + $0x80] sm:$0xff]
  %v61 = vld [vmem:[%s1 + $0x88] sm:$0xff]
  %v62 = vld [vmem:[%s1 + $0x90] sm:$0xff]
  %v63 = vld [vmem:[%s1 + $0x98] sm:$0xff]
  %v64 = vld [vmem:[%s1 + $0xa0] sm:$0xff]
  %v65 = vld [vmem:[%s1 + $0xa8] sm:$0xff]
  %v66 = vld [vmem:[%s1 + $0xb0] sm:$0xff]
  %v67 = vld [vmem:[%s1 + $0xb8] sm:$0xff]
  %v68 = vld [vmem:[%s1 + $0xc0] sm:$0xff]
  %v69 = vld [vmem:[%s1 + $0xc8] sm:$0xff]
  %v70 = vld [vmem:[%s1 + $0xd0] sm:$0xff]
  %v71 = vld [vmem:[%s1 + $0xd8] sm:$0xff]
  %v72 = vld [vmem:[%s1 + $0xe0] sm:$0xff]
  %v73 = vld [vmem:[%s1 + $0xe8] sm:$0xff]
  %v74 = vld [vmem:[%s1 + $0xf0] sm:$0xff]
  %v75 = vld [vmem:[%s1 + $0xf8] sm:$0xff]
  %v76 = vld [vmem:[%s2] sm:$0xf]
  %v78 = vlaneseq
  %v79 = vshrl.u32 %v78, 7
  %v80 = vsub.s32 0, %v79
  %v81 = vrot.slane %v76, %v80
  %v82 = vlaneseq
  %v83 = vshrl.u32 %v82, 7
  %v84 = vsub.s32 1, %v83
  %v85 = vrot.slane %v76, %v84
  %v86 = vlaneseq
  %v87 = vshrl.u32 %v86, 7
  %v88 = vsub.s32 2, %v87
  %v89 = vrot.slane %v76, %v88
  %v90 = vlaneseq
  %v91 = vshrl.u32 %v90, 7
  %v92 = vsub.s32 3, %v91
  %v93 = vrot.slane %v76, %v92
  %vm98 = vcmask 523264
  %v100 = vsel %vm98, %v42, 0
  %v103 = vsel %vm98, %v43, 0
  %105 = vmatprep.subr.mxu0 %v45
  %106 = vmatpush1.msra.mxu0 %v44
  %107 = vmatprep.subr.mxu0 %v49
  %108 = vmatpush1.msra.mxu0 %v48
  %109 = vmatprep.subr.mxu0 %v53
  %110 = vmatpush1.msra.mxu0 %v52
  %111 = vmatprep.subr.mxu0 %v57
  %112 = vmatpush1.msra.mxu0 %v56
  %113 = vmatprep.subr.mxu0 %v61
  %114 = vmatpush1.msra.mxu0 %v60
  %115 = vmatprep.subr.mxu0 %v65
  %116 = vmatpush1.msra.mxu0 %v64
  %117 = vmatprep.subr.mxu0 %v69
  %118 = vmatpush1.msra.mxu0 %v68
  %119 = vmatprep.subr.mxu0 %v73
  %120 = vmatpush1.msra.mxu0 %v72
  %121 = vmatprep.subr.mxu0 0.0
  %122 = vmatpush1.msra.mxu0 0.0
  %123 = vmatprep.subr.mxu0 0.0
  %124 = vmatpush1.msra.mxu0 0.0
  %125 = vmatprep.subr.mxu0 0.0
  %126 = vmatpush1.msra.mxu0 0.0
  %127 = vmatprep.subr.mxu0 0.0
  %128 = vmatpush1.msra.mxu0 0.0
  %129 = vmatprep.subr.mxu0 0.0
  %130 = vmatpush1.msra.mxu0 0.0
  %131 = vmatprep.subr.mxu0 0.0
  %132 = vmatpush1.msra.mxu0 0.0
  %133 = vmatprep.subr.mxu0 0.0
  %134 = vmatpush1.msra.mxu0 0.0
  %135 = vmatprep.subr.mxu0 0.0
  %136 = vmatpush1.msra.mxu0 0.0
  %137 = vmatprep.subr.mxu0 0.0
  %138 = vmatpush1.msra.mxu0 0.0
  %139 = vmatprep.subr.mxu0 0.0
  %140 = vmatpush1.msra.mxu0 0.0
  %141 = vmatprep.subr.mxu0 0.0
  %142 = vmatpush1.msra.mxu0 0.0
  %143 = vmatprep.subr.mxu0 0.0
  %144 = vmatpush1.msra.mxu0 0.0
  %145 = vmatprep.subr.mxu0 0.0
  %146 = vmatpush1.msra.mxu0 0.0
  %147 = vmatprep.subr.mxu0 0.0
  %148 = vmatpush1.msra.mxu0 0.0
  %149 = vmatprep.subr.mxu0 0.0
  %150 = vmatpush1.msra.mxu0 0.0
  %151 = vmatprep.subr.mxu0 0.0
  %152 = vmatpush1.msra.mxu0 0.0
  %153 = vmatprep.subr.mxu0 0.0
  %154 = vmatpush1.msra.mxu0 0.0
  %155 = vmatprep.subr.mxu0 0.0
  %156 = vmatpush1.msra.mxu0 0.0
  %157 = vmatprep.subr.mxu0 0.0
  %158 = vmatpush1.msra.mxu0 0.0
  %159 = vmatprep.subr.mxu0 0.0
  %160 = vmatpush1.msra.mxu0 0.0
  %161 = vmatprep.subr.mxu0 0.0
  %162 = vmatpush1.msra.mxu0 0.0
  %163 = vmatprep.subr.mxu0 0.0
  %164 = vmatpush1.msra.mxu0 0.0
  %165 = vmatprep.subr.mxu0 0.0
  %166 = vmatpush1.msra.mxu0 0.0
  %167 = vmatprep.subr.mxu0 0.0
  %168 = vmatpush1.msra.mxu0 0.0
  %169 = vmatprep.mubr.f32.mxu0 0.0
  %170 = vmatmul.mubr.f32.gmra.mrb[0].mxu0 %v100
  %v171 = vpop.f32.mrb[0].mxu0
  %v172 = vadd.f32 %v81, %v171
  %v173 = vpop.f32.mrb[0].mxu0
  %v174 = vadd.f32 %v85, %v173
  %175 = vmatprep.mubr.f32.mxu0 0.0
  %176 = vmatmul.mubr.f32.gmra.mrb[0].mxu0 %v103
  %v177 = vpop.f32.mrb[0].mxu0
  %v178 = vadd.f32 %v81, %v177
  %v179 = vpop.f32.mrb[0].mxu0
  %v180 = vadd.f32 %v85, %v179
  %181 = vdwg.mxu0
  %182 = vmatprep.subr.mxu0 %v47
  %183 = vmatpush1.msra.mxu0 %v46
  %184 = vmatprep.subr.mxu0 %v51
  %185 = vmatpush1.msra.mxu0 %v50
  %186 = vmatprep.subr.mxu0 %v55
  %187 = vmatpush1.msra.mxu0 %v54
  %188 = vmatprep.subr.mxu0 %v59
  %189 = vmatpush1.msra.mxu0 %v58
  %190 = vmatprep.subr.mxu0 %v63
  %191 = vmatpush1.msra.mxu0 %v62
  %192 = vmatprep.subr.mxu0 %v67
  %193 = vmatpush1.msra.mxu0 %v66
  %194 = vmatprep.subr.mxu0 %v71
  %195 = vmatpush1.msra.mxu0 %v70
  %196 = vmatprep.subr.mxu0 %v75
  %197 = vmatpush1.msra.mxu0 %v74
  %198 = vmatprep.subr.mxu0 0.0
  %199 = vmatpush1.msra.mxu0 0.0
  %200 = vmatprep.subr.mxu0 0.0
  %201 = vmatpush1.msra.mxu0 0.0
  %202 = vmatprep.subr.mxu0 0.0
  %203 = vmatpush1.msra.mxu0 0.0
  %204 = vmatprep.subr.mxu0 0.0
  %205 = vmatpush1.msra.mxu0 0.0
  %206 = vmatprep.subr.mxu0 0.0
  %207 = vmatpush1.msra.mxu0 0.0
  %208 = vmatprep.subr.mxu0 0.0
  %209 = vmatpush1.msra.mxu0 0.0
  %210 = vmatprep.subr.mxu0 0.0
  %211 = vmatpush1.msra.mxu0 0.0
  %212 = vmatprep.subr.mxu0 0.0
  %213 = vmatpush1.msra.mxu0 0.0
  %214 = vmatprep.subr.mxu0 0.0
  %215 = vmatpush1.msra.mxu0 0.0
  %216 = vmatprep.subr.mxu0 0.0
  %217 = vmatpush1.msra.mxu0 0.0
  %218 = vmatprep.subr.mxu0 0.0
  %219 = vmatpush1.msra.mxu0 0.0
  %220 = vmatprep.subr.mxu0 0.0
  %221 = vmatpush1.msra.mxu0 0.0
  %222 = vmatprep.subr.mxu0 0.0
  %223 = vmatpush1.msra.mxu0 0.0
  %224 = vmatprep.subr.mxu0 0.0
  %225 = vmatpush1.msra.mxu0 0.0
  %226 = vmatprep.subr.mxu0 0.0
  %227 = vmatpush1.msra.mxu0 0.0
  %228 = vmatprep.subr.mxu0 0.0
  %229 = vmatpush1.msra.mxu0 0.0
  %230 = vmatprep.subr.mxu0 0.0
  %231 = vmatpush1.msra.mxu0 0.0
  %232 = vmatprep.subr.mxu0 0.0
  %233 = vmatpush1.msra.mxu0 0.0
  %234 = vmatprep.subr.mxu0 0.0
  %235 = vmatpush1.msra.mxu0 0.0
  %236 = vmatprep.subr.mxu0 0.0
  %237 = vmatpush1.msra.mxu0 0.0
  %238 = vmatprep.subr.mxu0 0.0
  %239 = vmatpush1.msra.mxu0 0.0
  %240 = vmatprep.subr.mxu0 0.0
  %241 = vmatpush1.msra.mxu0 0.0
  %242 = vmatprep.subr.mxu0 0.0
  %243 = vmatpush1.msra.mxu0 0.0
  %244 = vmatprep.subr.mxu0 0.0
  %245 = vmatpush1.msra.mxu0 0.0
  %246 = vmatprep.mubr.f32.mxu0 0.0
  %247 = vmatmul.mubr.f32.gmra.mrb[0].mxu0 %v100
  %v248 = vpop.f32.mrb[0].mxu0
  %v249 = vadd.f32 %v89, %v248
  %v250 = vpop.f32.mrb[0].mxu0
  %v251 = vadd.f32 %v93, %v250
  %252 = vmatprep.mubr.f32.mxu0 0.0
  %253 = vmatmul.mubr.f32.gmra.mrb[0].mxu0 %v103
  %v254 = vpop.f32.mrb[0].mxu0
  %v255 = vadd.f32 %v89, %v254
  %v256 = vpop.f32.mrb[0].mxu0
  %v257 = vadd.f32 %v93, %v256
  %258 = vdwg.mxu0
  %v259 = vmax.f32 %v172, 0.0
  %v260 = vmax.f32 %v174, 0.0
  %v261 = vmax.f32 %v249, 0.0
  %v262 = vmax.f32 %v251, 0.0
  %v263 = vmax.f32 %v178, 0.0
  %v264 = vmax.f32 %v180, 0.0
  %v265 = vmax.f32 %v255, 0.0
  %v266 = vmax.f32 %v257, 0.0
  %v267 = vpack.c.bf16 %v263, %v259
  %v268 = vpack.c.bf16 %v264, %v260
  %v269 = vpack.c.bf16 %v265, %v261
  %v270 = vpack.c.bf16 %v266, %v262
  %v271 = vld [vmem:[%s3] sm:$0xff]
  %v272 = vld [vmem:[%s3 + $0x8] sm:$0xff]
  %v273 = vld [vmem:[%s3 + $0x10] sm:$0xff]
  %v274 = vld [vmem:[%s3 + $0x18] sm:$0xff]
  %v275 = vld [vmem:[%s3 + $0x20] sm:$0xff]
  %v276 = vld [vmem:[%s3 + $0x28] sm:$0xff]
  %v277 = vld [vmem:[%s3 + $0x30] sm:$0xff]
  %v278 = vld [vmem:[%s3 + $0x38] sm:$0xff]
  %v279 = vld [vmem:[%s3 + $0x40] sm:$0xff]
  %v280 = vld [vmem:[%s3 + $0x48] sm:$0xff]
  %v281 = vld [vmem:[%s3 + $0x50] sm:$0xff]
  %v282 = vld [vmem:[%s3 + $0x58] sm:$0xff]
  %v283 = vld [vmem:[%s3 + $0x60] sm:$0xff]
  %v284 = vld [vmem:[%s3 + $0x68] sm:$0xff]
  %v285 = vld [vmem:[%s3 + $0x70] sm:$0xff]
  %v286 = vld [vmem:[%s3 + $0x78] sm:$0xff]
  %v287 = vld [vmem:[%s3 + $0x80] sm:$0xff]
  %v288 = vld [vmem:[%s3 + $0x88] sm:$0xff]
  %v289 = vld [vmem:[%s3 + $0x90] sm:$0xff]
  %v290 = vld [vmem:[%s3 + $0x98] sm:$0xff]
  %v291 = vld [vmem:[%s3 + $0xa0] sm:$0xff]
  %v292 = vld [vmem:[%s3 + $0xa8] sm:$0xff]
  %v293 = vld [vmem:[%s3 + $0xb0] sm:$0xff]
  %v294 = vld [vmem:[%s3 + $0xb8] sm:$0xff]
  %v295 = vld [vmem:[%s3 + $0xc0] sm:$0xff]
  %v296 = vld [vmem:[%s3 + $0xc8] sm:$0xff]
  %v297 = vld [vmem:[%s3 + $0xd0] sm:$0xff]
  %v298 = vld [vmem:[%s3 + $0xd8] sm:$0xff]
  %v299 = vld [vmem:[%s3 + $0xe0] sm:$0xff]
  %v300 = vld [vmem:[%s3 + $0xe8] sm:$0xff]
  %v301 = vld [vmem:[%s3 + $0xf0] sm:$0xff]
  %v302 = vld [vmem:[%s3 + $0xf8] sm:$0xff]
  %v303 = vld [vmem:[%s3 + $0x100] sm:$0xff]
  %v304 = vld [vmem:[%s3 + $0x108] sm:$0xff]
  %v305 = vld [vmem:[%s3 + $0x110] sm:$0xff]
  %v306 = vld [vmem:[%s3 + $0x118] sm:$0xff]
  %v307 = vld [vmem:[%s3 + $0x120] sm:$0xff]
  %v308 = vld [vmem:[%s3 + $0x128] sm:$0xff]
  %v309 = vld [vmem:[%s3 + $0x130] sm:$0xff]
  %v310 = vld [vmem:[%s3 + $0x138] sm:$0xff]
  %v311 = vld [vmem:[%s3 + $0x140] sm:$0xff]
  %v312 = vld [vmem:[%s3 + $0x148] sm:$0xff]
  %v313 = vld [vmem:[%s3 + $0x150] sm:$0xff]
  %v314 = vld [vmem:[%s3 + $0x158] sm:$0xff]
  %v315 = vld [vmem:[%s3 + $0x160] sm:$0xff]
  %v316 = vld [vmem:[%s3 + $0x168] sm:$0xff]
  %v317 = vld [vmem:[%s3 + $0x170] sm:$0xff]
  %v318 = vld [vmem:[%s3 + $0x178] sm:$0xff]
  %v319 = vld [vmem:[%s3 + $0x180] sm:$0xff]
  %v320 = vld [vmem:[%s3 + $0x188] sm:$0xff]
  %v321 = vld [vmem:[%s3 + $0x190] sm:$0xff]
  %v322 = vld [vmem:[%s3 + $0x198] sm:$0xff]
  %v323 = vld [vmem:[%s3 + $0x1a0] sm:$0xff]
  %v324 = vld [vmem:[%s3 + $0x1a8] sm:$0xff]
  %v325 = vld [vmem:[%s3 + $0x1b0] sm:$0xff]
  %v326 = vld [vmem:[%s3 + $0x1b8] sm:$0xff]
  %v327 = vld [vmem:[%s3 + $0x1c0] sm:$0xff]
  %v328 = vld [vmem:[%s3 + $0x1c8] sm:$0xff]
  %v329 = vld [vmem:[%s3 + $0x1d0] sm:$0xff]
  %v330 = vld [vmem:[%s3 + $0x1d8] sm:$0xff]
  %v331 = vld [vmem:[%s3 + $0x1e0] sm:$0xff]
  %v332 = vld [vmem:[%s3 + $0x1e8] sm:$0xff]
  %v333 = vld [vmem:[%s3 + $0x1f0] sm:$0xff]
  %v334 = vld [vmem:[%s3 + $0x1f8] sm:$0xff]
  %v335 = vld [vmem:[%s3 + $0x200] sm:$0xff]
  %v336 = vld [vmem:[%s3 + $0x208] sm:$0xff]
  %v337 = vld [vmem:[%s3 + $0x210] sm:$0xff]
  %v338 = vld [vmem:[%s3 + $0x218] sm:$0xff]
  %v339 = vld [vmem:[%s3 + $0x220] sm:$0xff]
  %v340 = vld [vmem:[%s3 + $0x228] sm:$0xff]
  %v341 = vld [vmem:[%s3 + $0x230] sm:$0xff]
  %v342 = vld [vmem:[%s3 + $0x238] sm:$0xff]
  %v343 = vld [vmem:[%s3 + $0x240] sm:$0xff]
  %v344 = vld [vmem:[%s3 + $0x248] sm:$0xff]
  %v345 = vld [vmem:[%s3 + $0x250] sm:$0xff]
  %v346 = vld [vmem:[%s3 + $0x258] sm:$0xff]
  %v347 = vld [vmem:[%s3 + $0x260] sm:$0xff]
  %v348 = vld [vmem:[%s3 + $0x268] sm:$0xff]
  %v349 = vld [vmem:[%s3 + $0x270] sm:$0xff]
  %v350 = vld [vmem:[%s3 + $0x278] sm:$0xff]
  %v351 = vld [vmem:[%s3 + $0x280] sm:$0xff]
  %v352 = vld [vmem:[%s3 + $0x288] sm:$0xff]
  %v353 = vld [vmem:[%s3 + $0x290] sm:$0xff]
  %v354 = vld [vmem:[%s3 + $0x298] sm:$0xff]
  %v355 = vld [vmem:[%s3 + $0x2a0] sm:$0xff]
  %v356 = vld [vmem:[%s3 + $0x2a8] sm:$0xff]
  %v357 = vld [vmem:[%s3 + $0x2b0] sm:$0xff]
  %v358 = vld [vmem:[%s3 + $0x2b8] sm:$0xff]
  %v359 = vld [vmem:[%s3 + $0x2c0] sm:$0xff]
  %v360 = vld [vmem:[%s3 + $0x2c8] sm:$0xff]
  %v361 = vld [vmem:[%s3 + $0x2d0] sm:$0xff]
  %v362 = vld [vmem:[%s3 + $0x2d8] sm:$0xff]
  %v363 = vld [vmem:[%s3 + $0x2e0] sm:$0xff]
  %v364 = vld [vmem:[%s3 + $0x2e8] sm:$0xff]
  %v365 = vld [vmem:[%s3 + $0x2f0] sm:$0xff]
  %v366 = vld [vmem:[%s3 + $0x2f8] sm:$0xff]
  %v367 = vld [vmem:[%s3 + $0x300] sm:$0xff]
  %v368 = vld [vmem:[%s3 + $0x308] sm:$0xff]
  %v369 = vld [vmem:[%s3 + $0x310] sm:$0xff]
  %v370 = vld [vmem:[%s3 + $0x318] sm:$0xff]
  %v371 = vld [vmem:[%s3 + $0x320] sm:$0xff]
  %v372 = vld [vmem:[%s3 + $0x328] sm:$0xff]
  %v373 = vld [vmem:[%s3 + $0x330] sm:$0xff]
  %v374 = vld [vmem:[%s3 + $0x338] sm:$0xff]
  %v375 = vld [vmem:[%s3 + $0x340] sm:$0xff]
  %v376 = vld [vmem:[%s3 + $0x348] sm:$0xff]
  %v377 = vld [vmem:[%s3 + $0x350] sm:$0xff]
  %v378 = vld [vmem:[%s3 + $0x358] sm:$0xff]
  %v379 = vld [vmem:[%s3 + $0x360] sm:$0xff]
  %v380 = vld [vmem:[%s3 + $0x368] sm:$0xff]
  %v381 = vld [vmem:[%s3 + $0x370] sm:$0xff]
  %v382 = vld [vmem:[%s3 + $0x378] sm:$0xff]
  %v383 = vld [vmem:[%s3 + $0x380] sm:$0xff]
  %v384 = vld [vmem:[%s3 + $0x388] sm:$0xff]
  %v385 = vld [vmem:[%s3 + $0x390] sm:$0xff]
  %v386 = vld [vmem:[%s3 + $0x398] sm:$0xff]
  %v387 = vld [vmem:[%s3 + $0x3a0] sm:$0xff]
  %v388 = vld [vmem:[%s3 + $0x3a8] sm:$0xff]
  %v389 = vld [vmem:[%s3 + $0x3b0] sm:$0xff]
  %v390 = vld [vmem:[%s3 + $0x3b8] sm:$0xff]
  %v391 = vld [vmem:[%s3 + $0x3c0] sm:$0xff]
  %v392 = vld [vmem:[%s3 + $0x3c8] sm:$0xff]
  %v393 = vld [vmem:[%s3 + $0x3d0] sm:$0xff]
  %v394 = vld [vmem:[%s3 + $0x3d8] sm:$0xff]
  %v395 = vld [vmem:[%s3 + $0x3e0] sm:$0xff]
  %v396 = vld [vmem:[%s3 + $0x3e8] sm:$0xff]
  %v397 = vld [vmem:[%s3 + $0x3f0] sm:$0xff]
  %v398 = vld [vmem:[%s3 + $0x3f8] sm:$0xff]
  %v399 = vld [vmem:[%s4] sm:$0xf]
  %v401 = vlaneseq
  %v402 = vshrl.u32 %v401, 7
  %v403 = vsub.s32 0, %v402
  %v404 = vrot.slane %v399, %v403
  %v405 = vlaneseq
  %v406 = vshrl.u32 %v405, 7
  %v407 = vsub.s32 1, %v406
  %v408 = vrot.slane %v399, %v407
  %v409 = vlaneseq
  %v410 = vshrl.u32 %v409, 7
  %v411 = vsub.s32 2, %v410
  %v412 = vrot.slane %v399, %v411
  %v413 = vlaneseq
  %v414 = vshrl.u32 %v413, 7
  %v415 = vsub.s32 3, %v414
  %v416 = vrot.slane %v399, %v415
  %v549 = vunpack.c.l.b16 %v271
  %v550 = vunpack.c.h.b16 %v271
  %v551 = vunpack.c.l.b16 %v272
  %v552 = vunpack.c.h.b16 %v272
  %v553 = vunpack.c.l.b16 %v273
  %v554 = vunpack.c.h.b16 %v273
  %v555 = vunpack.c.l.b16 %v274
  %v556 = vunpack.c.h.b16 %v274
  %v557 = vunpack.c.l.b16 %v275
  %v558 = vunpack.c.h.b16 %v275
  %v559 = vunpack.c.l.b16 %v276
  %v560 = vunpack.c.h.b16 %v276
  %v561 = vunpack.c.l.b16 %v277
  %v562 = vunpack.c.h.b16 %v277
  %v563 = vunpack.c.l.b16 %v278
  %v564 = vunpack.c.h.b16 %v278
  %v565 = vunpack.c.l.b16 %v279
  %v566 = vunpack.c.h.b16 %v279
  %v567 = vunpack.c.l.b16 %v280
  %v568 = vunpack.c.h.b16 %v280
  %v569 = vunpack.c.l.b16 %v281
  %v570 = vunpack.c.h.b16 %v281
  %v571 = vunpack.c.l.b16 %v282
  %v572 = vunpack.c.h.b16 %v282
  %v573 = vunpack.c.l.b16 %v283
  %v574 = vunpack.c.h.b16 %v283
  %v575 = vunpack.c.l.b16 %v284
  %v576 = vunpack.c.h.b16 %v284
  %v577 = vunpack.c.l.b16 %v285
  %v578 = vunpack.c.h.b16 %v285
  %v579 = vunpack.c.l.b16 %v286
  %v580 = vunpack.c.h.b16 %v286
  %v581 = vunpack.c.l.b16 %v287
  %v582 = vunpack.c.h.b16 %v287
  %v583 = vunpack.c.l.b16 %v288
  %v584 = vunpack.c.h.b16 %v288
  %v585 = vunpack.c.l.b16 %v289
  %v586 = vunpack.c.h.b16 %v289
  %v587 = vunpack.c.l.b16 %v290
  %v588 = vunpack.c.h.b16 %v290
  %v589 = vunpack.c.l.b16 %v291
  %v590 = vunpack.c.h.b16 %v291
  %v591 = vunpack.c.l.b16 %v292
  %v592 = vunpack.c.h.b16 %v292
  %v593 = vunpack.c.l.b16 %v293
  %v594 = vunpack.c.h.b16 %v293
  %v595 = vunpack.c.l.b16 %v294
  %v596 = vunpack.c.h.b16 %v294
  %v597 = vunpack.c.l.b16 %v295
  %v598 = vunpack.c.h.b16 %v295
  %v599 = vunpack.c.l.b16 %v296
  %v600 = vunpack.c.h.b16 %v296
  %v601 = vunpack.c.l.b16 %v297
  %v602 = vunpack.c.h.b16 %v297
  %v603 = vunpack.c.l.b16 %v298
  %v604 = vunpack.c.h.b16 %v298
  %v605 = vunpack.c.l.b16 %v299
  %v606 = vunpack.c.h.b16 %v299
  %v607 = vunpack.c.l.b16 %v300
  %v608 = vunpack.c.h.b16 %v300
  %v609 = vunpack.c.l.b16 %v301
  %v610 = vunpack.c.h.b16 %v301
  %v611 = vunpack.c.l.b16 %v302
  %v612 = vunpack.c.h.b16 %v302
  %v613 = vunpack.c.l.b16 %v303
  %v614 = vunpack.c.h.b16 %v303
  %v615 = vunpack.c.l.b16 %v304
  %v616 = vunpack.c.h.b16 %v304
  %v617 = vunpack.c.l.b16 %v305
  %v618 = vunpack.c.h.b16 %v305
  %v619 = vunpack.c.l.b16 %v306
  %v620 = vunpack.c.h.b16 %v306
  %v621 = vunpack.c.l.b16 %v307
  %v622 = vunpack.c.h.b16 %v307
  %v623 = vunpack.c.l.b16 %v308
  %v624 = vunpack.c.h.b16 %v308
  %v625 = vunpack.c.l.b16 %v309
  %v626 = vunpack.c.h.b16 %v309
  %v627 = vunpack.c.l.b16 %v310
  %v628 = vunpack.c.h.b16 %v310
  %v629 = vunpack.c.l.b16 %v311
  %v630 = vunpack.c.h.b16 %v311
  %v631 = vunpack.c.l.b16 %v312
  %v632 = vunpack.c.h.b16 %v312
  %v633 = vunpack.c.l.b16 %v313
  %v634 = vunpack.c.h.b16 %v313
  %v635 = vunpack.c.l.b16 %v314
  %v636 = vunpack.c.h.b16 %v314
  %v637 = vunpack.c.l.b16 %v315
  %v638 = vunpack.c.h.b16 %v315
  %v639 = vunpack.c.l.b16 %v316
  %v640 = vunpack.c.h.b16 %v316
  %v641 = vunpack.c.l.b16 %v317
  %v642 = vunpack.c.h.b16 %v317
  %v643 = vunpack.c.l.b16 %v318
  %v644 = vunpack.c.h.b16 %v318
  %v645 = vunpack.c.l.b16 %v319
  %v646 = vunpack.c.h.b16 %v319
  %v647 = vunpack.c.l.b16 %v320
  %v648 = vunpack.c.h.b16 %v320
  %v649 = vunpack.c.l.b16 %v321
  %v650 = vunpack.c.h.b16 %v321
  %v651 = vunpack.c.l.b16 %v322
  %v652 = vunpack.c.h.b16 %v322
  %v653 = vunpack.c.l.b16 %v323
  %v654 = vunpack.c.h.b16 %v323
  %v655 = vunpack.c.l.b16 %v324
  %v656 = vunpack.c.h.b16 %v324
  %v657 = vunpack.c.l.b16 %v325
  %v658 = vunpack.c.h.b16 %v325
  %v659 = vunpack.c.l.b16 %v326
  %v660 = vunpack.c.h.b16 %v326
  %v661 = vunpack.c.l.b16 %v327
  %v662 = vunpack.c.h.b16 %v327
  %v663 = vunpack.c.l.b16 %v328
  %v664 = vunpack.c.h.b16 %v328
  %v665 = vunpack.c.l.b16 %v329
  %v666 = vunpack.c.h.b16 %v329
  %v667 = vunpack.c.l.b16 %v330
  %v668 = vunpack.c.h.b16 %v330
  %v669 = vunpack.c.l.b16 %v331
  %v670 = vunpack.c.h.b16 %v331
  %v671 = vunpack.c.l.b16 %v332
  %v672 = vunpack.c.h.b16 %v332
  %v673 = vunpack.c.l.b16 %v333
  %v674 = vunpack.c.h.b16 %v333
  %v675 = vunpack.c.l.b16 %v334
  %v676 = vunpack.c.h.b16 %v334
  %v677 = vunpack.c.l.b16 %v335
  %v678 = vunpack.c.h.b16 %v335
  %v679 = vunpack.c.l.b16 %v336
  %v680 = vunpack.c.h.b16 %v336
  %v681 = vunpack.c.l.b16 %v337
  %v682 = vunpack.c.h.b16 %v337
  %v683 = vunpack.c.l.b16 %v338
  %v684 = vunpack.c.h.b16 %v338
  %v685 = vunpack.c.l.b16 %v339
  %v686 = vunpack.c.h.b16 %v339
  %v687 = vunpack.c.l.b16 %v340
  %v688 = vunpack.c.h.b16 %v340
  %v689 = vunpack.c.l.b16 %v341
  %v690 = vunpack.c.h.b16 %v341
  %v691 = vunpack.c.l.b16 %v342
  %v692 = vunpack.c.h.b16 %v342
  %v693 = vunpack.c.l.b16 %v343
  %v694 = vunpack.c.h.b16 %v343
  %v695 = vunpack.c.l.b16 %v344
  %v696 = vunpack.c.h.b16 %v344
  %v697 = vunpack.c.l.b16 %v345
  %v698 = vunpack.c.h.b16 %v345
  %v699 = vunpack.c.l.b16 %v346
  %v700 = vunpack.c.h.b16 %v346
  %v701 = vunpack.c.l.b16 %v347
  %v702 = vunpack.c.h.b16 %v347
  %v703 = vunpack.c.l.b16 %v348
  %v704 = vunpack.c.h.b16 %v348
  %v705 = vunpack.c.l.b16 %v349
  %v706 = vunpack.c.h.b16 %v349
  %v707 = vunpack.c.l.b16 %v350
  %v708 = vunpack.c.h.b16 %v350
  %v709 = vunpack.c.l.b16 %v351
  %v710 = vunpack.c.h.b16 %v351
  %v711 = vunpack.c.l.b16 %v352
  %v712 = vunpack.c.h.b16 %v352
  %v713 = vunpack.c.l.b16 %v353
  %v714 = vunpack.c.h.b16 %v353
  %v715 = vunpack.c.l.b16 %v354
  %v716 = vunpack.c.h.b16 %v354
  %v717 = vunpack.c.l.b16 %v355
  %v718 = vunpack.c.h.b16 %v355
  %v719 = vunpack.c.l.b16 %v356
  %v720 = vunpack.c.h.b16 %v356
  %v721 = vunpack.c.l.b16 %v357
  %v722 = vunpack.c.h.b16 %v357
  %v723 = vunpack.c.l.b16 %v358
  %v724 = vunpack.c.h.b16 %v358
  %v725 = vunpack.c.l.b16 %v359
  %v726 = vunpack.c.h.b16 %v359
  %v727 = vunpack.c.l.b16 %v360
  %v728 = vunpack.c.h.b16 %v360
  %v729 = vunpack.c.l.b16 %v361
  %v730 = vunpack.c.h.b16 %v361
  %v731 = vunpack.c.l.b16 %v362
  %v732 = vunpack.c.h.b16 %v362
  %v733 = vunpack.c.l.b16 %v363
  %v734 = vunpack.c.h.b16 %v363
  %v735 = vunpack.c.l.b16 %v364
  %v736 = vunpack.c.h.b16 %v364
  %v737 = vunpack.c.l.b16 %v365
  %v738 = vunpack.c.h.b16 %v365
  %v739 = vunpack.c.l.b16 %v366
  %v740 = vunpack.c.h.b16 %v366
  %v741 = vunpack.c.l.b16 %v367
  %v742 = vunpack.c.h.b16 %v367
  %v743 = vunpack.c.l.b16 %v368
  %v744 = vunpack.c.h.b16 %v368
  %v745 = vunpack.c.l.b16 %v369
  %v746 = vunpack.c.h.b16 %v369
  %v747 = vunpack.c.l.b16 %v370
  %v748 = vunpack.c.h.b16 %v370
  %v749 = vunpack.c.l.b16 %v371
  %v750 = vunpack.c.h.b16 %v371
  %v751 = vunpack.c.l.b16 %v372
  %v752 = vunpack.c.h.b16 %v372
  %v753 = vunpack.c.l.b16 %v373
  %v754 = vunpack.c.h.b16 %v373
  %v755 = vunpack.c.l.b16 %v374
  %v756 = vunpack.c.h.b16 %v374
  %v757 = vunpack.c.l.b16 %v375
  %v758 = vunpack.c.h.b16 %v375
  %v759 = vunpack.c.l.b16 %v376
  %v760 = vunpack.c.h.b16 %v376
  %v761 = vunpack.c.l.b16 %v377
  %v762 = vunpack.c.h.b16 %v377
  %v763 = vunpack.c.l.b16 %v378
  %v764 = vunpack.c.h.b16 %v378
  %v765 = vunpack.c.l.b16 %v379
  %v766 = vunpack.c.h.b16 %v379
  %v767 = vunpack.c.l.b16 %v380
  %v768 = vunpack.c.h.b16 %v380
  %v769 = vunpack.c.l.b16 %v381
  %v770 = vunpack.c.h.b16 %v381
  %v771 = vunpack.c.l.b16 %v382
  %v772 = vunpack.c.h.b16 %v382
  %v773 = vunpack.c.l.b16 %v383
  %v774 = vunpack.c.h.b16 %v383
  %v775 = vunpack.c.l.b16 %v384
  %v776 = vunpack.c.h.b16 %v384
  %v777 = vunpack.c.l.b16 %v385
  %v778 = vunpack.c.h.b16 %v385
  %v779 = vunpack.c.l.b16 %v386
  %v780 = vunpack.c.h.b16 %v386
  %v781 = vunpack.c.l.b16 %v387
  %v782 = vunpack.c.h.b16 %v387
  %v783 = vunpack.c.l.b16 %v388
  %v784 = vunpack.c.h.b16 %v388
  %v785 = vunpack.c.l.b16 %v389
  %v786 = vunpack.c.h.b16 %v389
  %v787 = vunpack.c.l.b16 %v390
  %v788 = vunpack.c.h.b16 %v390
  %v789 = vunpack.c.l.b16 %v391
  %v790 = vunpack.c.h.b16 %v391
  %v791 = vunpack.c.l.b16 %v392
  %v792 = vunpack.c.h.b16 %v392
  %v793 = vunpack.c.l.b16 %v393
  %v794 = vunpack.c.h.b16 %v393
  %v795 = vunpack.c.l.b16 %v394
  %v796 = vunpack.c.h.b16 %v394
  %v797 = vunpack.c.l.b16 %v395
  %v798 = vunpack.c.h.b16 %v395
  %v799 = vunpack.c.l.b16 %v396
  %v800 = vunpack.c.h.b16 %v396
  %v801 = vunpack.c.l.b16 %v397
  %v802 = vunpack.c.h.b16 %v397
  %v803 = vunpack.c.l.b16 %v398
  %v804 = vunpack.c.h.b16 %v398
  %v805 = vpack.c.b16 %v553, %v549
  %v806 = vpack.c.b16 %v554, %v550
  %v807 = vpack.c.b16 %v555, %v551
  %v808 = vpack.c.b16 %v556, %v552
  %v809 = vpack.c.b16 %v561, %v557
  %v810 = vpack.c.b16 %v562, %v558
  %v811 = vpack.c.b16 %v563, %v559
  %v812 = vpack.c.b16 %v564, %v560
  %v813 = vpack.c.b16 %v569, %v565
  %v814 = vpack.c.b16 %v570, %v566
  %v815 = vpack.c.b16 %v571, %v567
  %v816 = vpack.c.b16 %v572, %v568
  %v817 = vpack.c.b16 %v577, %v573
  %v818 = vpack.c.b16 %v578, %v574
  %v819 = vpack.c.b16 %v579, %v575
  %v820 = vpack.c.b16 %v580, %v576
  %v821 = vpack.c.b16 %v585, %v581
  %v822 = vpack.c.b16 %v586, %v582
  %v823 = vpack.c.b16 %v587, %v583
  %v824 = vpack.c.b16 %v588, %v584
  %v825 = vpack.c.b16 %v593, %v589
  %v826 = vpack.c.b16 %v594, %v590
  %v827 = vpack.c.b16 %v595, %v591
  %v828 = vpack.c.b16 %v596, %v592
  %v829 = vpack.c.b16 %v601, %v597
  %v830 = vpack.c.b16 %v602, %v598
  %v831 = vpack.c.b16 %v603, %v599
  %v832 = vpack.c.b16 %v604, %v600
  %v833 = vpack.c.b16 %v609, %v605
  %v834 = vpack.c.b16 %v610, %v606
  %v835 = vpack.c.b16 %v611, %v607
  %v836 = vpack.c.b16 %v612, %v608
  %v837 = vpack.c.b16 %v617, %v613
  %v838 = vpack.c.b16 %v618, %v614
  %v839 = vpack.c.b16 %v619, %v615
  %v840 = vpack.c.b16 %v620, %v616
  %v841 = vpack.c.b16 %v625, %v621
  %v842 = vpack.c.b16 %v626, %v622
  %v843 = vpack.c.b16 %v627, %v623
  %v844 = vpack.c.b16 %v628, %v624
  %v845 = vpack.c.b16 %v633, %v629
  %v846 = vpack.c.b16 %v634, %v630
  %v847 = vpack.c.b16 %v635, %v631
  %v848 = vpack.c.b16 %v636, %v632
  %v849 = vpack.c.b16 %v641, %v637
  %v850 = vpack.c.b16 %v642, %v638
  %v851 = vpack.c.b16 %v643, %v639
  %v852 = vpack.c.b16 %v644, %v640
  %v853 = vpack.c.b16 %v649, %v645
  %v854 = vpack.c.b16 %v650, %v646
  %v855 = vpack.c.b16 %v651, %v647
  %v856 = vpack.c.b16 %v652, %v648
  %v857 = vpack.c.b16 %v657, %v653
  %v858 = vpack.c.b16 %v658, %v654
  %v859 = vpack.c.b16 %v659, %v655
  %v860 = vpack.c.b16 %v660, %v656
  %v861 = vpack.c.b16 %v665, %v661
  %v862 = vpack.c.b16 %v666, %v662
  %v863 = vpack.c.b16 %v667, %v663
  %v864 = vpack.c.b16 %v668, %v664
  %v865 = vpack.c.b16 %v673, %v669
  %v866 = vpack.c.b16 %v674, %v670
  %v867 = vpack.c.b16 %v675, %v671
  %v868 = vpack.c.b16 %v676, %v672
  %v869 = vpack.c.b16 %v681, %v677
  %v870 = vpack.c.b16 %v682, %v678
  %v871 = vpack.c.b16 %v683, %v679
  %v872 = vpack.c.b16 %v684, %v680
  %v873 = vpack.c.b16 %v689, %v685
  %v874 = vpack.c.b16 %v690, %v686
  %v875 = vpack.c.b16 %v691, %v687
  %v876 = vpack.c.b16 %v692, %v688
  %v877 = vpack.c.b16 %v697, %v693
  %v878 = vpack.c.b16 %v698, %v694
  %v879 = vpack.c.b16 %v699, %v695
  %v880 = vpack.c.b16 %v700, %v696
  %v881 = vpack.c.b16 %v705, %v701
  %v882 = vpack.c.b16 %v706, %v702
  %v883 = vpack.c.b16 %v707, %v703
  %v884 = vpack.c.b16 %v708, %v704
  %v885 = vpack.c.b16 %v713, %v709
  %v886 = vpack.c.b16 %v714, %v710
  %v887 = vpack.c.b16 %v715, %v711
  %v888 = vpack.c.b16 %v716, %v712
  %v889 = vpack.c.b16 %v721, %v717
  %v890 = vpack.c.b16 %v722, %v718
  %v891 = vpack.c.b16 %v723, %v719
  %v892 = vpack.c.b16 %v724, %v720
  %v893 = vpack.c.b16 %v729, %v725
  %v894 = vpack.c.b16 %v730, %v726
  %v895 = vpack.c.b16 %v731, %v727
  %v896 = vpack.c.b16 %v732, %v728
  %v897 = vpack.c.b16 %v737, %v733
  %v898 = vpack.c.b16 %v738, %v734
  %v899 = vpack.c.b16 %v739, %v735
  %v900 = vpack.c.b16 %v740, %v736
  %v901 = vpack.c.b16 %v745, %v741
  %v902 = vpack.c.b16 %v746, %v742
  %v903 = vpack.c.b16 %v747, %v743
  %v904 = vpack.c.b16 %v748, %v744
  %v905 = vpack.c.b16 %v753, %v749
  %v906 = vpack.c.b16 %v754, %v750
  %v907 = vpack.c.b16 %v755, %v751
  %v908 = vpack.c.b16 %v756, %v752
  %v909 = vpack.c.b16 %v761, %v757
  %v910 = vpack.c.b16 %v762, %v758
  %v911 = vpack.c.b16 %v763, %v759
  %v912 = vpack.c.b16 %v764, %v760
  %v913 = vpack.c.b16 %v769, %v765
  %v914 = vpack.c.b16 %v770, %v766
  %v915 = vpack.c.b16 %v771, %v767
  %v916 = vpack.c.b16 %v772, %v768
  %v917 = vpack.c.b16 %v777, %v773
  %v918 = vpack.c.b16 %v778, %v774
  %v919 = vpack.c.b16 %v779, %v775
  %v920 = vpack.c.b16 %v780, %v776
  %v921 = vpack.c.b16 %v785, %v781
  %v922 = vpack.c.b16 %v786, %v782
  %v923 = vpack.c.b16 %v787, %v783
  %v924 = vpack.c.b16 %v788, %v784
  %v925 = vpack.c.b16 %v793, %v789
  %v926 = vpack.c.b16 %v794, %v790
  %v927 = vpack.c.b16 %v795, %v791
  %v928 = vpack.c.b16 %v796, %v792
  %v929 = vpack.c.b16 %v801, %v797
  %v930 = vpack.c.b16 %v802, %v798
  %v931 = vpack.c.b16 %v803, %v799
  %v932 = vpack.c.b16 %v804, %v800
  %1061 = vmatprep.subr.bf16.mxu0 %v806
  %1062 = vmatpush1.bf16.msra.mxu0 %v805
  %1063 = vmatprep.subr.bf16.mxu0 %v810
  %1064 = vmatpush1.bf16.msra.mxu0 %v809
  %1065 = vmatprep.subr.bf16.mxu0 %v814
  %1066 = vmatpush1.bf16.msra.mxu0 %v813
  %1067 = vmatprep.subr.bf16.mxu0 %v818
  %1068 = vmatpush1.bf16.msra.mxu0 %v817
  %1069 = vmatprep.subr.bf16.mxu0 %v822
  %1070 = vmatpush1.bf16.msra.mxu0 %v821
  %1071 = vmatprep.subr.bf16.mxu0 %v826
  %1072 = vmatpush1.bf16.msra.mxu0 %v825
  %1073 = vmatprep.subr.bf16.mxu0 %v830
  %1074 = vmatpush1.bf16.msra.mxu0 %v829
  %1075 = vmatprep.subr.bf16.mxu0 %v834
  %1076 = vmatpush1.bf16.msra.mxu0 %v833
  %1077 = vmatprep.subr.bf16.mxu0 %v838
  %1078 = vmatpush1.bf16.msra.mxu0 %v837
  %1079 = vmatprep.subr.bf16.mxu0 %v842
  %1080 = vmatpush1.bf16.msra.mxu0 %v841
  %1081 = vmatprep.subr.bf16.mxu0 %v846
  %1082 = vmatpush1.bf16.msra.mxu0 %v845
  %1083 = vmatprep.subr.bf16.mxu0 %v850
  %1084 = vmatpush1.bf16.msra.mxu0 %v849
  %1085 = vmatprep.subr.bf16.mxu0 %v854
  %1086 = vmatpush1.bf16.msra.mxu0 %v853
  %1087 = vmatprep.subr.bf16.mxu0 %v858
  %1088 = vmatpush1.bf16.msra.mxu0 %v857
  %1089 = vmatprep.subr.bf16.mxu0 %v862
  %1090 = vmatpush1.bf16.msra.mxu0 %v861
  %1091 = vmatprep.subr.bf16.mxu0 %v866
  %1092 = vmatpush1.bf16.msra.mxu0 %v865
  %1093 = vmatprep.mubr.bf16.mxu0 %v268
  %1094 = vmatmul.mubr.bf16.gmra.mrb[0].mxu0 %v267
  %v1095 = vpop.f32.mrb[0].mxu0
  %v1096 = vadd.f32 %v404, %v1095
  %v1097 = vpop.f32.mrb[0].mxu0
  %v1098 = vadd.f32 %v408, %v1097
  %v1099 = vpop.f32.mrb[0].mxu0
  %v1100 = vadd.f32 %v404, %v1099
  %v1101 = vpop.f32.mrb[0].mxu0
  %v1102 = vadd.f32 %v408, %v1101
  %1103 = vdwg.mxu0
  %1104 = vmatprep.subr.bf16.mxu0 %v870
  %1105 = vmatpush1.bf16.msra.mxu0 %v869
  %1106 = vmatprep.subr.bf16.mxu0 %v874
  %1107 = vmatpush1.bf16.msra.mxu0 %v873
  %1108 = vmatprep.subr.bf16.mxu0 %v878
  %1109 = vmatpush1.bf16.msra.mxu0 %v877
  %1110 = vmatprep.subr.bf16.mxu0 %v882
  %1111 = vmatpush1.bf16.msra.mxu0 %v881
  %1112 = vmatprep.subr.bf16.mxu0 %v886
  %1113 = vmatpush1.bf16.msra.mxu0 %v885
  %1114 = vmatprep.subr.bf16.mxu0 %v890
  %1115 = vmatpush1.bf16.msra.mxu0 %v889
  %1116 = vmatprep.subr.bf16.mxu0 %v894
  %1117 = vmatpush1.bf16.msra.mxu0 %v893
  %1118 = vmatprep.subr.bf16.mxu0 %v898
  %1119 = vmatpush1.bf16.msra.mxu0 %v897
  %1120 = vmatprep.subr.bf16.mxu0 %v902
  %1121 = vmatpush1.bf16.msra.mxu0 %v901
  %1122 = vmatprep.subr.bf16.mxu0 %v906
  %1123 = vmatpush1.bf16.msra.mxu0 %v905
  %1124 = vmatprep.subr.bf16.mxu0 %v910
  %1125 = vmatpush1.bf16.msra.mxu0 %v909
  %1126 = vmatprep.subr.bf16.mxu0 %v914
  %1127 = vmatpush1.bf16.msra.mxu0 %v913
  %1128 = vmatprep.subr.bf16.mxu0 %v918
  %1129 = vmatpush1.bf16.msra.mxu0 %v917
  %1130 = vmatprep.subr.bf16.mxu0 %v922
  %1131 = vmatpush1.bf16.msra.mxu0 %v921
  %1132 = vmatprep.subr.bf16.mxu0 %v926
  %1133 = vmatpush1.bf16.msra.mxu0 %v925
  %1134 = vmatprep.subr.bf16.mxu0 %v930
  %1135 = vmatpush1.bf16.msra.mxu0 %v929
  %1136 = vmatprep.mubr.bf16.mxu0 %v270
  %1137 = vmatmul.mubr.bf16.gmra.mrb[0].mxu0 %v269
  %v1138 = vpop.f32.mrb[0].mxu0
  %v1139 = vadd.f32 %v1096, %v1138
  %v1140 = vpop.f32.mrb[0].mxu0
  %v1141 = vadd.f32 %v1098, %v1140
  %v1142 = vpop.f32.mrb[0].mxu0
  %v1143 = vadd.f32 %v1100, %v1142
  %v1144 = vpop.f32.mrb[0].mxu0
  %v1145 = vadd.f32 %v1102, %v1144
  %1146 = vdwg.mxu0
  %1147 = vmatprep.subr.bf16.mxu0 %v808
  %1148 = vmatpush1.bf16.msra.mxu0 %v807
  %1149 = vmatprep.subr.bf16.mxu0 %v812
  %1150 = vmatpush1.bf16.msra.mxu0 %v811
  %1151 = vmatprep.subr.bf16.mxu0 %v816
  %1152 = vmatpush1.bf16.msra.mxu0 %v815
  %1153 = vmatprep.subr.bf16.mxu0 %v820
  %1154 = vmatpush1.bf16.msra.mxu0 %v819
  %1155 = vmatprep.subr.bf16.mxu0 %v824
  %1156 = vmatpush1.bf16.msra.mxu0 %v823
  %1157 = vmatprep.subr.bf16.mxu0 %v828
  %1158 = vmatpush1.bf16.msra.mxu0 %v827
  %1159 = vmatprep.subr.bf16.mxu0 %v832
  %1160 = vmatpush1.bf16.msra.mxu0 %v831
  %1161 = vmatprep.subr.bf16.mxu0 %v836
  %1162 = vmatpush1.bf16.msra.mxu0 %v835
  %1163 = vmatprep.subr.bf16.mxu0 %v840
  %1164 = vmatpush1.bf16.msra.mxu0 %v839
  %1165 = vmatprep.subr.bf16.mxu0 %v844
  %1166 = vmatpush1.bf16.msra.mxu0 %v843
  %1167 = vmatprep.subr.bf16.mxu0 %v848
  %1168 = vmatpush1.bf16.msra.mxu0 %v847
  %1169 = vmatprep.subr.bf16.mxu0 %v852
  %1170 = vmatpush1.bf16.msra.mxu0 %v851
  %1171 = vmatprep.subr.bf16.mxu0 %v856
  %1172 = vmatpush1.bf16.msra.mxu0 %v855
  %1173 = vmatprep.subr.bf16.mxu0 %v860
  %1174 = vmatpush1.bf16.msra.mxu0 %v859
  %1175 = vmatprep.subr.bf16.mxu0 %v864
  %1176 = vmatpush1.bf16.msra.mxu0 %v863
  %1177 = vmatprep.subr.bf16.mxu0 %v868
  %1178 = vmatpush1.bf16.msra.mxu0 %v867
  %1179 = vmatprep.mubr.bf16.mxu0 %v268
  %1180 = vmatmul.mubr.bf16.gmra.mrb[0].mxu0 %v267
  %v1181 = vpop.f32.mrb[0].mxu0
  %v1182 = vadd.f32 %v412, %v1181
  %v1183 = vpop.f32.mrb[0].mxu0
  %v1184 = vadd.f32 %v416, %v1183
  %v1185 = vpop.f32.mrb[0].mxu0
  %v1186 = vadd.f32 %v412, %v1185
  %v1187 = vpop.f32.mrb[0].mxu0
  %v1188 = vadd.f32 %v416, %v1187
  %1189 = vdwg.mxu0
  %1190 = vmatprep.subr.bf16.mxu0 %v872
  %1191 = vmatpush1.bf16.msra.mxu0 %v871
  %1192 = vmatprep.subr.bf16.mxu0 %v876
  %1193 = vmatpush1.bf16.msra.mxu0 %v875
  %1194 = vmatprep.subr.bf16.mxu0 %v880
  %1195 = vmatpush1.bf16.msra.mxu0 %v879
  %1196 = vmatprep.subr.bf16.mxu0 %v884
  %1197 = vmatpush1.bf16.msra.mxu0 %v883
  %1198 = vmatprep.subr.bf16.mxu0 %v888
  %1199 = vmatpush1.bf16.msra.mxu0 %v887
  %1200 = vmatprep.subr.bf16.mxu0 %v892
  %1201 = vmatpush1.bf16.msra.mxu0 %v891
  %1202 = vmatprep.subr.bf16.mxu0 %v896
  %1203 = vmatpush1.bf16.msra.mxu0 %v895
  %1204 = vmatprep.subr.bf16.mxu0 %v900
  %1205 = vmatpush1.bf16.msra.mxu0 %v899
  %1206 = vmatprep.subr.bf16.mxu0 %v904
  %1207 = vmatpush1.bf16.msra.mxu0 %v903
  %1208 = vmatprep.subr.bf16.mxu0 %v908
  %1209 = vmatpush1.bf16.msra.mxu0 %v907
  %1210 = vmatprep.subr.bf16.mxu0 %v912
  %1211 = vmatpush1.bf16.msra.mxu0 %v911
  %1212 = vmatprep.subr.bf16.mxu0 %v916
  %1213 = vmatpush1.bf16.msra.mxu0 %v915
  %1214 = vmatprep.subr.bf16.mxu0 %v920
  %1215 = vmatpush1.bf16.msra.mxu0 %v919
  %1216 = vmatprep.subr.bf16.mxu0 %v924
  %1217 = vmatpush1.bf16.msra.mxu0 %v923
  %1218 = vmatprep.subr.bf16.mxu0 %v928
  %1219 = vmatpush1.bf16.msra.mxu0 %v927
  %1220 = vmatprep.subr.bf16.mxu0 %v932
  %1221 = vmatpush1.bf16.msra.mxu0 %v931
  %1222 = vmatprep.mubr.bf16.mxu0 %v270
  %1223 = vmatmul.mubr.bf16.gmra.mrb[0].mxu0 %v269
  %v1224 = vpop.f32.mrb[0].mxu0
  %v1225 = vadd.f32 %v1182, %v1224
  %v1226 = vpop.f32.mrb[0].mxu0
  %v1227 = vadd.f32 %v1184, %v1226
  %v1228 = vpop.f32.mrb[0].mxu0
  %v1229 = vadd.f32 %v1186, %v1228
  %v1230 = vpop.f32.mrb[0].mxu0
  %v1231 = vadd.f32 %v1188, %v1230
  %1232 = vdwg.mxu0
  %v1233 = vmax.f32 %v1139, 0.0
  %v1234 = vmax.f32 %v1141, 0.0
  %v1235 = vmax.f32 %v1225, 0.0
  %v1236 = vmax.f32 %v1227, 0.0
  %v1237 = vmax.f32 %v1143, 0.0
  %v1238 = vmax.f32 %v1145, 0.0
  %v1239 = vmax.f32 %v1229, 0.0
  %v1240 = vmax.f32 %v1231, 0.0
  %v1241 = vpack.c.bf16 %v1237, %v1233
  %v1242 = vpack.c.bf16 %v1238, %v1234
  %v1243 = vpack.c.bf16 %v1239, %v1235
  %v1244 = vpack.c.bf16 %v1240, %v1236
  %v1245 = vld [vmem:[%s5] sm:$0xff]
  %v1246 = vld [vmem:[%s5 + $0x8] sm:$0xff]
  %v1247 = vld [vmem:[%s5 + $0x10] sm:$0xff]
  %v1248 = vld [vmem:[%s5 + $0x18] sm:$0xff]
  %v1249 = vld [vmem:[%s5 + $0x20] sm:$0xff]
  %v1250 = vld [vmem:[%s5 + $0x28] sm:$0xff]
  %v1251 = vld [vmem:[%s5 + $0x30] sm:$0xff]
  %v1252 = vld [vmem:[%s5 + $0x38] sm:$0xff]
  %v1253 = vld [vmem:[%s5 + $0x40] sm:$0xff]
  %v1254 = vld [vmem:[%s5 + $0x48] sm:$0xff]
  %v1255 = vld [vmem:[%s5 + $0x50] sm:$0xff]
  %v1256 = vld [vmem:[%s5 + $0x58] sm:$0xff]
  %v1257 = vld [vmem:[%s5 + $0x60] sm:$0xff]
  %v1258 = vld [vmem:[%s5 + $0x68] sm:$0xff]
  %v1259 = vld [vmem:[%s5 + $0x70] sm:$0xff]
  %v1260 = vld [vmem:[%s5 + $0x78] sm:$0xff]
  %v1261 = vld [vmem:[%s5 + $0x80] sm:$0xff]
  %v1262 = vld [vmem:[%s5 + $0x88] sm:$0xff]
  %v1263 = vld [vmem:[%s5 + $0x90] sm:$0xff]
  %v1264 = vld [vmem:[%s5 + $0x98] sm:$0xff]
  %v1265 = vld [vmem:[%s5 + $0xa0] sm:$0xff]
  %v1266 = vld [vmem:[%s5 + $0xa8] sm:$0xff]
  %v1267 = vld [vmem:[%s5 + $0xb0] sm:$0xff]
  %v1268 = vld [vmem:[%s5 + $0xb8] sm:$0xff]
  %v1269 = vld [vmem:[%s5 + $0xc0] sm:$0xff]
  %v1270 = vld [vmem:[%s5 + $0xc8] sm:$0xff]
  %v1271 = vld [vmem:[%s5 + $0xd0] sm:$0xff]
  %v1272 = vld [vmem:[%s5 + $0xd8] sm:$0xff]
  %v1273 = vld [vmem:[%s5 + $0xe0] sm:$0xff]
  %v1274 = vld [vmem:[%s5 + $0xe8] sm:$0xff]
  %v1275 = vld [vmem:[%s5 + $0xf0] sm:$0xff]
  %v1276 = vld [vmem:[%s5 + $0xf8] sm:$0xff]
  %v1277 = vld [vmem:[%s5 + $0x100] sm:$0xff]
  %v1278 = vld [vmem:[%s5 + $0x108] sm:$0xff]
  %v1279 = vld [vmem:[%s5 + $0x110] sm:$0xff]
  %v1280 = vld [vmem:[%s5 + $0x118] sm:$0xff]
  %v1281 = vld [vmem:[%s5 + $0x120] sm:$0xff]
  %v1282 = vld [vmem:[%s5 + $0x128] sm:$0xff]
  %v1283 = vld [vmem:[%s5 + $0x130] sm:$0xff]
  %v1284 = vld [vmem:[%s5 + $0x138] sm:$0xff]
  %v1285 = vld [vmem:[%s5 + $0x140] sm:$0xff]
  %v1286 = vld [vmem:[%s5 + $0x148] sm:$0xff]
  %v1287 = vld [vmem:[%s5 + $0x150] sm:$0xff]
  %v1288 = vld [vmem:[%s5 + $0x158] sm:$0xff]
  %v1289 = vld [vmem:[%s5 + $0x160] sm:$0xff]
  %v1290 = vld [vmem:[%s5 + $0x168] sm:$0xff]
  %v1291 = vld [vmem:[%s5 + $0x170] sm:$0xff]
  %v1292 = vld [vmem:[%s5 + $0x178] sm:$0xff]
  %v1293 = vld [vmem:[%s5 + $0x180] sm:$0xff]
  %v1294 = vld [vmem:[%s5 + $0x188] sm:$0xff]
  %v1295 = vld [vmem:[%s5 + $0x190] sm:$0xff]
  %v1296 = vld [vmem:[%s5 + $0x198] sm:$0xff]
  %v1297 = vld [vmem:[%s5 + $0x1a0] sm:$0xff]
  %v1298 = vld [vmem:[%s5 + $0x1a8] sm:$0xff]
  %v1299 = vld [vmem:[%s5 + $0x1b0] sm:$0xff]
  %v1300 = vld [vmem:[%s5 + $0x1b8] sm:$0xff]
  %v1301 = vld [vmem:[%s5 + $0x1c0] sm:$0xff]
  %v1302 = vld [vmem:[%s5 + $0x1c8] sm:$0xff]
  %v1303 = vld [vmem:[%s5 + $0x1d0] sm:$0xff]
  %v1304 = vld [vmem:[%s5 + $0x1d8] sm:$0xff]
  %v1305 = vld [vmem:[%s5 + $0x1e0] sm:$0xff]
  %v1306 = vld [vmem:[%s5 + $0x1e8] sm:$0xff]
  %v1307 = vld [vmem:[%s5 + $0x1f0] sm:$0xff]
  %v1308 = vld [vmem:[%s5 + $0x1f8] sm:$0xff]
  %v1309 = vld [vmem:[%s5 + $0x200] sm:$0xff]
  %v1310 = vld [vmem:[%s5 + $0x208] sm:$0xff]
  %v1311 = vld [vmem:[%s5 + $0x210] sm:$0xff]
  %v1312 = vld [vmem:[%s5 + $0x218] sm:$0xff]
  %v1313 = vld [vmem:[%s5 + $0x220] sm:$0xff]
  %v1314 = vld [vmem:[%s5 + $0x228] sm:$0xff]
  %v1315 = vld [vmem:[%s5 + $0x230] sm:$0xff]
  %v1316 = vld [vmem:[%s5 + $0x238] sm:$0xff]
  %v1317 = vld [vmem:[%s5 + $0x240] sm:$0xff]
  %v1318 = vld [vmem:[%s5 + $0x248] sm:$0xff]
  %v1319 = vld [vmem:[%s5 + $0x250] sm:$0xff]
  %v1320 = vld [vmem:[%s5 + $0x258] sm:$0xff]
  %v1321 = vld [vmem:[%s5 + $0x260] sm:$0xff]
  %v1322 = vld [vmem:[%s5 + $0x268] sm:$0xff]
  %v1323 = vld [vmem:[%s5 + $0x270] sm:$0xff]
  %v1324 = vld [vmem:[%s5 + $0x278] sm:$0xff]
  %v1325 = vld [vmem:[%s5 + $0x280] sm:$0xff]
  %v1326 = vld [vmem:[%s5 + $0x288] sm:$0xff]
  %v1327 = vld [vmem:[%s5 + $0x290] sm:$0xff]
  %v1328 = vld [vmem:[%s5 + $0x298] sm:$0xff]
  %v1329 = vld [vmem:[%s5 + $0x2a0] sm:$0xff]
  %v1330 = vld [vmem:[%s5 + $0x2a8] sm:$0xff]
  %v1331 = vld [vmem:[%s5 + $0x2b0] sm:$0xff]
  %v1332 = vld [vmem:[%s5 + $0x2b8] sm:$0xff]
  %v1333 = vld [vmem:[%s5 + $0x2c0] sm:$0xff]
  %v1334 = vld [vmem:[%s5 + $0x2c8] sm:$0xff]
  %v1335 = vld [vmem:[%s5 + $0x2d0] sm:$0xff]
  %v1336 = vld [vmem:[%s5 + $0x2d8] sm:$0xff]
  %v1337 = vld [vmem:[%s5 + $0x2e0] sm:$0xff]
  %v1338 = vld [vmem:[%s5 + $0x2e8] sm:$0xff]
  %v1339 = vld [vmem:[%s5 + $0x2f0] sm:$0xff]
  %v1340 = vld [vmem:[%s5 + $0x2f8] sm:$0xff]
  %v1341 = vld [vmem:[%s5 + $0x300] sm:$0xff]
  %v1342 = vld [vmem:[%s5 + $0x308] sm:$0xff]
  %v1343 = vld [vmem:[%s5 + $0x310] sm:$0xff]
  %v1344 = vld [vmem:[%s5 + $0x318] sm:$0xff]
  %v1345 = vld [vmem:[%s5 + $0x320] sm:$0xff]
  %v1346 = vld [vmem:[%s5 + $0x328] sm:$0xff]
  %v1347 = vld [vmem:[%s5 + $0x330] sm:$0xff]
  %v1348 = vld [vmem:[%s5 + $0x338] sm:$0xff]
  %v1349 = vld [vmem:[%s5 + $0x340] sm:$0xff]
  %v1350 = vld [vmem:[%s5 + $0x348] sm:$0xff]
  %v1351 = vld [vmem:[%s5 + $0x350] sm:$0xff]
  %v1352 = vld [vmem:[%s5 + $0x358] sm:$0xff]
  %v1353 = vld [vmem:[%s5 + $0x360] sm:$0xff]
  %v1354 = vld [vmem:[%s5 + $0x368] sm:$0xff]
  %v1355 = vld [vmem:[%s5 + $0x370] sm:$0xff]
  %v1356 = vld [vmem:[%s5 + $0x378] sm:$0xff]
  %v1357 = vld [vmem:[%s5 + $0x380] sm:$0xff]
  %v1358 = vld [vmem:[%s5 + $0x388] sm:$0xff]
  %v1359 = vld [vmem:[%s5 + $0x390] sm:$0xff]
  %v1360 = vld [vmem:[%s5 + $0x398] sm:$0xff]
  %v1361 = vld [vmem:[%s5 + $0x3a0] sm:$0xff]
  %v1362 = vld [vmem:[%s5 + $0x3a8] sm:$0xff]
  %v1363 = vld [vmem:[%s5 + $0x3b0] sm:$0xff]
  %v1364 = vld [vmem:[%s5 + $0x3b8] sm:$0xff]
  %v1365 = vld [vmem:[%s5 + $0x3c0] sm:$0xff]
  %v1366 = vld [vmem:[%s5 + $0x3c8] sm:$0xff]
  %v1367 = vld [vmem:[%s5 + $0x3d0] sm:$0xff]
  %v1368 = vld [vmem:[%s5 + $0x3d8] sm:$0xff]
  %v1369 = vld [vmem:[%s5 + $0x3e0] sm:$0xff]
  %v1370 = vld [vmem:[%s5 + $0x3e8] sm:$0xff]
  %v1371 = vld [vmem:[%s5 + $0x3f0] sm:$0xff]
  %v1372 = vld [vmem:[%s5 + $0x3f8] sm:$0xff]
  %v1373 = vld [vmem:[%s5 + $0x400] sm:$0xff]
  %v1374 = vld [vmem:[%s5 + $0x408] sm:$0xff]
  %v1375 = vld [vmem:[%s5 + $0x410] sm:$0xff]
  %v1376 = vld [vmem:[%s5 + $0x418] sm:$0xff]
  %v1377 = vld [vmem:[%s5 + $0x420] sm:$0xff]
  %v1378 = vld [vmem:[%s5 + $0x428] sm:$0xff]
  %v1379 = vld [vmem:[%s5 + $0x430] sm:$0xff]
  %v1380 = vld [vmem:[%s5 + $0x438] sm:$0xff]
  %v1381 = vld [vmem:[%s5 + $0x440] sm:$0xff]
  %v1382 = vld [vmem:[%s5 + $0x448] sm:$0xff]
  %v1383 = vld [vmem:[%s5 + $0x450] sm:$0xff]
  %v1384 = vld [vmem:[%s5 + $0x458] sm:$0xff]
  %v1385 = vld [vmem:[%s5 + $0x460] sm:$0xff]
  %v1386 = vld [vmem:[%s5 + $0x468] sm:$0xff]
  %v1387 = vld [vmem:[%s5 + $0x470] sm:$0xff]
  %v1388 = vld [vmem:[%s5 + $0x478] sm:$0xff]
  %v1389 = vld [vmem:[%s5 + $0x480] sm:$0xff]
  %v1390 = vld [vmem:[%s5 + $0x488] sm:$0xff]
  %v1391 = vld [vmem:[%s5 + $0x490] sm:$0xff]
  %v1392 = vld [vmem:[%s5 + $0x498] sm:$0xff]
  %v1393 = vld [vmem:[%s5 + $0x4a0] sm:$0xff]
  %v1394 = vld [vmem:[%s5 + $0x4a8] sm:$0xff]
  %v1395 = vld [vmem:[%s5 + $0x4b0] sm:$0xff]
  %v1396 = vld [vmem:[%s5 + $0x4b8] sm:$0xff]
  %v1397 = vld [vmem:[%s5 + $0x4c0] sm:$0xff]
  %v1398 = vld [vmem:[%s5 + $0x4c8] sm:$0xff]
  %v1399 = vld [vmem:[%s5 + $0x4d0] sm:$0xff]
  %v1400 = vld [vmem:[%s5 + $0x4d8] sm:$0xff]
  %v1401 = vld [vmem:[%s5 + $0x4e0] sm:$0xff]
  %v1402 = vld [vmem:[%s5 + $0x4e8] sm:$0xff]
  %v1403 = vld [vmem:[%s5 + $0x4f0] sm:$0xff]
  %v1404 = vld [vmem:[%s5 + $0x4f8] sm:$0xff]
  %v1405 = vld [vmem:[%s5 + $0x500] sm:$0xff]
  %v1406 = vld [vmem:[%s5 + $0x508] sm:$0xff]
  %v1407 = vld [vmem:[%s5 + $0x510] sm:$0xff]
  %v1408 = vld [vmem:[%s5 + $0x518] sm:$0xff]
  %v1409 = vld [vmem:[%s5 + $0x520] sm:$0xff]
  %v1410 = vld [vmem:[%s5 + $0x528] sm:$0xff]
  %v1411 = vld [vmem:[%s5 + $0x530] sm:$0xff]
  %v1412 = vld [vmem:[%s5 + $0x538] sm:$0xff]
  %v1413 = vld [vmem:[%s5 + $0x540] sm:$0xff]
  %v1414 = vld [vmem:[%s5 + $0x548] sm:$0xff]
  %v1415 = vld [vmem:[%s5 + $0x550] sm:$0xff]
  %v1416 = vld [vmem:[%s5 + $0x558] sm:$0xff]
  %v1417 = vld [vmem:[%s5 + $0x560] sm:$0xff]
  %v1418 = vld [vmem:[%s5 + $0x568] sm:$0xff]
  %v1419 = vld [vmem:[%s5 + $0x570] sm:$0xff]
  %v1420 = vld [vmem:[%s5 + $0x578] sm:$0xff]
  %v1421 = vld [vmem:[%s5 + $0x580] sm:$0xff]
  %v1422 = vld [vmem:[%s5 + $0x588] sm:$0xff]
  %v1423 = vld [vmem:[%s5 + $0x590] sm:$0xff]
  %v1424 = vld [vmem:[%s5 + $0x598] sm:$0xff]
  %v1425 = vld [vmem:[%s5 + $0x5a0] sm:$0xff]
  %v1426 = vld [vmem:[%s5 + $0x5a8] sm:$0xff]
  %v1427 = vld [vmem:[%s5 + $0x5b0] sm:$0xff]
  %v1428 = vld [vmem:[%s5 + $0x5b8] sm:$0xff]
  %v1429 = vld [vmem:[%s5 + $0x5c0] sm:$0xff]
  %v1430 = vld [vmem:[%s5 + $0x5c8] sm:$0xff]
  %v1431 = vld [vmem:[%s5 + $0x5d0] sm:$0xff]
  %v1432 = vld [vmem:[%s5 + $0x5d8] sm:$0xff]
  %v1433 = vld [vmem:[%s5 + $0x5e0] sm:$0xff]
  %v1434 = vld [vmem:[%s5 + $0x5e8] sm:$0xff]
  %v1435 = vld [vmem:[%s5 + $0x5f0] sm:$0xff]
  %v1436 = vld [vmem:[%s5 + $0x5f8] sm:$0xff]
  %v1437 = vld [vmem:[%s5 + $0x600] sm:$0xff]
  %v1438 = vld [vmem:[%s5 + $0x608] sm:$0xff]
  %v1439 = vld [vmem:[%s5 + $0x610] sm:$0xff]
  %v1440 = vld [vmem:[%s5 + $0x618] sm:$0xff]
  %v1441 = vld [vmem:[%s5 + $0x620] sm:$0xff]
  %v1442 = vld [vmem:[%s5 + $0x628] sm:$0xff]
  %v1443 = vld [vmem:[%s5 + $0x630] sm:$0xff]
  %v1444 = vld [vmem:[%s5 + $0x638] sm:$0xff]
  %v1445 = vld [vmem:[%s5 + $0x640] sm:$0xff]
  %v1446 = vld [vmem:[%s5 + $0x648] sm:$0xff]
  %v1447 = vld [vmem:[%s5 + $0x650] sm:$0xff]
  %v1448 = vld [vmem:[%s5 + $0x658] sm:$0xff]
  %v1449 = vld [vmem:[%s5 + $0x660] sm:$0xff]
  %v1450 = vld [vmem:[%s5 + $0x668] sm:$0xff]
  %v1451 = vld [vmem:[%s5 + $0x670] sm:$0xff]
  %v1452 = vld [vmem:[%s5 + $0x678] sm:$0xff]
  %v1453 = vld [vmem:[%s5 + $0x680] sm:$0xff]
  %v1454 = vld [vmem:[%s5 + $0x688] sm:$0xff]
  %v1455 = vld [vmem:[%s5 + $0x690] sm:$0xff]
  %v1456 = vld [vmem:[%s5 + $0x698] sm:$0xff]
  %v1457 = vld [vmem:[%s5 + $0x6a0] sm:$0xff]
  %v1458 = vld [vmem:[%s5 + $0x6a8] sm:$0xff]
  %v1459 = vld [vmem:[%s5 + $0x6b0] sm:$0xff]
  %v1460 = vld [vmem:[%s5 + $0x6b8] sm:$0xff]
  %v1461 = vld [vmem:[%s5 + $0x6c0] sm:$0xff]
  %v1462 = vld [vmem:[%s5 + $0x6c8] sm:$0xff]
  %v1463 = vld [vmem:[%s5 + $0x6d0] sm:$0xff]
  %v1464 = vld [vmem:[%s5 + $0x6d8] sm:$0xff]
  %v1465 = vld [vmem:[%s5 + $0x6e0] sm:$0xff]
  %v1466 = vld [vmem:[%s5 + $0x6e8] sm:$0xff]
  %v1467 = vld [vmem:[%s5 + $0x6f0] sm:$0xff]
  %v1468 = vld [vmem:[%s5 + $0x6f8] sm:$0xff]
  %v1469 = vld [vmem:[%s5 + $0x700] sm:$0xff]
  %v1470 = vld [vmem:[%s5 + $0x708] sm:$0xff]
  %v1471 = vld [vmem:[%s5 + $0x710] sm:$0xff]
  %v1472 = vld [vmem:[%s5 + $0x718] sm:$0xff]
  %v1473 = vld [vmem:[%s5 + $0x720] sm:$0xff]
  %v1474 = vld [vmem:[%s5 + $0x728] sm:$0xff]
  %v1475 = vld [vmem:[%s5 + $0x730] sm:$0xff]
  %v1476 = vld [vmem:[%s5 + $0x738] sm:$0xff]
  %v1477 = vld [vmem:[%s5 + $0x740] sm:$0xff]
  %v1478 = vld [vmem:[%s5 + $0x748] sm:$0xff]
  %v1479 = vld [vmem:[%s5 + $0x750] sm:$0xff]
  %v1480 = vld [vmem:[%s5 + $0x758] sm:$0xff]
  %v1481 = vld [vmem:[%s5 + $0x760] sm:$0xff]
  %v1482 = vld [vmem:[%s5 + $0x768] sm:$0xff]
  %v1483 = vld [vmem:[%s5 + $0x770] sm:$0xff]
  %v1484 = vld [vmem:[%s5 + $0x778] sm:$0xff]
  %v1485 = vld [vmem:[%s5 + $0x780] sm:$0xff]
  %v1486 = vld [vmem:[%s5 + $0x788] sm:$0xff]
  %v1487 = vld [vmem:[%s5 + $0x790] sm:$0xff]
  %v1488 = vld [vmem:[%s5 + $0x798] sm:$0xff]
  %v1489 = vld [vmem:[%s5 + $0x7a0] sm:$0xff]
  %v1490 = vld [vmem:[%s5 + $0x7a8] sm:$0xff]
  %v1491 = vld [vmem:[%s5 + $0x7b0] sm:$0xff]
  %v1492 = vld [vmem:[%s5 + $0x7b8] sm:$0xff]
  %v1493 = vld [vmem:[%s5 + $0x7c0] sm:$0xff]
  %v1494 = vld [vmem:[%s5 + $0x7c8] sm:$0xff]
  %v1495 = vld [vmem:[%s5 + $0x7d0] sm:$0xff]
  %v1496 = vld [vmem:[%s5 + $0x7d8] sm:$0xff]
  %v1497 = vld [vmem:[%s5 + $0x7e0] sm:$0xff]
  %v1498 = vld [vmem:[%s5 + $0x7e8] sm:$0xff]
  %v1499 = vld [vmem:[%s5 + $0x7f0] sm:$0xff]
  %v1500 = vld [vmem:[%s5 + $0x7f8] sm:$0xff]
  %v1501 = vld [vmem:[%s6] sm:$0xff]
  %v1503 = vlaneseq
  %v1504 = vshrl.u32 %v1503, 7
  %v1505 = vsub.s32 0, %v1504
  %v1506 = vrot.slane %v1501, %v1505
  %v1507 = vlaneseq
  %v1508 = vshrl.u32 %v1507, 7
  %v1509 = vsub.s32 1, %v1508
  %v1510 = vrot.slane %v1501, %v1509
  %v1511 = vlaneseq
  %v1512 = vshrl.u32 %v1511, 7
  %v1513 = vsub.s32 2, %v1512
  %v1514 = vrot.slane %v1501, %v1513
  %v1515 = vlaneseq
  %v1516 = vshrl.u32 %v1515, 7
  %v1517 = vsub.s32 3, %v1516
  %v1518 = vrot.slane %v1501, %v1517
  %v1519 = vlaneseq
  %v1520 = vshrl.u32 %v1519, 7
  %v1521 = vsub.s32 4, %v1520
  %v1522 = vrot.slane %v1501, %v1521
  %v1523 = vlaneseq
  %v1524 = vshrl.u32 %v1523, 7
  %v1525 = vsub.s32 5, %v1524
  %v1526 = vrot.slane %v1501, %v1525
  %v1527 = vlaneseq
  %v1528 = vshrl.u32 %v1527, 7
  %v1529 = vsub.s32 6, %v1528
  %v1530 = vrot.slane %v1501, %v1529
  %v1531 = vlaneseq
  %v1532 = vshrl.u32 %v1531, 7
  %v1533 = vsub.s32 7, %v1532
  %v1534 = vrot.slane %v1501, %v1533
  %v1799 = vunpack.c.l.b16 %v1245
  %v1800 = vunpack.c.h.b16 %v1245
  %v1801 = vunpack.c.l.b16 %v1246
  %v1802 = vunpack.c.h.b16 %v1246
  %v1803 = vunpack.c.l.b16 %v1247
  %v1804 = vunpack.c.h.b16 %v1247
  %v1805 = vunpack.c.l.b16 %v1248
  %v1806 = vunpack.c.h.b16 %v1248
  %v1807 = vunpack.c.l.b16 %v1249
  %v1808 = vunpack.c.h.b16 %v1249
  %v1809 = vunpack.c.l.b16 %v1250
  %v1810 = vunpack.c.h.b16 %v1250
  %v1811 = vunpack.c.l.b16 %v1251
  %v1812 = vunpack.c.h.b16 %v1251
  %v1813 = vunpack.c.l.b16 %v1252
  %v1814 = vunpack.c.h.b16 %v1252
  %v1815 = vunpack.c.l.b16 %v1253
  %v1816 = vunpack.c.h.b16 %v1253
  %v1817 = vunpack.c.l.b16 %v1254
  %v1818 = vunpack.c.h.b16 %v1254
  %v1819 = vunpack.c.l.b16 %v1255
  %v1820 = vunpack.c.h.b16 %v1255
  %v1821 = vunpack.c.l.b16 %v1256
  %v1822 = vunpack.c.h.b16 %v1256
  %v1823 = vunpack.c.l.b16 %v1257
  %v1824 = vunpack.c.h.b16 %v1257
  %v1825 = vunpack.c.l.b16 %v1258
  %v1826 = vunpack.c.h.b16 %v1258
  %v1827 = vunpack.c.l.b16 %v1259
  %v1828 = vunpack.c.h.b16 %v1259
  %v1829 = vunpack.c.l.b16 %v1260
  %v1830 = vunpack.c.h.b16 %v1260
  %v1831 = vunpack.c.l.b16 %v1261
  %v1832 = vunpack.c.h.b16 %v1261
  %v1833 = vunpack.c.l.b16 %v1262
  %v1834 = vunpack.c.h.b16 %v1262
  %v1835 = vunpack.c.l.b16 %v1263
  %v1836 = vunpack.c.h.b16 %v1263
  %v1837 = vunpack.c.l.b16 %v1264
  %v1838 = vunpack.c.h.b16 %v1264
  %v1839 = vunpack.c.l.b16 %v1265
  %v1840 = vunpack.c.h.b16 %v1265
  %v1841 = vunpack.c.l.b16 %v1266
  %v1842 = vunpack.c.h.b16 %v1266
  %v1843 = vunpack.c.l.b16 %v1267
  %v1844 = vunpack.c.h.b16 %v1267
  %v1845 = vunpack.c.l.b16 %v1268
  %v1846 = vunpack.c.h.b16 %v1268
  %v1847 = vunpack.c.l.b16 %v1269
  %v1848 = vunpack.c.h.b16 %v1269
  %v1849 = vunpack.c.l.b16 %v1270
  %v1850 = vunpack.c.h.b16 %v1270
  %v1851 = vunpack.c.l.b16 %v1271
  %v1852 = vunpack.c.h.b16 %v1271
  %v1853 = vunpack.c.l.b16 %v1272
  %v1854 = vunpack.c.h.b16 %v1272
  %v1855 = vunpack.c.l.b16 %v1273
  %v1856 = vunpack.c.h.b16 %v1273
  %v1857 = vunpack.c.l.b16 %v1274
  %v1858 = vunpack.c.h.b16 %v1274
  %v1859 = vunpack.c.l.b16 %v1275
  %v1860 = vunpack.c.h.b16 %v1275
  %v1861 = vunpack.c.l.b16 %v1276
  %v1862 = vunpack.c.h.b16 %v1276
  %v1863 = vunpack.c.l.b16 %v1277
  %v1864 = vunpack.c.h.b16 %v1277
  %v1865 = vunpack.c.l.b16 %v1278
  %v1866 = vunpack.c.h.b16 %v1278
  %v1867 = vunpack.c.l.b16 %v1279
  %v1868 = vunpack.c.h.b16 %v1279
  %v1869 = vunpack.c.l.b16 %v1280
  %v1870 = vunpack.c.h.b16 %v1280
  %v1871 = vunpack.c.l.b16 %v1281
  %v1872 = vunpack.c.h.b16 %v1281
  %v1873 = vunpack.c.l.b16 %v1282
  %v1874 = vunpack.c.h.b16 %v1282
  %v1875 = vunpack.c.l.b16 %v1283
  %v1876 = vunpack.c.h.b16 %v1283
  %v1877 = vunpack.c.l.b16 %v1284
  %v1878 = vunpack.c.h.b16 %v1284
  %v1879 = vunpack.c.l.b16 %v1285
  %v1880 = vunpack.c.h.b16 %v1285
  %v1881 = vunpack.c.l.b16 %v1286
  %v1882 = vunpack.c.h.b16 %v1286
  %v1883 = vunpack.c.l.b16 %v1287
  %v1884 = vunpack.c.h.b16 %v1287
  %v1885 = vunpack.c.l.b16 %v1288
  %v1886 = vunpack.c.h.b16 %v1288
  %v1887 = vunpack.c.l.b16 %v1289
  %v1888 = vunpack.c.h.b16 %v1289
  %v1889 = vunpack.c.l.b16 %v1290
  %v1890 = vunpack.c.h.b16 %v1290
  %v1891 = vunpack.c.l.b16 %v1291
  %v1892 = vunpack.c.h.b16 %v1291
  %v1893 = vunpack.c.l.b16 %v1292
  %v1894 = vunpack.c.h.b16 %v1292
  %v1895 = vunpack.c.l.b16 %v1293
  %v1896 = vunpack.c.h.b16 %v1293
  %v1897 = vunpack.c.l.b16 %v1294
  %v1898 = vunpack.c.h.b16 %v1294
  %v1899 = vunpack.c.l.b16 %v1295
  %v1900 = vunpack.c.h.b16 %v1295
  %v1901 = vunpack.c.l.b16 %v1296
  %v1902 = vunpack.c.h.b16 %v1296
  %v1903 = vunpack.c.l.b16 %v1297
  %v1904 = vunpack.c.h.b16 %v1297
  %v1905 = vunpack.c.l.b16 %v1298
  %v1906 = vunpack.c.h.b16 %v1298
  %v1907 = vunpack.c.l.b16 %v1299
  %v1908 = vunpack.c.h.b16 %v1299
  %v1909 = vunpack.c.l.b16 %v1300
  %v1910 = vunpack.c.h.b16 %v1300
  %v1911 = vunpack.c.l.b16 %v1301
  %v1912 = vunpack.c.h.b16 %v1301
  %v1913 = vunpack.c.l.b16 %v1302
  %v1914 = vunpack.c.h.b16 %v1302
  %v1915 = vunpack.c.l.b16 %v1303
  %v1916 = vunpack.c.h.b16 %v1303
  %v1917 = vunpack.c.l.b16 %v1304
  %v1918 = vunpack.c.h.b16 %v1304
  %v1919 = vunpack.c.l.b16 %v1305
  %v1920 = vunpack.c.h.b16 %v1305
  %v1921 = vunpack.c.l.b16 %v1306
  %v1922 = vunpack.c.h.b16 %v1306
  %v1923 = vunpack.c.l.b16 %v1307
  %v1924 = vunpack.c.h.b16 %v1307
  %v1925 = vunpack.c.l.b16 %v1308
  %v1926 = vunpack.c.h.b16 %v1308
  %v1927 = vunpack.c.l.b16 %v1309
  %v1928 = vunpack.c.h.b16 %v1309
  %v1929 = vunpack.c.l.b16 %v1310
  %v1930 = vunpack.c.h.b16 %v1310
  %v1931 = vunpack.c.l.b16 %v1311
  %v1932 = vunpack.c.h.b16 %v1311
  %v1933 = vunpack.c.l.b16 %v1312
  %v1934 = vunpack.c.h.b16 %v1312
  %v1935 = vunpack.c.l.b16 %v1313
  %v1936 = vunpack.c.h.b16 %v1313
  %v1937 = vunpack.c.l.b16 %v1314
  %v1938 = vunpack.c.h.b16 %v1314
  %v1939 = vunpack.c.l.b16 %v1315
  %v1940 = vunpack.c.h.b16 %v1315
  %v1941 = vunpack.c.l.b16 %v1316
  %v1942 = vunpack.c.h.b16 %v1316
  %v1943 = vunpack.c.l.b16 %v1317
  %v1944 = vunpack.c.h.b16 %v1317
  %v1945 = vunpack.c.l.b16 %v1318
  %v1946 = vunpack.c.h.b16 %v1318
  %v1947 = vunpack.c.l.b16 %v1319
  %v1948 = vunpack.c.h.b16 %v1319
  %v1949 = vunpack.c.l.b16 %v1320
  %v1950 = vunpack.c.h.b16 %v1320
  %v1951 = vunpack.c.l.b16 %v1321
  %v1952 = vunpack.c.h.b16 %v1321
  %v1953 = vunpack.c.l.b16 %v1322
  %v1954 = vunpack.c.h.b16 %v1322
  %v1955 = vunpack.c.l.b16 %v1323
  %v1956 = vunpack.c.h.b16 %v1323
  %v1957 = vunpack.c.l.b16 %v1324
  %v1958 = vunpack.c.h.b16 %v1324
  %v1959 = vunpack.c.l.b16 %v1325
  %v1960 = vunpack.c.h.b16 %v1325
  %v1961 = vunpack.c.l.b16 %v1326
  %v1962 = vunpack.c.h.b16 %v1326
  %v1963 = vunpack.c.l.b16 %v1327
  %v1964 = vunpack.c.h.b16 %v1327
  %v1965 = vunpack.c.l.b16 %v1328
  %v1966 = vunpack.c.h.b16 %v1328
  %v1967 = vunpack.c.l.b16 %v1329
  %v1968 = vunpack.c.h.b16 %v1329
  %v1969 = vunpack.c.l.b16 %v1330
  %v1970 = vunpack.c.h.b16 %v1330
  %v1971 = vunpack.c.l.b16 %v1331
  %v1972 = vunpack.c.h.b16 %v1331
  %v1973 = vunpack.c.l.b16 %v1332
  %v1974 = vunpack.c.h.b16 %v1332
  %v1975 = vunpack.c.l.b16 %v1333
  %v1976 = vunpack.c.h.b16 %v1333
  %v1977 = vunpack.c.l.b16 %v1334
  %v1978 = vunpack.c.h.b16 %v1334
  %v1979 = vunpack.c.l.b16 %v1335
  %v1980 = vunpack.c.h.b16 %v1335
  %v1981 = vunpack.c.l.b16 %v1336
  %v1982 = vunpack.c.h.b16 %v1336
  %v1983 = vunpack.c.l.b16 %v1337
  %v1984 = vunpack.c.h.b16 %v1337
  %v1985 = vunpack.c.l.b16 %v1338
  %v1986 = vunpack.c.h.b16 %v1338
  %v1987 = vunpack.c.l.b16 %v1339
  %v1988 = vunpack.c.h.b16 %v1339
  %v1989 = vunpack.c.l.b16 %v1340
  %v1990 = vunpack.c.h.b16 %v1340
  %v1991 = vunpack.c.l.b16 %v1341
  %v1992 = vunpack.c.h.b16 %v1341
  %v1993 = vunpack.c.l.b16 %v1342
  %v1994 = vunpack.c.h.b16 %v1342
  %v1995 = vunpack.c.l.b16 %v1343
  %v1996 = vunpack.c.h.b16 %v1343
  %v1997 = vunpack.c.l.b16 %v1344
  %v1998 = vunpack.c.h.b16 %v1344
  %v1999 = vunpack.c.l.b16 %v1345
  %v2000 = vunpack.c.h.b16 %v1345
  %v2001 = vunpack.c.l.b16 %v1346
  %v2002 = vunpack.c.h.b16 %v1346
  %v2003 = vunpack.c.l.b16 %v1347
  %v2004 = vunpack.c.h.b16 %v1347
  %v2005 = vunpack.c.l.b16 %v1348
  %v2006 = vunpack.c.h.b16 %v1348
  %v2007 = vunpack.c.l.b16 %v1349
  %v2008 = vunpack.c.h.b16 %v1349
  %v2009 = vunpack.c.l.b16 %v1350
  %v2010 = vunpack.c.h.b16 %v1350
  %v2011 = vunpack.c.l.b16 %v1351
  %v2012 = vunpack.c.h.b16 %v1351
  %v2013 = vunpack.c.l.b16 %v1352
  %v2014 = vunpack.c.h.b16 %v1352
  %v2015 = vunpack.c.l.b16 %v1353
  %v2016 = vunpack.c.h.b16 %v1353
  %v2017 = vunpack.c.l.b16 %v1354
  %v2018 = vunpack.c.h.b16 %v1354
  %v2019 = vunpack.c.l.b16 %v1355
  %v2020 = vunpack.c.h.b16 %v1355
  %v2021 = vunpack.c.l.b16 %v1356
  %v2022 = vunpack.c.h.b16 %v1356
  %v2023 = vunpack.c.l.b16 %v1357
  %v2024 = vunpack.c.h.b16 %v1357
  %v2025 = vunpack.c.l.b16 %v1358
  %v2026 = vunpack.c.h.b16 %v1358
  %v2027 = vunpack.c.l.b16 %v1359
  %v2028 = vunpack.c.h.b16 %v1359
  %v2029 = vunpack.c.l.b16 %v1360
  %v2030 = vunpack.c.h.b16 %v1360
  %v2031 = vunpack.c.l.b16 %v1361
  %v2032 = vunpack.c.h.b16 %v1361
  %v2033 = vunpack.c.l.b16 %v1362
  %v2034 = vunpack.c.h.b16 %v1362
  %v2035 = vunpack.c.l.b16 %v1363
  %v2036 = vunpack.c.h.b16 %v1363
  %v2037 = vunpack.c.l.b16 %v1364
  %v2038 = vunpack.c.h.b16 %v1364
  %v2039 = vunpack.c.l.b16 %v1365
  %v2040 = vunpack.c.h.b16 %v1365
  %v2041 = vunpack.c.l.b16 %v1366
  %v2042 = vunpack.c.h.b16 %v1366
  %v2043 = vunpack.c.l.b16 %v1367
  %v2044 = vunpack.c.h.b16 %v1367
  %v2045 = vunpack.c.l.b16 %v1368
  %v2046 = vunpack.c.h.b16 %v1368
  %v2047 = vunpack.c.l.b16 %v1369
  %v2048 = vunpack.c.h.b16 %v1369
  %v2049 = vunpack.c.l.b16 %v1370
  %v2050 = vunpack.c.h.b16 %v1370
  %v2051 = vunpack.c.l.b16 %v1371
  %v2052 = vunpack.c.h.b16 %v1371
  %v2053 = vunpack.c.l.b16 %v1372
  %v2054 = vunpack.c.h.b16 %v1372
  %v2055 = vunpack.c.l.b16 %v1373
  %v2056 = vunpack.c.h.b16 %v1373
  %v2057 = vunpack.c.l.b16 %v1374
  %v2058 = vunpack.c.h.b16 %v1374
  %v2059 = vunpack.c.l.b16 %v1375
  %v2060 = vunpack.c.h.b16 %v1375
  %v2061 = vunpack.c.l.b16 %v1376
  %v2062 = vunpack.c.h.b16 %v1376
  %v2063 = vunpack.c.l.b16 %v1377
  %v2064 = vunpack.c.h.b16 %v1377
  %v2065 = vunpack.c.l.b16 %v1378
  %v2066 = vunpack.c.h.b16 %v1378
  %v2067 = vunpack.c.l.b16 %v1379
  %v2068 = vunpack.c.h.b16 %v1379
  %v2069 = vunpack.c.l.b16 %v1380
  %v2070 = vunpack.c.h.b16 %v1380
  %v2071 = vunpack.c.l.b16 %v1381
  %v2072 = vunpack.c.h.b16 %v1381
  %v2073 = vunpack.c.l.b16 %v1382
  %v2074 = vunpack.c.h.b16 %v1382
  %v2075 = vunpack.c.l.b16 %v1383
  %v2076 = vunpack.c.h.b16 %v1383
  %v2077 = vunpack.c.l.b16 %v1384
  %v2078 = vunpack.c.h.b16 %v1384
  %v2079 = vunpack.c.l.b16 %v1385
  %v2080 = vunpack.c.h.b16 %v1385
  %v2081 = vunpack.c.l.b16 %v1386
  %v2082 = vunpack.c.h.b16 %v1386
  %v2083 = vunpack.c.l.b16 %v1387
  %v2084 = vunpack.c.h.b16 %v1387
  %v2085 = vunpack.c.l.b16 %v1388
  %v2086 = vunpack.c.h.b16 %v1388
  %v2087 = vunpack.c.l.b16 %v1389
  %v2088 = vunpack.c.h.b16 %v1389
  %v2089 = vunpack.c.l.b16 %v1390
  %v2090 = vunpack.c.h.b16 %v1390
  %v2091 = vunpack.c.l.b16 %v1391
  %v2092 = vunpack.c.h.b16 %v1391
  %v2093 = vunpack.c.l.b16 %v1392
  %v2094 = vunpack.c.h.b16 %v1392
  %v2095 = vunpack.c.l.b16 %v1393
  %v2096 = vunpack.c.h.b16 %v1393
  %v2097 = vunpack.c.l.b16 %v1394
  %v2098 = vunpack.c.h.b16 %v1394
  %v2099 = vunpack.c.l.b16 %v1395
  %v2100 = vunpack.c.h.b16 %v1395
  %v2101 = vunpack.c.l.b16 %v1396
  %v2102 = vunpack.c.h.b16 %v1396
  %v2103 = vunpack.c.l.b16 %v1397
  %v2104 = vunpack.c.h.b16 %v1397
  %v2105 = vunpack.c.l.b16 %v1398
  %v2106 = vunpack.c.h.b16 %v1398
  %v2107 = vunpack.c.l.b16 %v1399
  %v2108 = vunpack.c.h.b16 %v1399
  %v2109 = vunpack.c.l.b16 %v1400
  %v2110 = vunpack.c.h.b16 %v1400
  %v2111 = vunpack.c.l.b16 %v1401
  %v2112 = vunpack.c.h.b16 %v1401
  %v2113 = vunpack.c.l.b16 %v1402
  %v2114 = vunpack.c.h.b16 %v1402
  %v2115 = vunpack.c.l.b16 %v1403
  %v2116 = vunpack.c.h.b16 %v1403
  %v2117 = vunpack.c.l.b16 %v1404
  %v2118 = vunpack.c.h.b16 %v1404
  %v2119 = vunpack.c.l.b16 %v1405
  %v2120 = vunpack.c.h.b16 %v1405
  %v2121 = vunpack.c.l.b16 %v1406
  %v2122 = vunpack.c.h.b16 %v1406
  %v2123 = vunpack.c.l.b16 %v1407
  %v2124 = vunpack.c.h.b16 %v1407
  %v2125 = vunpack.c.l.b16 %v1408
  %v2126 = vunpack.c.h.b16 %v1408
  %v2127 = vunpack.c.l.b16 %v1409
  %v2128 = vunpack.c.h.b16 %v1409
  %v2129 = vunpack.c.l.b16 %v1410
  %v2130 = vunpack.c.h.b16 %v1410
  %v2131 = vunpack.c.l.b16 %v1411
  %v2132 = vunpack.c.h.b16 %v1411
  %v2133 = vunpack.c.l.b16 %v1412
  %v2134 = vunpack.c.h.b16 %v1412
  %v2135 = vunpack.c.l.b16 %v1413
  %v2136 = vunpack.c.h.b16 %v1413
  %v2137 = vunpack.c.l.b16 %v1414
  %v2138 = vunpack.c.h.b16 %v1414
  %v2139 = vunpack.c.l.b16 %v1415
  %v2140 = vunpack.c.h.b16 %v1415
  %v2141 = vunpack.c.l.b16 %v1416
  %v2142 = vunpack.c.h.b16 %v1416
  %v2143 = vunpack.c.l.b16 %v1417
  %v2144 = vunpack.c.h.b16 %v1417
  %v2145 = vunpack.c.l.b16 %v1418
  %v2146 = vunpack.c.h.b16 %v1418
  %v2147 = vunpack.c.l.b16 %v1419
  %v2148 = vunpack.c.h.b16 %v1419
  %v2149 = vunpack.c.l.b16 %v1420
  %v2150 = vunpack.c.h.b16 %v1420
  %v2151 = vunpack.c.l.b16 %v1421
  %v2152 = vunpack.c.h.b16 %v1421
  %v2153 = vunpack.c.l.b16 %v1422
  %v2154 = vunpack.c.h.b16 %v1422
  %v2155 = vunpack.c.l.b16 %v1423
  %v2156 = vunpack.c.h.b16 %v1423
  %v2157 = vunpack.c.l.b16 %v1424
  %v2158 = vunpack.c.h.b16 %v1424
  %v2159 = vunpack.c.l.b16 %v1425
  %v2160 = vunpack.c.h.b16 %v1425
  %v2161 = vunpack.c.l.b16 %v1426
  %v2162 = vunpack.c.h.b16 %v1426
  %v2163 = vunpack.c.l.b16 %v1427
  %v2164 = vunpack.c.h.b16 %v1427
  %v2165 = vunpack.c.l.b16 %v1428
  %v2166 = vunpack.c.h.b16 %v1428
  %v2167 = vunpack.c.l.b16 %v1429
  %v2168 = vunpack.c.h.b16 %v1429
  %v2169 = vunpack.c.l.b16 %v1430
  %v2170 = vunpack.c.h.b16 %v1430
  %v2171 = vunpack.c.l.b16 %v1431
  %v2172 = vunpack.c.h.b16 %v1431
  %v2173 = vunpack.c.l.b16 %v1432
  %v2174 = vunpack.c.h.b16 %v1432
  %v2175 = vunpack.c.l.b16 %v1433
  %v2176 = vunpack.c.h.b16 %v1433
  %v2177 = vunpack.c.l.b16 %v1434
  %v2178 = vunpack.c.h.b16 %v1434
  %v2179 = vunpack.c.l.b16 %v1435
  %v2180 = vunpack.c.h.b16 %v1435
  %v2181 = vunpack.c.l.b16 %v1436
  %v2182 = vunpack.c.h.b16 %v1436
  %v2183 = vunpack.c.l.b16 %v1437
  %v2184 = vunpack.c.h.b16 %v1437
  %v2185 = vunpack.c.l.b16 %v1438
  %v2186 = vunpack.c.h.b16 %v1438
  %v2187 = vunpack.c.l.b16 %v1439
  %v2188 = vunpack.c.h.b16 %v1439
  %v2189 = vunpack.c.l.b16 %v1440
  %v2190 = vunpack.c.h.b16 %v1440
  %v2191 = vunpack.c.l.b16 %v1441
  %v2192 = vunpack.c.h.b16 %v1441
  %v2193 = vunpack.c.l.b16 %v1442
  %v2194 = vunpack.c.h.b16 %v1442
  %v2195 = vunpack.c.l.b16 %v1443
  %v2196 = vunpack.c.h.b16 %v1443
  %v2197 = vunpack.c.l.b16 %v1444
  %v2198 = vunpack.c.h.b16 %v1444
  %v2199 = vunpack.c.l.b16 %v1445
  %v2200 = vunpack.c.h.b16 %v1445
  %v2201 = vunpack.c.l.b16 %v1446
  %v2202 = vunpack.c.h.b16 %v1446
  %v2203 = vunpack.c.l.b16 %v1447
  %v2204 = vunpack.c.h.b16 %v1447
  %v2205 = vunpack.c.l.b16 %v1448
  %v2206 = vunpack.c.h.b16 %v1448
  %v2207 = vunpack.c.l.b16 %v1449
  %v2208 = vunpack.c.h.b16 %v1449
  %v2209 = vunpack.c.l.b16 %v1450
  %v2210 = vunpack.c.h.b16 %v1450
  %v2211 = vunpack.c.l.b16 %v1451
  %v2212 = vunpack.c.h.b16 %v1451
  %v2213 = vunpack.c.l.b16 %v1452
  %v2214 = vunpack.c.h.b16 %v1452
  %v2215 = vunpack.c.l.b16 %v1453
  %v2216 = vunpack.c.h.b16 %v1453
  %v2217 = vunpack.c.l.b16 %v1454
  %v2218 = vunpack.c.h.b16 %v1454
  %v2219 = vunpack.c.l.b16 %v1455
  %v2220 = vunpack.c.h.b16 %v1455
  %v2221 = vunpack.c.l.b16 %v1456
  %v2222 = vunpack.c.h.b16 %v1456
  %v2223 = vunpack.c.l.b16 %v1457
  %v2224 = vunpack.c.h.b16 %v1457
  %v2225 = vunpack.c.l.b16 %v1458
  %v2226 = vunpack.c.h.b16 %v1458
  %v2227 = vunpack.c.l.b16 %v1459
  %v2228 = vunpack.c.h.b16 %v1459
  %v2229 = vunpack.c.l.b16 %v1460
  %v2230 = vunpack.c.h.b16 %v1460
  %v2231 = vunpack.c.l.b16 %v1461
  %v2232 = vunpack.c.h.b16 %v1461
  %v2233 = vunpack.c.l.b16 %v1462
  %v2234 = vunpack.c.h.b16 %v1462
  %v2235 = vunpack.c.l.b16 %v1463
  %v2236 = vunpack.c.h.b16 %v1463
  %v2237 = vunpack.c.l.b16 %v1464
  %v2238 = vunpack.c.h.b16 %v1464
  %v2239 = vunpack.c.l.b16 %v1465
  %v2240 = vunpack.c.h.b16 %v1465
  %v2241 = vunpack.c.l.b16 %v1466
  %v2242 = vunpack.c.h.b16 %v1466
  %v2243 = vunpack.c.l.b16 %v1467
  %v2244 = vunpack.c.h.b16 %v1467
  %v2245 = vunpack.c.l.b16 %v1468
  %v2246 = vunpack.c.h.b16 %v1468
  %v2247 = vunpack.c.l.b16 %v1469
  %v2248 = vunpack.c.h.b16 %v1469
  %v2249 = vunpack.c.l.b16 %v1470
  %v2250 = vunpack.c.h.b16 %v1470
  %v2251 = vunpack.c.l.b16 %v1471
  %v2252 = vunpack.c.h.b16 %v1471
  %v2253 = vunpack.c.l.b16 %v1472
  %v2254 = vunpack.c.h.b16 %v1472
  %v2255 = vunpack.c.l.b16 %v1473
  %v2256 = vunpack.c.h.b16 %v1473
  %v2257 = vunpack.c.l.b16 %v1474
  %v2258 = vunpack.c.h.b16 %v1474
  %v2259 = vunpack.c.l.b16 %v1475
  %v2260 = vunpack.c.h.b16 %v1475
  %v2261 = vunpack.c.l.b16 %v1476
  %v2262 = vunpack.c.h.b16 %v1476
  %v2263 = vunpack.c.l.b16 %v1477
  %v2264 = vunpack.c.h.b16 %v1477
  %v2265 = vunpack.c.l.b16 %v1478
  %v2266 = vunpack.c.h.b16 %v1478
  %v2267 = vunpack.c.l.b16 %v1479
  %v2268 = vunpack.c.h.b16 %v1479
  %v2269 = vunpack.c.l.b16 %v1480
  %v2270 = vunpack.c.h.b16 %v1480
  %v2271 = vunpack.c.l.b16 %v1481
  %v2272 = vunpack.c.h.b16 %v1481
  %v2273 = vunpack.c.l.b16 %v1482
  %v2274 = vunpack.c.h.b16 %v1482
  %v2275 = vunpack.c.l.b16 %v1483
  %v2276 = vunpack.c.h.b16 %v1483
  %v2277 = vunpack.c.l.b16 %v1484
  %v2278 = vunpack.c.h.b16 %v1484
  %v2279 = vunpack.c.l.b16 %v1485
  %v2280 = vunpack.c.h.b16 %v1485
  %v2281 = vunpack.c.l.b16 %v1486
  %v2282 = vunpack.c.h.b16 %v1486
  %v2283 = vunpack.c.l.b16 %v1487
  %v2284 = vunpack.c.h.b16 %v1487
  %v2285 = vunpack.c.l.b16 %v1488
  %v2286 = vunpack.c.h.b16 %v1488
  %v2287 = vunpack.c.l.b16 %v1489
  %v2288 = vunpack.c.h.b16 %v1489
  %v2289 = vunpack.c.l.b16 %v1490
  %v2290 = vunpack.c.h.b16 %v1490
  %v2291 = vunpack.c.l.b16 %v1491
  %v2292 = vunpack.c.h.b16 %v1491
  %v2293 = vunpack.c.l.b16 %v1492
  %v2294 = vunpack.c.h.b16 %v1492
  %v2295 = vunpack.c.l.b16 %v1493
  %v2296 = vunpack.c.h.b16 %v1493
  %v2297 = vunpack.c.l.b16 %v1494
  %v2298 = vunpack.c.h.b16 %v1494
  %v2299 = vunpack.c.l.b16 %v1495
  %v2300 = vunpack.c.h.b16 %v1495
  %v2301 = vunpack.c.l.b16 %v1496
  %v2302 = vunpack.c.h.b16 %v1496
  %v2303 = vunpack.c.l.b16 %v1497
  %v2304 = vunpack.c.h.b16 %v1497
  %v2305 = vunpack.c.l.b16 %v1498
  %v2306 = vunpack.c.h.b16 %v1498
  %v2307 = vunpack.c.l.b16 %v1499
  %v2308 = vunpack.c.h.b16 %v1499
  %v2309 = vunpack.c.l.b16 %v1500
  %v2310 = vunpack.c.h.b16 %v1500
  %v2311 = vpack.c.b16 %v1807, %v1799
  %v2312 = vpack.c.b16 %v1808, %v1800
  %v2313 = vpack.c.b16 %v1809, %v1801
  %v2314 = vpack.c.b16 %v1810, %v1802
  %v2315 = vpack.c.b16 %v1811, %v1803
  %v2316 = vpack.c.b16 %v1812, %v1804
  %v2317 = vpack.c.b16 %v1813, %v1805
  %v2318 = vpack.c.b16 %v1814, %v1806
  %v2319 = vpack.c.b16 %v1823, %v1815
  %v2320 = vpack.c.b16 %v1824, %v1816
  %v2321 = vpack.c.b16 %v1825, %v1817
  %v2322 = vpack.c.b16 %v1826, %v1818
  %v2323 = vpack.c.b16 %v1827, %v1819
  %v2324 = vpack.c.b16 %v1828, %v1820
  %v2325 = vpack.c.b16 %v1829, %v1821
  %v2326 = vpack.c.b16 %v1830, %v1822
  %v2327 = vpack.c.b16 %v1839, %v1831
  %v2328 = vpack.c.b16 %v1840, %v1832
  %v2329 = vpack.c.b16 %v1841, %v1833
  %v2330 = vpack.c.b16 %v1842, %v1834
  %v2331 = vpack.c.b16 %v1843, %v1835
  %v2332 = vpack.c.b16 %v1844, %v1836
  %v2333 = vpack.c.b16 %v1845, %v1837
  %v2334 = vpack.c.b16 %v1846, %v1838
  %v2335 = vpack.c.b16 %v1855, %v1847
  %v2336 = vpack.c.b16 %v1856, %v1848
  %v2337 = vpack.c.b16 %v1857, %v1849
  %v2338 = vpack.c.b16 %v1858, %v1850
  %v2339 = vpack.c.b16 %v1859, %v1851
  %v2340 = vpack.c.b16 %v1860, %v1852
  %v2341 = vpack.c.b16 %v1861, %v1853
  %v2342 = vpack.c.b16 %v1862, %v1854
  %v2343 = vpack.c.b16 %v1871, %v1863
  %v2344 = vpack.c.b16 %v1872, %v1864
  %v2345 = vpack.c.b16 %v1873, %v1865
  %v2346 = vpack.c.b16 %v1874, %v1866
  %v2347 = vpack.c.b16 %v1875, %v1867
  %v2348 = vpack.c.b16 %v1876, %v1868
  %v2349 = vpack.c.b16 %v1877, %v1869
  %v2350 = vpack.c.b16 %v1878, %v1870
  %v2351 = vpack.c.b16 %v1887, %v1879
  %v2352 = vpack.c.b16 %v1888, %v1880
  %v2353 = vpack.c.b16 %v1889, %v1881
  %v2354 = vpack.c.b16 %v1890, %v1882
  %v2355 = vpack.c.b16 %v1891, %v1883
  %v2356 = vpack.c.b16 %v1892, %v1884
  %v2357 = vpack.c.b16 %v1893, %v1885
  %v2358 = vpack.c.b16 %v1894, %v1886
  %v2359 = vpack.c.b16 %v1903, %v1895
  %v2360 = vpack.c.b16 %v1904, %v1896
  %v2361 = vpack.c.b16 %v1905, %v1897
  %v2362 = vpack.c.b16 %v1906, %v1898
  %v2363 = vpack.c.b16 %v1907, %v1899
  %v2364 = vpack.c.b16 %v1908, %v1900
  %v2365 = vpack.c.b16 %v1909, %v1901
  %v2366 = vpack.c.b16 %v1910, %v1902
  %v2367 = vpack.c.b16 %v1919, %v1911
  %v2368 = vpack.c.b16 %v1920, %v1912
  %v2369 = vpack.c.b16 %v1921, %v1913
  %v2370 = vpack.c.b16 %v1922, %v1914
  %v2371 = vpack.c.b16 %v1923, %v1915
  %v2372 = vpack.c.b16 %v1924, %v1916
  %v2373 = vpack.c.b16 %v1925, %v1917
  %v2374 = vpack.c.b16 %v1926, %v1918
  %v2375 = vpack.c.b16 %v1935, %v1927
  %v2376 = vpack.c.b16 %v1936, %v1928
  %v2377 = vpack.c.b16 %v1937, %v1929
  %v2378 = vpack.c.b16 %v1938, %v1930
  %v2379 = vpack.c.b16 %v1939, %v1931
  %v2380 = vpack.c.b16 %v1940, %v1932
  %v2381 = vpack.c.b16 %v1941, %v1933
  %v2382 = vpack.c.b16 %v1942, %v1934
  %v2383 = vpack.c.b16 %v1951, %v1943
  %v2384 = vpack.c.b16 %v1952, %v1944
  %v2385 = vpack.c.b16 %v1953, %v1945
  %v2386 = vpack.c.b16 %v1954, %v1946
  %v2387 = vpack.c.b16 %v1955, %v1947
  %v2388 = vpack.c.b16 %v1956, %v1948
  %v2389 = vpack.c.b16 %v1957, %v1949
  %v2390 = vpack.c.b16 %v1958, %v1950
  %v2391 = vpack.c.b16 %v1967, %v1959
  %v2392 = vpack.c.b16 %v1968, %v1960
  %v2393 = vpack.c.b16 %v1969, %v1961
  %v2394 = vpack.c.b16 %v1970, %v1962
  %v2395 = vpack.c.b16 %v1971, %v1963
  %v2396 = vpack.c.b16 %v1972, %v1964
  %v2397 = vpack.c.b16 %v1973, %v1965
  %v2398 = vpack.c.b16 %v1974, %v1966
  %v2399 = vpack.c.b16 %v1983, %v1975
  %v2400 = vpack.c.b16 %v1984, %v1976
  %v2401 = vpack.c.b16 %v1985, %v1977
  %v2402 = vpack.c.b16 %v1986, %v1978
  %v2403 = vpack.c.b16 %v1987, %v1979
  %v2404 = vpack.c.b16 %v1988, %v1980
  %v2405 = vpack.c.b16 %v1989, %v1981
  %v2406 = vpack.c.b16 %v1990, %v1982
  %v2407 = vpack.c.b16 %v1999, %v1991
  %v2408 = vpack.c.b16 %v2000, %v1992
  %v2409 = vpack.c.b16 %v2001, %v1993
  %v2410 = vpack.c.b16 %v2002, %v1994
  %v2411 = vpack.c.b16 %v2003, %v1995
  %v2412 = vpack.c.b16 %v2004, %v1996
  %v2413 = vpack.c.b16 %v2005, %v1997
  %v2414 = vpack.c.b16 %v2006, %v1998
  %v2415 = vpack.c.b16 %v2015, %v2007
  %v2416 = vpack.c.b16 %v2016, %v2008
  %v2417 = vpack.c.b16 %v2017, %v2009
  %v2418 = vpack.c.b16 %v2018, %v2010
  %v2419 = vpack.c.b16 %v2019, %v2011
  %v2420 = vpack.c.b16 %v2020, %v2012
  %v2421 = vpack.c.b16 %v2021, %v2013
  %v2422 = vpack.c.b16 %v2022, %v2014
  %v2423 = vpack.c.b16 %v2031, %v2023
  %v2424 = vpack.c.b16 %v2032, %v2024
  %v2425 = vpack.c.b16 %v2033, %v2025
  %v2426 = vpack.c.b16 %v2034, %v2026
  %v2427 = vpack.c.b16 %v2035, %v2027
  %v2428 = vpack.c.b16 %v2036, %v2028
  %v2429 = vpack.c.b16 %v2037, %v2029
  %v2430 = vpack.c.b16 %v2038, %v2030
  %v2431 = vpack.c.b16 %v2047, %v2039
  %v2432 = vpack.c.b16 %v2048, %v2040
  %v2433 = vpack.c.b16 %v2049, %v2041
  %v2434 = vpack.c.b16 %v2050, %v2042
  %v2435 = vpack.c.b16 %v2051, %v2043
  %v2436 = vpack.c.b16 %v2052, %v2044
  %v2437 = vpack.c.b16 %v2053, %v2045
  %v2438 = vpack.c.b16 %v2054, %v2046
  %v2439 = vpack.c.b16 %v2063, %v2055
  %v2440 = vpack.c.b16 %v2064, %v2056
  %v2441 = vpack.c.b16 %v2065, %v2057
  %v2442 = vpack.c.b16 %v2066, %v2058
  %v2443 = vpack.c.b16 %v2067, %v2059
  %v2444 = vpack.c.b16 %v2068, %v2060
  %v2445 = vpack.c.b16 %v2069, %v2061
  %v2446 = vpack.c.b16 %v2070, %v2062
  %v2447 = vpack.c.b16 %v2079, %v2071
  %v2448 = vpack.c.b16 %v2080, %v2072
  %v2449 = vpack.c.b16 %v2081, %v2073
  %v2450 = vpack.c.b16 %v2082, %v2074
  %v2451 = vpack.c.b16 %v2083, %v2075
  %v2452 = vpack.c.b16 %v2084, %v2076
  %v2453 = vpack.c.b16 %v2085, %v2077
  %v2454 = vpack.c.b16 %v2086, %v2078
  %v2455 = vpack.c.b16 %v2095, %v2087
  %v2456 = vpack.c.b16 %v2096, %v2088
  %v2457 = vpack.c.b16 %v2097, %v2089
  %v2458 = vpack.c.b16 %v2098, %v2090
  %v2459 = vpack.c.b16 %v2099, %v2091
  %v2460 = vpack.c.b16 %v2100, %v2092
  %v2461 = vpack.c.b16 %v2101, %v2093
  %v2462 = vpack.c.b16 %v2102, %v2094
  %v2463 = vpack.c.b16 %v2111, %v2103
  %v2464 = vpack.c.b16 %v2112, %v2104
  %v2465 = vpack.c.b16 %v2113, %v2105
  %v2466 = vpack.c.b16 %v2114, %v2106
  %v2467 = vpack.c.b16 %v2115, %v2107
  %v2468 = vpack.c.b16 %v2116, %v2108
  %v2469 = vpack.c.b16 %v2117, %v2109
  %v2470 = vpack.c.b16 %v2118, %v2110
  %v2471 = vpack.c.b16 %v2127, %v2119
  %v2472 = vpack.c.b16 %v2128, %v2120
  %v2473 = vpack.c.b16 %v2129, %v2121
  %v2474 = vpack.c.b16 %v2130, %v2122
  %v2475 = vpack.c.b16 %v2131, %v2123
  %v2476 = vpack.c.b16 %v2132, %v2124
  %v2477 = vpack.c.b16 %v2133, %v2125
  %v2478 = vpack.c.b16 %v2134, %v2126
  %v2479 = vpack.c.b16 %v2143, %v2135
  %v2480 = vpack.c.b16 %v2144, %v2136
  %v2481 = vpack.c.b16 %v2145, %v2137
  %v2482 = vpack.c.b16 %v2146, %v2138
  %v2483 = vpack.c.b16 %v2147, %v2139
  %v2484 = vpack.c.b16 %v2148, %v2140
  %v2485 = vpack.c.b16 %v2149, %v2141
  %v2486 = vpack.c.b16 %v2150, %v2142
  %v2487 = vpack.c.b16 %v2159, %v2151
  %v2488 = vpack.c.b16 %v2160, %v2152
  %v2489 = vpack.c.b16 %v2161, %v2153
  %v2490 = vpack.c.b16 %v2162, %v2154
  %v2491 = vpack.c.b16 %v2163, %v2155
  %v2492 = vpack.c.b16 %v2164, %v2156
  %v2493 = vpack.c.b16 %v2165, %v2157
  %v2494 = vpack.c.b16 %v2166, %v2158
  %v2495 = vpack.c.b16 %v2175, %v2167
  %v2496 = vpack.c.b16 %v2176, %v2168
  %v2497 = vpack.c.b16 %v2177, %v2169
  %v2498 = vpack.c.b16 %v2178, %v2170
  %v2499 = vpack.c.b16 %v2179, %v2171
  %v2500 = vpack.c.b16 %v2180, %v2172
  %v2501 = vpack.c.b16 %v2181, %v2173
  %v2502 = vpack.c.b16 %v2182, %v2174
  %v2503 = vpack.c.b16 %v2191, %v2183
  %v2504 = vpack.c.b16 %v2192, %v2184
  %v2505 = vpack.c.b16 %v2193, %v2185
  %v2506 = vpack.c.b16 %v2194, %v2186
  %v2507 = vpack.c.b16 %v2195, %v2187
  %v2508 = vpack.c.b16 %v2196, %v2188
  %v2509 = vpack.c.b16 %v2197, %v2189
  %v2510 = vpack.c.b16 %v2198, %v2190
  %v2511 = vpack.c.b16 %v2207, %v2199
  %v2512 = vpack.c.b16 %v2208, %v2200
  %v2513 = vpack.c.b16 %v2209, %v2201
  %v2514 = vpack.c.b16 %v2210, %v2202
  %v2515 = vpack.c.b16 %v2211, %v2203
  %v2516 = vpack.c.b16 %v2212, %v2204
  %v2517 = vpack.c.b16 %v2213, %v2205
  %v2518 = vpack.c.b16 %v2214, %v2206
  %v2519 = vpack.c.b16 %v2223, %v2215
  %v2520 = vpack.c.b16 %v2224, %v2216
  %v2521 = vpack.c.b16 %v2225, %v2217
  %v2522 = vpack.c.b16 %v2226, %v2218
  %v2523 = vpack.c.b16 %v2227, %v2219
  %v2524 = vpack.c.b16 %v2228, %v2220
  %v2525 = vpack.c.b16 %v2229, %v2221
  %v2526 = vpack.c.b16 %v2230, %v2222
  %v2527 = vpack.c.b16 %v2239, %v2231
  %v2528 = vpack.c.b16 %v2240, %v2232
  %v2529 = vpack.c.b16 %v2241, %v2233
  %v2530 = vpack.c.b16 %v2242, %v2234
  %v2531 = vpack.c.b16 %v2243, %v2235
  %v2532 = vpack.c.b16 %v2244, %v2236
  %v2533 = vpack.c.b16 %v2245, %v2237
  %v2534 = vpack.c.b16 %v2246, %v2238
  %v2535 = vpack.c.b16 %v2255, %v2247
  %v2536 = vpack.c.b16 %v2256, %v2248
  %v2537 = vpack.c.b16 %v2257, %v2249
  %v2538 = vpack.c.b16 %v2258, %v2250
  %v2539 = vpack.c.b16 %v2259, %v2251
  %v2540 = vpack.c.b16 %v2260, %v2252
  %v2541 = vpack.c.b16 %v2261, %v2253
  %v2542 = vpack.c.b16 %v2262, %v2254
  %v2543 = vpack.c.b16 %v2271, %v2263
  %v2544 = vpack.c.b16 %v2272, %v2264
  %v2545 = vpack.c.b16 %v2273, %v2265
  %v2546 = vpack.c.b16 %v2274, %v2266
  %v2547 = vpack.c.b16 %v2275, %v2267
  %v2548 = vpack.c.b16 %v2276, %v2268
  %v2549 = vpack.c.b16 %v2277, %v2269
  %v2550 = vpack.c.b16 %v2278, %v2270
  %v2551 = vpack.c.b16 %v2287, %v2279
  %v2552 = vpack.c.b16 %v2288, %v2280
  %v2553 = vpack.c.b16 %v2289, %v2281
  %v2554 = vpack.c.b16 %v2290, %v2282
  %v2555 = vpack.c.b16 %v2291, %v2283
  %v2556 = vpack.c.b16 %v2292, %v2284
  %v2557 = vpack.c.b16 %v2293, %v2285
  %v2558 = vpack.c.b16 %v2294, %v2286
  %v2559 = vpack.c.b16 %v2303, %v2295
  %v2560 = vpack.c.b16 %v2304, %v2296
  %v2561 = vpack.c.b16 %v2305, %v2297
  %v2562 = vpack.c.b16 %v2306, %v2298
  %v2563 = vpack.c.b16 %v2307, %v2299
  %v2564 = vpack.c.b16 %v2308, %v2300
  %v2565 = vpack.c.b16 %v2309, %v2301
  %v2566 = vpack.c.b16 %v2310, %v2302
  %2823 = vmatprep.subr.bf16.mxu0 %v2312
  %2824 = vmatpush1.bf16.msra.mxu0 %v2311
  %2825 = vmatprep.subr.bf16.mxu0 %v2320
  %2826 = vmatpush1.bf16.msra.mxu0 %v2319
  %2827 = vmatprep.subr.bf16.mxu0 %v2328
  %2828 = vmatpush1.bf16.msra.mxu0 %v2327
  %2829 = vmatprep.subr.bf16.mxu0 %v2336
  %2830 = vmatpush1.bf16.msra.mxu0 %v2335
  %2831 = vmatprep.subr.bf16.mxu0 %v2344
  %2832 = vmatpush1.bf16.msra.mxu0 %v2343
  %2833 = vmatprep.subr.bf16.mxu0 %v2352
  %2834 = vmatpush1.bf16.msra.mxu0 %v2351
  %2835 = vmatprep.subr.bf16.mxu0 %v2360
  %2836 = vmatpush1.bf16.msra.mxu0 %v2359
  %2837 = vmatprep.subr.bf16.mxu0 %v2368
  %2838 = vmatpush1.bf16.msra.mxu0 %v2367
  %2839 = vmatprep.subr.bf16.mxu0 %v2376
  %2840 = vmatpush1.bf16.msra.mxu0 %v2375
  %2841 = vmatprep.subr.bf16.mxu0 %v2384
  %2842 = vmatpush1.bf16.msra.mxu0 %v2383
  %2843 = vmatprep.subr.bf16.mxu0 %v2392
  %2844 = vmatpush1.bf16.msra.mxu0 %v2391
  %2845 = vmatprep.subr.bf16.mxu0 %v2400
  %2846 = vmatpush1.bf16.msra.mxu0 %v2399
  %2847 = vmatprep.subr.bf16.mxu0 %v2408
  %2848 = vmatpush1.bf16.msra.mxu0 %v2407
  %2849 = vmatprep.subr.bf16.mxu0 %v2416
  %2850 = vmatpush1.bf16.msra.mxu0 %v2415
  %2851 = vmatprep.subr.bf16.mxu0 %v2424
  %2852 = vmatpush1.bf16.msra.mxu0 %v2423
  %2853 = vmatprep.subr.bf16.mxu0 %v2432
  %2854 = vmatpush1.bf16.msra.mxu0 %v2431
  %2855 = vmatprep.mubr.bf16.mxu0 %v1242
  %2856 = vmatmul.mubr.bf16.gmra.mrb[0].mxu0 %v1241
  %v2857 = vpop.f32.mrb[0].mxu0
  %v2858 = vadd.f32 %v1506, %v2857
  %v2859 = vpop.f32.mrb[0].mxu0
  %v2860 = vadd.f32 %v1510, %v2859
  %v2861 = vpop.f32.mrb[0].mxu0
  %v2862 = vadd.f32 %v1506, %v2861
  %v2863 = vpop.f32.mrb[0].mxu0
  %v2864 = vadd.f32 %v1510, %v2863
  %2865 = vdwg.mxu0
  %2866 = vmatprep.subr.bf16.mxu0 %v2440
  %2867 = vmatpush1.bf16.msra.mxu0 %v2439
  %2868 = vmatprep.subr.bf16.mxu0 %v2448
  %2869 = vmatpush1.bf16.msra.mxu0 %v2447
  %2870 = vmatprep.subr.bf16.mxu0 %v2456
  %2871 = vmatpush1.bf16.msra.mxu0 %v2455
  %2872 = vmatprep.subr.bf16.mxu0 %v2464
  %2873 = vmatpush1.bf16.msra.mxu0 %v2463
  %2874 = vmatprep.subr.bf16.mxu0 %v2472
  %2875 = vmatpush1.bf16.msra.mxu0 %v2471
  %2876 = vmatprep.subr.bf16.mxu0 %v2480
  %2877 = vmatpush1.bf16.msra.mxu0 %v2479
  %2878 = vmatprep.subr.bf16.mxu0 %v2488
  %2879 = vmatpush1.bf16.msra.mxu0 %v2487
  %2880 = vmatprep.subr.bf16.mxu0 %v2496
  %2881 = vmatpush1.bf16.msra.mxu0 %v2495
  %2882 = vmatprep.subr.bf16.mxu0 %v2504
  %2883 = vmatpush1.bf16.msra.mxu0 %v2503
  %2884 = vmatprep.subr.bf16.mxu0 %v2512
  %2885 = vmatpush1.bf16.msra.mxu0 %v2511
  %2886 = vmatprep.subr.bf16.mxu0 %v2520
  %2887 = vmatpush1.bf16.msra.mxu0 %v2519
  %2888 = vmatprep.subr.bf16.mxu0 %v2528
  %2889 = vmatpush1.bf16.msra.mxu0 %v2527
  %2890 = vmatprep.subr.bf16.mxu0 %v2536
  %2891 = vmatpush1.bf16.msra.mxu0 %v2535
  %2892 = vmatprep.subr.bf16.mxu0 %v2544
  %2893 = vmatpush1.bf16.msra.mxu0 %v2543
  %2894 = vmatprep.subr.bf16.mxu0 %v2552
  %2895 = vmatpush1.bf16.msra.mxu0 %v2551
  %2896 = vmatprep.subr.bf16.mxu0 %v2560
  %2897 = vmatpush1.bf16.msra.mxu0 %v2559
  %2898 = vmatprep.mubr.bf16.mxu0 %v1244
  %2899 = vmatmul.mubr.bf16.gmra.mrb[0].mxu0 %v1243
  %v2900 = vpop.f32.mrb[0].mxu0
  %v2901 = vadd.f32 %v2858, %v2900
  %v2902 = vpop.f32.mrb[0].mxu0
  %v2903 = vadd.f32 %v2860, %v2902
  %v2904 = vpop.f32.mrb[0].mxu0
  %v2905 = vadd.f32 %v2862, %v2904
  %v2906 = vpop.f32.mrb[0].mxu0
  %v2907 = vadd.f32 %v2864, %v2906
  %2908 = vdwg.mxu0
  %2909 = vmatprep.subr.bf16.mxu0 %v2314
  %2910 = vmatpush1.bf16.msra.mxu0 %v2313
  %2911 = vmatprep.subr.bf16.mxu0 %v2322
  %2912 = vmatpush1.bf16.msra.mxu0 %v2321
  %2913 = vmatprep.subr.bf16.mxu0 %v2330
  %2914 = vmatpush1.bf16.msra.mxu0 %v2329
  %2915 = vmatprep.subr.bf16.mxu0 %v2338
  %2916 = vmatpush1.bf16.msra.mxu0 %v2337
  %2917 = vmatprep.subr.bf16.mxu0 %v2346
  %2918 = vmatpush1.bf16.msra.mxu0 %v2345
  %2919 = vmatprep.subr.bf16.mxu0 %v2354
  %2920 = vmatpush1.bf16.msra.mxu0 %v2353
  %2921 = vmatprep.subr.bf16.mxu0 %v2362
  %2922 = vmatpush1.bf16.msra.mxu0 %v2361
  %2923 = vmatprep.subr.bf16.mxu0 %v2370
  %2924 = vmatpush1.bf16.msra.mxu0 %v2369
  %2925 = vmatprep.subr.bf16.mxu0 %v2378
  %2926 = vmatpush1.bf16.msra.mxu0 %v2377
  %2927 = vmatprep.subr.bf16.mxu0 %v2386
  %2928 = vmatpush1.bf16.msra.mxu0 %v2385
  %2929 = vmatprep.subr.bf16.mxu0 %v2394
  %2930 = vmatpush1.bf16.msra.mxu0 %v2393
  %2931 = vmatprep.subr.bf16.mxu0 %v2402
  %2932 = vmatpush1.bf16.msra.mxu0 %v2401
  %2933 = vmatprep.subr.bf16.mxu0 %v2410
  %2934 = vmatpush1.bf16.msra.mxu0 %v2409
  %2935 = vmatprep.subr.bf16.mxu0 %v2418
  %2936 = vmatpush1.bf16.msra.mxu0 %v2417
  %2937 = vmatprep.subr.bf16.mxu0 %v2426
  %2938 = vmatpush1.bf16.msra.mxu0 %v2425
  %2939 = vmatprep.subr.bf16.mxu0 %v2434
  %2940 = vmatpush1.bf16.msra.mxu0 %v2433
  %2941 = vmatprep.mubr.bf16.mxu0 %v1242
  %2942 = vmatmul.mubr.bf16.gmra.mrb[0].mxu0 %v1241
  %v2943 = vpop.f32.mrb[0].mxu0
  %v2944 = vadd.f32 %v1514, %v2943
  %v2945 = vpop.f32.mrb[0].mxu0
  %v2946 = vadd.f32 %v1518, %v2945
  %v2947 = vpop.f32.mrb[0].mxu0
  %v2948 = vadd.f32 %v1514, %v2947
  %v2949 = vpop.f32.mrb[0].mxu0
  %v2950 = vadd.f32 %v1518, %v2949
  %2951 = vdwg.mxu0
  %2952 = vmatprep.subr.bf16.mxu0 %v2442
  %2953 = vmatpush1.bf16.msra.mxu0 %v2441
  %2954 = vmatprep.subr.bf16.mxu0 %v2450
  %2955 = vmatpush1.bf16.msra.mxu0 %v2449
  %2956 = vmatprep.subr.bf16.mxu0 %v2458
  %2957 = vmatpush1.bf16.msra.mxu0 %v2457
  %2958 = vmatprep.subr.bf16.mxu0 %v2466
  %2959 = vmatpush1.bf16.msra.mxu0 %v2465
  %2960 = vmatprep.subr.bf16.mxu0 %v2474
  %2961 = vmatpush1.bf16.msra.mxu0 %v2473
  %2962 = vmatprep.subr.bf16.mxu0 %v2482
  %2963 = vmatpush1.bf16.msra.mxu0 %v2481
  %2964 = vmatprep.subr.bf16.mxu0 %v2490
  %2965 = vmatpush1.bf16.msra.mxu0 %v2489
  %2966 = vmatprep.subr.bf16.mxu0 %v2498
  %2967 = vmatpush1.bf16.msra.mxu0 %v2497
  %2968 = vmatprep.subr.bf16.mxu0 %v2506
  %2969 = vmatpush1.bf16.msra.mxu0 %v2505
  %2970 = vmatprep.subr.bf16.mxu0 %v2514
  %2971 = vmatpush1.bf16.msra.mxu0 %v2513
  %2972 = vmatprep.subr.bf16.mxu0 %v2522
  %2973 = vmatpush1.bf16.msra.mxu0 %v2521
  %2974 = vmatprep.subr.bf16.mxu0 %v2530
  %2975 = vmatpush1.bf16.msra.mxu0 %v2529
  %2976 = vmatprep.subr.bf16.mxu0 %v2538
  %2977 = vmatpush1.bf16.msra.mxu0 %v2537
  %2978 = vmatprep.subr.bf16.mxu0 %v2546
  %2979 = vmatpush1.bf16.msra.mxu0 %v2545
  %2980 = vmatprep.subr.bf16.mxu0 %v2554
  %2981 = vmatpush1.bf16.msra.mxu0 %v2553
  %2982 = vmatprep.subr.bf16.mxu0 %v2562
  %2983 = vmatpush1.bf16.msra.mxu0 %v2561
  %2984 = vmatprep.mubr.bf16.mxu0 %v1244
  %2985 = vmatmul.mubr.bf16.gmra.mrb[0].mxu0 %v1243
  %v2986 = vpop.f32.mrb[0].mxu0
  %v2987 = vadd.f32 %v2944, %v2986
  %v2988 = vpop.f32.mrb[0].mxu0
  %v2989 = vadd.f32 %v2946, %v2988
  %v2990 = vpop.f32.mrb[0].mxu0
  %v2991 = vadd.f32 %v2948, %v2990
  %v2992 = vpop.f32.mrb[0].mxu0
  %v2993 = vadd.f32 %v2950, %v2992
  %2994 = vdwg.mxu0
  %2995 = vmatprep.subr.bf16.mxu0 %v2316
  %2996 = vmatpush1.bf16.msra.mxu0 %v2315
  %2997 = vmatprep.subr.bf16.mxu0 %v2324
  %2998 = vmatpush1.bf16.msra.mxu0 %v2323
  %2999 = vmatprep.subr.bf16.mxu0 %v2332
  %3000 = vmatpush1.bf16.msra.mxu0 %v2331
  %3001 = vmatprep.subr.bf16.mxu0 %v2340
  %3002 = vmatpush1.bf16.msra.mxu0 %v2339
  %3003 = vmatprep.subr.bf16.mxu0 %v2348
  %3004 = vmatpush1.bf16.msra.mxu0 %v2347
  %3005 = vmatprep.subr.bf16.mxu0 %v2356
  %3006 = vmatpush1.bf16.msra.mxu0 %v2355
  %3007 = vmatprep.subr.bf16.mxu0 %v2364
  %3008 = vmatpush1.bf16.msra.mxu0 %v2363
  %3009 = vmatprep.subr.bf16.mxu0 %v2372
  %3010 = vmatpush1.bf16.msra.mxu0 %v2371
  %3011 = vmatprep.subr.bf16.mxu0 %v2380
  %3012 = vmatpush1.bf16.msra.mxu0 %v2379
  %3013 = vmatprep.subr.bf16.mxu0 %v2388
  %3014 = vmatpush1.bf16.msra.mxu0 %v2387
  %3015 = vmatprep.subr.bf16.mxu0 %v2396
  %3016 = vmatpush1.bf16.msra.mxu0 %v2395
  %3017 = vmatprep.subr.bf16.mxu0 %v2404
  %3018 = vmatpush1.bf16.msra.mxu0 %v2403
  %3019 = vmatprep.subr.bf16.mxu0 %v2412
  %3020 = vmatpush1.bf16.msra.mxu0 %v2411
  %3021 = vmatprep.subr.bf16.mxu0 %v2420
  %3022 = vmatpush1.bf16.msra.mxu0 %v2419
  %3023 = vmatprep.subr.bf16.mxu0 %v2428
  %3024 = vmatpush1.bf16.msra.mxu0 %v2427
  %3025 = vmatprep.subr.bf16.mxu0 %v2436
  %3026 = vmatpush1.bf16.msra.mxu0 %v2435
  %3027 = vmatprep.mubr.bf16.mxu0 %v1242
  %3028 = vmatmul.mubr.bf16.gmra.mrb[0].mxu0 %v1241
  %v3029 = vpop.f32.mrb[0].mxu0
  %v3030 = vadd.f32 %v1522, %v3029
  %v3031 = vpop.f32.mrb[0].mxu0
  %v3032 = vadd.f32 %v1526, %v3031
  %v3033 = vpop.f32.mrb[0].mxu0
  %v3034 = vadd.f32 %v1522, %v3033
  %v3035 = vpop.f32.mrb[0].mxu0
  %v3036 = vadd.f32 %v1526, %v3035
  %3037 = vdwg.mxu0
  %3038 = vmatprep.subr.bf16.mxu0 %v2444
  %3039 = vmatpush1.bf16.msra.mxu0 %v2443
  %3040 = vmatprep.subr.bf16.mxu0 %v2452
  %3041 = vmatpush1.bf16.msra.mxu0 %v2451
  %3042 = vmatprep.subr.bf16.mxu0 %v2460
  %3043 = vmatpush1.bf16.msra.mxu0 %v2459
  %3044 = vmatprep.subr.bf16.mxu0 %v2468
  %3045 = vmatpush1.bf16.msra.mxu0 %v2467
  %3046 = vmatprep.subr.bf16.mxu0 %v2476
  %3047 = vmatpush1.bf16.msra.mxu0 %v2475
  %3048 = vmatprep.subr.bf16.mxu0 %v2484
  %3049 = vmatpush1.bf16.msra.mxu0 %v2483
  %3050 = vmatprep.subr.bf16.mxu0 %v2492
  %3051 = vmatpush1.bf16.msra.mxu0 %v2491
  %3052 = vmatprep.subr.bf16.mxu0 %v2500
  %3053 = vmatpush1.bf16.msra.mxu0 %v2499
  %3054 = vmatprep.subr.bf16.mxu0 %v2508
  %3055 = vmatpush1.bf16.msra.mxu0 %v2507
  %3056 = vmatprep.subr.bf16.mxu0 %v2516
  %3057 = vmatpush1.bf16.msra.mxu0 %v2515
  %3058 = vmatprep.subr.bf16.mxu0 %v2524
  %3059 = vmatpush1.bf16.msra.mxu0 %v2523
  %3060 = vmatprep.subr.bf16.mxu0 %v2532
  %3061 = vmatpush1.bf16.msra.mxu0 %v2531
  %3062 = vmatprep.subr.bf16.mxu0 %v2540
  %3063 = vmatpush1.bf16.msra.mxu0 %v2539
  %3064 = vmatprep.subr.bf16.mxu0 %v2548
  %3065 = vmatpush1.bf16.msra.mxu0 %v2547
  %3066 = vmatprep.subr.bf16.mxu0 %v2556
  %3067 = vmatpush1.bf16.msra.mxu0 %v2555
  %3068 = vmatprep.subr.bf16.mxu0 %v2564
  %3069 = vmatpush1.bf16.msra.mxu0 %v2563
  %3070 = vmatprep.mubr.bf16.mxu0 %v1244
  %3071 = vmatmul.mubr.bf16.gmra.mrb[0].mxu0 %v1243
  %v3072 = vpop.f32.mrb[0].mxu0
  %v3073 = vadd.f32 %v3030, %v3072
  %v3074 = vpop.f32.mrb[0].mxu0
  %v3075 = vadd.f32 %v3032, %v3074
  %v3076 = vpop.f32.mrb[0].mxu0
  %v3077 = vadd.f32 %v3034, %v3076
  %v3078 = vpop.f32.mrb[0].mxu0
  %v3079 = vadd.f32 %v3036, %v3078
  %3080 = vdwg.mxu0
  %3081 = vmatprep.subr.bf16.mxu0 %v2318
  %3082 = vmatpush1.bf16.msra.mxu0 %v2317
  %3083 = vmatprep.subr.bf16.mxu0 %v2326
  %3084 = vmatpush1.bf16.msra.mxu0 %v2325
  %3085 = vmatprep.subr.bf16.mxu0 %v2334
  %3086 = vmatpush1.bf16.msra.mxu0 %v2333
  %3087 = vmatprep.subr.bf16.mxu0 %v2342
  %3088 = vmatpush1.bf16.msra.mxu0 %v2341
  %3089 = vmatprep.subr.bf16.mxu0 %v2350
  %3090 = vmatpush1.bf16.msra.mxu0 %v2349
  %3091 = vmatprep.subr.bf16.mxu0 %v2358
  %3092 = vmatpush1.bf16.msra.mxu0 %v2357
  %3093 = vmatprep.subr.bf16.mxu0 %v2366
  %3094 = vmatpush1.bf16.msra.mxu0 %v2365
  %3095 = vmatprep.subr.bf16.mxu0 %v2374
  %3096 = vmatpush1.bf16.msra.mxu0 %v2373
  %3097 = vmatprep.subr.bf16.mxu0 %v2382
  %3098 = vmatpush1.bf16.msra.mxu0 %v2381
  %3099 = vmatprep.subr.bf16.mxu0 %v2390
  %3100 = vmatpush1.bf16.msra.mxu0 %v2389
  %3101 = vmatprep.subr.bf16.mxu0 %v2398
  %3102 = vmatpush1.bf16.msra.mxu0 %v2397
  %3103 = vmatprep.subr.bf16.mxu0 %v2406
  %3104 = vmatpush1.bf16.msra.mxu0 %v2405
  %3105 = vmatprep.subr.bf16.mxu0 %v2414
  %3106 = vmatpush1.bf16.msra.mxu0 %v2413
  %3107 = vmatprep.subr.bf16.mxu0 %v2422
  %3108 = vmatpush1.bf16.msra.mxu0 %v2421
  %3109 = vmatprep.subr.bf16.mxu0 %v2430
  %3110 = vmatpush1.bf16.msra.mxu0 %v2429
  %3111 = vmatprep.subr.bf16.mxu0 %v2438
  %3112 = vmatpush1.bf16.msra.mxu0 %v2437
  %3113 = vmatprep.mubr.bf16.mxu0 %v1242
  %3114 = vmatmul.mubr.bf16.gmra.mrb[0].mxu0 %v1241
  %v3115 = vpop.f32.mrb[0].mxu0
  %v3116 = vadd.f32 %v1530, %v3115
  %v3117 = vpop.f32.mrb[0].mxu0
  %v3118 = vadd.f32 %v1534, %v3117
  %v3119 = vpop.f32.mrb[0].mxu0
  %v3120 = vadd.f32 %v1530, %v3119
  %v3121 = vpop.f32.mrb[0].mxu0
  %v3122 = vadd.f32 %v1534, %v3121
  %3123 = vdwg.mxu0
  %3124 = vmatprep.subr.bf16.mxu0 %v2446
  %3125 = vmatpush1.bf16.msra.mxu0 %v2445
  %3126 = vmatprep.subr.bf16.mxu0 %v2454
  %3127 = vmatpush1.bf16.msra.mxu0 %v2453
  %3128 = vmatprep.subr.bf16.mxu0 %v2462
  %3129 = vmatpush1.bf16.msra.mxu0 %v2461
  %3130 = vmatprep.subr.bf16.mxu0 %v2470
  %3131 = vmatpush1.bf16.msra.mxu0 %v2469
  %3132 = vmatprep.subr.bf16.mxu0 %v2478
  %3133 = vmatpush1.bf16.msra.mxu0 %v2477
  %3134 = vmatprep.subr.bf16.mxu0 %v2486
  %3135 = vmatpush1.bf16.msra.mxu0 %v2485
  %3136 = vmatprep.subr.bf16.mxu0 %v2494
  %3137 = vmatpush1.bf16.msra.mxu0 %v2493
  %3138 = vmatprep.subr.bf16.mxu0 %v2502
  %3139 = vmatpush1.bf16.msra.mxu0 %v2501
  %3140 = vmatprep.subr.bf16.mxu0 %v2510
  %3141 = vmatpush1.bf16.msra.mxu0 %v2509
  %3142 = vmatprep.subr.bf16.mxu0 %v2518
  %3143 = vmatpush1.bf16.msra.mxu0 %v2517
  %3144 = vmatprep.subr.bf16.mxu0 %v2526
  %3145 = vmatpush1.bf16.msra.mxu0 %v2525
  %3146 = vmatprep.subr.bf16.mxu0 %v2534
  %3147 = vmatpush1.bf16.msra.mxu0 %v2533
  %3148 = vmatprep.subr.bf16.mxu0 %v2542
  %3149 = vmatpush1.bf16.msra.mxu0 %v2541
  %3150 = vmatprep.subr.bf16.mxu0 %v2550
  %3151 = vmatpush1.bf16.msra.mxu0 %v2549
  %3152 = vmatprep.subr.bf16.mxu0 %v2558
  %3153 = vmatpush1.bf16.msra.mxu0 %v2557
  %3154 = vmatprep.subr.bf16.mxu0 %v2566
  %3155 = vmatpush1.bf16.msra.mxu0 %v2565
  %3156 = vmatprep.mubr.bf16.mxu0 %v1244
  %3157 = vmatmul.mubr.bf16.gmra.mrb[0].mxu0 %v1243
  %v3158 = vpop.f32.mrb[0].mxu0
  %v3159 = vadd.f32 %v3116, %v3158
  %v3160 = vpop.f32.mrb[0].mxu0
  %v3161 = vadd.f32 %v3118, %v3160
  %v3162 = vpop.f32.mrb[0].mxu0
  %v3163 = vadd.f32 %v3120, %v3162
  %v3164 = vpop.f32.mrb[0].mxu0
  %v3165 = vadd.f32 %v3122, %v3164
  %3166 = vdwg.mxu0
  %v3167 = vmax.f32 %v2901, 0.0
  %v3168 = vmax.f32 %v2903, 0.0
  %v3169 = vmax.f32 %v2987, 0.0
  %v3170 = vmax.f32 %v2989, 0.0
  %v3171 = vmax.f32 %v3073, 0.0
  %v3172 = vmax.f32 %v3075, 0.0
  %v3173 = vmax.f32 %v3159, 0.0
  %v3174 = vmax.f32 %v3161, 0.0
  %v3175 = vmax.f32 %v2905, 0.0
  %v3176 = vmax.f32 %v2907, 0.0
  %v3177 = vmax.f32 %v2991, 0.0
  %v3178 = vmax.f32 %v2993, 0.0
  %v3179 = vmax.f32 %v3077, 0.0
  %v3180 = vmax.f32 %v3079, 0.0
  %v3181 = vmax.f32 %v3163, 0.0
  %v3182 = vmax.f32 %v3165, 0.0
  %v3183 = vpack.c.bf16 %v3175, %v3167
  %v3184 = vpack.c.bf16 %v3176, %v3168
  %v3185 = vpack.c.bf16 %v3177, %v3169
  %v3186 = vpack.c.bf16 %v3178, %v3170
  %v3187 = vpack.c.bf16 %v3179, %v3171
  %v3188 = vpack.c.bf16 %v3180, %v3172
  %v3189 = vpack.c.bf16 %v3181, %v3173
  %v3190 = vpack.c.bf16 %v3182, %v3174
  %v3191 = vld [vmem:[%s7] sm:$0xff]
  %v3192 = vld [vmem:[%s7 + $0x8] sm:$0xff]
  %v3193 = vld [vmem:[%s7 + $0x10] sm:$0xff]
  %v3194 = vld [vmem:[%s7 + $0x18] sm:$0xff]
  %v3195 = vld [vmem:[%s7 + $0x20] sm:$0xff]
  %v3196 = vld [vmem:[%s7 + $0x28] sm:$0xff]
  %v3197 = vld [vmem:[%s7 + $0x30] sm:$0xff]
  %v3198 = vld [vmem:[%s7 + $0x38] sm:$0xff]
  %v3199 = vld [vmem:[%s7 + $0x40] sm:$0xff]
  %v3200 = vld [vmem:[%s7 + $0x48] sm:$0xff]
  %v3201 = vld [vmem:[%s7 + $0x50] sm:$0xff]
  %v3202 = vld [vmem:[%s7 + $0x58] sm:$0xff]
  %v3203 = vld [vmem:[%s7 + $0x60] sm:$0xff]
  %v3204 = vld [vmem:[%s7 + $0x68] sm:$0xff]
  %v3205 = vld [vmem:[%s7 + $0x70] sm:$0xff]
  %v3206 = vld [vmem:[%s7 + $0x78] sm:$0xff]
  %v3207 = vld [vmem:[%s7 + $0x80] sm:$0xff]
  %v3208 = vld [vmem:[%s7 + $0x88] sm:$0xff]
  %v3209 = vld [vmem:[%s7 + $0x90] sm:$0xff]
  %v3210 = vld [vmem:[%s7 + $0x98] sm:$0xff]
  %v3211 = vld [vmem:[%s7 + $0xa0] sm:$0xff]
  %v3212 = vld [vmem:[%s7 + $0xa8] sm:$0xff]
  %v3213 = vld [vmem:[%s7 + $0xb0] sm:$0xff]
  %v3214 = vld [vmem:[%s7 + $0xb8] sm:$0xff]
  %v3215 = vld [vmem:[%s7 + $0xc0] sm:$0xff]
  %v3216 = vld [vmem:[%s7 + $0xc8] sm:$0xff]
  %v3217 = vld [vmem:[%s7 + $0xd0] sm:$0xff]
  %v3218 = vld [vmem:[%s7 + $0xd8] sm:$0xff]
  %v3219 = vld [vmem:[%s7 + $0xe0] sm:$0xff]
  %v3220 = vld [vmem:[%s7 + $0xe8] sm:$0xff]
  %v3221 = vld [vmem:[%s7 + $0xf0] sm:$0xff]
  %v3222 = vld [vmem:[%s7 + $0xf8] sm:$0xff]
  %v3223 = vld [vmem:[%s7 + $0x100] sm:$0xff]
  %v3224 = vld [vmem:[%s7 + $0x108] sm:$0xff]
  %v3225 = vld [vmem:[%s7 + $0x110] sm:$0xff]
  %v3226 = vld [vmem:[%s7 + $0x118] sm:$0xff]
  %v3227 = vld [vmem:[%s7 + $0x120] sm:$0xff]
  %v3228 = vld [vmem:[%s7 + $0x128] sm:$0xff]
  %v3229 = vld [vmem:[%s7 + $0x130] sm:$0xff]
  %v3230 = vld [vmem:[%s7 + $0x138] sm:$0xff]
  %v3231 = vld [vmem:[%s7 + $0x140] sm:$0xff]
  %v3232 = vld [vmem:[%s7 + $0x148] sm:$0xff]
  %v3233 = vld [vmem:[%s7 + $0x150] sm:$0xff]
  %v3234 = vld [vmem:[%s7 + $0x158] sm:$0xff]
  %v3235 = vld [vmem:[%s7 + $0x160] sm:$0xff]
  %v3236 = vld [vmem:[%s7 + $0x168] sm:$0xff]
  %v3237 = vld [vmem:[%s7 + $0x170] sm:$0xff]
  %v3238 = vld [vmem:[%s7 + $0x178] sm:$0xff]
  %v3239 = vld [vmem:[%s7 + $0x180] sm:$0xff]
  %v3240 = vld [vmem:[%s7 + $0x188] sm:$0xff]
  %v3241 = vld [vmem:[%s7 + $0x190] sm:$0xff]
  %v3242 = vld [vmem:[%s7 + $0x198] sm:$0xff]
  %v3243 = vld [vmem:[%s7 + $0x1a0] sm:$0xff]
  %v3244 = vld [vmem:[%s7 + $0x1a8] sm:$0xff]
  %v3245 = vld [vmem:[%s7 + $0x1b0] sm:$0xff]
  %v3246 = vld [vmem:[%s7 + $0x1b8] sm:$0xff]
  %v3247 = vld [vmem:[%s7 + $0x1c0] sm:$0xff]
  %v3248 = vld [vmem:[%s7 + $0x1c8] sm:$0xff]
  %v3249 = vld [vmem:[%s7 + $0x1d0] sm:$0xff]
  %v3250 = vld [vmem:[%s7 + $0x1d8] sm:$0xff]
  %v3251 = vld [vmem:[%s7 + $0x1e0] sm:$0xff]
  %v3252 = vld [vmem:[%s7 + $0x1e8] sm:$0xff]
  %v3253 = vld [vmem:[%s7 + $0x1f0] sm:$0xff]
  %v3254 = vld [vmem:[%s7 + $0x1f8] sm:$0xff]
  %v3255 = vld [vmem:[%s7 + $0x200] sm:$0xff]
  %v3256 = vld [vmem:[%s7 + $0x208] sm:$0xff]
  %v3257 = vld [vmem:[%s7 + $0x210] sm:$0xff]
  %v3258 = vld [vmem:[%s7 + $0x218] sm:$0xff]
  %v3259 = vld [vmem:[%s7 + $0x220] sm:$0xff]
  %v3260 = vld [vmem:[%s7 + $0x228] sm:$0xff]
  %v3261 = vld [vmem:[%s7 + $0x230] sm:$0xff]
  %v3262 = vld [vmem:[%s7 + $0x238] sm:$0xff]
  %v3263 = vld [vmem:[%s7 + $0x240] sm:$0xff]
  %v3264 = vld [vmem:[%s7 + $0x248] sm:$0xff]
  %v3265 = vld [vmem:[%s7 + $0x250] sm:$0xff]
  %v3266 = vld [vmem:[%s7 + $0x258] sm:$0xff]
  %v3267 = vld [vmem:[%s7 + $0x260] sm:$0xff]
  %v3268 = vld [vmem:[%s7 + $0x268] sm:$0xff]
  %v3269 = vld [vmem:[%s7 + $0x270] sm:$0xff]
  %v3270 = vld [vmem:[%s7 + $0x278] sm:$0xff]
  %v3271 = vld [vmem:[%s7 + $0x280] sm:$0xff]
  %v3272 = vld [vmem:[%s7 + $0x288] sm:$0xff]
  %v3273 = vld [vmem:[%s7 + $0x290] sm:$0xff]
  %v3274 = vld [vmem:[%s7 + $0x298] sm:$0xff]
  %v3275 = vld [vmem:[%s7 + $0x2a0] sm:$0xff]
  %v3276 = vld [vmem:[%s7 + $0x2a8] sm:$0xff]
  %v3277 = vld [vmem:[%s7 + $0x2b0] sm:$0xff]
  %v3278 = vld [vmem:[%s7 + $0x2b8] sm:$0xff]
  %v3279 = vld [vmem:[%s7 + $0x2c0] sm:$0xff]
  %v3280 = vld [vmem:[%s7 + $0x2c8] sm:$0xff]
  %v3281 = vld [vmem:[%s7 + $0x2d0] sm:$0xff]
  %v3282 = vld [vmem:[%s7 + $0x2d8] sm:$0xff]
  %v3283 = vld [vmem:[%s7 + $0x2e0] sm:$0xff]
  %v3284 = vld [vmem:[%s7 + $0x2e8] sm:$0xff]
  %v3285 = vld [vmem:[%s7 + $0x2f0] sm:$0xff]
  %v3286 = vld [vmem:[%s7 + $0x2f8] sm:$0xff]
  %v3287 = vld [vmem:[%s7 + $0x300] sm:$0xff]
  %v3288 = vld [vmem:[%s7 + $0x308] sm:$0xff]
  %v3289 = vld [vmem:[%s7 + $0x310] sm:$0xff]
  %v3290 = vld [vmem:[%s7 + $0x318] sm:$0xff]
  %v3291 = vld [vmem:[%s7 + $0x320] sm:$0xff]
  %v3292 = vld [vmem:[%s7 + $0x328] sm:$0xff]
  %v3293 = vld [vmem:[%s7 + $0x330] sm:$0xff]
  %v3294 = vld [vmem:[%s7 + $0x338] sm:$0xff]
  %v3295 = vld [vmem:[%s7 + $0x340] sm:$0xff]
  %v3296 = vld [vmem:[%s7 + $0x348] sm:$0xff]
  %v3297 = vld [vmem:[%s7 + $0x350] sm:$0xff]
  %v3298 = vld [vmem:[%s7 + $0x358] sm:$0xff]
  %v3299 = vld [vmem:[%s7 + $0x360] sm:$0xff]
  %v3300 = vld [vmem:[%s7 + $0x368] sm:$0xff]
  %v3301 = vld [vmem:[%s7 + $0x370] sm:$0xff]
  %v3302 = vld [vmem:[%s7 + $0x378] sm:$0xff]
  %v3303 = vld [vmem:[%s7 + $0x380] sm:$0xff]
  %v3304 = vld [vmem:[%s7 + $0x388] sm:$0xff]
  %v3305 = vld [vmem:[%s7 + $0x390] sm:$0xff]
  %v3306 = vld [vmem:[%s7 + $0x398] sm:$0xff]
  %v3307 = vld [vmem:[%s7 + $0x3a0] sm:$0xff]
  %v3308 = vld [vmem:[%s7 + $0x3a8] sm:$0xff]
  %v3309 = vld [vmem:[%s7 + $0x3b0] sm:$0xff]
  %v3310 = vld [vmem:[%s7 + $0x3b8] sm:$0xff]
  %v3311 = vld [vmem:[%s7 + $0x3c0] sm:$0xff]
  %v3312 = vld [vmem:[%s7 + $0x3c8] sm:$0xff]
  %v3313 = vld [vmem:[%s7 + $0x3d0] sm:$0xff]
  %v3314 = vld [vmem:[%s7 + $0x3d8] sm:$0xff]
  %v3315 = vld [vmem:[%s7 + $0x3e0] sm:$0xff]
  %v3316 = vld [vmem:[%s7 + $0x3e8] sm:$0xff]
  %v3317 = vld [vmem:[%s7 + $0x3f0] sm:$0xff]
  %v3318 = vld [vmem:[%s7 + $0x3f8] sm:$0xff]
  %v3319 = vld [vmem:[%s7 + $0x400] sm:$0xff]
  %v3320 = vld [vmem:[%s7 + $0x408] sm:$0xff]
  %v3321 = vld [vmem:[%s7 + $0x410] sm:$0xff]
  %v3322 = vld [vmem:[%s7 + $0x418] sm:$0xff]
  %v3323 = vld [vmem:[%s7 + $0x420] sm:$0xff]
  %v3324 = vld [vmem:[%s7 + $0x428] sm:$0xff]
  %v3325 = vld [vmem:[%s7 + $0x430] sm:$0xff]
  %v3326 = vld [vmem:[%s7 + $0x438] sm:$0xff]
  %v3327 = vld [vmem:[%s7 + $0x440] sm:$0xff]
  %v3328 = vld [vmem:[%s7 + $0x448] sm:$0xff]
  %v3329 = vld [vmem:[%s7 + $0x450] sm:$0xff]
  %v3330 = vld [vmem:[%s7 + $0x458] sm:$0xff]
  %v3331 = vld [vmem:[%s7 + $0x460] sm:$0xff]
  %v3332 = vld [vmem:[%s7 + $0x468] sm:$0xff]
  %v3333 = vld [vmem:[%s7 + $0x470] sm:$0xff]
  %v3334 = vld [vmem:[%s7 + $0x478] sm:$0xff]
  %v3335 = vld [vmem:[%s7 + $0x480] sm:$0xff]
  %v3336 = vld [vmem:[%s7 + $0x488] sm:$0xff]
  %v3337 = vld [vmem:[%s7 + $0x490] sm:$0xff]
  %v3338 = vld [vmem:[%s7 + $0x498] sm:$0xff]
  %v3339 = vld [vmem:[%s7 + $0x4a0] sm:$0xff]
  %v3340 = vld [vmem:[%s7 + $0x4a8] sm:$0xff]
  %v3341 = vld [vmem:[%s7 + $0x4b0] sm:$0xff]
  %v3342 = vld [vmem:[%s7 + $0x4b8] sm:$0xff]
  %v3343 = vld [vmem:[%s7 + $0x4c0] sm:$0xff]
  %v3344 = vld [vmem:[%s7 + $0x4c8] sm:$0xff]
  %v3345 = vld [vmem:[%s7 + $0x4d0] sm:$0xff]
  %v3346 = vld [vmem:[%s7 + $0x4d8] sm:$0xff]
  %v3347 = vld [vmem:[%s7 + $0x4e0] sm:$0xff]
  %v3348 = vld [vmem:[%s7 + $0x4e8] sm:$0xff]
  %v3349 = vld [vmem:[%s7 + $0x4f0] sm:$0xff]
  %v3350 = vld [vmem:[%s7 + $0x4f8] sm:$0xff]
  %v3351 = vld [vmem:[%s7 + $0x500] sm:$0xff]
  %v3352 = vld [vmem:[%s7 + $0x508] sm:$0xff]
  %v3353 = vld [vmem:[%s7 + $0x510] sm:$0xff]
  %v3354 = vld [vmem:[%s7 + $0x518] sm:$0xff]
  %v3355 = vld [vmem:[%s7 + $0x520] sm:$0xff]
  %v3356 = vld [vmem:[%s7 + $0x528] sm:$0xff]
  %v3357 = vld [vmem:[%s7 + $0x530] sm:$0xff]
  %v3358 = vld [vmem:[%s7 + $0x538] sm:$0xff]
  %v3359 = vld [vmem:[%s7 + $0x540] sm:$0xff]
  %v3360 = vld [vmem:[%s7 + $0x548] sm:$0xff]
  %v3361 = vld [vmem:[%s7 + $0x550] sm:$0xff]
  %v3362 = vld [vmem:[%s7 + $0x558] sm:$0xff]
  %v3363 = vld [vmem:[%s7 + $0x560] sm:$0xff]
  %v3364 = vld [vmem:[%s7 + $0x568] sm:$0xff]
  %v3365 = vld [vmem:[%s7 + $0x570] sm:$0xff]
  %v3366 = vld [vmem:[%s7 + $0x578] sm:$0xff]
  %v3367 = vld [vmem:[%s7 + $0x580] sm:$0xff]
  %v3368 = vld [vmem:[%s7 + $0x588] sm:$0xff]
  %v3369 = vld [vmem:[%s7 + $0x590] sm:$0xff]
  %v3370 = vld [vmem:[%s7 + $0x598] sm:$0xff]
  %v3371 = vld [vmem:[%s7 + $0x5a0] sm:$0xff]
  %v3372 = vld [vmem:[%s7 + $0x5a8] sm:$0xff]
  %v3373 = vld [vmem:[%s7 + $0x5b0] sm:$0xff]
  %v3374 = vld [vmem:[%s7 + $0x5b8] sm:$0xff]
  %v3375 = vld [vmem:[%s7 + $0x5c0] sm:$0xff]
  %v3376 = vld [vmem:[%s7 + $0x5c8] sm:$0xff]
  %v3377 = vld [vmem:[%s7 + $0x5d0] sm:$0xff]
  %v3378 = vld [vmem:[%s7 + $0x5d8] sm:$0xff]
  %v3379 = vld [vmem:[%s7 + $0x5e0] sm:$0xff]
  %v3380 = vld [vmem:[%s7 + $0x5e8] sm:$0xff]
  %v3381 = vld [vmem:[%s7 + $0x5f0] sm:$0xff]
  %v3382 = vld [vmem:[%s7 + $0x5f8] sm:$0xff]
  %v3383 = vld [vmem:[%s7 + $0x600] sm:$0xff]
  %v3384 = vld [vmem:[%s7 + $0x608] sm:$0xff]
  %v3385 = vld [vmem:[%s7 + $0x610] sm:$0xff]
  %v3386 = vld [vmem:[%s7 + $0x618] sm:$0xff]
  %v3387 = vld [vmem:[%s7 + $0x620] sm:$0xff]
  %v3388 = vld [vmem:[%s7 + $0x628] sm:$0xff]
  %v3389 = vld [vmem:[%s7 + $0x630] sm:$0xff]
  %v3390 = vld [vmem:[%s7 + $0x638] sm:$0xff]
  %v3391 = vld [vmem:[%s7 + $0x640] sm:$0xff]
  %v3392 = vld [vmem:[%s7 + $0x648] sm:$0xff]
  %v3393 = vld [vmem:[%s7 + $0x650] sm:$0xff]
  %v3394 = vld [vmem:[%s7 + $0x658] sm:$0xff]
  %v3395 = vld [vmem:[%s7 + $0x660] sm:$0xff]
  %v3396 = vld [vmem:[%s7 + $0x668] sm:$0xff]
  %v3397 = vld [vmem:[%s7 + $0x670] sm:$0xff]
  %v3398 = vld [vmem:[%s7 + $0x678] sm:$0xff]
  %v3399 = vld [vmem:[%s7 + $0x680] sm:$0xff]
  %v3400 = vld [vmem:[%s7 + $0x688] sm:$0xff]
  %v3401 = vld [vmem:[%s7 + $0x690] sm:$0xff]
  %v3402 = vld [vmem:[%s7 + $0x698] sm:$0xff]
  %v3403 = vld [vmem:[%s7 + $0x6a0] sm:$0xff]
  %v3404 = vld [vmem:[%s7 + $0x6a8] sm:$0xff]
  %v3405 = vld [vmem:[%s7 + $0x6b0] sm:$0xff]
  %v3406 = vld [vmem:[%s7 + $0x6b8] sm:$0xff]
  %v3407 = vld [vmem:[%s7 + $0x6c0] sm:$0xff]
  %v3408 = vld [vmem:[%s7 + $0x6c8] sm:$0xff]
  %v3409 = vld [vmem:[%s7 + $0x6d0] sm:$0xff]
  %v3410 = vld [vmem:[%s7 + $0x6d8] sm:$0xff]
  %v3411 = vld [vmem:[%s7 + $0x6e0] sm:$0xff]
  %v3412 = vld [vmem:[%s7 + $0x6e8] sm:$0xff]
  %v3413 = vld [vmem:[%s7 + $0x6f0] sm:$0xff]
  %v3414 = vld [vmem:[%s7 + $0x6f8] sm:$0xff]
  %v3415 = vld [vmem:[%s7 + $0x700] sm:$0xff]
  %v3416 = vld [vmem:[%s7 + $0x708] sm:$0xff]
  %v3417 = vld [vmem:[%s7 + $0x710] sm:$0xff]
  %v3418 = vld [vmem:[%s7 + $0x718] sm:$0xff]
  %v3419 = vld [vmem:[%s7 + $0x720] sm:$0xff]
  %v3420 = vld [vmem:[%s7 + $0x728] sm:$0xff]
  %v3421 = vld [vmem:[%s7 + $0x730] sm:$0xff]
  %v3422 = vld [vmem:[%s7 + $0x738] sm:$0xff]
  %v3423 = vld [vmem:[%s7 + $0x740] sm:$0xff]
  %v3424 = vld [vmem:[%s7 + $0x748] sm:$0xff]
  %v3425 = vld [vmem:[%s7 + $0x750] sm:$0xff]
  %v3426 = vld [vmem:[%s7 + $0x758] sm:$0xff]
  %v3427 = vld [vmem:[%s7 + $0x760] sm:$0xff]
  %v3428 = vld [vmem:[%s7 + $0x768] sm:$0xff]
  %v3429 = vld [vmem:[%s7 + $0x770] sm:$0xff]
  %v3430 = vld [vmem:[%s7 + $0x778] sm:$0xff]
  %v3431 = vld [vmem:[%s7 + $0x780] sm:$0xff]
  %v3432 = vld [vmem:[%s7 + $0x788] sm:$0xff]
  %v3433 = vld [vmem:[%s7 + $0x790] sm:$0xff]
  %v3434 = vld [vmem:[%s7 + $0x798] sm:$0xff]
  %v3435 = vld [vmem:[%s7 + $0x7a0] sm:$0xff]
  %v3436 = vld [vmem:[%s7 + $0x7a8] sm:$0xff]
  %v3437 = vld [vmem:[%s7 + $0x7b0] sm:$0xff]
  %v3438 = vld [vmem:[%s7 + $0x7b8] sm:$0xff]
  %v3439 = vld [vmem:[%s7 + $0x7c0] sm:$0xff]
  %v3440 = vld [vmem:[%s7 + $0x7c8] sm:$0xff]
  %v3441 = vld [vmem:[%s7 + $0x7d0] sm:$0xff]
  %v3442 = vld [vmem:[%s7 + $0x7d8] sm:$0xff]
  %v3443 = vld [vmem:[%s7 + $0x7e0] sm:$0xff]
  %v3444 = vld [vmem:[%s7 + $0x7e8] sm:$0xff]
  %v3445 = vld [vmem:[%s7 + $0x7f0] sm:$0xff]
  %v3446 = vld [vmem:[%s7 + $0x7f8] sm:$0xff]
  %v3447 = vld [vmem:[%s7 + $0x800] sm:$0xff]
  %v3448 = vld [vmem:[%s7 + $0x808] sm:$0xff]
  %v3449 = vld [vmem:[%s7 + $0x810] sm:$0xff]
  %v3450 = vld [vmem:[%s7 + $0x818] sm:$0xff]
  %v3451 = vld [vmem:[%s7 + $0x820] sm:$0xff]
  %v3452 = vld [vmem:[%s7 + $0x828] sm:$0xff]
  %v3453 = vld [vmem:[%s7 + $0x830] sm:$0xff]
  %v3454 = vld [vmem:[%s7 + $0x838] sm:$0xff]
  %v3455 = vld [vmem:[%s7 + $0x840] sm:$0xff]
  %v3456 = vld [vmem:[%s7 + $0x848] sm:$0xff]
  %v3457 = vld [vmem:[%s7 + $0x850] sm:$0xff]
  %v3458 = vld [vmem:[%s7 + $0x858] sm:$0xff]
  %v3459 = vld [vmem:[%s7 + $0x860] sm:$0xff]
  %v3460 = vld [vmem:[%s7 + $0x868] sm:$0xff]
  %v3461 = vld [vmem:[%s7 + $0x870] sm:$0xff]
  %v3462 = vld [vmem:[%s7 + $0x878] sm:$0xff]
  %v3463 = vld [vmem:[%s7 + $0x880] sm:$0xff]
  %v3464 = vld [vmem:[%s7 + $0x888] sm:$0xff]
  %v3465 = vld [vmem:[%s7 + $0x890] sm:$0xff]
  %v3466 = vld [vmem:[%s7 + $0x898] sm:$0xff]
  %v3467 = vld [vmem:[%s7 + $0x8a0] sm:$0xff]
  %v3468 = vld [vmem:[%s7 + $0x8a8] sm:$0xff]
  %v3469 = vld [vmem:[%s7 + $0x8b0] sm:$0xff]
  %v3470 = vld [vmem:[%s7 + $0x8b8] sm:$0xff]
  %v3471 = vld [vmem:[%s7 + $0x8c0] sm:$0xff]
  %v3472 = vld [vmem:[%s7 + $0x8c8] sm:$0xff]
  %v3473 = vld [vmem:[%s7 + $0x8d0] sm:$0xff]
  %v3474 = vld [vmem:[%s7 + $0x8d8] sm:$0xff]
  %v3475 = vld [vmem:[%s7 + $0x8e0] sm:$0xff]
  %v3476 = vld [vmem:[%s7 + $0x8e8] sm:$0xff]
  %v3477 = vld [vmem:[%s7 + $0x8f0] sm:$0xff]
  %v3478 = vld [vmem:[%s7 + $0x8f8] sm:$0xff]
  %v3479 = vld [vmem:[%s7 + $0x900] sm:$0xff]
  %v3480 = vld [vmem:[%s7 + $0x908] sm:$0xff]
  %v3481 = vld [vmem:[%s7 + $0x910] sm:$0xff]
  %v3482 = vld [vmem:[%s7 + $0x918] sm:$0xff]
  %v3483 = vld [vmem:[%s7 + $0x920] sm:$0xff]
  %v3484 = vld [vmem:[%s7 + $0x928] sm:$0xff]
  %v3485 = vld [vmem:[%s7 + $0x930] sm:$0xff]
  %v3486 = vld [vmem:[%s7 + $0x938] sm:$0xff]
  %v3487 = vld [vmem:[%s7 + $0x940] sm:$0xff]
  %v3488 = vld [vmem:[%s7 + $0x948] sm:$0xff]
  %v3489 = vld [vmem:[%s7 + $0x950] sm:$0xff]
  %v3490 = vld [vmem:[%s7 + $0x958] sm:$0xff]
  %v3491 = vld [vmem:[%s7 + $0x960] sm:$0xff]
  %v3492 = vld [vmem:[%s7 + $0x968] sm:$0xff]
  %v3493 = vld [vmem:[%s7 + $0x970] sm:$0xff]
  %v3494 = vld [vmem:[%s7 + $0x978] sm:$0xff]
  %v3495 = vld [vmem:[%s7 + $0x980] sm:$0xff]
  %v3496 = vld [vmem:[%s7 + $0x988] sm:$0xff]
  %v3497 = vld [vmem:[%s7 + $0x990] sm:$0xff]
  %v3498 = vld [vmem:[%s7 + $0x998] sm:$0xff]
  %v3499 = vld [vmem:[%s7 + $0x9a0] sm:$0xff]
  %v3500 = vld [vmem:[%s7 + $0x9a8] sm:$0xff]
  %v3501 = vld [vmem:[%s7 + $0x9b0] sm:$0xff]
  %v3502 = vld [vmem:[%s7 + $0x9b8] sm:$0xff]
  %v3503 = vld [vmem:[%s7 + $0x9c0] sm:$0xff]
  %v3504 = vld [vmem:[%s7 + $0x9c8] sm:$0xff]
  %v3505 = vld [vmem:[%s7 + $0x9d0] sm:$0xff]
  %v3506 = vld [vmem:[%s7 + $0x9d8] sm:$0xff]
  %v3507 = vld [vmem:[%s7 + $0x9e0] sm:$0xff]
  %v3508 = vld [vmem:[%s7 + $0x9e8] sm:$0xff]
  %v3509 = vld [vmem:[%s7 + $0x9f0] sm:$0xff]
  %v3510 = vld [vmem:[%s7 + $0x9f8] sm:$0xff]
  %v3511 = vld [vmem:[%s7 + $0xa00] sm:$0xff]
  %v3512 = vld [vmem:[%s7 + $0xa08] sm:$0xff]
  %v3513 = vld [vmem:[%s7 + $0xa10] sm:$0xff]
  %v3514 = vld [vmem:[%s7 + $0xa18] sm:$0xff]
  %v3515 = vld [vmem:[%s7 + $0xa20] sm:$0xff]
  %v3516 = vld [vmem:[%s7 + $0xa28] sm:$0xff]
  %v3517 = vld [vmem:[%s7 + $0xa30] sm:$0xff]
  %v3518 = vld [vmem:[%s7 + $0xa38] sm:$0xff]
  %v3519 = vld [vmem:[%s7 + $0xa40] sm:$0xff]
  %v3520 = vld [vmem:[%s7 + $0xa48] sm:$0xff]
  %v3521 = vld [vmem:[%s7 + $0xa50] sm:$0xff]
  %v3522 = vld [vmem:[%s7 + $0xa58] sm:$0xff]
  %v3523 = vld [vmem:[%s7 + $0xa60] sm:$0xff]
  %v3524 = vld [vmem:[%s7 + $0xa68] sm:$0xff]
  %v3525 = vld [vmem:[%s7 + $0xa70] sm:$0xff]
  %v3526 = vld [vmem:[%s7 + $0xa78] sm:$0xff]
  %v3527 = vld [vmem:[%s7 + $0xa80] sm:$0xff]
  %v3528 = vld [vmem:[%s7 + $0xa88] sm:$0xff]
  %v3529 = vld [vmem:[%s7 + $0xa90] sm:$0xff]
  %v3530 = vld [vmem:[%s7 + $0xa98] sm:$0xff]
  %v3531 = vld [vmem:[%s7 + $0xaa0] sm:$0xff]
  %v3532 = vld [vmem:[%s7 + $0xaa8] sm:$0xff]
  %v3533 = vld [vmem:[%s7 + $0xab0] sm:$0xff]
  %v3534 = vld [vmem:[%s7 + $0xab8] sm:$0xff]
  %v3535 = vld [vmem:[%s7 + $0xac0] sm:$0xff]
  %v3536 = vld [vmem:[%s7 + $0xac8] sm:$0xff]
  %v3537 = vld [vmem:[%s7 + $0xad0] sm:$0xff]
  %v3538 = vld [vmem:[%s7 + $0xad8] sm:$0xff]
  %v3539 = vld [vmem:[%s7 + $0xae0] sm:$0xff]
  %v3540 = vld [vmem:[%s7 + $0xae8] sm:$0xff]
  %v3541 = vld [vmem:[%s7 + $0xaf0] sm:$0xff]
  %v3542 = vld [vmem:[%s7 + $0xaf8] sm:$0xff]
  %v3543 = vld [vmem:[%s7 + $0xb00] sm:$0xff]
  %v3544 = vld [vmem:[%s7 + $0xb08] sm:$0xff]
  %v3545 = vld [vmem:[%s7 + $0xb10] sm:$0xff]
  %v3546 = vld [vmem:[%s7 + $0xb18] sm:$0xff]
  %v3547 = vld [vmem:[%s7 + $0xb20] sm:$0xff]
  %v3548 = vld [vmem:[%s7 + $0xb28] sm:$0xff]
  %v3549 = vld [vmem:[%s7 + $0xb30] sm:$0xff]
  %v3550 = vld [vmem:[%s7 + $0xb38] sm:$0xff]
  %v3551 = vld [vmem:[%s7 + $0xb40] sm:$0xff]
  %v3552 = vld [vmem:[%s7 + $0xb48] sm:$0xff]
  %v3553 = vld [vmem:[%s7 + $0xb50] sm:$0xff]
  %v3554 = vld [vmem:[%s7 + $0xb58] sm:$0xff]
  %v3555 = vld [vmem:[%s7 + $0xb60] sm:$0xff]
  %v3556 = vld [vmem:[%s7 + $0xb68] sm:$0xff]
  %v3557 = vld [vmem:[%s7 + $0xb70] sm:$0xff]
  %v3558 = vld [vmem:[%s7 + $0xb78] sm:$0xff]
  %v3559 = vld [vmem:[%s7 + $0xb80] sm:$0xff]
  %v3560 = vld [vmem:[%s7 + $0xb88] sm:$0xff]
  %v3561 = vld [vmem:[%s7 + $0xb90] sm:$0xff]
  %v3562 = vld [vmem:[%s7 + $0xb98] sm:$0xff]
  %v3563 = vld [vmem:[%s7 + $0xba0] sm:$0xff]
  %v3564 = vld [vmem:[%s7 + $0xba8] sm:$0xff]
  %v3565 = vld [vmem:[%s7 + $0xbb0] sm:$0xff]
  %v3566 = vld [vmem:[%s7 + $0xbb8] sm:$0xff]
  %v3567 = vld [vmem:[%s7 + $0xbc0] sm:$0xff]
  %v3568 = vld [vmem:[%s7 + $0xbc8] sm:$0xff]
  %v3569 = vld [vmem:[%s7 + $0xbd0] sm:$0xff]
  %v3570 = vld [vmem:[%s7 + $0xbd8] sm:$0xff]
  %v3571 = vld [vmem:[%s7 + $0xbe0] sm:$0xff]
  %v3572 = vld [vmem:[%s7 + $0xbe8] sm:$0xff]
  %v3573 = vld [vmem:[%s7 + $0xbf0] sm:$0xff]
  %v3574 = vld [vmem:[%s7 + $0xbf8] sm:$0xff]
  %v3575 = vld [vmem:[%s7 + $0xc00] sm:$0xff]
  %v3576 = vld [vmem:[%s7 + $0xc08] sm:$0xff]
  %v3577 = vld [vmem:[%s7 + $0xc10] sm:$0xff]
  %v3578 = vld [vmem:[%s7 + $0xc18] sm:$0xff]
  %v3579 = vld [vmem:[%s7 + $0xc20] sm:$0xff]
  %v3580 = vld [vmem:[%s7 + $0xc28] sm:$0xff]
  %v3581 = vld [vmem:[%s7 + $0xc30] sm:$0xff]
  %v3582 = vld [vmem:[%s7 + $0xc38] sm:$0xff]
  %v3583 = vld [vmem:[%s7 + $0xc40] sm:$0xff]
  %v3584 = vld [vmem:[%s7 + $0xc48] sm:$0xff]
  %v3585 = vld [vmem:[%s7 + $0xc50] sm:$0xff]
  %v3586 = vld [vmem:[%s7 + $0xc58] sm:$0xff]
  %v3587 = vld [vmem:[%s7 + $0xc60] sm:$0xff]
  %v3588 = vld [vmem:[%s7 + $0xc68] sm:$0xff]
  %v3589 = vld [vmem:[%s7 + $0xc70] sm:$0xff]
  %v3590 = vld [vmem:[%s7 + $0xc78] sm:$0xff]
  %v3591 = vld [vmem:[%s7 + $0xc80] sm:$0xff]
  %v3592 = vld [vmem:[%s7 + $0xc88] sm:$0xff]
  %v3593 = vld [vmem:[%s7 + $0xc90] sm:$0xff]
  %v3594 = vld [vmem:[%s7 + $0xc98] sm:$0xff]
  %v3595 = vld [vmem:[%s7 + $0xca0] sm:$0xff]
  %v3596 = vld [vmem:[%s7 + $0xca8] sm:$0xff]
  %v3597 = vld [vmem:[%s7 + $0xcb0] sm:$0xff]
  %v3598 = vld [vmem:[%s7 + $0xcb8] sm:$0xff]
  %v3599 = vld [vmem:[%s7 + $0xcc0] sm:$0xff]
  %v3600 = vld [vmem:[%s7 + $0xcc8] sm:$0xff]
  %v3601 = vld [vmem:[%s7 + $0xcd0] sm:$0xff]
  %v3602 = vld [vmem:[%s7 + $0xcd8] sm:$0xff]
  %v3603 = vld [vmem:[%s7 + $0xce0] sm:$0xff]
  %v3604 = vld [vmem:[%s7 + $0xce8] sm:$0xff]
  %v3605 = vld [vmem:[%s7 + $0xcf0] sm:$0xff]
  %v3606 = vld [vmem:[%s7 + $0xcf8] sm:$0xff]
  %v3607 = vld [vmem:[%s7 + $0xd00] sm:$0xff]
  %v3608 = vld [vmem:[%s7 + $0xd08] sm:$0xff]
  %v3609 = vld [vmem:[%s7 + $0xd10] sm:$0xff]
  %v3610 = vld [vmem:[%s7 + $0xd18] sm:$0xff]
  %v3611 = vld [vmem:[%s7 + $0xd20] sm:$0xff]
  %v3612 = vld [vmem:[%s7 + $0xd28] sm:$0xff]
  %v3613 = vld [vmem:[%s7 + $0xd30] sm:$0xff]
  %v3614 = vld [vmem:[%s7 + $0xd38] sm:$0xff]
  %v3615 = vld [vmem:[%s7 + $0xd40] sm:$0xff]
  %v3616 = vld [vmem:[%s7 + $0xd48] sm:$0xff]
  %v3617 = vld [vmem:[%s7 + $0xd50] sm:$0xff]
  %v3618 = vld [vmem:[%s7 + $0xd58] sm:$0xff]
  %v3619 = vld [vmem:[%s7 + $0xd60] sm:$0xff]
  %v3620 = vld [vmem:[%s7 + $0xd68] sm:$0xff]
  %v3621 = vld [vmem:[%s7 + $0xd70] sm:$0xff]
  %v3622 = vld [vmem:[%s7 + $0xd78] sm:$0xff]
  %v3623 = vld [vmem:[%s7 + $0xd80] sm:$0xff]
  %v3624 = vld [vmem:[%s7 + $0xd88] sm:$0xff]
  %v3625 = vld [vmem:[%s7 + $0xd90] sm:$0xff]
  %v3626 = vld [vmem:[%s7 + $0xd98] sm:$0xff]
  %v3627 = vld [vmem:[%s7 + $0xda0] sm:$0xff]
  %v3628 = vld [vmem:[%s7 + $0xda8] sm:$0xff]
  %v3629 = vld [vmem:[%s7 + $0xdb0] sm:$0xff]
  %v3630 = vld [vmem:[%s7 + $0xdb8] sm:$0xff]
  %v3631 = vld [vmem:[%s7 + $0xdc0] sm:$0xff]
  %v3632 = vld [vmem:[%s7 + $0xdc8] sm:$0xff]
  %v3633 = vld [vmem:[%s7 + $0xdd0] sm:$0xff]
  %v3634 = vld [vmem:[%s7 + $0xdd8] sm:$0xff]
  %v3635 = vld [vmem:[%s7 + $0xde0] sm:$0xff]
  %v3636 = vld [vmem:[%s7 + $0xde8] sm:$0xff]
  %v3637 = vld [vmem:[%s7 + $0xdf0] sm:$0xff]
  %v3638 = vld [vmem:[%s7 + $0xdf8] sm:$0xff]
  %v3639 = vld [vmem:[%s7 + $0xe00] sm:$0xff]
  %v3640 = vld [vmem:[%s7 + $0xe08] sm:$0xff]
  %v3641 = vld [vmem:[%s7 + $0xe10] sm:$0xff]
  %v3642 = vld [vmem:[%s7 + $0xe18] sm:$0xff]
  %v3643 = vld [vmem:[%s7 + $0xe20] sm:$0xff]
  %v3644 = vld [vmem:[%s7 + $0xe28] sm:$0xff]
  %v3645 = vld [vmem:[%s7 + $0xe30] sm:$0xff]
  %v3646 = vld [vmem:[%s7 + $0xe38] sm:$0xff]
  %v3647 = vld [vmem:[%s7 + $0xe40] sm:$0xff]
  %v3648 = vld [vmem:[%s7 + $0xe48] sm:$0xff]
  %v3649 = vld [vmem:[%s7 + $0xe50] sm:$0xff]
  %v3650 = vld [vmem:[%s7 + $0xe58] sm:$0xff]
  %v3651 = vld [vmem:[%s7 + $0xe60] sm:$0xff]
  %v3652 = vld [vmem:[%s7 + $0xe68] sm:$0xff]
  %v3653 = vld [vmem:[%s7 + $0xe70] sm:$0xff]
  %v3654 = vld [vmem:[%s7 + $0xe78] sm:$0xff]
  %v3655 = vld [vmem:[%s7 + $0xe80] sm:$0xff]
  %v3656 = vld [vmem:[%s7 + $0xe88] sm:$0xff]
  %v3657 = vld [vmem:[%s7 + $0xe90] sm:$0xff]
  %v3658 = vld [vmem:[%s7 + $0xe98] sm:$0xff]
  %v3659 = vld [vmem:[%s7 + $0xea0] sm:$0xff]
  %v3660 = vld [vmem:[%s7 + $0xea8] sm:$0xff]
  %v3661 = vld [vmem:[%s7 + $0xeb0] sm:$0xff]
  %v3662 = vld [vmem:[%s7 + $0xeb8] sm:$0xff]
  %v3663 = vld [vmem:[%s7 + $0xec0] sm:$0xff]
  %v3664 = vld [vmem:[%s7 + $0xec8] sm:$0xff]
  %v3665 = vld [vmem:[%s7 + $0xed0] sm:$0xff]
  %v3666 = vld [vmem:[%s7 + $0xed8] sm:$0xff]
  %v3667 = vld [vmem:[%s7 + $0xee0] sm:$0xff]
  %v3668 = vld [vmem:[%s7 + $0xee8] sm:$0xff]
  %v3669 = vld [vmem:[%s7 + $0xef0] sm:$0xff]
  %v3670 = vld [vmem:[%s7 + $0xef8] sm:$0xff]
  %v3671 = vld [vmem:[%s7 + $0xf00] sm:$0xff]
  %v3672 = vld [vmem:[%s7 + $0xf08] sm:$0xff]
  %v3673 = vld [vmem:[%s7 + $0xf10] sm:$0xff]
  %v3674 = vld [vmem:[%s7 + $0xf18] sm:$0xff]
  %v3675 = vld [vmem:[%s7 + $0xf20] sm:$0xff]
  %v3676 = vld [vmem:[%s7 + $0xf28] sm:$0xff]
  %v3677 = vld [vmem:[%s7 + $0xf30] sm:$0xff]
  %v3678 = vld [vmem:[%s7 + $0xf38] sm:$0xff]
  %v3679 = vld [vmem:[%s7 + $0xf40] sm:$0xff]
  %v3680 = vld [vmem:[%s7 + $0xf48] sm:$0xff]
  %v3681 = vld [vmem:[%s7 + $0xf50] sm:$0xff]
  %v3682 = vld [vmem:[%s7 + $0xf58] sm:$0xff]
  %v3683 = vld [vmem:[%s7 + $0xf60] sm:$0xff]
  %v3684 = vld [vmem:[%s7 + $0xf68] sm:$0xff]
  %v3685 = vld [vmem:[%s7 + $0xf70] sm:$0xff]
  %v3686 = vld [vmem:[%s7 + $0xf78] sm:$0xff]
  %v3687 = vld [vmem:[%s7 + $0xf80] sm:$0xff]
  %v3688 = vld [vmem:[%s7 + $0xf88] sm:$0xff]
  %v3689 = vld [vmem:[%s7 + $0xf90] sm:$0xff]
  %v3690 = vld [vmem:[%s7 + $0xf98] sm:$0xff]
  %v3691 = vld [vmem:[%s7 + $0xfa0] sm:$0xff]
  %v3692 = vld [vmem:[%s7 + $0xfa8] sm:$0xff]
  %v3693 = vld [vmem:[%s7 + $0xfb0] sm:$0xff]
  %v3694 = vld [vmem:[%s7 + $0xfb8] sm:$0xff]
  %v3695 = vld [vmem:[%s7 + $0xfc0] sm:$0xff]
  %v3696 = vld [vmem:[%s7 + $0xfc8] sm:$0xff]
  %v3697 = vld [vmem:[%s7 + $0xfd0] sm:$0xff]
  %v3698 = vld [vmem:[%s7 + $0xfd8] sm:$0xff]
  %v3699 = vld [vmem:[%s7 + $0xfe0] sm:$0xff]
  %v3700 = vld [vmem:[%s7 + $0xfe8] sm:$0xff]
  %v3701 = vld [vmem:[%s7 + $0xff0] sm:$0xff]
  %v3702 = vld [vmem:[%s7 + $0xff8] sm:$0xff]
  %v3703 = vld [vmem:[%s8] sm:$0xff]
  %v3705 = vlaneseq
  %v3706 = vshrl.u32 %v3705, 7
  %v3707 = vsub.s32 0, %v3706
  %v3708 = vrot.slane %v3703, %v3707
  %v3709 = vlaneseq
  %v3710 = vshrl.u32 %v3709, 7
  %v3711 = vsub.s32 1, %v3710
  %v3712 = vrot.slane %v3703, %v3711
  %v3713 = vlaneseq
  %v3714 = vshrl.u32 %v3713, 7
  %v3715 = vsub.s32 2, %v3714
  %v3716 = vrot.slane %v3703, %v3715
  %v3717 = vlaneseq
  %v3718 = vshrl.u32 %v3717, 7
  %v3719 = vsub.s32 3, %v3718
  %v3720 = vrot.slane %v3703, %v3719
  %v3721 = vlaneseq
  %v3722 = vshrl.u32 %v3721, 7
  %v3723 = vsub.s32 4, %v3722
  %v3724 = vrot.slane %v3703, %v3723
  %v3725 = vlaneseq
  %v3726 = vshrl.u32 %v3725, 7
  %v3727 = vsub.s32 5, %v3726
  %v3728 = vrot.slane %v3703, %v3727
  %v3729 = vlaneseq
  %v3730 = vshrl.u32 %v3729, 7
  %v3731 = vsub.s32 6, %v3730
  %v3732 = vrot.slane %v3703, %v3731
  %v3733 = vlaneseq
  %v3734 = vshrl.u32 %v3733, 7
  %v3735 = vsub.s32 7, %v3734
  %v3736 = vrot.slane %v3703, %v3735
  %v4257 = vunpack.c.l.b16 %v3191
  %v4258 = vunpack.c.h.b16 %v3191
  %v4259 = vunpack.c.l.b16 %v3192
  %v4260 = vunpack.c.h.b16 %v3192
  %v4261 = vunpack.c.l.b16 %v3193
  %v4262 = vunpack.c.h.b16 %v3193
  %v4263 = vunpack.c.l.b16 %v3194
  %v4264 = vunpack.c.h.b16 %v3194
  %v4265 = vunpack.c.l.b16 %v3195
  %v4266 = vunpack.c.h.b16 %v3195
  %v4267 = vunpack.c.l.b16 %v3196
  %v4268 = vunpack.c.h.b16 %v3196
  %v4269 = vunpack.c.l.b16 %v3197
  %v4270 = vunpack.c.h.b16 %v3197
  %v4271 = vunpack.c.l.b16 %v3198
  %v4272 = vunpack.c.h.b16 %v3198
  %v4273 = vunpack.c.l.b16 %v3199
  %v4274 = vunpack.c.h.b16 %v3199
  %v4275 = vunpack.c.l.b16 %v3200
  %v4276 = vunpack.c.h.b16 %v3200
  %v4277 = vunpack.c.l.b16 %v3201
  %v4278 = vunpack.c.h.b16 %v3201
  %v4279 = vunpack.c.l.b16 %v3202
  %v4280 = vunpack.c.h.b16 %v3202
  %v4281 = vunpack.c.l.b16 %v3203
  %v4282 = vunpack.c.h.b16 %v3203
  %v4283 = vunpack.c.l.b16 %v3204
  %v4284 = vunpack.c.h.b16 %v3204
  %v4285 = vunpack.c.l.b16 %v3205
  %v4286 = vunpack.c.h.b16 %v3205
  %v4287 = vunpack.c.l.b16 %v3206
  %v4288 = vunpack.c.h.b16 %v3206
  %v4289 = vunpack.c.l.b16 %v3207
  %v4290 = vunpack.c.h.b16 %v3207
  %v4291 = vunpack.c.l.b16 %v3208
  %v4292 = vunpack.c.h.b16 %v3208
  %v4293 = vunpack.c.l.b16 %v3209
  %v4294 = vunpack.c.h.b16 %v3209
  %v4295 = vunpack.c.l.b16 %v3210
  %v4296 = vunpack.c.h.b16 %v3210
  %v4297 = vunpack.c.l.b16 %v3211
  %v4298 = vunpack.c.h.b16 %v3211
  %v4299 = vunpack.c.l.b16 %v3212
  %v4300 = vunpack.c.h.b16 %v3212
  %v4301 = vunpack.c.l.b16 %v3213
  %v4302 = vunpack.c.h.b16 %v3213
  %v4303 = vunpack.c.l.b16 %v3214
  %v4304 = vunpack.c.h.b16 %v3214
  %v4305 = vunpack.c.l.b16 %v3215
  %v4306 = vunpack.c.h.b16 %v3215
  %v4307 = vunpack.c.l.b16 %v3216
  %v4308 = vunpack.c.h.b16 %v3216
  %v4309 = vunpack.c.l.b16 %v3217
  %v4310 = vunpack.c.h.b16 %v3217
  %v4311 = vunpack.c.l.b16 %v3218
  %v4312 = vunpack.c.h.b16 %v3218
  %v4313 = vunpack.c.l.b16 %v3219
  %v4314 = vunpack.c.h.b16 %v3219
  %v4315 = vunpack.c.l.b16 %v3220
  %v4316 = vunpack.c.h.b16 %v3220
  %v4317 = vunpack.c.l.b16 %v3221
  %v4318 = vunpack.c.h.b16 %v3221
  %v4319 = vunpack.c.l.b16 %v3222
  %v4320 = vunpack.c.h.b16 %v3222
  %v4321 = vunpack.c.l.b16 %v3223
  %v4322 = vunpack.c.h.b16 %v3223
  %v4323 = vunpack.c.l.b16 %v3224
  %v4324 = vunpack.c.h.b16 %v3224
  %v4325 = vunpack.c.l.b16 %v3225
  %v4326 = vunpack.c.h.b16 %v3225
  %v4327 = vunpack.c.l.b16 %v3226
  %v4328 = vunpack.c.h.b16 %v3226
  %v4329 = vunpack.c.l.b16 %v3227
  %v4330 = vunpack.c.h.b16 %v3227
  %v4331 = vunpack.c.l.b16 %v3228
  %v4332 = vunpack.c.h.b16 %v3228
  %v4333 = vunpack.c.l.b16 %v3229
  %v4334 = vunpack.c.h.b16 %v3229
  %v4335 = vunpack.c.l.b16 %v3230
  %v4336 = vunpack.c.h.b16 %v3230
  %v4337 = vunpack.c.l.b16 %v3231
  %v4338 = vunpack.c.h.b16 %v3231
  %v4339 = vunpack.c.l.b16 %v3232
  %v4340 = vunpack.c.h.b16 %v3232
  %v4341 = vunpack.c.l.b16 %v3233
  %v4342 = vunpack.c.h.b16 %v3233
  %v4343 = vunpack.c.l.b16 %v3234
  %v4344 = vunpack.c.h.b16 %v3234
  %v4345 = vunpack.c.l.b16 %v3235
  %v4346 = vunpack.c.h.b16 %v3235
  %v4347 = vunpack.c.l.b16 %v3236
  %v4348 = vunpack.c.h.b16 %v3236
  %v4349 = vunpack.c.l.b16 %v3237
  %v4350 = vunpack.c.h.b16 %v3237
  %v4351 = vunpack.c.l.b16 %v3238
  %v4352 = vunpack.c.h.b16 %v3238
  %v4353 = vunpack.c.l.b16 %v3239
  %v4354 = vunpack.c.h.b16 %v3239
  %v4355 = vunpack.c.l.b16 %v3240
  %v4356 = vunpack.c.h.b16 %v3240
  %v4357 = vunpack.c.l.b16 %v3241
  %v4358 = vunpack.c.h.b16 %v3241
  %v4359 = vunpack.c.l.b16 %v3242
  %v4360 = vunpack.c.h.b16 %v3242
  %v4361 = vunpack.c.l.b16 %v3243
  %v4362 = vunpack.c.h.b16 %v3243
  %v4363 = vunpack.c.l.b16 %v3244
  %v4364 = vunpack.c.h.b16 %v3244
  %v4365 = vunpack.c.l.b16 %v3245
  %v4366 = vunpack.c.h.b16 %v3245
  %v4367 = vunpack.c.l.b16 %v3246
  %v4368 = vunpack.c.h.b16 %v3246
  %v4369 = vunpack.c.l.b16 %v3247
  %v4370 = vunpack.c.h.b16 %v3247
  %v4371 = vunpack.c.l.b16 %v3248
  %v4372 = vunpack.c.h.b16 %v3248
  %v4373 = vunpack.c.l.b16 %v3249
  %v4374 = vunpack.c.h.b16 %v3249
  %v4375 = vunpack.c.l.b16 %v3250
  %v4376 = vunpack.c.h.b16 %v3250
  %v4377 = vunpack.c.l.b16 %v3251
  %v4378 = vunpack.c.h.b16 %v3251
  %v4379 = vunpack.c.l.b16 %v3252
  %v4380 = vunpack.c.h.b16 %v3252
  %v4381 = vunpack.c.l.b16 %v3253
  %v4382 = vunpack.c.h.b16 %v3253
  %v4383 = vunpack.c.l.b16 %v3254
  %v4384 = vunpack.c.h.b16 %v3254
  %v4385 = vunpack.c.l.b16 %v3255
  %v4386 = vunpack.c.h.b16 %v3255
  %v4387 = vunpack.c.l.b16 %v3256
  %v4388 = vunpack.c.h.b16 %v3256
  %v4389 = vunpack.c.l.b16 %v3257
  %v4390 = vunpack.c.h.b16 %v3257
  %v4391 = vunpack.c.l.b16 %v3258
  %v4392 = vunpack.c.h.b16 %v3258
  %v4393 = vunpack.c.l.b16 %v3259
  %v4394 = vunpack.c.h.b16 %v3259
  %v4395 = vunpack.c.l.b16 %v3260
  %v4396 = vunpack.c.h.b16 %v3260
  %v4397 = vunpack.c.l.b16 %v3261
  %v4398 = vunpack.c.h.b16 %v3261
  %v4399 = vunpack.c.l.b16 %v3262
  %v4400 = vunpack.c.h.b16 %v3262
  %v4401 = vunpack.c.l.b16 %v3263
  %v4402 = vunpack.c.h.b16 %v3263
  %v4403 = vunpack.c.l.b16 %v3264
  %v4404 = vunpack.c.h.b16 %v3264
  %v4405 = vunpack.c.l.b16 %v3265
  %v4406 = vunpack.c.h.b16 %v3265
  %v4407 = vunpack.c.l.b16 %v3266
  %v4408 = vunpack.c.h.b16 %v3266
  %v4409 = vunpack.c.l.b16 %v3267
  %v4410 = vunpack.c.h.b16 %v3267
  %v4411 = vunpack.c.l.b16 %v3268
  %v4412 = vunpack.c.h.b16 %v3268
  %v4413 = vunpack.c.l.b16 %v3269
  %v4414 = vunpack.c.h.b16 %v3269
  %v4415 = vunpack.c.l.b16 %v3270
  %v4416 = vunpack.c.h.b16 %v3270
  %v4417 = vunpack.c.l.b16 %v3271
  %v4418 = vunpack.c.h.b16 %v3271
  %v4419 = vunpack.c.l.b16 %v3272
  %v4420 = vunpack.c.h.b16 %v3272
  %v4421 = vunpack.c.l.b16 %v3273
  %v4422 = vunpack.c.h.b16 %v3273
  %v4423 = vunpack.c.l.b16 %v3274
  %v4424 = vunpack.c.h.b16 %v3274
  %v4425 = vunpack.c.l.b16 %v3275
  %v4426 = vunpack.c.h.b16 %v3275
  %v4427 = vunpack.c.l.b16 %v3276
  %v4428 = vunpack.c.h.b16 %v3276
  %v4429 = vunpack.c.l.b16 %v3277
  %v4430 = vunpack.c.h.b16 %v3277
  %v4431 = vunpack.c.l.b16 %v3278
  %v4432 = vunpack.c.h.b16 %v3278
  %v4433 = vunpack.c.l.b16 %v3279
  %v4434 = vunpack.c.h.b16 %v3279
  %v4435 = vunpack.c.l.b16 %v3280
  %v4436 = vunpack.c.h.b16 %v3280
  %v4437 = vunpack.c.l.b16 %v3281
  %v4438 = vunpack.c.h.b16 %v3281
  %v4439 = vunpack.c.l.b16 %v3282
  %v4440 = vunpack.c.h.b16 %v3282
  %v4441 = vunpack.c.l.b16 %v3283
  %v4442 = vunpack.c.h.b16 %v3283
  %v4443 = vunpack.c.l.b16 %v3284
  %v4444 = vunpack.c.h.b16 %v3284
  %v4445 = vunpack.c.l.b16 %v3285
  %v4446 = vunpack.c.h.b16 %v3285
  %v4447 = vunpack.c.l.b16 %v3286
  %v4448 = vunpack.c.h.b16 %v3286
  %v4449 = vunpack.c.l.b16 %v3287
  %v4450 = vunpack.c.h.b16 %v3287
  %v4451 = vunpack.c.l.b16 %v3288
  %v4452 = vunpack.c.h.b16 %v3288
  %v4453 = vunpack.c.l.b16 %v3289
  %v4454 = vunpack.c.h.b16 %v3289
  %v4455 = vunpack.c.l.b16 %v3290
  %v4456 = vunpack.c.h.b16 %v3290
  %v4457 = vunpack.c.l.b16 %v3291
  %v4458 = vunpack.c.h.b16 %v3291
  %v4459 = vunpack.c.l.b16 %v3292
  %v4460 = vunpack.c.h.b16 %v3292
  %v4461 = vunpack.c.l.b16 %v3293
  %v4462 = vunpack.c.h.b16 %v3293
  %v4463 = vunpack.c.l.b16 %v3294
  %v4464 = vunpack.c.h.b16 %v3294
  %v4465 = vunpack.c.l.b16 %v3295
  %v4466 = vunpack.c.h.b16 %v3295
  %v4467 = vunpack.c.l.b16 %v3296
  %v4468 = vunpack.c.h.b16 %v3296
  %v4469 = vunpack.c.l.b16 %v3297
  %v4470 = vunpack.c.h.b16 %v3297
  %v4471 = vunpack.c.l.b16 %v3298
  %v4472 = vunpack.c.h.b16 %v3298
  %v4473 = vunpack.c.l.b16 %v3299
  %v4474 = vunpack.c.h.b16 %v3299
  %v4475 = vunpack.c.l.b16 %v3300
  %v4476 = vunpack.c.h.b16 %v3300
  %v4477 = vunpack.c.l.b16 %v3301
  %v4478 = vunpack.c.h.b16 %v3301
  %v4479 = vunpack.c.l.b16 %v3302
  %v4480 = vunpack.c.h.b16 %v3302
  %v4481 = vunpack.c.l.b16 %v3303
  %v4482 = vunpack.c.h.b16 %v3303
  %v4483 = vunpack.c.l.b16 %v3304
  %v4484 = vunpack.c.h.b16 %v3304
  %v4485 = vunpack.c.l.b16 %v3305
  %v4486 = vunpack.c.h.b16 %v3305
  %v4487 = vunpack.c.l.b16 %v3306
  %v4488 = vunpack.c.h.b16 %v3306
  %v4489 = vunpack.c.l.b16 %v3307
  %v4490 = vunpack.c.h.b16 %v3307
  %v4491 = vunpack.c.l.b16 %v3308
  %v4492 = vunpack.c.h.b16 %v3308
  %v4493 = vunpack.c.l.b16 %v3309
  %v4494 = vunpack.c.h.b16 %v3309
  %v4495 = vunpack.c.l.b16 %v3310
  %v4496 = vunpack.c.h.b16 %v3310
  %v4497 = vunpack.c.l.b16 %v3311
  %v4498 = vunpack.c.h.b16 %v3311
  %v4499 = vunpack.c.l.b16 %v3312
  %v4500 = vunpack.c.h.b16 %v3312
  %v4501 = vunpack.c.l.b16 %v3313
  %v4502 = vunpack.c.h.b16 %v3313
  %v4503 = vunpack.c.l.b16 %v3314
  %v4504 = vunpack.c.h.b16 %v3314
  %v4505 = vunpack.c.l.b16 %v3315
  %v4506 = vunpack.c.h.b16 %v3315
  %v4507 = vunpack.c.l.b16 %v3316
  %v4508 = vunpack.c.h.b16 %v3316
  %v4509 = vunpack.c.l.b16 %v3317
  %v4510 = vunpack.c.h.b16 %v3317
  %v4511 = vunpack.c.l.b16 %v3318
  %v4512 = vunpack.c.h.b16 %v3318
  %v4513 = vunpack.c.l.b16 %v3319
  %v4514 = vunpack.c.h.b16 %v3319
  %v4515 = vunpack.c.l.b16 %v3320
  %v4516 = vunpack.c.h.b16 %v3320
  %v4517 = vunpack.c.l.b16 %v3321
  %v4518 = vunpack.c.h.b16 %v3321
  %v4519 = vunpack.c.l.b16 %v3322
  %v4520 = vunpack.c.h.b16 %v3322
  %v4521 = vunpack.c.l.b16 %v3323
  %v4522 = vunpack.c.h.b16 %v3323
  %v4523 = vunpack.c.l.b16 %v3324
  %v4524 = vunpack.c.h.b16 %v3324
  %v4525 = vunpack.c.l.b16 %v3325
  %v4526 = vunpack.c.h.b16 %v3325
  %v4527 = vunpack.c.l.b16 %v3326
  %v4528 = vunpack.c.h.b16 %v3326
  %v4529 = vunpack.c.l.b16 %v3327
  %v4530 = vunpack.c.h.b16 %v3327
  %v4531 = vunpack.c.l.b16 %v3328
  %v4532 = vunpack.c.h.b16 %v3328
  %v4533 = vunpack.c.l.b16 %v3329
  %v4534 = vunpack.c.h.b16 %v3329
  %v4535 = vunpack.c.l.b16 %v3330
  %v4536 = vunpack.c.h.b16 %v3330
  %v4537 = vunpack.c.l.b16 %v3331
  %v4538 = vunpack.c.h.b16 %v3331
  %v4539 = vunpack.c.l.b16 %v3332
  %v4540 = vunpack.c.h.b16 %v3332
  %v4541 = vunpack.c.l.b16 %v3333
  %v4542 = vunpack.c.h.b16 %v3333
  %v4543 = vunpack.c.l.b16 %v3334
  %v4544 = vunpack.c.h.b16 %v3334
  %v4545 = vunpack.c.l.b16 %v3335
  %v4546 = vunpack.c.h.b16 %v3335
  %v4547 = vunpack.c.l.b16 %v3336
  %v4548 = vunpack.c.h.b16 %v3336
  %v4549 = vunpack.c.l.b16 %v3337
  %v4550 = vunpack.c.h.b16 %v3337
  %v4551 = vunpack.c.l.b16 %v3338
  %v4552 = vunpack.c.h.b16 %v3338
  %v4553 = vunpack.c.l.b16 %v3339
  %v4554 = vunpack.c.h.b16 %v3339
  %v4555 = vunpack.c.l.b16 %v3340
  %v4556 = vunpack.c.h.b16 %v3340
  %v4557 = vunpack.c.l.b16 %v3341
  %v4558 = vunpack.c.h.b16 %v3341
  %v4559 = vunpack.c.l.b16 %v3342
  %v4560 = vunpack.c.h.b16 %v3342
  %v4561 = vunpack.c.l.b16 %v3343
  %v4562 = vunpack.c.h.b16 %v3343
  %v4563 = vunpack.c.l.b16 %v3344
  %v4564 = vunpack.c.h.b16 %v3344
  %v4565 = vunpack.c.l.b16 %v3345
  %v4566 = vunpack.c.h.b16 %v3345
  %v4567 = vunpack.c.l.b16 %v3346
  %v4568 = vunpack.c.h.b16 %v3346
  %v4569 = vunpack.c.l.b16 %v3347
  %v4570 = vunpack.c.h.b16 %v3347
  %v4571 = vunpack.c.l.b16 %v3348
  %v4572 = vunpack.c.h.b16 %v3348
  %v4573 = vunpack.c.l.b16 %v3349
  %v4574 = vunpack.c.h.b16 %v3349
  %v4575 = vunpack.c.l.b16 %v3350
  %v4576 = vunpack.c.h.b16 %v3350
  %v4577 = vunpack.c.l.b16 %v3351
  %v4578 = vunpack.c.h.b16 %v3351
  %v4579 = vunpack.c.l.b16 %v3352
  %v4580 = vunpack.c.h.b16 %v3352
  %v4581 = vunpack.c.l.b16 %v3353
  %v4582 = vunpack.c.h.b16 %v3353
  %v4583 = vunpack.c.l.b16 %v3354
  %v4584 = vunpack.c.h.b16 %v3354
  %v4585 = vunpack.c.l.b16 %v3355
  %v4586 = vunpack.c.h.b16 %v3355
  %v4587 = vunpack.c.l.b16 %v3356
  %v4588 = vunpack.c.h.b16 %v3356
  %v4589 = vunpack.c.l.b16 %v3357
  %v4590 = vunpack.c.h.b16 %v3357
  %v4591 = vunpack.c.l.b16 %v3358
  %v4592 = vunpack.c.h.b16 %v3358
  %v4593 = vunpack.c.l.b16 %v3359
  %v4594 = vunpack.c.h.b16 %v3359
  %v4595 = vunpack.c.l.b16 %v3360
  %v4596 = vunpack.c.h.b16 %v3360
  %v4597 = vunpack.c.l.b16 %v3361
  %v4598 = vunpack.c.h.b16 %v3361
  %v4599 = vunpack.c.l.b16 %v3362
  %v4600 = vunpack.c.h.b16 %v3362
  %v4601 = vunpack.c.l.b16 %v3363
  %v4602 = vunpack.c.h.b16 %v3363
  %v4603 = vunpack.c.l.b16 %v3364
  %v4604 = vunpack.c.h.b16 %v3364
  %v4605 = vunpack.c.l.b16 %v3365
  %v4606 = vunpack.c.h.b16 %v3365
  %v4607 = vunpack.c.l.b16 %v3366
  %v4608 = vunpack.c.h.b16 %v3366
  %v4609 = vunpack.c.l.b16 %v3367
  %v4610 = vunpack.c.h.b16 %v3367
  %v4611 = vunpack.c.l.b16 %v3368
  %v4612 = vunpack.c.h.b16 %v3368
  %v4613 = vunpack.c.l.b16 %v3369
  %v4614 = vunpack.c.h.b16 %v3369
  %v4615 = vunpack.c.l.b16 %v3370
  %v4616 = vunpack.c.h.b16 %v3370
  %v4617 = vunpack.c.l.b16 %v3371
  %v4618 = vunpack.c.h.b16 %v3371
  %v4619 = vunpack.c.l.b16 %v3372
  %v4620 = vunpack.c.h.b16 %v3372
  %v4621 = vunpack.c.l.b16 %v3373
  %v4622 = vunpack.c.h.b16 %v3373
  %v4623 = vunpack.c.l.b16 %v3374
  %v4624 = vunpack.c.h.b16 %v3374
  %v4625 = vunpack.c.l.b16 %v3375
  %v4626 = vunpack.c.h.b16 %v3375
  %v4627 = vunpack.c.l.b16 %v3376
  %v4628 = vunpack.c.h.b16 %v3376
  %v4629 = vunpack.c.l.b16 %v3377
  %v4630 = vunpack.c.h.b16 %v3377
  %v4631 = vunpack.c.l.b16 %v3378
  %v4632 = vunpack.c.h.b16 %v3378
  %v4633 = vunpack.c.l.b16 %v3379
  %v4634 = vunpack.c.h.b16 %v3379
  %v4635 = vunpack.c.l.b16 %v3380
  %v4636 = vunpack.c.h.b16 %v3380
  %v4637 = vunpack.c.l.b16 %v3381
  %v4638 = vunpack.c.h.b16 %v3381
  %v4639 = vunpack.c.l.b16 %v3382
  %v4640 = vunpack.c.h.b16 %v3382
  %v4641 = vunpack.c.l.b16 %v3383
  %v4642 = vunpack.c.h.b16 %v3383
  %v4643 = vunpack.c.l.b16 %v3384
  %v4644 = vunpack.c.h.b16 %v3384
  %v4645 = vunpack.c.l.b16 %v3385
  %v4646 = vunpack.c.h.b16 %v3385
  %v4647 = vunpack.c.l.b16 %v3386
  %v4648 = vunpack.c.h.b16 %v3386
  %v4649 = vunpack.c.l.b16 %v3387
  %v4650 = vunpack.c.h.b16 %v3387
  %v4651 = vunpack.c.l.b16 %v3388
  %v4652 = vunpack.c.h.b16 %v3388
  %v4653 = vunpack.c.l.b16 %v3389
  %v4654 = vunpack.c.h.b16 %v3389
  %v4655 = vunpack.c.l.b16 %v3390
  %v4656 = vunpack.c.h.b16 %v3390
  %v4657 = vunpack.c.l.b16 %v3391
  %v4658 = vunpack.c.h.b16 %v3391
  %v4659 = vunpack.c.l.b16 %v3392
  %v4660 = vunpack.c.h.b16 %v3392
  %v4661 = vunpack.c.l.b16 %v3393
  %v4662 = vunpack.c.h.b16 %v3393
  %v4663 = vunpack.c.l.b16 %v3394
  %v4664 = vunpack.c.h.b16 %v3394
  %v4665 = vunpack.c.l.b16 %v3395
  %v4666 = vunpack.c.h.b16 %v3395
  %v4667 = vunpack.c.l.b16 %v3396
  %v4668 = vunpack.c.h.b16 %v3396
  %v4669 = vunpack.c.l.b16 %v3397
  %v4670 = vunpack.c.h.b16 %v3397
  %v4671 = vunpack.c.l.b16 %v3398
  %v4672 = vunpack.c.h.b16 %v3398
  %v4673 = vunpack.c.l.b16 %v3399
  %v4674 = vunpack.c.h.b16 %v3399
  %v4675 = vunpack.c.l.b16 %v3400
  %v4676 = vunpack.c.h.b16 %v3400
  %v4677 = vunpack.c.l.b16 %v3401
  %v4678 = vunpack.c.h.b16 %v3401
  %v4679 = vunpack.c.l.b16 %v3402
  %v4680 = vunpack.c.h.b16 %v3402
  %v4681 = vunpack.c.l.b16 %v3403
  %v4682 = vunpack.c.h.b16 %v3403
  %v4683 = vunpack.c.l.b16 %v3404
  %v4684 = vunpack.c.h.b16 %v3404
  %v4685 = vunpack.c.l.b16 %v3405
  %v4686 = vunpack.c.h.b16 %v3405
  %v4687 = vunpack.c.l.b16 %v3406
  %v4688 = vunpack.c.h.b16 %v3406
  %v4689 = vunpack.c.l.b16 %v3407
  %v4690 = vunpack.c.h.b16 %v3407
  %v4691 = vunpack.c.l.b16 %v3408
  %v4692 = vunpack.c.h.b16 %v3408
  %v4693 = vunpack.c.l.b16 %v3409
  %v4694 = vunpack.c.h.b16 %v3409
  %v4695 = vunpack.c.l.b16 %v3410
  %v4696 = vunpack.c.h.b16 %v3410
  %v4697 = vunpack.c.l.b16 %v3411
  %v4698 = vunpack.c.h.b16 %v3411
  %v4699 = vunpack.c.l.b16 %v3412
  %v4700 = vunpack.c.h.b16 %v3412
  %v4701 = vunpack.c.l.b16 %v3413
  %v4702 = vunpack.c.h.b16 %v3413
  %v4703 = vunpack.c.l.b16 %v3414
  %v4704 = vunpack.c.h.b16 %v3414
  %v4705 = vunpack.c.l.b16 %v3415
  %v4706 = vunpack.c.h.b16 %v3415
  %v4707 = vunpack.c.l.b16 %v3416
  %v4708 = vunpack.c.h.b16 %v3416
  %v4709 = vunpack.c.l.b16 %v3417
  %v4710 = vunpack.c.h.b16 %v3417
  %v4711 = vunpack.c.l.b16 %v3418
  %v4712 = vunpack.c.h.b16 %v3418
  %v4713 = vunpack.c.l.b16 %v3419
  %v4714 = vunpack.c.h.b16 %v3419
  %v4715 = vunpack.c.l.b16 %v3420
  %v4716 = vunpack.c.h.b16 %v3420
  %v4717 = vunpack.c.l.b16 %v3421
  %v4718 = vunpack.c.h.b16 %v3421
  %v4719 = vunpack.c.l.b16 %v3422
  %v4720 = vunpack.c.h.b16 %v3422
  %v4721 = vunpack.c.l.b16 %v3423
  %v4722 = vunpack.c.h.b16 %v3423
  %v4723 = vunpack.c.l.b16 %v3424
  %v4724 = vunpack.c.h.b16 %v3424
  %v4725 = vunpack.c.l.b16 %v3425
  %v4726 = vunpack.c.h.b16 %v3425
  %v4727 = vunpack.c.l.b16 %v3426
  %v4728 = vunpack.c.h.b16 %v3426
  %v4729 = vunpack.c.l.b16 %v3427
  %v4730 = vunpack.c.h.b16 %v3427
  %v4731 = vunpack.c.l.b16 %v3428
  %v4732 = vunpack.c.h.b16 %v3428
  %v4733 = vunpack.c.l.b16 %v3429
  %v4734 = vunpack.c.h.b16 %v3429
  %v4735 = vunpack.c.l.b16 %v3430
  %v4736 = vunpack.c.h.b16 %v3430
  %v4737 = vunpack.c.l.b16 %v3431
  %v4738 = vunpack.c.h.b16 %v3431
  %v4739 = vunpack.c.l.b16 %v3432
  %v4740 = vunpack.c.h.b16 %v3432
  %v4741 = vunpack.c.l.b16 %v3433
  %v4742 = vunpack.c.h.b16 %v3433
  %v4743 = vunpack.c.l.b16 %v3434
  %v4744 = vunpack.c.h.b16 %v3434
  %v4745 = vunpack.c.l.b16 %v3435
  %v4746 = vunpack.c.h.b16 %v3435
  %v4747 = vunpack.c.l.b16 %v3436
  %v4748 = vunpack.c.h.b16 %v3436
  %v4749 = vunpack.c.l.b16 %v3437
  %v4750 = vunpack.c.h.b16 %v3437
  %v4751 = vunpack.c.l.b16 %v3438
  %v4752 = vunpack.c.h.b16 %v3438
  %v4753 = vunpack.c.l.b16 %v3439
  %v4754 = vunpack.c.h.b16 %v3439
  %v4755 = vunpack.c.l.b16 %v3440
  %v4756 = vunpack.c.h.b16 %v3440
  %v4757 = vunpack.c.l.b16 %v3441
  %v4758 = vunpack.c.h.b16 %v3441
  %v4759 = vunpack.c.l.b16 %v3442
  %v4760 = vunpack.c.h.b16 %v3442
  %v4761 = vunpack.c.l.b16 %v3443
  %v4762 = vunpack.c.h.b16 %v3443
  %v4763 = vunpack.c.l.b16 %v3444
  %v4764 = vunpack.c.h.b16 %v3444
  %v4765 = vunpack.c.l.b16 %v3445
  %v4766 = vunpack.c.h.b16 %v3445
  %v4767 = vunpack.c.l.b16 %v3446
  %v4768 = vunpack.c.h.b16 %v3446
  %v4769 = vunpack.c.l.b16 %v3447
  %v4770 = vunpack.c.h.b16 %v3447
  %v4771 = vunpack.c.l.b16 %v3448
  %v4772 = vunpack.c.h.b16 %v3448
  %v4773 = vunpack.c.l.b16 %v3449
  %v4774 = vunpack.c.h.b16 %v3449
  %v4775 = vunpack.c.l.b16 %v3450
  %v4776 = vunpack.c.h.b16 %v3450
  %v4777 = vunpack.c.l.b16 %v3451
  %v4778 = vunpack.c.h.b16 %v3451
  %v4779 = vunpack.c.l.b16 %v3452
  %v4780 = vunpack.c.h.b16 %v3452
  %v4781 = vunpack.c.l.b16 %v3453
  %v4782 = vunpack.c.h.b16 %v3453
  %v4783 = vunpack.c.l.b16 %v3454
  %v4784 = vunpack.c.h.b16 %v3454
  %v4785 = vunpack.c.l.b16 %v3455
  %v4786 = vunpack.c.h.b16 %v3455
  %v4787 = vunpack.c.l.b16 %v3456
  %v4788 = vunpack.c.h.b16 %v3456
  %v4789 = vunpack.c.l.b16 %v3457
  %v4790 = vunpack.c.h.b16 %v3457
  %v4791 = vunpack.c.l.b16 %v3458
  %v4792 = vunpack.c.h.b16 %v3458
  %v4793 = vunpack.c.l.b16 %v3459
  %v4794 = vunpack.c.h.b16 %v3459
  %v4795 = vunpack.c.l.b16 %v3460
  %v4796 = vunpack.c.h.b16 %v3460
  %v4797 = vunpack.c.l.b16 %v3461
  %v4798 = vunpack.c.h.b16 %v3461
  %v4799 = vunpack.c.l.b16 %v3462
  %v4800 = vunpack.c.h.b16 %v3462
  %v4801 = vunpack.c.l.b16 %v3463
  %v4802 = vunpack.c.h.b16 %v3463
  %v4803 = vunpack.c.l.b16 %v3464
  %v4804 = vunpack.c.h.b16 %v3464
  %v4805 = vunpack.c.l.b16 %v3465
  %v4806 = vunpack.c.h.b16 %v3465
  %v4807 = vunpack.c.l.b16 %v3466
  %v4808 = vunpack.c.h.b16 %v3466
  %v4809 = vunpack.c.l.b16 %v3467
  %v4810 = vunpack.c.h.b16 %v3467
  %v4811 = vunpack.c.l.b16 %v3468
  %v4812 = vunpack.c.h.b16 %v3468
  %v4813 = vunpack.c.l.b16 %v3469
  %v4814 = vunpack.c.h.b16 %v3469
  %v4815 = vunpack.c.l.b16 %v3470
  %v4816 = vunpack.c.h.b16 %v3470
  %v4817 = vunpack.c.l.b16 %v3471
  %v4818 = vunpack.c.h.b16 %v3471
  %v4819 = vunpack.c.l.b16 %v3472
  %v4820 = vunpack.c.h.b16 %v3472
  %v4821 = vunpack.c.l.b16 %v3473
  %v4822 = vunpack.c.h.b16 %v3473
  %v4823 = vunpack.c.l.b16 %v3474
  %v4824 = vunpack.c.h.b16 %v3474
  %v4825 = vunpack.c.l.b16 %v3475
  %v4826 = vunpack.c.h.b16 %v3475
  %v4827 = vunpack.c.l.b16 %v3476
  %v4828 = vunpack.c.h.b16 %v3476
  %v4829 = vunpack.c.l.b16 %v3477
  %v4830 = vunpack.c.h.b16 %v3477
  %v4831 = vunpack.c.l.b16 %v3478
  %v4832 = vunpack.c.h.b16 %v3478
  %v4833 = vunpack.c.l.b16 %v3479
  %v4834 = vunpack.c.h.b16 %v3479
  %v4835 = vunpack.c.l.b16 %v3480
  %v4836 = vunpack.c.h.b16 %v3480
  %v4837 = vunpack.c.l.b16 %v3481
  %v4838 = vunpack.c.h.b16 %v3481
  %v4839 = vunpack.c.l.b16 %v3482
  %v4840 = vunpack.c.h.b16 %v3482
  %v4841 = vunpack.c.l.b16 %v3483
  %v4842 = vunpack.c.h.b16 %v3483
  %v4843 = vunpack.c.l.b16 %v3484
  %v4844 = vunpack.c.h.b16 %v3484
  %v4845 = vunpack.c.l.b16 %v3485
  %v4846 = vunpack.c.h.b16 %v3485
  %v4847 = vunpack.c.l.b16 %v3486
  %v4848 = vunpack.c.h.b16 %v3486
  %v4849 = vunpack.c.l.b16 %v3487
  %v4850 = vunpack.c.h.b16 %v3487
  %v4851 = vunpack.c.l.b16 %v3488
  %v4852 = vunpack.c.h.b16 %v3488
  %v4853 = vunpack.c.l.b16 %v3489
  %v4854 = vunpack.c.h.b16 %v3489
  %v4855 = vunpack.c.l.b16 %v3490
  %v4856 = vunpack.c.h.b16 %v3490
  %v4857 = vunpack.c.l.b16 %v3491
  %v4858 = vunpack.c.h.b16 %v3491
  %v4859 = vunpack.c.l.b16 %v3492
  %v4860 = vunpack.c.h.b16 %v3492
  %v4861 = vunpack.c.l.b16 %v3493
  %v4862 = vunpack.c.h.b16 %v3493
  %v4863 = vunpack.c.l.b16 %v3494
  %v4864 = vunpack.c.h.b16 %v3494
  %v4865 = vunpack.c.l.b16 %v3495
  %v4866 = vunpack.c.h.b16 %v3495
  %v4867 = vunpack.c.l.b16 %v3496
  %v4868 = vunpack.c.h.b16 %v3496
  %v4869 = vunpack.c.l.b16 %v3497
  %v4870 = vunpack.c.h.b16 %v3497
  %v4871 = vunpack.c.l.b16 %v3498
  %v4872 = vunpack.c.h.b16 %v3498
  %v4873 = vunpack.c.l.b16 %v3499
  %v4874 = vunpack.c.h.b16 %v3499
  %v4875 = vunpack.c.l.b16 %v3500
  %v4876 = vunpack.c.h.b16 %v3500
  %v4877 = vunpack.c.l.b16 %v3501
  %v4878 = vunpack.c.h.b16 %v3501
  %v4879 = vunpack.c.l.b16 %v3502
  %v4880 = vunpack.c.h.b16 %v3502
  %v4881 = vunpack.c.l.b16 %v3503
  %v4882 = vunpack.c.h.b16 %v3503
  %v4883 = vunpack.c.l.b16 %v3504
  %v4884 = vunpack.c.h.b16 %v3504
  %v4885 = vunpack.c.l.b16 %v3505
  %v4886 = vunpack.c.h.b16 %v3505
  %v4887 = vunpack.c.l.b16 %v3506
  %v4888 = vunpack.c.h.b16 %v3506
  %v4889 = vunpack.c.l.b16 %v3507
  %v4890 = vunpack.c.h.b16 %v3507
  %v4891 = vunpack.c.l.b16 %v3508
  %v4892 = vunpack.c.h.b16 %v3508
  %v4893 = vunpack.c.l.b16 %v3509
  %v4894 = vunpack.c.h.b16 %v3509
  %v4895 = vunpack.c.l.b16 %v3510
  %v4896 = vunpack.c.h.b16 %v3510
  %v4897 = vunpack.c.l.b16 %v3511
  %v4898 = vunpack.c.h.b16 %v3511
  %v4899 = vunpack.c.l.b16 %v3512
  %v4900 = vunpack.c.h.b16 %v3512
  %v4901 = vunpack.c.l.b16 %v3513
  %v4902 = vunpack.c.h.b16 %v3513
  %v4903 = vunpack.c.l.b16 %v3514
  %v4904 = vunpack.c.h.b16 %v3514
  %v4905 = vunpack.c.l.b16 %v3515
  %v4906 = vunpack.c.h.b16 %v3515
  %v4907 = vunpack.c.l.b16 %v3516
  %v4908 = vunpack.c.h.b16 %v3516
  %v4909 = vunpack.c.l.b16 %v3517
  %v4910 = vunpack.c.h.b16 %v3517
  %v4911 = vunpack.c.l.b16 %v3518
  %v4912 = vunpack.c.h.b16 %v3518
  %v4913 = vunpack.c.l.b16 %v3519
  %v4914 = vunpack.c.h.b16 %v3519
  %v4915 = vunpack.c.l.b16 %v3520
  %v4916 = vunpack.c.h.b16 %v3520
  %v4917 = vunpack.c.l.b16 %v3521
  %v4918 = vunpack.c.h.b16 %v3521
  %v4919 = vunpack.c.l.b16 %v3522
  %v4920 = vunpack.c.h.b16 %v3522
  %v4921 = vunpack.c.l.b16 %v3523
  %v4922 = vunpack.c.h.b16 %v3523
  %v4923 = vunpack.c.l.b16 %v3524
  %v4924 = vunpack.c.h.b16 %v3524
  %v4925 = vunpack.c.l.b16 %v3525
  %v4926 = vunpack.c.h.b16 %v3525
  %v4927 = vunpack.c.l.b16 %v3526
  %v4928 = vunpack.c.h.b16 %v3526
  %v4929 = vunpack.c.l.b16 %v3527
  %v4930 = vunpack.c.h.b16 %v3527
  %v4931 = vunpack.c.l.b16 %v3528
  %v4932 = vunpack.c.h.b16 %v3528
  %v4933 = vunpack.c.l.b16 %v3529
  %v4934 = vunpack.c.h.b16 %v3529
  %v4935 = vunpack.c.l.b16 %v3530
  %v4936 = vunpack.c.h.b16 %v3530
  %v4937 = vunpack.c.l.b16 %v3531
  %v4938 = vunpack.c.h.b16 %v3531
  %v4939 = vunpack.c.l.b16 %v3532
  %v4940 = vunpack.c.h.b16 %v3532
  %v4941 = vunpack.c.l.b16 %v3533
  %v4942 = vunpack.c.h.b16 %v3533
  %v4943 = vunpack.c.l.b16 %v3534
  %v4944 = vunpack.c.h.b16 %v3534
  %v4945 = vunpack.c.l.b16 %v3535
  %v4946 = vunpack.c.h.b16 %v3535
  %v4947 = vunpack.c.l.b16 %v3536
  %v4948 = vunpack.c.h.b16 %v3536
  %v4949 = vunpack.c.l.b16 %v3537
  %v4950 = vunpack.c.h.b16 %v3537
  %v4951 = vunpack.c.l.b16 %v3538
  %v4952 = vunpack.c.h.b16 %v3538
  %v4953 = vunpack.c.l.b16 %v3539
  %v4954 = vunpack.c.h.b16 %v3539
  %v4955 = vunpack.c.l.b16 %v3540
  %v4956 = vunpack.c.h.b16 %v3540
  %v4957 = vunpack.c.l.b16 %v3541
  %v4958 = vunpack.c.h.b16 %v3541
  %v4959 = vunpack.c.l.b16 %v3542
  %v4960 = vunpack.c.h.b16 %v3542
  %v4961 = vunpack.c.l.b16 %v3543
  %v4962 = vunpack.c.h.b16 %v3543
  %v4963 = vunpack.c.l.b16 %v3544
  %v4964 = vunpack.c.h.b16 %v3544
  %v4965 = vunpack.c.l.b16 %v3545
  %v4966 = vunpack.c.h.b16 %v3545
  %v4967 = vunpack.c.l.b16 %v3546
  %v4968 = vunpack.c.h.b16 %v3546
  %v4969 = vunpack.c.l.b16 %v3547
  %v4970 = vunpack.c.h.b16 %v3547
  %v4971 = vunpack.c.l.b16 %v3548
  %v4972 = vunpack.c.h.b16 %v3548
  %v4973 = vunpack.c.l.b16 %v3549
  %v4974 = vunpack.c.h.b16 %v3549
  %v4975 = vunpack.c.l.b16 %v3550
  %v4976 = vunpack.c.h.b16 %v3550
  %v4977 = vunpack.c.l.b16 %v3551
  %v4978 = vunpack.c.h.b16 %v3551
  %v4979 = vunpack.c.l.b16 %v3552
  %v4980 = vunpack.c.h.b16 %v3552
  %v4981 = vunpack.c.l.b16 %v3553
  %v4982 = vunpack.c.h.b16 %v3553
  %v4983 = vunpack.c.l.b16 %v3554
  %v4984 = vunpack.c.h.b16 %v3554
  %v4985 = vunpack.c.l.b16 %v3555
  %v4986 = vunpack.c.h.b16 %v3555
  %v4987 = vunpack.c.l.b16 %v3556
  %v4988 = vunpack.c.h.b16 %v3556
  %v4989 = vunpack.c.l.b16 %v3557
  %v4990 = vunpack.c.h.b16 %v3557
  %v4991 = vunpack.c.l.b16 %v3558
  %v4992 = vunpack.c.h.b16 %v3558
  %v4993 = vunpack.c.l.b16 %v3559
  %v4994 = vunpack.c.h.b16 %v3559
  %v4995 = vunpack.c.l.b16 %v3560
  %v4996 = vunpack.c.h.b16 %v3560
  %v4997 = vunpack.c.l.b16 %v3561
  %v4998 = vunpack.c.h.b16 %v3561
  %v4999 = vunpack.c.l.b16 %v3562
  %v5000 = vunpack.c.h.b16 %v3562
  %v5001 = vunpack.c.l.b16 %v3563
  %v5002 = vunpack.c.h.b16 %v3563
  %v5003 = vunpack.c.l.b16 %v3564
  %v5004 = vunpack.c.h.b16 %v3564
  %v5005 = vunpack.c.l.b16 %v3565
  %v5006 = vunpack.c.h.b16 %v3565
  %v5007 = vunpack.c.l.b16 %v3566
  %v5008 = vunpack.c.h.b16 %v3566
  %v5009 = vunpack.c.l.b16 %v3567
  %v5010 = vunpack.c.h.b16 %v3567
  %v5011 = vunpack.c.l.b16 %v3568
  %v5012 = vunpack.c.h.b16 %v3568
  %v5013 = vunpack.c.l.b16 %v3569
  %v5014 = vunpack.c.h.b16 %v3569
  %v5015 = vunpack.c.l.b16 %v3570
  %v5016 = vunpack.c.h.b16 %v3570
  %v5017 = vunpack.c.l.b16 %v3571
  %v5018 = vunpack.c.h.b16 %v3571
  %v5019 = vunpack.c.l.b16 %v3572
  %v5020 = vunpack.c.h.b16 %v3572
  %v5021 = vunpack.c.l.b16 %v3573
  %v5022 = vunpack.c.h.b16 %v3573
  %v5023 = vunpack.c.l.b16 %v3574
  %v5024 = vunpack.c.h.b16 %v3574
  %v5025 = vunpack.c.l.b16 %v3575
  %v5026 = vunpack.c.h.b16 %v3575
  %v5027 = vunpack.c.l.b16 %v3576
  %v5028 = vunpack.c.h.b16 %v3576
  %v5029 = vunpack.c.l.b16 %v3577
  %v5030 = vunpack.c.h.b16 %v3577
  %v5031 = vunpack.c.l.b16 %v3578
  %v5032 = vunpack.c.h.b16 %v3578
  %v5033 = vunpack.c.l.b16 %v3579
  %v5034 = vunpack.c.h.b16 %v3579
  %v5035 = vunpack.c.l.b16 %v3580
  %v5036 = vunpack.c.h.b16 %v3580
  %v5037 = vunpack.c.l.b16 %v3581
  %v5038 = vunpack.c.h.b16 %v3581
  %v5039 = vunpack.c.l.b16 %v3582
  %v5040 = vunpack.c.h.b16 %v3582
  %v5041 = vunpack.c.l.b16 %v3583
  %v5042 = vunpack.c.h.b16 %v3583
  %v5043 = vunpack.c.l.b16 %v3584
  %v5044 = vunpack.c.h.b16 %v3584
  %v5045 = vunpack.c.l.b16 %v3585
  %v5046 = vunpack.c.h.b16 %v3585
  %v5047 = vunpack.c.l.b16 %v3586
  %v5048 = vunpack.c.h.b16 %v3586
  %v5049 = vunpack.c.l.b16 %v3587
  %v5050 = vunpack.c.h.b16 %v3587
  %v5051 = vunpack.c.l.b16 %v3588
  %v5052 = vunpack.c.h.b16 %v3588
  %v5053 = vunpack.c.l.b16 %v3589
  %v5054 = vunpack.c.h.b16 %v3589
  %v5055 = vunpack.c.l.b16 %v3590
  %v5056 = vunpack.c.h.b16 %v3590
  %v5057 = vunpack.c.l.b16 %v3591
  %v5058 = vunpack.c.h.b16 %v3591
  %v5059 = vunpack.c.l.b16 %v3592
  %v5060 = vunpack.c.h.b16 %v3592
  %v5061 = vunpack.c.l.b16 %v3593
  %v5062 = vunpack.c.h.b16 %v3593
  %v5063 = vunpack.c.l.b16 %v3594
  %v5064 = vunpack.c.h.b16 %v3594
  %v5065 = vunpack.c.l.b16 %v3595
  %v5066 = vunpack.c.h.b16 %v3595
  %v5067 = vunpack.c.l.b16 %v3596
  %v5068 = vunpack.c.h.b16 %v3596
  %v5069 = vunpack.c.l.b16 %v3597
  %v5070 = vunpack.c.h.b16 %v3597
  %v5071 = vunpack.c.l.b16 %v3598
  %v5072 = vunpack.c.h.b16 %v3598
  %v5073 = vunpack.c.l.b16 %v3599
  %v5074 = vunpack.c.h.b16 %v3599
  %v5075 = vunpack.c.l.b16 %v3600
  %v5076 = vunpack.c.h.b16 %v3600
  %v5077 = vunpack.c.l.b16 %v3601
  %v5078 = vunpack.c.h.b16 %v3601
  %v5079 = vunpack.c.l.b16 %v3602
  %v5080 = vunpack.c.h.b16 %v3602
  %v5081 = vunpack.c.l.b16 %v3603
  %v5082 = vunpack.c.h.b16 %v3603
  %v5083 = vunpack.c.l.b16 %v3604
  %v5084 = vunpack.c.h.b16 %v3604
  %v5085 = vunpack.c.l.b16 %v3605
  %v5086 = vunpack.c.h.b16 %v3605
  %v5087 = vunpack.c.l.b16 %v3606
  %v5088 = vunpack.c.h.b16 %v3606
  %v5089 = vunpack.c.l.b16 %v3607
  %v5090 = vunpack.c.h.b16 %v3607
  %v5091 = vunpack.c.l.b16 %v3608
  %v5092 = vunpack.c.h.b16 %v3608
  %v5093 = vunpack.c.l.b16 %v3609
  %v5094 = vunpack.c.h.b16 %v3609
  %v5095 = vunpack.c.l.b16 %v3610
  %v5096 = vunpack.c.h.b16 %v3610
  %v5097 = vunpack.c.l.b16 %v3611
  %v5098 = vunpack.c.h.b16 %v3611
  %v5099 = vunpack.c.l.b16 %v3612
  %v5100 = vunpack.c.h.b16 %v3612
  %v5101 = vunpack.c.l.b16 %v3613
  %v5102 = vunpack.c.h.b16 %v3613
  %v5103 = vunpack.c.l.b16 %v3614
  %v5104 = vunpack.c.h.b16 %v3614
  %v5105 = vunpack.c.l.b16 %v3615
  %v5106 = vunpack.c.h.b16 %v3615
  %v5107 = vunpack.c.l.b16 %v3616
  %v5108 = vunpack.c.h.b16 %v3616
  %v5109 = vunpack.c.l.b16 %v3617
  %v5110 = vunpack.c.h.b16 %v3617
  %v5111 = vunpack.c.l.b16 %v3618
  %v5112 = vunpack.c.h.b16 %v3618
  %v5113 = vunpack.c.l.b16 %v3619
  %v5114 = vunpack.c.h.b16 %v3619
  %v5115 = vunpack.c.l.b16 %v3620
  %v5116 = vunpack.c.h.b16 %v3620
  %v5117 = vunpack.c.l.b16 %v3621
  %v5118 = vunpack.c.h.b16 %v3621
  %v5119 = vunpack.c.l.b16 %v3622
  %v5120 = vunpack.c.h.b16 %v3622
  %v5121 = vunpack.c.l.b16 %v3623
  %v5122 = vunpack.c.h.b16 %v3623
  %v5123 = vunpack.c.l.b16 %v3624
  %v5124 = vunpack.c.h.b16 %v3624
  %v5125 = vunpack.c.l.b16 %v3625
  %v5126 = vunpack.c.h.b16 %v3625
  %v5127 = vunpack.c.l.b16 %v3626
  %v5128 = vunpack.c.h.b16 %v3626
  %v5129 = vunpack.c.l.b16 %v3627
  %v5130 = vunpack.c.h.b16 %v3627
  %v5131 = vunpack.c.l.b16 %v3628
  %v5132 = vunpack.c.h.b16 %v3628
  %v5133 = vunpack.c.l.b16 %v3629
  %v5134 = vunpack.c.h.b16 %v3629
  %v5135 = vunpack.c.l.b16 %v3630
  %v5136 = vunpack.c.h.b16 %v3630
  %v5137 = vunpack.c.l.b16 %v3631
  %v5138 = vunpack.c.h.b16 %v3631
  %v5139 = vunpack.c.l.b16 %v3632
  %v5140 = vunpack.c.h.b16 %v3632
  %v5141 = vunpack.c.l.b16 %v3633
  %v5142 = vunpack.c.h.b16 %v3633
  %v5143 = vunpack.c.l.b16 %v3634
  %v5144 = vunpack.c.h.b16 %v3634
  %v5145 = vunpack.c.l.b16 %v3635
  %v5146 = vunpack.c.h.b16 %v3635
  %v5147 = vunpack.c.l.b16 %v3636
  %v5148 = vunpack.c.h.b16 %v3636
  %v5149 = vunpack.c.l.b16 %v3637
  %v5150 = vunpack.c.h.b16 %v3637
  %v5151 = vunpack.c.l.b16 %v3638
  %v5152 = vunpack.c.h.b16 %v3638
  %v5153 = vunpack.c.l.b16 %v3639
  %v5154 = vunpack.c.h.b16 %v3639
  %v5155 = vunpack.c.l.b16 %v3640
  %v5156 = vunpack.c.h.b16 %v3640
  %v5157 = vunpack.c.l.b16 %v3641
  %v5158 = vunpack.c.h.b16 %v3641
  %v5159 = vunpack.c.l.b16 %v3642
  %v5160 = vunpack.c.h.b16 %v3642
  %v5161 = vunpack.c.l.b16 %v3643
  %v5162 = vunpack.c.h.b16 %v3643
  %v5163 = vunpack.c.l.b16 %v3644
  %v5164 = vunpack.c.h.b16 %v3644
  %v5165 = vunpack.c.l.b16 %v3645
  %v5166 = vunpack.c.h.b16 %v3645
  %v5167 = vunpack.c.l.b16 %v3646
  %v5168 = vunpack.c.h.b16 %v3646
  %v5169 = vunpack.c.l.b16 %v3647
  %v5170 = vunpack.c.h.b16 %v3647
  %v5171 = vunpack.c.l.b16 %v3648
  %v5172 = vunpack.c.h.b16 %v3648
  %v5173 = vunpack.c.l.b16 %v3649
  %v5174 = vunpack.c.h.b16 %v3649
  %v5175 = vunpack.c.l.b16 %v3650
  %v5176 = vunpack.c.h.b16 %v3650
  %v5177 = vunpack.c.l.b16 %v3651
  %v5178 = vunpack.c.h.b16 %v3651
  %v5179 = vunpack.c.l.b16 %v3652
  %v5180 = vunpack.c.h.b16 %v3652
  %v5181 = vunpack.c.l.b16 %v3653
  %v5182 = vunpack.c.h.b16 %v3653
  %v5183 = vunpack.c.l.b16 %v3654
  %v5184 = vunpack.c.h.b16 %v3654
  %v5185 = vunpack.c.l.b16 %v3655
  %v5186 = vunpack.c.h.b16 %v3655
  %v5187 = vunpack.c.l.b16 %v3656
  %v5188 = vunpack.c.h.b16 %v3656
  %v5189 = vunpack.c.l.b16 %v3657
  %v5190 = vunpack.c.h.b16 %v3657
  %v5191 = vunpack.c.l.b16 %v3658
  %v5192 = vunpack.c.h.b16 %v3658
  %v5193 = vunpack.c.l.b16 %v3659
  %v5194 = vunpack.c.h.b16 %v3659
  %v5195 = vunpack.c.l.b16 %v3660
  %v5196 = vunpack.c.h.b16 %v3660
  %v5197 = vunpack.c.l.b16 %v3661
  %v5198 = vunpack.c.h.b16 %v3661
  %v5199 = vunpack.c.l.b16 %v3662
  %v5200 = vunpack.c.h.b16 %v3662
  %v5201 = vunpack.c.l.b16 %v3663
  %v5202 = vunpack.c.h.b16 %v3663
  %v5203 = vunpack.c.l.b16 %v3664
  %v5204 = vunpack.c.h.b16 %v3664
  %v5205 = vunpack.c.l.b16 %v3665
  %v5206 = vunpack.c.h.b16 %v3665
  %v5207 = vunpack.c.l.b16 %v3666
  %v5208 = vunpack.c.h.b16 %v3666
  %v5209 = vunpack.c.l.b16 %v3667
  %v5210 = vunpack.c.h.b16 %v3667
  %v5211 = vunpack.c.l.b16 %v3668
  %v5212 = vunpack.c.h.b16 %v3668
  %v5213 = vunpack.c.l.b16 %v3669
  %v5214 = vunpack.c.h.b16 %v3669
  %v5215 = vunpack.c.l.b16 %v3670
  %v5216 = vunpack.c.h.b16 %v3670
  %v5217 = vunpack.c.l.b16 %v3671
  %v5218 = vunpack.c.h.b16 %v3671
  %v5219 = vunpack.c.l.b16 %v3672
  %v5220 = vunpack.c.h.b16 %v3672
  %v5221 = vunpack.c.l.b16 %v3673
  %v5222 = vunpack.c.h.b16 %v3673
  %v5223 = vunpack.c.l.b16 %v3674
  %v5224 = vunpack.c.h.b16 %v3674
  %v5225 = vunpack.c.l.b16 %v3675
  %v5226 = vunpack.c.h.b16 %v3675
  %v5227 = vunpack.c.l.b16 %v3676
  %v5228 = vunpack.c.h.b16 %v3676
  %v5229 = vunpack.c.l.b16 %v3677
  %v5230 = vunpack.c.h.b16 %v3677
  %v5231 = vunpack.c.l.b16 %v3678
  %v5232 = vunpack.c.h.b16 %v3678
  %v5233 = vunpack.c.l.b16 %v3679
  %v5234 = vunpack.c.h.b16 %v3679
  %v5235 = vunpack.c.l.b16 %v3680
  %v5236 = vunpack.c.h.b16 %v3680
  %v5237 = vunpack.c.l.b16 %v3681
  %v5238 = vunpack.c.h.b16 %v3681
  %v5239 = vunpack.c.l.b16 %v3682
  %v5240 = vunpack.c.h.b16 %v3682
  %v5241 = vunpack.c.l.b16 %v3683
  %v5242 = vunpack.c.h.b16 %v3683
  %v5243 = vunpack.c.l.b16 %v3684
  %v5244 = vunpack.c.h.b16 %v3684
  %v5245 = vunpack.c.l.b16 %v3685
  %v5246 = vunpack.c.h.b16 %v3685
  %v5247 = vunpack.c.l.b16 %v3686
  %v5248 = vunpack.c.h.b16 %v3686
  %v5249 = vunpack.c.l.b16 %v3687
  %v5250 = vunpack.c.h.b16 %v3687
  %v5251 = vunpack.c.l.b16 %v3688
  %v5252 = vunpack.c.h.b16 %v3688
  %v5253 = vunpack.c.l.b16 %v3689
  %v5254 = vunpack.c.h.b16 %v3689
  %v5255 = vunpack.c.l.b16 %v3690
  %v5256 = vunpack.c.h.b16 %v3690
  %v5257 = vunpack.c.l.b16 %v3691
  %v5258 = vunpack.c.h.b16 %v3691
  %v5259 = vunpack.c.l.b16 %v3692
  %v5260 = vunpack.c.h.b16 %v3692
  %v5261 = vunpack.c.l.b16 %v3693
  %v5262 = vunpack.c.h.b16 %v3693
  %v5263 = vunpack.c.l.b16 %v3694
  %v5264 = vunpack.c.h.b16 %v3694
  %v5265 = vunpack.c.l.b16 %v3695
  %v5266 = vunpack.c.h.b16 %v3695
  %v5267 = vunpack.c.l.b16 %v3696
  %v5268 = vunpack.c.h.b16 %v3696
  %v5269 = vunpack.c.l.b16 %v3697
  %v5270 = vunpack.c.h.b16 %v3697
  %v5271 = vunpack.c.l.b16 %v3698
  %v5272 = vunpack.c.h.b16 %v3698
  %v5273 = vunpack.c.l.b16 %v3699
  %v5274 = vunpack.c.h.b16 %v3699
  %v5275 = vunpack.c.l.b16 %v3700
  %v5276 = vunpack.c.h.b16 %v3700
  %v5277 = vunpack.c.l.b16 %v3701
  %v5278 = vunpack.c.h.b16 %v3701
  %v5279 = vunpack.c.l.b16 %v3702
  %v5280 = vunpack.c.h.b16 %v3702
  %v5281 = vpack.c.b16 %v4265, %v4257
  %v5282 = vpack.c.b16 %v4266, %v4258
  %v5283 = vpack.c.b16 %v4267, %v4259
  %v5284 = vpack.c.b16 %v4268, %v4260
  %v5285 = vpack.c.b16 %v4269, %v4261
  %v5286 = vpack.c.b16 %v4270, %v4262
  %v5287 = vpack.c.b16 %v4271, %v4263
  %v5288 = vpack.c.b16 %v4272, %v4264
  %v5289 = vpack.c.b16 %v4281, %v4273
  %v5290 = vpack.c.b16 %v4282, %v4274
  %v5291 = vpack.c.b16 %v4283, %v4275
  %v5292 = vpack.c.b16 %v4284, %v4276
  %v5293 = vpack.c.b16 %v4285, %v4277
  %v5294 = vpack.c.b16 %v4286, %v4278
  %v5295 = vpack.c.b16 %v4287, %v4279
  %v5296 = vpack.c.b16 %v4288, %v4280
  %v5297 = vpack.c.b16 %v4297, %v4289
  %v5298 = vpack.c.b16 %v4298, %v4290
  %v5299 = vpack.c.b16 %v4299, %v4291
  %v5300 = vpack.c.b16 %v4300, %v4292
  %v5301 = vpack.c.b16 %v4301, %v4293
  %v5302 = vpack.c.b16 %v4302, %v4294
  %v5303 = vpack.c.b16 %v4303, %v4295
  %v5304 = vpack.c.b16 %v4304, %v4296
  %v5305 = vpack.c.b16 %v4313, %v4305
  %v5306 = vpack.c.b16 %v4314, %v4306
  %v5307 = vpack.c.b16 %v4315, %v4307
  %v5308 = vpack.c.b16 %v4316, %v4308
  %v5309 = vpack.c.b16 %v4317, %v4309
  %v5310 = vpack.c.b16 %v4318, %v4310
  %v5311 = vpack.c.b16 %v4319, %v4311
  %v5312 = vpack.c.b16 %v4320, %v4312
  %v5313 = vpack.c.b16 %v4329, %v4321
  %v5314 = vpack.c.b16 %v4330, %v4322
  %v5315 = vpack.c.b16 %v4331, %v4323
  %v5316 = vpack.c.b16 %v4332, %v4324
  %v5317 = vpack.c.b16 %v4333, %v4325
  %v5318 = vpack.c.b16 %v4334, %v4326
  %v5319 = vpack.c.b16 %v4335, %v4327
  %v5320 = vpack.c.b16 %v4336, %v4328
  %v5321 = vpack.c.b16 %v4345, %v4337
  %v5322 = vpack.c.b16 %v4346, %v4338
  %v5323 = vpack.c.b16 %v4347, %v4339
  %v5324 = vpack.c.b16 %v4348, %v4340
  %v5325 = vpack.c.b16 %v4349, %v4341
  %v5326 = vpack.c.b16 %v4350, %v4342
  %v5327 = vpack.c.b16 %v4351, %v4343
  %v5328 = vpack.c.b16 %v4352, %v4344
  %v5329 = vpack.c.b16 %v4361, %v4353
  %v5330 = vpack.c.b16 %v4362, %v4354
  %v5331 = vpack.c.b16 %v4363, %v4355
  %v5332 = vpack.c.b16 %v4364, %v4356
  %v5333 = vpack.c.b16 %v4365, %v4357
  %v5334 = vpack.c.b16 %v4366, %v4358
  %v5335 = vpack.c.b16 %v4367, %v4359
  %v5336 = vpack.c.b16 %v4368, %v4360
  %v5337 = vpack.c.b16 %v4377, %v4369
  %v5338 = vpack.c.b16 %v4378, %v4370
  %v5339 = vpack.c.b16 %v4379, %v4371
  %v5340 = vpack.c.b16 %v4380, %v4372
  %v5341 = vpack.c.b16 %v4381, %v4373
  %v5342 = vpack.c.b16 %v4382, %v4374
  %v5343 = vpack.c.b16 %v4383, %v4375
  %v5344 = vpack.c.b16 %v4384, %v4376
  %v5345 = vpack.c.b16 %v4393, %v4385
  %v5346 = vpack.c.b16 %v4394, %v4386
  %v5347 = vpack.c.b16 %v4395, %v4387
  %v5348 = vpack.c.b16 %v4396, %v4388
  %v5349 = vpack.c.b16 %v4397, %v4389
  %v5350 = vpack.c.b16 %v4398, %v4390
  %v5351 = vpack.c.b16 %v4399, %v4391
  %v5352 = vpack.c.b16 %v4400, %v4392
  %v5353 = vpack.c.b16 %v4409, %v4401
  %v5354 = vpack.c.b16 %v4410, %v4402
  %v5355 = vpack.c.b16 %v4411, %v4403
  %v5356 = vpack.c.b16 %v4412, %v4404
  %v5357 = vpack.c.b16 %v4413, %v4405
  %v5358 = vpack.c.b16 %v4414, %v4406
  %v5359 = vpack.c.b16 %v4415, %v4407
  %v5360 = vpack.c.b16 %v4416, %v4408
  %v5361 = vpack.c.b16 %v4425, %v4417
  %v5362 = vpack.c.b16 %v4426, %v4418
  %v5363 = vpack.c.b16 %v4427, %v4419
  %v5364 = vpack.c.b16 %v4428, %v4420
  %v5365 = vpack.c.b16 %v4429, %v4421
  %v5366 = vpack.c.b16 %v4430, %v4422
  %v5367 = vpack.c.b16 %v4431, %v4423
  %v5368 = vpack.c.b16 %v4432, %v4424
  %v5369 = vpack.c.b16 %v4441, %v4433
  %v5370 = vpack.c.b16 %v4442, %v4434
  %v5371 = vpack.c.b16 %v4443, %v4435
  %v5372 = vpack.c.b16 %v4444, %v4436
  %v5373 = vpack.c.b16 %v4445, %v4437
  %v5374 = vpack.c.b16 %v4446, %v4438
  %v5375 = vpack.c.b16 %v4447, %v4439
  %v5376 = vpack.c.b16 %v4448, %v4440
  %v5377 = vpack.c.b16 %v4457, %v4449
  %v5378 = vpack.c.b16 %v4458, %v4450
  %v5379 = vpack.c.b16 %v4459, %v4451
  %v5380 = vpack.c.b16 %v4460, %v4452
  %v5381 = vpack.c.b16 %v4461, %v4453
  %v5382 = vpack.c.b16 %v4462, %v4454
  %v5383 = vpack.c.b16 %v4463, %v4455
  %v5384 = vpack.c.b16 %v4464, %v4456
  %v5385 = vpack.c.b16 %v4473, %v4465
  %v5386 = vpack.c.b16 %v4474, %v4466
  %v5387 = vpack.c.b16 %v4475, %v4467
  %v5388 = vpack.c.b16 %v4476, %v4468
  %v5389 = vpack.c.b16 %v4477, %v4469
  %v5390 = vpack.c.b16 %v4478, %v4470
  %v5391 = vpack.c.b16 %v4479, %v4471
  %v5392 = vpack.c.b16 %v4480, %v4472
  %v5393 = vpack.c.b16 %v4489, %v4481
  %v5394 = vpack.c.b16 %v4490, %v4482
  %v5395 = vpack.c.b16 %v4491, %v4483
  %v5396 = vpack.c.b16 %v4492, %v4484
  %v5397 = vpack.c.b16 %v4493, %v4485
  %v5398 = vpack.c.b16 %v4494, %v4486
  %v5399 = vpack.c.b16 %v4495, %v4487
  %v5400 = vpack.c.b16 %v4496, %v4488
  %v5401 = vpack.c.b16 %v4505, %v4497
  %v5402 = vpack.c.b16 %v4506, %v4498
  %v5403 = vpack.c.b16 %v4507, %v4499
  %v5404 = vpack.c.b16 %v4508, %v4500
  %v5405 = vpack.c.b16 %v4509, %v4501
  %v5406 = vpack.c.b16 %v4510, %v4502
  %v5407 = vpack.c.b16 %v4511, %v4503
  %v5408 = vpack.c.b16 %v4512, %v4504
  %v5409 = vpack.c.b16 %v4521, %v4513
  %v5410 = vpack.c.b16 %v4522, %v4514
  %v5411 = vpack.c.b16 %v4523, %v4515
  %v5412 = vpack.c.b16 %v4524, %v4516
  %v5413 = vpack.c.b16 %v4525, %v4517
  %v5414 = vpack.c.b16 %v4526, %v4518
  %v5415 = vpack.c.b16 %v4527, %v4519
  %v5416 = vpack.c.b16 %v4528, %v4520
  %v5417 = vpack.c.b16 %v4537, %v4529
  %v5418 = vpack.c.b16 %v4538, %v4530
  %v5419 = vpack.c.b16 %v4539, %v4531
  %v5420 = vpack.c.b16 %v4540, %v4532
  %v5421 = vpack.c.b16 %v4541, %v4533
  %v5422 = vpack.c.b16 %v4542, %v4534
  %v5423 = vpack.c.b16 %v4543, %v4535
  %v5424 = vpack.c.b16 %v4544, %v4536
  %v5425 = vpack.c.b16 %v4553, %v4545
  %v5426 = vpack.c.b16 %v4554, %v4546
  %v5427 = vpack.c.b16 %v4555, %v4547
  %v5428 = vpack.c.b16 %v4556, %v4548
  %v5429 = vpack.c.b16 %v4557, %v4549
  %v5430 = vpack.c.b16 %v4558, %v4550
  %v5431 = vpack.c.b16 %v4559, %v4551
  %v5432 = vpack.c.b16 %v4560, %v4552
  %v5433 = vpack.c.b16 %v4569, %v4561
  %v5434 = vpack.c.b16 %v4570, %v4562
  %v5435 = vpack.c.b16 %v4571, %v4563
  %v5436 = vpack.c.b16 %v4572, %v4564
  %v5437 = vpack.c.b16 %v4573, %v4565
  %v5438 = vpack.c.b16 %v4574, %v4566
  %v5439 = vpack.c.b16 %v4575, %v4567
  %v5440 = vpack.c.b16 %v4576, %v4568
  %v5441 = vpack.c.b16 %v4585, %v4577
  %v5442 = vpack.c.b16 %v4586, %v4578
  %v5443 = vpack.c.b16 %v4587, %v4579
  %v5444 = vpack.c.b16 %v4588, %v4580
  %v5445 = vpack.c.b16 %v4589, %v4581
  %v5446 = vpack.c.b16 %v4590, %v4582
  %v5447 = vpack.c.b16 %v4591, %v4583
  %v5448 = vpack.c.b16 %v4592, %v4584
  %v5449 = vpack.c.b16 %v4601, %v4593
  %v5450 = vpack.c.b16 %v4602, %v4594
  %v5451 = vpack.c.b16 %v4603, %v4595
  %v5452 = vpack.c.b16 %v4604, %v4596
  %v5453 = vpack.c.b16 %v4605, %v4597
  %v5454 = vpack.c.b16 %v4606, %v4598
  %v5455 = vpack.c.b16 %v4607, %v4599
  %v5456 = vpack.c.b16 %v4608, %v4600
  %v5457 = vpack.c.b16 %v4617, %v4609
  %v5458 = vpack.c.b16 %v4618, %v4610
  %v5459 = vpack.c.b16 %v4619, %v4611
  %v5460 = vpack.c.b16 %v4620, %v4612
  %v5461 = vpack.c.b16 %v4621, %v4613
  %v5462 = vpack.c.b16 %v4622, %v4614
  %v5463 = vpack.c.b16 %v4623, %v4615
  %v5464 = vpack.c.b16 %v4624, %v4616
  %v5465 = vpack.c.b16 %v4633, %v4625
  %v5466 = vpack.c.b16 %v4634, %v4626
  %v5467 = vpack.c.b16 %v4635, %v4627
  %v5468 = vpack.c.b16 %v4636, %v4628
  %v5469 = vpack.c.b16 %v4637, %v4629
  %v5470 = vpack.c.b16 %v4638, %v4630
  %v5471 = vpack.c.b16 %v4639, %v4631
  %v5472 = vpack.c.b16 %v4640, %v4632
  %v5473 = vpack.c.b16 %v4649, %v4641
  %v5474 = vpack.c.b16 %v4650, %v4642
  %v5475 = vpack.c.b16 %v4651, %v4643
  %v5476 = vpack.c.b16 %v4652, %v4644
  %v5477 = vpack.c.b16 %v4653, %v4645
  %v5478 = vpack.c.b16 %v4654, %v4646
  %v5479 = vpack.c.b16 %v4655, %v4647
  %v5480 = vpack.c.b16 %v4656, %v4648
  %v5481 = vpack.c.b16 %v4665, %v4657
  %v5482 = vpack.c.b16 %v4666, %v4658
  %v5483 = vpack.c.b16 %v4667, %v4659
  %v5484 = vpack.c.b16 %v4668, %v4660
  %v5485 = vpack.c.b16 %v4669, %v4661
  %v5486 = vpack.c.b16 %v4670, %v4662
  %v5487 = vpack.c.b16 %v4671, %v4663
  %v5488 = vpack.c.b16 %v4672, %v4664
  %v5489 = vpack.c.b16 %v4681, %v4673
  %v5490 = vpack.c.b16 %v4682, %v4674
  %v5491 = vpack.c.b16 %v4683, %v4675
  %v5492 = vpack.c.b16 %v4684, %v4676
  %v5493 = vpack.c.b16 %v4685, %v4677
  %v5494 = vpack.c.b16 %v4686, %v4678
  %v5495 = vpack.c.b16 %v4687, %v4679
  %v5496 = vpack.c.b16 %v4688, %v4680
  %v5497 = vpack.c.b16 %v4697, %v4689
  %v5498 = vpack.c.b16 %v4698, %v4690
  %v5499 = vpack.c.b16 %v4699, %v4691
  %v5500 = vpack.c.b16 %v4700, %v4692
  %v5501 = vpack.c.b16 %v4701, %v4693
  %v5502 = vpack.c.b16 %v4702, %v4694
  %v5503 = vpack.c.b16 %v4703, %v4695
  %v5504 = vpack.c.b16 %v4704, %v4696
  %v5505 = vpack.c.b16 %v4713, %v4705
  %v5506 = vpack.c.b16 %v4714, %v4706
  %v5507 = vpack.c.b16 %v4715, %v4707
  %v5508 = vpack.c.b16 %v4716, %v4708
  %v5509 = vpack.c.b16 %v4717, %v4709
  %v5510 = vpack.c.b16 %v4718, %v4710
  %v5511 = vpack.c.b16 %v4719, %v4711
  %v5512 = vpack.c.b16 %v4720, %v4712
  %v5513 = vpack.c.b16 %v4729, %v4721
  %v5514 = vpack.c.b16 %v4730, %v4722
  %v5515 = vpack.c.b16 %v4731, %v4723
  %v5516 = vpack.c.b16 %v4732, %v4724
  %v5517 = vpack.c.b16 %v4733, %v4725
  %v5518 = vpack.c.b16 %v4734, %v4726
  %v5519 = vpack.c.b16 %v4735, %v4727
  %v5520 = vpack.c.b16 %v4736, %v4728
  %v5521 = vpack.c.b16 %v4745, %v4737
  %v5522 = vpack.c.b16 %v4746, %v4738
  %v5523 = vpack.c.b16 %v4747, %v4739
  %v5524 = vpack.c.b16 %v4748, %v4740
  %v5525 = vpack.c.b16 %v4749, %v4741
  %v5526 = vpack.c.b16 %v4750, %v4742
  %v5527 = vpack.c.b16 %v4751, %v4743
  %v5528 = vpack.c.b16 %v4752, %v4744
  %v5529 = vpack.c.b16 %v4761, %v4753
  %v5530 = vpack.c.b16 %v4762, %v4754
  %v5531 = vpack.c.b16 %v4763, %v4755
  %v5532 = vpack.c.b16 %v4764, %v4756
  %v5533 = vpack.c.b16 %v4765, %v4757
  %v5534 = vpack.c.b16 %v4766, %v4758
  %v5535 = vpack.c.b16 %v4767, %v4759
  %v5536 = vpack.c.b16 %v4768, %v4760
  %v5537 = vpack.c.b16 %v4777, %v4769
  %v5538 = vpack.c.b16 %v4778, %v4770
  %v5539 = vpack.c.b16 %v4779, %v4771
  %v5540 = vpack.c.b16 %v4780, %v4772
  %v5541 = vpack.c.b16 %v4781, %v4773
  %v5542 = vpack.c.b16 %v4782, %v4774
  %v5543 = vpack.c.b16 %v4783, %v4775
  %v5544 = vpack.c.b16 %v4784, %v4776
  %v5545 = vpack.c.b16 %v4793, %v4785
  %v5546 = vpack.c.b16 %v4794, %v4786
  %v5547 = vpack.c.b16 %v4795, %v4787
  %v5548 = vpack.c.b16 %v4796, %v4788
  %v5549 = vpack.c.b16 %v4797, %v4789
  %v5550 = vpack.c.b16 %v4798, %v4790
  %v5551 = vpack.c.b16 %v4799, %v4791
  %v5552 = vpack.c.b16 %v4800, %v4792
  %v5553 = vpack.c.b16 %v4809, %v4801
  %v5554 = vpack.c.b16 %v4810, %v4802
  %v5555 = vpack.c.b16 %v4811, %v4803
  %v5556 = vpack.c.b16 %v4812, %v4804
  %v5557 = vpack.c.b16 %v4813, %v4805
  %v5558 = vpack.c.b16 %v4814, %v4806
  %v5559 = vpack.c.b16 %v4815, %v4807
  %v5560 = vpack.c.b16 %v4816, %v4808
  %v5561 = vpack.c.b16 %v4825, %v4817
  %v5562 = vpack.c.b16 %v4826, %v4818
  %v5563 = vpack.c.b16 %v4827, %v4819
  %v5564 = vpack.c.b16 %v4828, %v4820
  %v5565 = vpack.c.b16 %v4829, %v4821
  %v5566 = vpack.c.b16 %v4830, %v4822
  %v5567 = vpack.c.b16 %v4831, %v4823
  %v5568 = vpack.c.b16 %v4832, %v4824
  %v5569 = vpack.c.b16 %v4841, %v4833
  %v5570 = vpack.c.b16 %v4842, %v4834
  %v5571 = vpack.c.b16 %v4843, %v4835
  %v5572 = vpack.c.b16 %v4844, %v4836
  %v5573 = vpack.c.b16 %v4845, %v4837
  %v5574 = vpack.c.b16 %v4846, %v4838
  %v5575 = vpack.c.b16 %v4847, %v4839
  %v5576 = vpack.c.b16 %v4848, %v4840
  %v5577 = vpack.c.b16 %v4857, %v4849
  %v5578 = vpack.c.b16 %v4858, %v4850
  %v5579 = vpack.c.b16 %v4859, %v4851
  %v5580 = vpack.c.b16 %v4860, %v4852
  %v5581 = vpack.c.b16 %v4861, %v4853
  %v5582 = vpack.c.b16 %v4862, %v4854
  %v5583 = vpack.c.b16 %v4863, %v4855
  %v5584 = vpack.c.b16 %v4864, %v4856
  %v5585 = vpack.c.b16 %v4873, %v4865
  %v5586 = vpack.c.b16 %v4874, %v4866
  %v5587 = vpack.c.b16 %v4875, %v4867
  %v5588 = vpack.c.b16 %v4876, %v4868
  %v5589 = vpack.c.b16 %v4877, %v4869
  %v5590 = vpack.c.b16 %v4878, %v4870
  %v5591 = vpack.c.b16 %v4879, %v4871
  %v5592 = vpack.c.b16 %v4880, %v4872
  %v5593 = vpack.c.b16 %v4889, %v4881
  %v5594 = vpack.c.b16 %v4890, %v4882
  %v5595 = vpack.c.b16 %v4891, %v4883
  %v5596 = vpack.c.b16 %v4892, %v4884
  %v5597 = vpack.c.b16 %v4893, %v4885
  %v5598 = vpack.c.b16 %v4894, %v4886
  %v5599 = vpack.c.b16 %v4895, %v4887
  %v5600 = vpack.c.b16 %v4896, %v4888
  %v5601 = vpack.c.b16 %v4905, %v4897
  %v5602 = vpack.c.b16 %v4906, %v4898
  %v5603 = vpack.c.b16 %v4907, %v4899
  %v5604 = vpack.c.b16 %v4908, %v4900
  %v5605 = vpack.c.b16 %v4909, %v4901
  %v5606 = vpack.c.b16 %v4910, %v4902
  %v5607 = vpack.c.b16 %v4911, %v4903
  %v5608 = vpack.c.b16 %v4912, %v4904
  %v5609 = vpack.c.b16 %v4921, %v4913
  %v5610 = vpack.c.b16 %v4922, %v4914
  %v5611 = vpack.c.b16 %v4923, %v4915
  %v5612 = vpack.c.b16 %v4924, %v4916
  %v5613 = vpack.c.b16 %v4925, %v4917
  %v5614 = vpack.c.b16 %v4926, %v4918
  %v5615 = vpack.c.b16 %v4927, %v4919
  %v5616 = vpack.c.b16 %v4928, %v4920
  %v5617 = vpack.c.b16 %v4937, %v4929
  %v5618 = vpack.c.b16 %v4938, %v4930
  %v5619 = vpack.c.b16 %v4939, %v4931
  %v5620 = vpack.c.b16 %v4940, %v4932
  %v5621 = vpack.c.b16 %v4941, %v4933
  %v5622 = vpack.c.b16 %v4942, %v4934
  %v5623 = vpack.c.b16 %v4943, %v4935
  %v5624 = vpack.c.b16 %v4944, %v4936
  %v5625 = vpack.c.b16 %v4953, %v4945
  %v5626 = vpack.c.b16 %v4954, %v4946
  %v5627 = vpack.c.b16 %v4955, %v4947
  %v5628 = vpack.c.b16 %v4956, %v4948
  %v5629 = vpack.c.b16 %v4957, %v4949
  %v5630 = vpack.c.b16 %v4958, %v4950
  %v5631 = vpack.c.b16 %v4959, %v4951
  %v5632 = vpack.c.b16 %v4960, %v4952
  %v5633 = vpack.c.b16 %v4969, %v4961
  %v5634 = vpack.c.b16 %v4970, %v4962
  %v5635 = vpack.c.b16 %v4971, %v4963
  %v5636 = vpack.c.b16 %v4972, %v4964
  %v5637 = vpack.c.b16 %v4973, %v4965
  %v5638 = vpack.c.b16 %v4974, %v4966
  %v5639 = vpack.c.b16 %v4975, %v4967
  %v5640 = vpack.c.b16 %v4976, %v4968
  %v5641 = vpack.c.b16 %v4985, %v4977
  %v5642 = vpack.c.b16 %v4986, %v4978
  %v5643 = vpack.c.b16 %v4987, %v4979
  %v5644 = vpack.c.b16 %v4988, %v4980
  %v5645 = vpack.c.b16 %v4989, %v4981
  %v5646 = vpack.c.b16 %v4990, %v4982
  %v5647 = vpack.c.b16 %v4991, %v4983
  %v5648 = vpack.c.b16 %v4992, %v4984
  %v5649 = vpack.c.b16 %v5001, %v4993
  %v5650 = vpack.c.b16 %v5002, %v4994
  %v5651 = vpack.c.b16 %v5003, %v4995
  %v5652 = vpack.c.b16 %v5004, %v4996
  %v5653 = vpack.c.b16 %v5005, %v4997
  %v5654 = vpack.c.b16 %v5006, %v4998
  %v5655 = vpack.c.b16 %v5007, %v4999
  %v5656 = vpack.c.b16 %v5008, %v5000
  %v5657 = vpack.c.b16 %v5017, %v5009
  %v5658 = vpack.c.b16 %v5018, %v5010
  %v5659 = vpack.c.b16 %v5019, %v5011
  %v5660 = vpack.c.b16 %v5020, %v5012
  %v5661 = vpack.c.b16 %v5021, %v5013
  %v5662 = vpack.c.b16 %v5022, %v5014
  %v5663 = vpack.c.b16 %v5023, %v5015
  %v5664 = vpack.c.b16 %v5024, %v5016
  %v5665 = vpack.c.b16 %v5033, %v5025
  %v5666 = vpack.c.b16 %v5034, %v5026
  %v5667 = vpack.c.b16 %v5035, %v5027
  %v5668 = vpack.c.b16 %v5036, %v5028
  %v5669 = vpack.c.b16 %v5037, %v5029
  %v5670 = vpack.c.b16 %v5038, %v5030
  %v5671 = vpack.c.b16 %v5039, %v5031
  %v5672 = vpack.c.b16 %v5040, %v5032
  %v5673 = vpack.c.b16 %v5049, %v5041
  %v5674 = vpack.c.b16 %v5050, %v5042
  %v5675 = vpack.c.b16 %v5051, %v5043
  %v5676 = vpack.c.b16 %v5052, %v5044
  %v5677 = vpack.c.b16 %v5053, %v5045
  %v5678 = vpack.c.b16 %v5054, %v5046
  %v5679 = vpack.c.b16 %v5055, %v5047
  %v5680 = vpack.c.b16 %v5056, %v5048
  %v5681 = vpack.c.b16 %v5065, %v5057
  %v5682 = vpack.c.b16 %v5066, %v5058
  %v5683 = vpack.c.b16 %v5067, %v5059
  %v5684 = vpack.c.b16 %v5068, %v5060
  %v5685 = vpack.c.b16 %v5069, %v5061
  %v5686 = vpack.c.b16 %v5070, %v5062
  %v5687 = vpack.c.b16 %v5071, %v5063
  %v5688 = vpack.c.b16 %v5072, %v5064
  %v5689 = vpack.c.b16 %v5081, %v5073
  %v5690 = vpack.c.b16 %v5082, %v5074
  %v5691 = vpack.c.b16 %v5083, %v5075
  %v5692 = vpack.c.b16 %v5084, %v5076
  %v5693 = vpack.c.b16 %v5085, %v5077
  %v5694 = vpack.c.b16 %v5086, %v5078
  %v5695 = vpack.c.b16 %v5087, %v5079
  %v5696 = vpack.c.b16 %v5088, %v5080
  %v5697 = vpack.c.b16 %v5097, %v5089
  %v5698 = vpack.c.b16 %v5098, %v5090
  %v5699 = vpack.c.b16 %v5099, %v5091
  %v5700 = vpack.c.b16 %v5100, %v5092
  %v5701 = vpack.c.b16 %v5101, %v5093
  %v5702 = vpack.c.b16 %v5102, %v5094
  %v5703 = vpack.c.b16 %v5103, %v5095
  %v5704 = vpack.c.b16 %v5104, %v5096
  %v5705 = vpack.c.b16 %v5113, %v5105
  %v5706 = vpack.c.b16 %v5114, %v5106
  %v5707 = vpack.c.b16 %v5115, %v5107
  %v5708 = vpack.c.b16 %v5116, %v5108
  %v5709 = vpack.c.b16 %v5117, %v5109
  %v5710 = vpack.c.b16 %v5118, %v5110
  %v5711 = vpack.c.b16 %v5119, %v5111
  %v5712 = vpack.c.b16 %v5120, %v5112
  %v5713 = vpack.c.b16 %v5129, %v5121
  %v5714 = vpack.c.b16 %v5130, %v5122
  %v5715 = vpack.c.b16 %v5131, %v5123
  %v5716 = vpack.c.b16 %v5132, %v5124
  %v5717 = vpack.c.b16 %v5133, %v5125
  %v5718 = vpack.c.b16 %v5134, %v5126
  %v5719 = vpack.c.b16 %v5135, %v5127
  %v5720 = vpack.c.b16 %v5136, %v5128
  %v5721 = vpack.c.b16 %v5145, %v5137
  %v5722 = vpack.c.b16 %v5146, %v5138
  %v5723 = vpack.c.b16 %v5147, %v5139
  %v5724 = vpack.c.b16 %v5148, %v5140
  %v5725 = vpack.c.b16 %v5149, %v5141
  %v5726 = vpack.c.b16 %v5150, %v5142
  %v5727 = vpack.c.b16 %v5151, %v5143
  %v5728 = vpack.c.b16 %v5152, %v5144
  %v5729 = vpack.c.b16 %v5161, %v5153
  %v5730 = vpack.c.b16 %v5162, %v5154
  %v5731 = vpack.c.b16 %v5163, %v5155
  %v5732 = vpack.c.b16 %v5164, %v5156
  %v5733 = vpack.c.b16 %v5165, %v5157
  %v5734 = vpack.c.b16 %v5166, %v5158
  %v5735 = vpack.c.b16 %v5167, %v5159
  %v5736 = vpack.c.b16 %v5168, %v5160
  %v5737 = vpack.c.b16 %v5177, %v5169
  %v5738 = vpack.c.b16 %v5178, %v5170
  %v5739 = vpack.c.b16 %v5179, %v5171
  %v5740 = vpack.c.b16 %v5180, %v5172
  %v5741 = vpack.c.b16 %v5181, %v5173
  %v5742 = vpack.c.b16 %v5182, %v5174
  %v5743 = vpack.c.b16 %v5183, %v5175
  %v5744 = vpack.c.b16 %v5184, %v5176
  %v5745 = vpack.c.b16 %v5193, %v5185
  %v5746 = vpack.c.b16 %v5194, %v5186
  %v5747 = vpack.c.b16 %v5195, %v5187
  %v5748 = vpack.c.b16 %v5196, %v5188
  %v5749 = vpack.c.b16 %v5197, %v5189
  %v5750 = vpack.c.b16 %v5198, %v5190
  %v5751 = vpack.c.b16 %v5199, %v5191
  %v5752 = vpack.c.b16 %v5200, %v5192
  %v5753 = vpack.c.b16 %v5209, %v5201
  %v5754 = vpack.c.b16 %v5210, %v5202
  %v5755 = vpack.c.b16 %v5211, %v5203
  %v5756 = vpack.c.b16 %v5212, %v5204
  %v5757 = vpack.c.b16 %v5213, %v5205
  %v5758 = vpack.c.b16 %v5214, %v5206
  %v5759 = vpack.c.b16 %v5215, %v5207
  %v5760 = vpack.c.b16 %v5216, %v5208
  %v5761 = vpack.c.b16 %v5225, %v5217
  %v5762 = vpack.c.b16 %v5226, %v5218
  %v5763 = vpack.c.b16 %v5227, %v5219
  %v5764 = vpack.c.b16 %v5228, %v5220
  %v5765 = vpack.c.b16 %v5229, %v5221
  %v5766 = vpack.c.b16 %v5230, %v5222
  %v5767 = vpack.c.b16 %v5231, %v5223
  %v5768 = vpack.c.b16 %v5232, %v5224
  %v5769 = vpack.c.b16 %v5241, %v5233
  %v5770 = vpack.c.b16 %v5242, %v5234
  %v5771 = vpack.c.b16 %v5243, %v5235
  %v5772 = vpack.c.b16 %v5244, %v5236
  %v5773 = vpack.c.b16 %v5245, %v5237
  %v5774 = vpack.c.b16 %v5246, %v5238
  %v5775 = vpack.c.b16 %v5247, %v5239
  %v5776 = vpack.c.b16 %v5248, %v5240
  %v5777 = vpack.c.b16 %v5257, %v5249
  %v5778 = vpack.c.b16 %v5258, %v5250
  %v5779 = vpack.c.b16 %v5259, %v5251
  %v5780 = vpack.c.b16 %v5260, %v5252
  %v5781 = vpack.c.b16 %v5261, %v5253
  %v5782 = vpack.c.b16 %v5262, %v5254
  %v5783 = vpack.c.b16 %v5263, %v5255
  %v5784 = vpack.c.b16 %v5264, %v5256
  %v5785 = vpack.c.b16 %v5273, %v5265
  %v5786 = vpack.c.b16 %v5274, %v5266
  %v5787 = vpack.c.b16 %v5275, %v5267
  %v5788 = vpack.c.b16 %v5276, %v5268
  %v5789 = vpack.c.b16 %v5277, %v5269
  %v5790 = vpack.c.b16 %v5278, %v5270
  %v5791 = vpack.c.b16 %v5279, %v5271
  %v5792 = vpack.c.b16 %v5280, %v5272
  %6305 = vmatprep.subr.bf16.mxu0 %v5282
  %6306 = vmatpush1.bf16.msra.mxu0 %v5281
  %6307 = vmatprep.subr.bf16.mxu0 %v5290
  %6308 = vmatpush1.bf16.msra.mxu0 %v5289
  %6309 = vmatprep.subr.bf16.mxu0 %v5298
  %6310 = vmatpush1.bf16.msra.mxu0 %v5297
  %6311 = vmatprep.subr.bf16.mxu0 %v5306
  %6312 = vmatpush1.bf16.msra.mxu0 %v5305
  %6313 = vmatprep.subr.bf16.mxu0 %v5314
  %6314 = vmatpush1.bf16.msra.mxu0 %v5313
  %6315 = vmatprep.subr.bf16.mxu0 %v5322
  %6316 = vmatpush1.bf16.msra.mxu0 %v5321
  %6317 = vmatprep.subr.bf16.mxu0 %v5330
  %6318 = vmatpush1.bf16.msra.mxu0 %v5329
  %6319 = vmatprep.subr.bf16.mxu0 %v5338
  %6320 = vmatpush1.bf16.msra.mxu0 %v5337
  %6321 = vmatprep.subr.bf16.mxu0 %v5346
  %6322 = vmatpush1.bf16.msra.mxu0 %v5345
  %6323 = vmatprep.subr.bf16.mxu0 %v5354
  %6324 = vmatpush1.bf16.msra.mxu0 %v5353
  %6325 = vmatprep.subr.bf16.mxu0 %v5362
  %6326 = vmatpush1.bf16.msra.mxu0 %v5361
  %6327 = vmatprep.subr.bf16.mxu0 %v5370
  %6328 = vmatpush1.bf16.msra.mxu0 %v5369
  %6329 = vmatprep.subr.bf16.mxu0 %v5378
  %6330 = vmatpush1.bf16.msra.mxu0 %v5377
  %6331 = vmatprep.subr.bf16.mxu0 %v5386
  %6332 = vmatpush1.bf16.msra.mxu0 %v5385
  %6333 = vmatprep.subr.bf16.mxu0 %v5394
  %6334 = vmatpush1.bf16.msra.mxu0 %v5393
  %6335 = vmatprep.subr.bf16.mxu0 %v5402
  %6336 = vmatpush1.bf16.msra.mxu0 %v5401
  %6337 = vmatprep.mubr.bf16.mxu0 %v3184
  %6338 = vmatmul.mubr.bf16.gmra.mrb[0].mxu0 %v3183
  %v6339 = vpop.f32.mrb[0].mxu0
  %v6340 = vadd.f32 %v3708, %v6339
  %v6341 = vpop.f32.mrb[0].mxu0
  %v6342 = vadd.f32 %v3712, %v6341
  %v6343 = vpop.f32.mrb[0].mxu0
  %v6344 = vadd.f32 %v3708, %v6343
  %v6345 = vpop.f32.mrb[0].mxu0
  %v6346 = vadd.f32 %v3712, %v6345
  %6347 = vdwg.mxu0
  %6348 = vmatprep.subr.bf16.mxu0 %v5410
  %6349 = vmatpush1.bf16.msra.mxu0 %v5409
  %6350 = vmatprep.subr.bf16.mxu0 %v5418
  %6351 = vmatpush1.bf16.msra.mxu0 %v5417
  %6352 = vmatprep.subr.bf16.mxu0 %v5426
  %6353 = vmatpush1.bf16.msra.mxu0 %v5425
  %6354 = vmatprep.subr.bf16.mxu0 %v5434
  %6355 = vmatpush1.bf16.msra.mxu0 %v5433
  %6356 = vmatprep.subr.bf16.mxu0 %v5442
  %6357 = vmatpush1.bf16.msra.mxu0 %v5441
  %6358 = vmatprep.subr.bf16.mxu0 %v5450
  %6359 = vmatpush1.bf16.msra.mxu0 %v5449
  %6360 = vmatprep.subr.bf16.mxu0 %v5458
  %6361 = vmatpush1.bf16.msra.mxu0 %v5457
  %6362 = vmatprep.subr.bf16.mxu0 %v5466
  %6363 = vmatpush1.bf16.msra.mxu0 %v5465
  %6364 = vmatprep.subr.bf16.mxu0 %v5474
  %6365 = vmatpush1.bf16.msra.mxu0 %v5473
  %6366 = vmatprep.subr.bf16.mxu0 %v5482
  %6367 = vmatpush1.bf16.msra.mxu0 %v5481
  %6368 = vmatprep.subr.bf16.mxu0 %v5490
  %6369 = vmatpush1.bf16.msra.mxu0 %v5489
  %6370 = vmatprep.subr.bf16.mxu0 %v5498
  %6371 = vmatpush1.bf16.msra.mxu0 %v5497
  %6372 = vmatprep.subr.bf16.mxu0 %v5506
  %6373 = vmatpush1.bf16.msra.mxu0 %v5505
  %6374 = vmatprep.subr.bf16.mxu0 %v5514
  %6375 = vmatpush1.bf16.msra.mxu0 %v5513
  %6376 = vmatprep.subr.bf16.mxu0 %v5522
  %6377 = vmatpush1.bf16.msra.mxu0 %v5521
  %6378 = vmatprep.subr.bf16.mxu0 %v5530
  %6379 = vmatpush1.bf16.msra.mxu0 %v5529
  %6380 = vmatprep.mubr.bf16.mxu0 %v3186
  %6381 = vmatmul.mubr.bf16.gmra.mrb[0].mxu0 %v3185
  %v6382 = vpop.f32.mrb[0].mxu0
  %v6383 = vadd.f32 %v6340, %v6382
  %v6384 = vpop.f32.mrb[0].mxu0
  %v6385 = vadd.f32 %v6342, %v6384
  %v6386 = vpop.f32.mrb[0].mxu0
  %v6387 = vadd.f32 %v6344, %v6386
  %v6388 = vpop.f32.mrb[0].mxu0
  %v6389 = vadd.f32 %v6346, %v6388
  %6390 = vdwg.mxu0
  %6391 = vmatprep.subr.bf16.mxu0 %v5538
  %6392 = vmatpush1.bf16.msra.mxu0 %v5537
  %6393 = vmatprep.subr.bf16.mxu0 %v5546
  %6394 = vmatpush1.bf16.msra.mxu0 %v5545
  %6395 = vmatprep.subr.bf16.mxu0 %v5554
  %6396 = vmatpush1.bf16.msra.mxu0 %v5553
  %6397 = vmatprep.subr.bf16.mxu0 %v5562
  %6398 = vmatpush1.bf16.msra.mxu0 %v5561
  %6399 = vmatprep.subr.bf16.mxu0 %v5570
  %6400 = vmatpush1.bf16.msra.mxu0 %v5569
  %6401 = vmatprep.subr.bf16.mxu0 %v5578
  %6402 = vmatpush1.bf16.msra.mxu0 %v5577
  %6403 = vmatprep.subr.bf16.mxu0 %v5586
  %6404 = vmatpush1.bf16.msra.mxu0 %v5585
  %6405 = vmatprep.subr.bf16.mxu0 %v5594
  %6406 = vmatpush1.bf16.msra.mxu0 %v5593
  %6407 = vmatprep.subr.bf16.mxu0 %v5602
  %6408 = vmatpush1.bf16.msra.mxu0 %v5601
  %6409 = vmatprep.subr.bf16.mxu0 %v5610
  %6410 = vmatpush1.bf16.msra.mxu0 %v5609
  %6411 = vmatprep.subr.bf16.mxu0 %v5618
  %6412 = vmatpush1.bf16.msra.mxu0 %v5617
  %6413 = vmatprep.subr.bf16.mxu0 %v5626
  %6414 = vmatpush1.bf16.msra.mxu0 %v5625
  %6415 = vmatprep.subr.bf16.mxu0 %v5634
  %6416 = vmatpush1.bf16.msra.mxu0 %v5633
  %6417 = vmatprep.subr.bf16.mxu0 %v5642
  %6418 = vmatpush1.bf16.msra.mxu0 %v5641
  %6419 = vmatprep.subr.bf16.mxu0 %v5650
  %6420 = vmatpush1.bf16.msra.mxu0 %v5649
  %6421 = vmatprep.subr.bf16.mxu0 %v5658
  %6422 = vmatpush1.bf16.msra.mxu0 %v5657
  %6423 = vmatprep.mubr.bf16.mxu0 %v3188
  %6424 = vmatmul.mubr.bf16.gmra.mrb[0].mxu0 %v3187
  %v6425 = vpop.f32.mrb[0].mxu0
  %v6426 = vadd.f32 %v6383, %v6425
  %v6427 = vpop.f32.mrb[0].mxu0
  %v6428 = vadd.f32 %v6385, %v6427
  %v6429 = vpop.f32.mrb[0].mxu0
  %v6430 = vadd.f32 %v6387, %v6429
  %v6431 = vpop.f32.mrb[0].mxu0
  %v6432 = vadd.f32 %v6389, %v6431
  %6433 = vdwg.mxu0
  %6434 = vmatprep.subr.bf16.mxu0 %v5666
  %6435 = vmatpush1.bf16.msra.mxu0 %v5665
  %6436 = vmatprep.subr.bf16.mxu0 %v5674
  %6437 = vmatpush1.bf16.msra.mxu0 %v5673
  %6438 = vmatprep.subr.bf16.mxu0 %v5682
  %6439 = vmatpush1.bf16.msra.mxu0 %v5681
  %6440 = vmatprep.subr.bf16.mxu0 %v5690
  %6441 = vmatpush1.bf16.msra.mxu0 %v5689
  %6442 = vmatprep.subr.bf16.mxu0 %v5698
  %6443 = vmatpush1.bf16.msra.mxu0 %v5697
  %6444 = vmatprep.subr.bf16.mxu0 %v5706
  %6445 = vmatpush1.bf16.msra.mxu0 %v5705
  %6446 = vmatprep.subr.bf16.mxu0 %v5714
  %6447 = vmatpush1.bf16.msra.mxu0 %v5713
  %6448 = vmatprep.subr.bf16.mxu0 %v5722
  %6449 = vmatpush1.bf16.msra.mxu0 %v5721
  %6450 = vmatprep.subr.bf16.mxu0 %v5730
  %6451 = vmatpush1.bf16.msra.mxu0 %v5729
  %6452 = vmatprep.subr.bf16.mxu0 %v5738
  %6453 = vmatpush1.bf16.msra.mxu0 %v5737
  %6454 = vmatprep.subr.bf16.mxu0 %v5746
  %6455 = vmatpush1.bf16.msra.mxu0 %v5745
  %6456 = vmatprep.subr.bf16.mxu0 %v5754
  %6457 = vmatpush1.bf16.msra.mxu0 %v5753
  %6458 = vmatprep.subr.bf16.mxu0 %v5762
  %6459 = vmatpush1.bf16.msra.mxu0 %v5761
  %6460 = vmatprep.subr.bf16.mxu0 %v5770
  %6461 = vmatpush1.bf16.msra.mxu0 %v5769
  %6462 = vmatprep.subr.bf16.mxu0 %v5778
  %6463 = vmatpush1.bf16.msra.mxu0 %v5777
  %6464 = vmatprep.subr.bf16.mxu0 %v5786
  %6465 = vmatpush1.bf16.msra.mxu0 %v5785
  %6466 = vmatprep.mubr.bf16.mxu0 %v3190
  %6467 = vmatmul.mubr.bf16.gmra.mrb[0].mxu0 %v3189
  %v6468 = vpop.f32.mrb[0].mxu0
  %v6469 = vadd.f32 %v6426, %v6468
  %v6470 = vpop.f32.mrb[0].mxu0
  %v6471 = vadd.f32 %v6428, %v6470
  %v6472 = vpop.f32.mrb[0].mxu0
  %v6473 = vadd.f32 %v6430, %v6472
  %v6474 = vpop.f32.mrb[0].mxu0
  %v6475 = vadd.f32 %v6432, %v6474
  %6476 = vdwg.mxu0
  %6477 = vmatprep.subr.bf16.mxu0 %v5284
  %6478 = vmatpush1.bf16.msra.mxu0 %v5283
  %6479 = vmatprep.subr.bf16.mxu0 %v5292
  %6480 = vmatpush1.bf16.msra.mxu0 %v5291
  %6481 = vmatprep.subr.bf16.mxu0 %v5300
  %6482 = vmatpush1.bf16.msra.mxu0 %v5299
  %6483 = vmatprep.subr.bf16.mxu0 %v5308
  %6484 = vmatpush1.bf16.msra.mxu0 %v5307
  %6485 = vmatprep.subr.bf16.mxu0 %v5316
  %6486 = vmatpush1.bf16.msra.mxu0 %v5315
  %6487 = vmatprep.subr.bf16.mxu0 %v5324
  %6488 = vmatpush1.bf16.msra.mxu0 %v5323
  %6489 = vmatprep.subr.bf16.mxu0 %v5332
  %6490 = vmatpush1.bf16.msra.mxu0 %v5331
  %6491 = vmatprep.subr.bf16.mxu0 %v5340
  %6492 = vmatpush1.bf16.msra.mxu0 %v5339
  %6493 = vmatprep.subr.bf16.mxu0 %v5348
  %6494 = vmatpush1.bf16.msra.mxu0 %v5347
  %6495 = vmatprep.subr.bf16.mxu0 %v5356
  %6496 = vmatpush1.bf16.msra.mxu0 %v5355
  %6497 = vmatprep.subr.bf16.mxu0 %v5364
  %6498 = vmatpush1.bf16.msra.mxu0 %v5363
  %6499 = vmatprep.subr.bf16.mxu0 %v5372
  %6500 = vmatpush1.bf16.msra.mxu0 %v5371
  %6501 = vmatprep.subr.bf16.mxu0 %v5380
  %6502 = vmatpush1.bf16.msra.mxu0 %v5379
  %6503 = vmatprep.subr.bf16.mxu0 %v5388
  %6504 = vmatpush1.bf16.msra.mxu0 %v5387
  %6505 = vmatprep.subr.bf16.mxu0 %v5396
  %6506 = vmatpush1.bf16.msra.mxu0 %v5395
  %6507 = vmatprep.subr.bf16.mxu0 %v5404
  %6508 = vmatpush1.bf16.msra.mxu0 %v5403
  %6509 = vmatprep.mubr.bf16.mxu0 %v3184
  %6510 = vmatmul.mubr.bf16.gmra.mrb[0].mxu0 %v3183
  %v6511 = vpop.f32.mrb[0].mxu0
  %v6512 = vadd.f32 %v3716, %v6511
  %v6513 = vpop.f32.mrb[0].mxu0
  %v6514 = vadd.f32 %v3720, %v6513
  %v6515 = vpop.f32.mrb[0].mxu0
  %v6516 = vadd.f32 %v3716, %v6515
  %v6517 = vpop.f32.mrb[0].mxu0
  %v6518 = vadd.f32 %v3720, %v6517
  %6519 = vdwg.mxu0
  %6520 = vmatprep.subr.bf16.mxu0 %v5412
  %6521 = vmatpush1.bf16.msra.mxu0 %v5411
  %6522 = vmatprep.subr.bf16.mxu0 %v5420
  %6523 = vmatpush1.bf16.msra.mxu0 %v5419
  %6524 = vmatprep.subr.bf16.mxu0 %v5428
  %6525 = vmatpush1.bf16.msra.mxu0 %v5427
  %6526 = vmatprep.subr.bf16.mxu0 %v5436
  %6527 = vmatpush1.bf16.msra.mxu0 %v5435
  %6528 = vmatprep.subr.bf16.mxu0 %v5444
  %6529 = vmatpush1.bf16.msra.mxu0 %v5443
  %6530 = vmatprep.subr.bf16.mxu0 %v5452
  %6531 = vmatpush1.bf16.msra.mxu0 %v5451
  %6532 = vmatprep.subr.bf16.mxu0 %v5460
  %6533 = vmatpush1.bf16.msra.mxu0 %v5459
  %6534 = vmatprep.subr.bf16.mxu0 %v5468
  %6535 = vmatpush1.bf16.msra.mxu0 %v5467
  %6536 = vmatprep.subr.bf16.mxu0 %v5476
  %6537 = vmatpush1.bf16.msra.mxu0 %v5475
  %6538 = vmatprep.subr.bf16.mxu0 %v5484
  %6539 = vmatpush1.bf16.msra.mxu0 %v5483
  %6540 = vmatprep.subr.bf16.mxu0 %v5492
  %6541 = vmatpush1.bf16.msra.mxu0 %v5491
  %6542 = vmatprep.subr.bf16.mxu0 %v5500
  %6543 = vmatpush1.bf16.msra.mxu0 %v5499
  %6544 = vmatprep.subr.bf16.mxu0 %v5508
  %6545 = vmatpush1.bf16.msra.mxu0 %v5507
  %6546 = vmatprep.subr.bf16.mxu0 %v5516
  %6547 = vmatpush1.bf16.msra.mxu0 %v5515
  %6548 = vmatprep.subr.bf16.mxu0 %v5524
  %6549 = vmatpush1.bf16.msra.mxu0 %v5523
  %6550 = vmatprep.subr.bf16.mxu0 %v5532
  %6551 = vmatpush1.bf16.msra.mxu0 %v5531
  %6552 = vmatprep.mubr.bf16.mxu0 %v3186
  %6553 = vmatmul.mubr.bf16.gmra.mrb[0].mxu0 %v3185
  %v6554 = vpop.f32.mrb[0].mxu0
  %v6555 = vadd.f32 %v6512, %v6554
  %v6556 = vpop.f32.mrb[0].mxu0
  %v6557 = vadd.f32 %v6514, %v6556
  %v6558 = vpop.f32.mrb[0].mxu0
  %v6559 = vadd.f32 %v6516, %v6558
  %v6560 = vpop.f32.mrb[0].mxu0
  %v6561 = vadd.f32 %v6518, %v6560
  %6562 = vdwg.mxu0
  %6563 = vmatprep.subr.bf16.mxu0 %v5540
  %6564 = vmatpush1.bf16.msra.mxu0 %v5539
  %6565 = vmatprep.subr.bf16.mxu0 %v5548
  %6566 = vmatpush1.bf16.msra.mxu0 %v5547
  %6567 = vmatprep.subr.bf16.mxu0 %v5556
  %6568 = vmatpush1.bf16.msra.mxu0 %v5555
  %6569 = vmatprep.subr.bf16.mxu0 %v5564
  %6570 = vmatpush1.bf16.msra.mxu0 %v5563
  %6571 = vmatprep.subr.bf16.mxu0 %v5572
  %6572 = vmatpush1.bf16.msra.mxu0 %v5571
  %6573 = vmatprep.subr.bf16.mxu0 %v5580
  %6574 = vmatpush1.bf16.msra.mxu0 %v5579
  %6575 = vmatprep.subr.bf16.mxu0 %v5588
  %6576 = vmatpush1.bf16.msra.mxu0 %v5587
  %6577 = vmatprep.subr.bf16.mxu0 %v5596
  %6578 = vmatpush1.bf16.msra.mxu0 %v5595
  %6579 = vmatprep.subr.bf16.mxu0 %v5604
  %6580 = vmatpush1.bf16.msra.mxu0 %v5603
  %6581 = vmatprep.subr.bf16.mxu0 %v5612
  %6582 = vmatpush1.bf16.msra.mxu0 %v5611
  %6583 = vmatprep.subr.bf16.mxu0 %v5620
  %6584 = vmatpush1.bf16.msra.mxu0 %v5619
  %6585 = vmatprep.subr.bf16.mxu0 %v5628
  %6586 = vmatpush1.bf16.msra.mxu0 %v5627
  %6587 = vmatprep.subr.bf16.mxu0 %v5636
  %6588 = vmatpush1.bf16.msra.mxu0 %v5635
  %6589 = vmatprep.subr.bf16.mxu0 %v5644
  %6590 = vmatpush1.bf16.msra.mxu0 %v5643
  %6591 = vmatprep.subr.bf16.mxu0 %v5652
  %6592 = vmatpush1.bf16.msra.mxu0 %v5651
  %6593 = vmatprep.subr.bf16.mxu0 %v5660
  %6594 = vmatpush1.bf16.msra.mxu0 %v5659
  %6595 = vmatprep.mubr.bf16.mxu0 %v3188
  %6596 = vmatmul.mubr.bf16.gmra.mrb[0].mxu0 %v3187
  %v6597 = vpop.f32.mrb[0].mxu0
  %v6598 = vadd.f32 %v6555, %v6597
  %v6599 = vpop.f32.mrb[0].mxu0
  %v6600 = vadd.f32 %v6557, %v6599
  %v6601 = vpop.f32.mrb[0].mxu0
  %v6602 = vadd.f32 %v6559, %v6601
  %v6603 = vpop.f32.mrb[0].mxu0
  %v6604 = vadd.f32 %v6561, %v6603
  %6605 = vdwg.mxu0
  %6606 = vmatprep.subr.bf16.mxu0 %v5668
  %6607 = vmatpush1.bf16.msra.mxu0 %v5667
  %6608 = vmatprep.subr.bf16.mxu0 %v5676
  %6609 = vmatpush1.bf16.msra.mxu0 %v5675
  %6610 = vmatprep.subr.bf16.mxu0 %v5684
  %6611 = vmatpush1.bf16.msra.mxu0 %v5683
  %6612 = vmatprep.subr.bf16.mxu0 %v5692
  %6613 = vmatpush1.bf16.msra.mxu0 %v5691
  %6614 = vmatprep.subr.bf16.mxu0 %v5700
  %6615 = vmatpush1.bf16.msra.mxu0 %v5699
  %6616 = vmatprep.subr.bf16.mxu0 %v5708
  %6617 = vmatpush1.bf16.msra.mxu0 %v5707
  %6618 = vmatprep.subr.bf16.mxu0 %v5716
  %6619 = vmatpush1.bf16.msra.mxu0 %v5715
  %6620 = vmatprep.subr.bf16.mxu0 %v5724
  %6621 = vmatpush1.bf16.msra.mxu0 %v5723
  %6622 = vmatprep.subr.bf16.mxu0 %v5732
  %6623 = vmatpush1.bf16.msra.mxu0 %v5731
  %6624 = vmatprep.subr.bf16.mxu0 %v5740
  %6625 = vmatpush1.bf16.msra.mxu0 %v5739
  %6626 = vmatprep.subr.bf16.mxu0 %v5748
  %6627 = vmatpush1.bf16.msra.mxu0 %v5747
  %6628 = vmatprep.subr.bf16.mxu0 %v5756
  %6629 = vmatpush1.bf16.msra.mxu0 %v5755
  %6630 = vmatprep.subr.bf16.mxu0 %v5764
  %6631 = vmatpush1.bf16.msra.mxu0 %v5763
  %6632 = vmatprep.subr.bf16.mxu0 %v5772
  %6633 = vmatpush1.bf16.msra.mxu0 %v5771
  %6634 = vmatprep.subr.bf16.mxu0 %v5780
  %6635 = vmatpush1.bf16.msra.mxu0 %v5779
  %6636 = vmatprep.subr.bf16.mxu0 %v5788
  %6637 = vmatpush1.bf16.msra.mxu0 %v5787
  %6638 = vmatprep.mubr.bf16.mxu0 %v3190
  %6639 = vmatmul.mubr.bf16.gmra.mrb[0].mxu0 %v3189
  %v6640 = vpop.f32.mrb[0].mxu0
  %v6641 = vadd.f32 %v6598, %v6640
  %v6642 = vpop.f32.mrb[0].mxu0
  %v6643 = vadd.f32 %v6600, %v6642
  %v6644 = vpop.f32.mrb[0].mxu0
  %v6645 = vadd.f32 %v6602, %v6644
  %v6646 = vpop.f32.mrb[0].mxu0
  %v6647 = vadd.f32 %v6604, %v6646
  %6648 = vdwg.mxu0
  %6649 = vmatprep.subr.bf16.mxu0 %v5286
  %6650 = vmatpush1.bf16.msra.mxu0 %v5285
  %6651 = vmatprep.subr.bf16.mxu0 %v5294
  %6652 = vmatpush1.bf16.msra.mxu0 %v5293
  %6653 = vmatprep.subr.bf16.mxu0 %v5302
  %6654 = vmatpush1.bf16.msra.mxu0 %v5301
  %6655 = vmatprep.subr.bf16.mxu0 %v5310
  %6656 = vmatpush1.bf16.msra.mxu0 %v5309
  %6657 = vmatprep.subr.bf16.mxu0 %v5318
  %6658 = vmatpush1.bf16.msra.mxu0 %v5317
  %6659 = vmatprep.subr.bf16.mxu0 %v5326
  %6660 = vmatpush1.bf16.msra.mxu0 %v5325
  %6661 = vmatprep.subr.bf16.mxu0 %v5334
  %6662 = vmatpush1.bf16.msra.mxu0 %v5333
  %6663 = vmatprep.subr.bf16.mxu0 %v5342
  %6664 = vmatpush1.bf16.msra.mxu0 %v5341
  %6665 = vmatprep.subr.bf16.mxu0 %v5350
  %6666 = vmatpush1.bf16.msra.mxu0 %v5349
  %6667 = vmatprep.subr.bf16.mxu0 %v5358
  %6668 = vmatpush1.bf16.msra.mxu0 %v5357
  %6669 = vmatprep.subr.bf16.mxu0 %v5366
  %6670 = vmatpush1.bf16.msra.mxu0 %v5365
  %6671 = vmatprep.subr.bf16.mxu0 %v5374
  %6672 = vmatpush1.bf16.msra.mxu0 %v5373
  %6673 = vmatprep.subr.bf16.mxu0 %v5382
  %6674 = vmatpush1.bf16.msra.mxu0 %v5381
  %6675 = vmatprep.subr.bf16.mxu0 %v5390
  %6676 = vmatpush1.bf16.msra.mxu0 %v5389
  %6677 = vmatprep.subr.bf16.mxu0 %v5398
  %6678 = vmatpush1.bf16.msra.mxu0 %v5397
  %6679 = vmatprep.subr.bf16.mxu0 %v5406
  %6680 = vmatpush1.bf16.msra.mxu0 %v5405
  %6681 = vmatprep.mubr.bf16.mxu0 %v3184
  %6682 = vmatmul.mubr.bf16.gmra.mrb[0].mxu0 %v3183
  %v6683 = vpop.f32.mrb[0].mxu0
  %v6684 = vadd.f32 %v3724, %v6683
  %v6685 = vpop.f32.mrb[0].mxu0
  %v6686 = vadd.f32 %v3728, %v6685
  %v6687 = vpop.f32.mrb[0].mxu0
  %v6688 = vadd.f32 %v3724, %v6687
  %v6689 = vpop.f32.mrb[0].mxu0
  %v6690 = vadd.f32 %v3728, %v6689
  %6691 = vdwg.mxu0
  %6692 = vmatprep.subr.bf16.mxu0 %v5414
  %6693 = vmatpush1.bf16.msra.mxu0 %v5413
  %6694 = vmatprep.subr.bf16.mxu0 %v5422
  %6695 = vmatpush1.bf16.msra.mxu0 %v5421
  %6696 = vmatprep.subr.bf16.mxu0 %v5430
  %6697 = vmatpush1.bf16.msra.mxu0 %v5429
  %6698 = vmatprep.subr.bf16.mxu0 %v5438
  %6699 = vmatpush1.bf16.msra.mxu0 %v5437
  %6700 = vmatprep.subr.bf16.mxu0 %v5446
  %6701 = vmatpush1.bf16.msra.mxu0 %v5445
  %6702 = vmatprep.subr.bf16.mxu0 %v5454
  %6703 = vmatpush1.bf16.msra.mxu0 %v5453
  %6704 = vmatprep.subr.bf16.mxu0 %v5462
  %6705 = vmatpush1.bf16.msra.mxu0 %v5461
  %6706 = vmatprep.subr.bf16.mxu0 %v5470
  %6707 = vmatpush1.bf16.msra.mxu0 %v5469
  %6708 = vmatprep.subr.bf16.mxu0 %v5478
  %6709 = vmatpush1.bf16.msra.mxu0 %v5477
  %6710 = vmatprep.subr.bf16.mxu0 %v5486
  %6711 = vmatpush1.bf16.msra.mxu0 %v5485
  %6712 = vmatprep.subr.bf16.mxu0 %v5494
  %6713 = vmatpush1.bf16.msra.mxu0 %v5493
  %6714 = vmatprep.subr.bf16.mxu0 %v5502
  %6715 = vmatpush1.bf16.msra.mxu0 %v5501
  %6716 = vmatprep.subr.bf16.mxu0 %v5510
  %6717 = vmatpush1.bf16.msra.mxu0 %v5509
  %6718 = vmatprep.subr.bf16.mxu0 %v5518
  %6719 = vmatpush1.bf16.msra.mxu0 %v5517
  %6720 = vmatprep.subr.bf16.mxu0 %v5526
  %6721 = vmatpush1.bf16.msra.mxu0 %v5525
  %6722 = vmatprep.subr.bf16.mxu0 %v5534
  %6723 = vmatpush1.bf16.msra.mxu0 %v5533
  %6724 = vmatprep.mubr.bf16.mxu0 %v3186
  %6725 = vmatmul.mubr.bf16.gmra.mrb[0].mxu0 %v3185
  %v6726 = vpop.f32.mrb[0].mxu0
  %v6727 = vadd.f32 %v6684, %v6726
  %v6728 = vpop.f32.mrb[0].mxu0
  %v6729 = vadd.f32 %v6686, %v6728
  %v6730 = vpop.f32.mrb[0].mxu0
  %v6731 = vadd.f32 %v6688, %v6730
  %v6732 = vpop.f32.mrb[0].mxu0
  %v6733 = vadd.f32 %v6690, %v6732
  %6734 = vdwg.mxu0
  %6735 = vmatprep.subr.bf16.mxu0 %v5542
  %6736 = vmatpush1.bf16.msra.mxu0 %v5541
  %6737 = vmatprep.subr.bf16.mxu0 %v5550
  %6738 = vmatpush1.bf16.msra.mxu0 %v5549
  %6739 = vmatprep.subr.bf16.mxu0 %v5558
  %6740 = vmatpush1.bf16.msra.mxu0 %v5557
  %6741 = vmatprep.subr.bf16.mxu0 %v5566
  %6742 = vmatpush1.bf16.msra.mxu0 %v5565
  %6743 = vmatprep.subr.bf16.mxu0 %v5574
  %6744 = vmatpush1.bf16.msra.mxu0 %v5573
  %6745 = vmatprep.subr.bf16.mxu0 %v5582
  %6746 = vmatpush1.bf16.msra.mxu0 %v5581
  %6747 = vmatprep.subr.bf16.mxu0 %v5590
  %6748 = vmatpush1.bf16.msra.mxu0 %v5589
  %6749 = vmatprep.subr.bf16.mxu0 %v5598
  %6750 = vmatpush1.bf16.msra.mxu0 %v5597
  %6751 = vmatprep.subr.bf16.mxu0 %v5606
  %6752 = vmatpush1.bf16.msra.mxu0 %v5605
  %6753 = vmatprep.subr.bf16.mxu0 %v5614
  %6754 = vmatpush1.bf16.msra.mxu0 %v5613
  %6755 = vmatprep.subr.bf16.mxu0 %v5622
  %6756 = vmatpush1.bf16.msra.mxu0 %v5621
  %6757 = vmatprep.subr.bf16.mxu0 %v5630
  %6758 = vmatpush1.bf16.msra.mxu0 %v5629
  %6759 = vmatprep.subr.bf16.mxu0 %v5638
  %6760 = vmatpush1.bf16.msra.mxu0 %v5637
  %6761 = vmatprep.subr.bf16.mxu0 %v5646
  %6762 = vmatpush1.bf16.msra.mxu0 %v5645
  %6763 = vmatprep.subr.bf16.mxu0 %v5654
  %6764 = vmatpush1.bf16.msra.mxu0 %v5653
  %6765 = vmatprep.subr.bf16.mxu0 %v5662
  %6766 = vmatpush1.bf16.msra.mxu0 %v5661
  %6767 = vmatprep.mubr.bf16.mxu0 %v3188
  %6768 = vmatmul.mubr.bf16.gmra.mrb[0].mxu0 %v3187
  %v6769 = vpop.f32.mrb[0].mxu0
  %v6770 = vadd.f32 %v6727, %v6769
  %v6771 = vpop.f32.mrb[0].mxu0
  %v6772 = vadd.f32 %v6729, %v6771
  %v6773 = vpop.f32.mrb[0].mxu0
  %v6774 = vadd.f32 %v6731, %v6773
  %v6775 = vpop.f32.mrb[0].mxu0
  %v6776 = vadd.f32 %v6733, %v6775
  %6777 = vdwg.mxu0
  %6778 = vmatprep.subr.bf16.mxu0 %v5670
  %6779 = vmatpush1.bf16.msra.mxu0 %v5669
  %6780 = vmatprep.subr.bf16.mxu0 %v5678
  %6781 = vmatpush1.bf16.msra.mxu0 %v5677
  %6782 = vmatprep.subr.bf16.mxu0 %v5686
  %6783 = vmatpush1.bf16.msra.mxu0 %v5685
  %6784 = vmatprep.subr.bf16.mxu0 %v5694
  %6785 = vmatpush1.bf16.msra.mxu0 %v5693
  %6786 = vmatprep.subr.bf16.mxu0 %v5702
  %6787 = vmatpush1.bf16.msra.mxu0 %v5701
  %6788 = vmatprep.subr.bf16.mxu0 %v5710
  %6789 = vmatpush1.bf16.msra.mxu0 %v5709
  %6790 = vmatprep.subr.bf16.mxu0 %v5718
  %6791 = vmatpush1.bf16.msra.mxu0 %v5717
  %6792 = vmatprep.subr.bf16.mxu0 %v5726
  %6793 = vmatpush1.bf16.msra.mxu0 %v5725
  %6794 = vmatprep.subr.bf16.mxu0 %v5734
  %6795 = vmatpush1.bf16.msra.mxu0 %v5733
  %6796 = vmatprep.subr.bf16.mxu0 %v5742
  %6797 = vmatpush1.bf16.msra.mxu0 %v5741
  %6798 = vmatprep.subr.bf16.mxu0 %v5750
  %6799 = vmatpush1.bf16.msra.mxu0 %v5749
  %6800 = vmatprep.subr.bf16.mxu0 %v5758
  %6801 = vmatpush1.bf16.msra.mxu0 %v5757
  %6802 = vmatprep.subr.bf16.mxu0 %v5766
  %6803 = vmatpush1.bf16.msra.mxu0 %v5765
  %6804 = vmatprep.subr.bf16.mxu0 %v5774
  %6805 = vmatpush1.bf16.msra.mxu0 %v5773
  %6806 = vmatprep.subr.bf16.mxu0 %v5782
  %6807 = vmatpush1.bf16.msra.mxu0 %v5781
  %6808 = vmatprep.subr.bf16.mxu0 %v5790
  %6809 = vmatpush1.bf16.msra.mxu0 %v5789
  %6810 = vmatprep.mubr.bf16.mxu0 %v3190
  %6811 = vmatmul.mubr.bf16.gmra.mrb[0].mxu0 %v3189
  %v6812 = vpop.f32.mrb[0].mxu0
  %v6813 = vadd.f32 %v6770, %v6812
  %v6814 = vpop.f32.mrb[0].mxu0
  %v6815 = vadd.f32 %v6772, %v6814
  %v6816 = vpop.f32.mrb[0].mxu0
  %v6817 = vadd.f32 %v6774, %v6816
  %v6818 = vpop.f32.mrb[0].mxu0
  %v6819 = vadd.f32 %v6776, %v6818
  %6820 = vdwg.mxu0
  %6821 = vmatprep.subr.bf16.mxu0 %v5288
  %6822 = vmatpush1.bf16.msra.mxu0 %v5287
  %6823 = vmatprep.subr.bf16.mxu0 %v5296
  %6824 = vmatpush1.bf16.msra.mxu0 %v5295
  %6825 = vmatprep.subr.bf16.mxu0 %v5304
  %6826 = vmatpush1.bf16.msra.mxu0 %v5303
  %6827 = vmatprep.subr.bf16.mxu0 %v5312
  %6828 = vmatpush1.bf16.msra.mxu0 %v5311
  %6829 = vmatprep.subr.bf16.mxu0 %v5320
  %6830 = vmatpush1.bf16.msra.mxu0 %v5319
  %6831 = vmatprep.subr.bf16.mxu0 %v5328
  %6832 = vmatpush1.bf16.msra.mxu0 %v5327
  %6833 = vmatprep.subr.bf16.mxu0 %v5336
  %6834 = vmatpush1.bf16.msra.mxu0 %v5335
  %6835 = vmatprep.subr.bf16.mxu0 %v5344
  %6836 = vmatpush1.bf16.msra.mxu0 %v5343
  %6837 = vmatprep.subr.bf16.mxu0 %v5352
  %6838 = vmatpush1.bf16.msra.mxu0 %v5351
  %6839 = vmatprep.subr.bf16.mxu0 %v5360
  %6840 = vmatpush1.bf16.msra.mxu0 %v5359
  %6841 = vmatprep.subr.bf16.mxu0 %v5368
  %6842 = vmatpush1.bf16.msra.mxu0 %v5367
  %6843 = vmatprep.subr.bf16.mxu0 %v5376
  %6844 = vmatpush1.bf16.msra.mxu0 %v5375
  %6845 = vmatprep.subr.bf16.mxu0 %v5384
  %6846 = vmatpush1.bf16.msra.mxu0 %v5383
  %6847 = vmatprep.subr.bf16.mxu0 %v5392
  %6848 = vmatpush1.bf16.msra.mxu0 %v5391
  %6849 = vmatprep.subr.bf16.mxu0 %v5400
  %6850 = vmatpush1.bf16.msra.mxu0 %v5399
  %6851 = vmatprep.subr.bf16.mxu0 %v5408
  %6852 = vmatpush1.bf16.msra.mxu0 %v5407
  %6853 = vmatprep.mubr.bf16.mxu0 %v3184
  %6854 = vmatmul.mubr.bf16.gmra.mrb[0].mxu0 %v3183
  %v6855 = vpop.f32.mrb[0].mxu0
  %v6856 = vadd.f32 %v3732, %v6855
  %v6857 = vpop.f32.mrb[0].mxu0
  %v6858 = vadd.f32 %v3736, %v6857
  %v6859 = vpop.f32.mrb[0].mxu0
  %v6860 = vadd.f32 %v3732, %v6859
  %v6861 = vpop.f32.mrb[0].mxu0
  %v6862 = vadd.f32 %v3736, %v6861
  %6863 = vdwg.mxu0
  %6864 = vmatprep.subr.bf16.mxu0 %v5416
  %6865 = vmatpush1.bf16.msra.mxu0 %v5415
  %6866 = vmatprep.subr.bf16.mxu0 %v5424
  %6867 = vmatpush1.bf16.msra.mxu0 %v5423
  %6868 = vmatprep.subr.bf16.mxu0 %v5432
  %6869 = vmatpush1.bf16.msra.mxu0 %v5431
  %6870 = vmatprep.subr.bf16.mxu0 %v5440
  %6871 = vmatpush1.bf16.msra.mxu0 %v5439
  %6872 = vmatprep.subr.bf16.mxu0 %v5448
  %6873 = vmatpush1.bf16.msra.mxu0 %v5447
  %6874 = vmatprep.subr.bf16.mxu0 %v5456
  %6875 = vmatpush1.bf16.msra.mxu0 %v5455
  %6876 = vmatprep.subr.bf16.mxu0 %v5464
  %6877 = vmatpush1.bf16.msra.mxu0 %v5463
  %6878 = vmatprep.subr.bf16.mxu0 %v5472
  %6879 = vmatpush1.bf16.msra.mxu0 %v5471
  %6880 = vmatprep.subr.bf16.mxu0 %v5480
  %6881 = vmatpush1.bf16.msra.mxu0 %v5479
  %6882 = vmatprep.subr.bf16.mxu0 %v5488
  %6883 = vmatpush1.bf16.msra.mxu0 %v5487
  %6884 = vmatprep.subr.bf16.mxu0 %v5496
  %6885 = vmatpush1.bf16.msra.mxu0 %v5495
  %6886 = vmatprep.subr.bf16.mxu0 %v5504
  %6887 = vmatpush1.bf16.msra.mxu0 %v5503
  %6888 = vmatprep.subr.bf16.mxu0 %v5512
  %6889 = vmatpush1.bf16.msra.mxu0 %v5511
  %6890 = vmatprep.subr.bf16.mxu0 %v5520
  %6891 = vmatpush1.bf16.msra.mxu0 %v5519
  %6892 = vmatprep.subr.bf16.mxu0 %v5528
  %6893 = vmatpush1.bf16.msra.mxu0 %v5527
  %6894 = vmatprep.subr.bf16.mxu0 %v5536
  %6895 = vmatpush1.bf16.msra.mxu0 %v5535
  %6896 = vmatprep.mubr.bf16.mxu0 %v3186
  %6897 = vmatmul.mubr.bf16.gmra.mrb[0].mxu0 %v3185
  %v6898 = vpop.f32.mrb[0].mxu0
  %v6899 = vadd.f32 %v6856, %v6898
  %v6900 = vpop.f32.mrb[0].mxu0
  %v6901 = vadd.f32 %v6858, %v6900
  %v6902 = vpop.f32.mrb[0].mxu0
  %v6903 = vadd.f32 %v6860, %v6902
  %v6904 = vpop.f32.mrb[0].mxu0
  %v6905 = vadd.f32 %v6862, %v6904
  %6906 = vdwg.mxu0
  %6907 = vmatprep.subr.bf16.mxu0 %v5544
  %6908 = vmatpush1.bf16.msra.mxu0 %v5543
  %6909 = vmatprep.subr.bf16.mxu0 %v5552
  %6910 = vmatpush1.bf16.msra.mxu0 %v5551
  %6911 = vmatprep.subr.bf16.mxu0 %v5560
  %6912 = vmatpush1.bf16.msra.mxu0 %v5559
  %6913 = vmatprep.subr.bf16.mxu0 %v5568
  %6914 = vmatpush1.bf16.msra.mxu0 %v5567
  %6915 = vmatprep.subr.bf16.mxu0 %v5576
  %6916 = vmatpush1.bf16.msra.mxu0 %v5575
  %6917 = vmatprep.subr.bf16.mxu0 %v5584
  %6918 = vmatpush1.bf16.msra.mxu0 %v5583
  %6919 = vmatprep.subr.bf16.mxu0 %v5592
  %6920 = vmatpush1.bf16.msra.mxu0 %v5591
  %6921 = vmatprep.subr.bf16.mxu0 %v5600
  %6922 = vmatpush1.bf16.msra.mxu0 %v5599
  %6923 = vmatprep.subr.bf16.mxu0 %v5608
  %6924 = vmatpush1.bf16.msra.mxu0 %v5607
  %6925 = vmatprep.subr.bf16.mxu0 %v5616
  %6926 = vmatpush1.bf16.msra.mxu0 %v5615
  %6927 = vmatprep.subr.bf16.mxu0 %v5624
  %6928 = vmatpush1.bf16.msra.mxu0 %v5623
  %6929 = vmatprep.subr.bf16.mxu0 %v5632
  %6930 = vmatpush1.bf16.msra.mxu0 %v5631
  %6931 = vmatprep.subr.bf16.mxu0 %v5640
  %6932 = vmatpush1.bf16.msra.mxu0 %v5639
  %6933 = vmatprep.subr.bf16.mxu0 %v5648
  %6934 = vmatpush1.bf16.msra.mxu0 %v5647
  %6935 = vmatprep.subr.bf16.mxu0 %v5656
  %6936 = vmatpush1.bf16.msra.mxu0 %v5655
  %6937 = vmatprep.subr.bf16.mxu0 %v5664
  %6938 = vmatpush1.bf16.msra.mxu0 %v5663
  %6939 = vmatprep.mubr.bf16.mxu0 %v3188
  %6940 = vmatmul.mubr.bf16.gmra.mrb[0].mxu0 %v3187
  %v6941 = vpop.f32.mrb[0].mxu0
  %v6942 = vadd.f32 %v6899, %v6941
  %v6943 = vpop.f32.mrb[0].mxu0
  %v6944 = vadd.f32 %v6901, %v6943
  %v6945 = vpop.f32.mrb[0].mxu0
  %v6946 = vadd.f32 %v6903, %v6945
  %v6947 = vpop.f32.mrb[0].mxu0
  %v6948 = vadd.f32 %v6905, %v6947
  %6949 = vdwg.mxu0
  %6950 = vmatprep.subr.bf16.mxu0 %v5672
  %6951 = vmatpush1.bf16.msra.mxu0 %v5671
  %6952 = vmatprep.subr.bf16.mxu0 %v5680
  %6953 = vmatpush1.bf16.msra.mxu0 %v5679
  %6954 = vmatprep.subr.bf16.mxu0 %v5688
  %6955 = vmatpush1.bf16.msra.mxu0 %v5687
  %6956 = vmatprep.subr.bf16.mxu0 %v5696
  %6957 = vmatpush1.bf16.msra.mxu0 %v5695
  %6958 = vmatprep.subr.bf16.mxu0 %v5704
  %6959 = vmatpush1.bf16.msra.mxu0 %v5703
  %6960 = vmatprep.subr.bf16.mxu0 %v5712
  %6961 = vmatpush1.bf16.msra.mxu0 %v5711
  %6962 = vmatprep.subr.bf16.mxu0 %v5720
  %6963 = vmatpush1.bf16.msra.mxu0 %v5719
  %6964 = vmatprep.subr.bf16.mxu0 %v5728
  %6965 = vmatpush1.bf16.msra.mxu0 %v5727
  %6966 = vmatprep.subr.bf16.mxu0 %v5736
  %6967 = vmatpush1.bf16.msra.mxu0 %v5735
  %6968 = vmatprep.subr.bf16.mxu0 %v5744
  %6969 = vmatpush1.bf16.msra.mxu0 %v5743
  %6970 = vmatprep.subr.bf16.mxu0 %v5752
  %6971 = vmatpush1.bf16.msra.mxu0 %v5751
  %6972 = vmatprep.subr.bf16.mxu0 %v5760
  %6973 = vmatpush1.bf16.msra.mxu0 %v5759
  %6974 = vmatprep.subr.bf16.mxu0 %v5768
  %6975 = vmatpush1.bf16.msra.mxu0 %v5767
  %6976 = vmatprep.subr.bf16.mxu0 %v5776
  %6977 = vmatpush1.bf16.msra.mxu0 %v5775
  %6978 = vmatprep.subr.bf16.mxu0 %v5784
  %6979 = vmatpush1.bf16.msra.mxu0 %v5783
  %6980 = vmatprep.subr.bf16.mxu0 %v5792
  %6981 = vmatpush1.bf16.msra.mxu0 %v5791
  %6982 = vmatprep.mubr.bf16.mxu0 %v3190
  %6983 = vmatmul.mubr.bf16.gmra.mrb[0].mxu0 %v3189
  %v6984 = vpop.f32.mrb[0].mxu0
  %v6985 = vadd.f32 %v6942, %v6984
  %v6986 = vpop.f32.mrb[0].mxu0
  %v6987 = vadd.f32 %v6944, %v6986
  %v6988 = vpop.f32.mrb[0].mxu0
  %v6989 = vadd.f32 %v6946, %v6988
  %v6990 = vpop.f32.mrb[0].mxu0
  %v6991 = vadd.f32 %v6948, %v6990
  %6992 = vdwg.mxu0
  %v6993 = vmax.f32 %v6469, 0.0
  %v6994 = vmax.f32 %v6471, 0.0
  %v6995 = vmax.f32 %v6641, 0.0
  %v6996 = vmax.f32 %v6643, 0.0
  %v6997 = vmax.f32 %v6813, 0.0
  %v6998 = vmax.f32 %v6815, 0.0
  %v6999 = vmax.f32 %v6985, 0.0
  %v7000 = vmax.f32 %v6987, 0.0
  %v7001 = vmax.f32 %v6473, 0.0
  %v7002 = vmax.f32 %v6475, 0.0
  %v7003 = vmax.f32 %v6645, 0.0
  %v7004 = vmax.f32 %v6647, 0.0
  %v7005 = vmax.f32 %v6817, 0.0
  %v7006 = vmax.f32 %v6819, 0.0
  %v7007 = vmax.f32 %v6989, 0.0
  %v7008 = vmax.f32 %v6991, 0.0
  %v7009 = vpack.c.bf16 %v7001, %v6993
  %v7010 = vpack.c.bf16 %v7002, %v6994
  %v7011 = vpack.c.bf16 %v7003, %v6995
  %v7012 = vpack.c.bf16 %v7004, %v6996
  %v7013 = vpack.c.bf16 %v7005, %v6997
  %v7014 = vpack.c.bf16 %v7006, %v6998
  %v7015 = vpack.c.bf16 %v7007, %v6999
  %v7016 = vpack.c.bf16 %v7008, %v7000
  %v7017 = vld [vmem:[%s9] sm:$0xf]
  %v7018 = vld [vmem:[%s9 + $0x4] sm:$0xf]
  %v7019 = vld [vmem:[%s9 + $0x8] sm:$0xf]
  %v7020 = vld [vmem:[%s9 + $0xc] sm:$0xf]
  %v7021 = vld [vmem:[%s9 + $0x10] sm:$0xf]
  %v7022 = vld [vmem:[%s9 + $0x14] sm:$0xf]
  %v7023 = vld [vmem:[%s9 + $0x18] sm:$0xf]
  %v7024 = vld [vmem:[%s9 + $0x1c] sm:$0xf]
  %v7025 = vld [vmem:[%s9 + $0x20] sm:$0xf]
  %v7026 = vld [vmem:[%s9 + $0x24] sm:$0xf]
  %v7027 = vld [vmem:[%s9 + $0x28] sm:$0xf]
  %v7028 = vld [vmem:[%s9 + $0x2c] sm:$0xf]
  %v7029 = vld [vmem:[%s9 + $0x30] sm:$0xf]
  %v7030 = vld [vmem:[%s9 + $0x34] sm:$0xf]
  %v7031 = vld [vmem:[%s9 + $0x38] sm:$0xf]
  %v7032 = vld [vmem:[%s9 + $0x3c] sm:$0xf]
  %v7033 = vld [vmem:[%s9 + $0x40] sm:$0xf]
  %v7034 = vld [vmem:[%s9 + $0x44] sm:$0xf]
  %v7035 = vld [vmem:[%s9 + $0x48] sm:$0xf]
  %v7036 = vld [vmem:[%s9 + $0x4c] sm:$0xf]
  %v7037 = vld [vmem:[%s9 + $0x50] sm:$0xf]
  %v7038 = vld [vmem:[%s9 + $0x54] sm:$0xf]
  %v7039 = vld [vmem:[%s9 + $0x58] sm:$0xf]
  %v7040 = vld [vmem:[%s9 + $0x5c] sm:$0xf]
  %v7041 = vld [vmem:[%s9 + $0x60] sm:$0xf]
  %v7042 = vld [vmem:[%s9 + $0x64] sm:$0xf]
  %v7043 = vld [vmem:[%s9 + $0x68] sm:$0xf]
  %v7044 = vld [vmem:[%s9 + $0x6c] sm:$0xf]
  %v7045 = vld [vmem:[%s9 + $0x70] sm:$0xf]
  %v7046 = vld [vmem:[%s9 + $0x74] sm:$0xf]
  %v7047 = vld [vmem:[%s9 + $0x78] sm:$0xf]
  %v7048 = vld [vmem:[%s9 + $0x7c] sm:$0xf]
  %v7049 = vld [vmem:[%s9 + $0x80] sm:$0xf]
  %v7050 = vld [vmem:[%s9 + $0x84] sm:$0xf]
  %v7051 = vld [vmem:[%s9 + $0x88] sm:$0xf]
  %v7052 = vld [vmem:[%s9 + $0x8c] sm:$0xf]
  %v7053 = vld [vmem:[%s9 + $0x90] sm:$0xf]
  %v7054 = vld [vmem:[%s9 + $0x94] sm:$0xf]
  %v7055 = vld [vmem:[%s9 + $0x98] sm:$0xf]
  %v7056 = vld [vmem:[%s9 + $0x9c] sm:$0xf]
  %v7057 = vld [vmem:[%s9 + $0xa0] sm:$0xf]
  %v7058 = vld [vmem:[%s9 + $0xa4] sm:$0xf]
  %v7059 = vld [vmem:[%s9 + $0xa8] sm:$0xf]
  %v7060 = vld [vmem:[%s9 + $0xac] sm:$0xf]
  %v7061 = vld [vmem:[%s9 + $0xb0] sm:$0xf]
  %v7062 = vld [vmem:[%s9 + $0xb4] sm:$0xf]
  %v7063 = vld [vmem:[%s9 + $0xb8] sm:$0xf]
  %v7064 = vld [vmem:[%s9 + $0xbc] sm:$0xf]
  %v7065 = vld [vmem:[%s9 + $0xc0] sm:$0xf]
  %v7066 = vld [vmem:[%s9 + $0xc4] sm:$0xf]
  %v7067 = vld [vmem:[%s9 + $0xc8] sm:$0xf]
  %v7068 = vld [vmem:[%s9 + $0xcc] sm:$0xf]
  %v7069 = vld [vmem:[%s9 + $0xd0] sm:$0xf]
  %v7070 = vld [vmem:[%s9 + $0xd4] sm:$0xf]
  %v7071 = vld [vmem:[%s9 + $0xd8] sm:$0xf]
  %v7072 = vld [vmem:[%s9 + $0xdc] sm:$0xf]
  %v7073 = vld [vmem:[%s9 + $0xe0] sm:$0xf]
  %v7074 = vld [vmem:[%s9 + $0xe4] sm:$0xf]
  %v7075 = vld [vmem:[%s9 + $0xe8] sm:$0xf]
  %v7076 = vld [vmem:[%s9 + $0xec] sm:$0xf]
  %v7077 = vld [vmem:[%s9 + $0xf0] sm:$0xf]
  %v7078 = vld [vmem:[%s9 + $0xf4] sm:$0xf]
  %v7079 = vld [vmem:[%s9 + $0xf8] sm:$0xf]
  %v7080 = vld [vmem:[%s9 + $0xfc] sm:$0xf]
  %v7081 = vld [vmem:[%s9 + $0x100] sm:$0xf]
  %v7082 = vld [vmem:[%s9 + $0x104] sm:$0xf]
  %v7083 = vld [vmem:[%s9 + $0x108] sm:$0xf]
  %v7084 = vld [vmem:[%s9 + $0x10c] sm:$0xf]
  %v7085 = vld [vmem:[%s9 + $0x110] sm:$0xf]
  %v7086 = vld [vmem:[%s9 + $0x114] sm:$0xf]
  %v7087 = vld [vmem:[%s9 + $0x118] sm:$0xf]
  %v7088 = vld [vmem:[%s9 + $0x11c] sm:$0xf]
  %v7089 = vld [vmem:[%s9 + $0x120] sm:$0xf]
  %v7090 = vld [vmem:[%s9 + $0x124] sm:$0xf]
  %v7091 = vld [vmem:[%s9 + $0x128] sm:$0xf]
  %v7092 = vld [vmem:[%s9 + $0x12c] sm:$0xf]
  %v7093 = vld [vmem:[%s9 + $0x130] sm:$0xf]
  %v7094 = vld [vmem:[%s9 + $0x134] sm:$0xf]
  %v7095 = vld [vmem:[%s9 + $0x138] sm:$0xf]
  %v7096 = vld [vmem:[%s9 + $0x13c] sm:$0xf]
  %v7097 = vld [vmem:[%s9 + $0x140] sm:$0xf]
  %v7098 = vld [vmem:[%s9 + $0x144] sm:$0xf]
  %v7099 = vld [vmem:[%s9 + $0x148] sm:$0xf]
  %v7100 = vld [vmem:[%s9 + $0x14c] sm:$0xf]
  %v7101 = vld [vmem:[%s9 + $0x150] sm:$0xf]
  %v7102 = vld [vmem:[%s9 + $0x154] sm:$0xf]
  %v7103 = vld [vmem:[%s9 + $0x158] sm:$0xf]
  %v7104 = vld [vmem:[%s9 + $0x15c] sm:$0xf]
  %v7105 = vld [vmem:[%s9 + $0x160] sm:$0xf]
  %v7106 = vld [vmem:[%s9 + $0x164] sm:$0xf]
  %v7107 = vld [vmem:[%s9 + $0x168] sm:$0xf]
  %v7108 = vld [vmem:[%s9 + $0x16c] sm:$0xf]
  %v7109 = vld [vmem:[%s9 + $0x170] sm:$0xf]
  %v7110 = vld [vmem:[%s9 + $0x174] sm:$0xf]
  %v7111 = vld [vmem:[%s9 + $0x178] sm:$0xf]
  %v7112 = vld [vmem:[%s9 + $0x17c] sm:$0xf]
  %v7113 = vld [vmem:[%s9 + $0x180] sm:$0xf]
  %v7114 = vld [vmem:[%s9 + $0x184] sm:$0xf]
  %v7115 = vld [vmem:[%s9 + $0x188] sm:$0xf]
  %v7116 = vld [vmem:[%s9 + $0x18c] sm:$0xf]
  %v7117 = vld [vmem:[%s9 + $0x190] sm:$0xf]
  %v7118 = vld [vmem:[%s9 + $0x194] sm:$0xf]
  %v7119 = vld [vmem:[%s9 + $0x198] sm:$0xf]
  %v7120 = vld [vmem:[%s9 + $0x19c] sm:$0xf]
  %v7121 = vld [vmem:[%s9 + $0x1a0] sm:$0xf]
  %v7122 = vld [vmem:[%s9 + $0x1a4] sm:$0xf]
  %v7123 = vld [vmem:[%s9 + $0x1a8] sm:$0xf]
  %v7124 = vld [vmem:[%s9 + $0x1ac] sm:$0xf]
  %v7125 = vld [vmem:[%s9 + $0x1b0] sm:$0xf]
  %v7126 = vld [vmem:[%s9 + $0x1b4] sm:$0xf]
  %v7127 = vld [vmem:[%s9 + $0x1b8] sm:$0xf]
  %v7128 = vld [vmem:[%s9 + $0x1bc] sm:$0xf]
  %v7129 = vld [vmem:[%s9 + $0x1c0] sm:$0xf]
  %v7130 = vld [vmem:[%s9 + $0x1c4] sm:$0xf]
  %v7131 = vld [vmem:[%s9 + $0x1c8] sm:$0xf]
  %v7132 = vld [vmem:[%s9 + $0x1cc] sm:$0xf]
  %v7133 = vld [vmem:[%s9 + $0x1d0] sm:$0xf]
  %v7134 = vld [vmem:[%s9 + $0x1d4] sm:$0xf]
  %v7135 = vld [vmem:[%s9 + $0x1d8] sm:$0xf]
  %v7136 = vld [vmem:[%s9 + $0x1dc] sm:$0xf]
  %v7137 = vld [vmem:[%s9 + $0x1e0] sm:$0xf]
  %v7138 = vld [vmem:[%s9 + $0x1e4] sm:$0xf]
  %v7139 = vld [vmem:[%s9 + $0x1e8] sm:$0xf]
  %v7140 = vld [vmem:[%s9 + $0x1ec] sm:$0xf]
  %v7141 = vld [vmem:[%s9 + $0x1f0] sm:$0xf]
  %v7142 = vld [vmem:[%s9 + $0x1f4] sm:$0xf]
  %v7143 = vld [vmem:[%s9 + $0x1f8] sm:$0xf]
  %v7144 = vld [vmem:[%s9 + $0x1fc] sm:$0xf]
  %v7145 = vld [vmem:[%s10] sm:$0x1]
  %v7147 = vlaneseq
  %v7148 = vshrl.u32 %v7147, 7
  %v7149 = vsub.s32 0, %v7148
  %v7150 = vrot.slane %v7145, %v7149
  %v7280 = vunpack.c.l.b16 %v7017
  %v7281 = vunpack.c.l.b16 %v7018
  %v7282 = vunpack.c.l.b16 %v7019
  %v7283 = vunpack.c.l.b16 %v7020
  %v7284 = vunpack.c.l.b16 %v7021
  %v7285 = vunpack.c.l.b16 %v7022
  %v7286 = vunpack.c.l.b16 %v7023
  %v7287 = vunpack.c.l.b16 %v7024
  %v7288 = vunpack.c.l.b16 %v7025
  %v7289 = vunpack.c.l.b16 %v7026
  %v7290 = vunpack.c.l.b16 %v7027
  %v7291 = vunpack.c.l.b16 %v7028
  %v7292 = vunpack.c.l.b16 %v7029
  %v7293 = vunpack.c.l.b16 %v7030
  %v7294 = vunpack.c.l.b16 %v7031
  %v7295 = vunpack.c.l.b16 %v7032
  %v7296 = vunpack.c.l.b16 %v7033
  %v7297 = vunpack.c.l.b16 %v7034
  %v7298 = vunpack.c.l.b16 %v7035
  %v7299 = vunpack.c.l.b16 %v7036
  %v7300 = vunpack.c.l.b16 %v7037
  %v7301 = vunpack.c.l.b16 %v7038
  %v7302 = vunpack.c.l.b16 %v7039
  %v7303 = vunpack.c.l.b16 %v7040
  %v7304 = vunpack.c.l.b16 %v7041
  %v7305 = vunpack.c.l.b16 %v7042
  %v7306 = vunpack.c.l.b16 %v7043
  %v7307 = vunpack.c.l.b16 %v7044
  %v7308 = vunpack.c.l.b16 %v7045
  %v7309 = vunpack.c.l.b16 %v7046
  %v7310 = vunpack.c.l.b16 %v7047
  %v7311 = vunpack.c.l.b16 %v7048
  %v7312 = vunpack.c.l.b16 %v7049
  %v7313 = vunpack.c.l.b16 %v7050
  %v7314 = vunpack.c.l.b16 %v7051
  %v7315 = vunpack.c.l.b16 %v7052
  %v7316 = vunpack.c.l.b16 %v7053
  %v7317 = vunpack.c.l.b16 %v7054
  %v7318 = vunpack.c.l.b16 %v7055
  %v7319 = vunpack.c.l.b16 %v7056
  %v7320 = vunpack.c.l.b16 %v7057
  %v7321 = vunpack.c.l.b16 %v7058
  %v7322 = vunpack.c.l.b16 %v7059
  %v7323 = vunpack.c.l.b16 %v7060
  %v7324 = vunpack.c.l.b16 %v7061
  %v7325 = vunpack.c.l.b16 %v7062
  %v7326 = vunpack.c.l.b16 %v7063
  %v7327 = vunpack.c.l.b16 %v7064
  %v7328 = vunpack.c.l.b16 %v7065
  %v7329 = vunpack.c.l.b16 %v7066
  %v7330 = vunpack.c.l.b16 %v7067
  %v7331 = vunpack.c.l.b16 %v7068
  %v7332 = vunpack.c.l.b16 %v7069
  %v7333 = vunpack.c.l.b16 %v7070
  %v7334 = vunpack.c.l.b16 %v7071
  %v7335 = vunpack.c.l.b16 %v7072
  %v7336 = vunpack.c.l.b16 %v7073
  %v7337 = vunpack.c.l.b16 %v7074
  %v7338 = vunpack.c.l.b16 %v7075
  %v7339 = vunpack.c.l.b16 %v7076
  %v7340 = vunpack.c.l.b16 %v7077
  %v7341 = vunpack.c.l.b16 %v7078
  %v7342 = vunpack.c.l.b16 %v7079
  %v7343 = vunpack.c.l.b16 %v7080
  %v7344 = vunpack.c.l.b16 %v7081
  %v7345 = vunpack.c.l.b16 %v7082
  %v7346 = vunpack.c.l.b16 %v7083
  %v7347 = vunpack.c.l.b16 %v7084
  %v7348 = vunpack.c.l.b16 %v7085
  %v7349 = vunpack.c.l.b16 %v7086
  %v7350 = vunpack.c.l.b16 %v7087
  %v7351 = vunpack.c.l.b16 %v7088
  %v7352 = vunpack.c.l.b16 %v7089
  %v7353 = vunpack.c.l.b16 %v7090
  %v7354 = vunpack.c.l.b16 %v7091
  %v7355 = vunpack.c.l.b16 %v7092
  %v7356 = vunpack.c.l.b16 %v7093
  %v7357 = vunpack.c.l.b16 %v7094
  %v7358 = vunpack.c.l.b16 %v7095
  %v7359 = vunpack.c.l.b16 %v7096
  %v7360 = vunpack.c.l.b16 %v7097
  %v7361 = vunpack.c.l.b16 %v7098
  %v7362 = vunpack.c.l.b16 %v7099
  %v7363 = vunpack.c.l.b16 %v7100
  %v7364 = vunpack.c.l.b16 %v7101
  %v7365 = vunpack.c.l.b16 %v7102
  %v7366 = vunpack.c.l.b16 %v7103
  %v7367 = vunpack.c.l.b16 %v7104
  %v7368 = vunpack.c.l.b16 %v7105
  %v7369 = vunpack.c.l.b16 %v7106
  %v7370 = vunpack.c.l.b16 %v7107
  %v7371 = vunpack.c.l.b16 %v7108
  %v7372 = vunpack.c.l.b16 %v7109
  %v7373 = vunpack.c.l.b16 %v7110
  %v7374 = vunpack.c.l.b16 %v7111
  %v7375 = vunpack.c.l.b16 %v7112
  %v7376 = vunpack.c.l.b16 %v7113
  %v7377 = vunpack.c.l.b16 %v7114
  %v7378 = vunpack.c.l.b16 %v7115
  %v7379 = vunpack.c.l.b16 %v7116
  %v7380 = vunpack.c.l.b16 %v7117
  %v7381 = vunpack.c.l.b16 %v7118
  %v7382 = vunpack.c.l.b16 %v7119
  %v7383 = vunpack.c.l.b16 %v7120
  %v7384 = vunpack.c.l.b16 %v7121
  %v7385 = vunpack.c.l.b16 %v7122
  %v7386 = vunpack.c.l.b16 %v7123
  %v7387 = vunpack.c.l.b16 %v7124
  %v7388 = vunpack.c.l.b16 %v7125
  %v7389 = vunpack.c.l.b16 %v7126
  %v7390 = vunpack.c.l.b16 %v7127
  %v7391 = vunpack.c.l.b16 %v7128
  %v7392 = vunpack.c.l.b16 %v7129
  %v7393 = vunpack.c.l.b16 %v7130
  %v7394 = vunpack.c.l.b16 %v7131
  %v7395 = vunpack.c.l.b16 %v7132
  %v7396 = vunpack.c.l.b16 %v7133
  %v7397 = vunpack.c.l.b16 %v7134
  %v7398 = vunpack.c.l.b16 %v7135
  %v7399 = vunpack.c.l.b16 %v7136
  %v7400 = vunpack.c.l.b16 %v7137
  %v7401 = vunpack.c.l.b16 %v7138
  %v7402 = vunpack.c.l.b16 %v7139
  %v7403 = vunpack.c.l.b16 %v7140
  %v7404 = vunpack.c.l.b16 %v7141
  %v7405 = vunpack.c.l.b16 %v7142
  %v7406 = vunpack.c.l.b16 %v7143
  %v7407 = vunpack.c.l.b16 %v7144
  %v7408 = vpack.c.b16 %v7281, %v7280
  %v7409 = vpack.c.b16 %v7283, %v7282
  %v7410 = vpack.c.b16 %v7285, %v7284
  %v7411 = vpack.c.b16 %v7287, %v7286
  %v7412 = vpack.c.b16 %v7289, %v7288
  %v7413 = vpack.c.b16 %v7291, %v7290
  %v7414 = vpack.c.b16 %v7293, %v7292
  %v7415 = vpack.c.b16 %v7295, %v7294
  %v7416 = vpack.c.b16 %v7297, %v7296
  %v7417 = vpack.c.b16 %v7299, %v7298
  %v7418 = vpack.c.b16 %v7301, %v7300
  %v7419 = vpack.c.b16 %v7303, %v7302
  %v7420 = vpack.c.b16 %v7305, %v7304
  %v7421 = vpack.c.b16 %v7307, %v7306
  %v7422 = vpack.c.b16 %v7309, %v7308
  %v7423 = vpack.c.b16 %v7311, %v7310
  %v7424 = vpack.c.b16 %v7313, %v7312
  %v7425 = vpack.c.b16 %v7315, %v7314
  %v7426 = vpack.c.b16 %v7317, %v7316
  %v7427 = vpack.c.b16 %v7319, %v7318
  %v7428 = vpack.c.b16 %v7321, %v7320
  %v7429 = vpack.c.b16 %v7323, %v7322
  %v7430 = vpack.c.b16 %v7325, %v7324
  %v7431 = vpack.c.b16 %v7327, %v7326
  %v7432 = vpack.c.b16 %v7329, %v7328
  %v7433 = vpack.c.b16 %v7331, %v7330
  %v7434 = vpack.c.b16 %v7333, %v7332
  %v7435 = vpack.c.b16 %v7335, %v7334
  %v7436 = vpack.c.b16 %v7337, %v7336
  %v7437 = vpack.c.b16 %v7339, %v7338
  %v7438 = vpack.c.b16 %v7341, %v7340
  %v7439 = vpack.c.b16 %v7343, %v7342
  %v7440 = vpack.c.b16 %v7345, %v7344
  %v7441 = vpack.c.b16 %v7347, %v7346
  %v7442 = vpack.c.b16 %v7349, %v7348
  %v7443 = vpack.c.b16 %v7351, %v7350
  %v7444 = vpack.c.b16 %v7353, %v7352
  %v7445 = vpack.c.b16 %v7355, %v7354
  %v7446 = vpack.c.b16 %v7357, %v7356
  %v7447 = vpack.c.b16 %v7359, %v7358
  %v7448 = vpack.c.b16 %v7361, %v7360
  %v7449 = vpack.c.b16 %v7363, %v7362
  %v7450 = vpack.c.b16 %v7365, %v7364
  %v7451 = vpack.c.b16 %v7367, %v7366
  %v7452 = vpack.c.b16 %v7369, %v7368
  %v7453 = vpack.c.b16 %v7371, %v7370
  %v7454 = vpack.c.b16 %v7373, %v7372
  %v7455 = vpack.c.b16 %v7375, %v7374
  %v7456 = vpack.c.b16 %v7377, %v7376
  %v7457 = vpack.c.b16 %v7379, %v7378
  %v7458 = vpack.c.b16 %v7381, %v7380
  %v7459 = vpack.c.b16 %v7383, %v7382
  %v7460 = vpack.c.b16 %v7385, %v7384
  %v7461 = vpack.c.b16 %v7387, %v7386
  %v7462 = vpack.c.b16 %v7389, %v7388
  %v7463 = vpack.c.b16 %v7391, %v7390
  %v7464 = vpack.c.b16 %v7393, %v7392
  %v7465 = vpack.c.b16 %v7395, %v7394
  %v7466 = vpack.c.b16 %v7397, %v7396
  %v7467 = vpack.c.b16 %v7399, %v7398
  %v7468 = vpack.c.b16 %v7401, %v7400
  %v7469 = vpack.c.b16 %v7403, %v7402
  %v7470 = vpack.c.b16 %v7405, %v7404
  %v7471 = vpack.c.b16 %v7407, %v7406
  %7536 = vmatprep.subr.bf16.mxu0 0
  %7537 = vmatpush1.bf16.msra.mxu0 %v7408
  %7538 = vmatprep.subr.bf16.mxu0 0
  %7539 = vmatpush1.bf16.msra.mxu0 %v7409
  %7540 = vmatprep.subr.bf16.mxu0 0
  %7541 = vmatpush1.bf16.msra.mxu0 %v7410
  %7542 = vmatprep.subr.bf16.mxu0 0
  %7543 = vmatpush1.bf16.msra.mxu0 %v7411
  %7544 = vmatprep.subr.bf16.mxu0 0
  %7545 = vmatpush1.bf16.msra.mxu0 %v7412
  %7546 = vmatprep.subr.bf16.mxu0 0
  %7547 = vmatpush1.bf16.msra.mxu0 %v7413
  %7548 = vmatprep.subr.bf16.mxu0 0
  %7549 = vmatpush1.bf16.msra.mxu0 %v7414
  %7550 = vmatprep.subr.bf16.mxu0 0
  %7551 = vmatpush1.bf16.msra.mxu0 %v7415
  %7552 = vmatprep.subr.bf16.mxu0 0
  %7553 = vmatpush1.bf16.msra.mxu0 %v7416
  %7554 = vmatprep.subr.bf16.mxu0 0
  %7555 = vmatpush1.bf16.msra.mxu0 %v7417
  %7556 = vmatprep.subr.bf16.mxu0 0
  %7557 = vmatpush1.bf16.msra.mxu0 %v7418
  %7558 = vmatprep.subr.bf16.mxu0 0
  %7559 = vmatpush1.bf16.msra.mxu0 %v7419
  %7560 = vmatprep.subr.bf16.mxu0 0
  %7561 = vmatpush1.bf16.msra.mxu0 %v7420
  %7562 = vmatprep.subr.bf16.mxu0 0
  %7563 = vmatpush1.bf16.msra.mxu0 %v7421
  %7564 = vmatprep.subr.bf16.mxu0 0
  %7565 = vmatpush1.bf16.msra.mxu0 %v7422
  %7566 = vmatprep.subr.bf16.mxu0 0
  %7567 = vmatpush1.bf16.msra.mxu0 %v7423
  %7568 = vmatprep.mubr.bf16.mxu0 %v7010
  %7569 = vmatmul.mubr.bf16.gmra.mrb[0].mxu0 %v7009
  %v7570 = vpop.f32.mrb[0].mxu0
  %v7571 = vadd.f32 %v7150, %v7570
  %v7572 = vpop.f32.mrb[0].mxu0
  %v7573 = vpop.f32.mrb[0].mxu0
  %v7574 = vadd.f32 %v7150, %v7573
  %v7575 = vpop.f32.mrb[0].mxu0
  %7576 = vdwg.mxu0
  %7577 = vmatprep.subr.bf16.mxu0 0
  %7578 = vmatpush1.bf16.msra.mxu0 %v7424
  %7579 = vmatprep.subr.bf16.mxu0 0
  %7580 = vmatpush1.bf16.msra.mxu0 %v7425
  %7581 = vmatprep.subr.bf16.mxu0 0
  %7582 = vmatpush1.bf16.msra.mxu0 %v7426
  %7583 = vmatprep.subr.bf16.mxu0 0
  %7584 = vmatpush1.bf16.msra.mxu0 %v7427
  %7585 = vmatprep.subr.bf16.mxu0 0
  %7586 = vmatpush1.bf16.msra.mxu0 %v7428
  %7587 = vmatprep.subr.bf16.mxu0 0
  %7588 = vmatpush1.bf16.msra.mxu0 %v7429
  %7589 = vmatprep.subr.bf16.mxu0 0
  %7590 = vmatpush1.bf16.msra.mxu0 %v7430
  %7591 = vmatprep.subr.bf16.mxu0 0
  %7592 = vmatpush1.bf16.msra.mxu0 %v7431
  %7593 = vmatprep.subr.bf16.mxu0 0
  %7594 = vmatpush1.bf16.msra.mxu0 %v7432
  %7595 = vmatprep.subr.bf16.mxu0 0
  %7596 = vmatpush1.bf16.msra.mxu0 %v7433
  %7597 = vmatprep.subr.bf16.mxu0 0
  %7598 = vmatpush1.bf16.msra.mxu0 %v7434
  %7599 = vmatprep.subr.bf16.mxu0 0
  %7600 = vmatpush1.bf16.msra.mxu0 %v7435
  %7601 = vmatprep.subr.bf16.mxu0 0
  %7602 = vmatpush1.bf16.msra.mxu0 %v7436
  %7603 = vmatprep.subr.bf16.mxu0 0
  %7604 = vmatpush1.bf16.msra.mxu0 %v7437
  %7605 = vmatprep.subr.bf16.mxu0 0
  %7606 = vmatpush1.bf16.msra.mxu0 %v7438
  %7607 = vmatprep.subr.bf16.mxu0 0
  %7608 = vmatpush1.bf16.msra.mxu0 %v7439
  %7609 = vmatprep.mubr.bf16.mxu0 %v7012
  %7610 = vmatmul.mubr.bf16.gmra.mrb[0].mxu0 %v7011
  %v7611 = vpop.f32.mrb[0].mxu0
  %v7612 = vadd.f32 %v7571, %v7611
  %v7613 = vpop.f32.mrb[0].mxu0
  %v7614 = vpop.f32.mrb[0].mxu0
  %v7615 = vadd.f32 %v7574, %v7614
  %v7616 = vpop.f32.mrb[0].mxu0
  %7617 = vdwg.mxu0
  %7618 = vmatprep.subr.bf16.mxu0 0
  %7619 = vmatpush1.bf16.msra.mxu0 %v7440
  %7620 = vmatprep.subr.bf16.mxu0 0
  %7621 = vmatpush1.bf16.msra.mxu0 %v7441
  %7622 = vmatprep.subr.bf16.mxu0 0
  %7623 = vmatpush1.bf16.msra.mxu0 %v7442
  %7624 = vmatprep.subr.bf16.mxu0 0
  %7625 = vmatpush1.bf16.msra.mxu0 %v7443
  %7626 = vmatprep.subr.bf16.mxu0 0
  %7627 = vmatpush1.bf16.msra.mxu0 %v7444
  %7628 = vmatprep.subr.bf16.mxu0 0
  %7629 = vmatpush1.bf16.msra.mxu0 %v7445
  %7630 = vmatprep.subr.bf16.mxu0 0
  %7631 = vmatpush1.bf16.msra.mxu0 %v7446
  %7632 = vmatprep.subr.bf16.mxu0 0
  %7633 = vmatpush1.bf16.msra.mxu0 %v7447
  %7634 = vmatprep.subr.bf16.mxu0 0
  %7635 = vmatpush1.bf16.msra.mxu0 %v7448
  %7636 = vmatprep.subr.bf16.mxu0 0
  %7637 = vmatpush1.bf16.msra.mxu0 %v7449
  %7638 = vmatprep.subr.bf16.mxu0 0
  %7639 = vmatpush1.bf16.msra.mxu0 %v7450
  %7640 = vmatprep.subr.bf16.mxu0 0
  %7641 = vmatpush1.bf16.msra.mxu0 %v7451
  %7642 = vmatprep.subr.bf16.mxu0 0
  %7643 = vmatpush1.bf16.msra.mxu0 %v7452
  %7644 = vmatprep.subr.bf16.mxu0 0
  %7645 = vmatpush1.bf16.msra.mxu0 %v7453
  %7646 = vmatprep.subr.bf16.mxu0 0
  %7647 = vmatpush1.bf16.msra.mxu0 %v7454
  %7648 = vmatprep.subr.bf16.mxu0 0
  %7649 = vmatpush1.bf16.msra.mxu0 %v7455
  %7650 = vmatprep.mubr.bf16.mxu0 %v7014
  %7651 = vmatmul.mubr.bf16.gmra.mrb[0].mxu0 %v7013
  %v7652 = vpop.f32.mrb[0].mxu0
  %v7653 = vadd.f32 %v7612, %v7652
  %v7654 = vpop.f32.mrb[0].mxu0
  %v7655 = vpop.f32.mrb[0].mxu0
  %v7656 = vadd.f32 %v7615, %v7655
  %v7657 = vpop.f32.mrb[0].mxu0
  %7658 = vdwg.mxu0
  %7659 = vmatprep.subr.bf16.mxu0 0
  %7660 = vmatpush1.bf16.msra.mxu0 %v7456
  %7661 = vmatprep.subr.bf16.mxu0 0
  %7662 = vmatpush1.bf16.msra.mxu0 %v7457
  %7663 = vmatprep.subr.bf16.mxu0 0
  %7664 = vmatpush1.bf16.msra.mxu0 %v7458
  %7665 = vmatprep.subr.bf16.mxu0 0
  %7666 = vmatpush1.bf16.msra.mxu0 %v7459
  %7667 = vmatprep.subr.bf16.mxu0 0
  %7668 = vmatpush1.bf16.msra.mxu0 %v7460
  %7669 = vmatprep.subr.bf16.mxu0 0
  %7670 = vmatpush1.bf16.msra.mxu0 %v7461
  %7671 = vmatprep.subr.bf16.mxu0 0
  %7672 = vmatpush1.bf16.msra.mxu0 %v7462
  %7673 = vmatprep.subr.bf16.mxu0 0
  %7674 = vmatpush1.bf16.msra.mxu0 %v7463
  %7675 = vmatprep.subr.bf16.mxu0 0
  %7676 = vmatpush1.bf16.msra.mxu0 %v7464
  %7677 = vmatprep.subr.bf16.mxu0 0
  %7678 = vmatpush1.bf16.msra.mxu0 %v7465
  %7679 = vmatprep.subr.bf16.mxu0 0
  %7680 = vmatpush1.bf16.msra.mxu0 %v7466
  %7681 = vmatprep.subr.bf16.mxu0 0
  %7682 = vmatpush1.bf16.msra.mxu0 %v7467
  %7683 = vmatprep.subr.bf16.mxu0 0
  %7684 = vmatpush1.bf16.msra.mxu0 %v7468
  %7685 = vmatprep.subr.bf16.mxu0 0
  %7686 = vmatpush1.bf16.msra.mxu0 %v7469
  %7687 = vmatprep.subr.bf16.mxu0 0
  %7688 = vmatpush1.bf16.msra.mxu0 %v7470
  %7689 = vmatprep.subr.bf16.mxu0 0
  %7690 = vmatpush1.bf16.msra.mxu0 %v7471
  %7691 = vmatprep.mubr.bf16.mxu0 %v7016
  %7692 = vmatmul.mubr.bf16.gmra.mrb[0].mxu0 %v7015
  %v7693 = vpop.f32.mrb[0].mxu0
  %v7694 = vadd.f32 %v7653, %v7693
  %v7695 = vpop.f32.mrb[0].mxu0
  %v7696 = vpop.f32.mrb[0].mxu0
  %v7697 = vadd.f32 %v7656, %v7696
  %v7698 = vpop.f32.mrb[0].mxu0
  %7699 = vdwg.mxu0
  %vm7700 = vcmp.gt.f32.partialorder %v7694, 0.0
  %vm7701 = vcmp.gt.f32.partialorder %v7697, 0.0
  %v7702 = vld [vmem:[%s11] sm:$0x1]
  %v7704 = vlaneseq
  %v7705 = vshrl.u32 %v7704, 7
  %v7706 = vsub.s32 0, %v7705
  %v7707 = vrot.slane %v7702, %v7706
  %v7709 = vmul.f32 %v7707, %v7694
  %v7710 = vmul.f32 %v7707, %v7697
  %v7711 = vsel %vm7700, %v7694, %v7709
  %v7712 = vsel %vm7701, %v7697, %v7710
  %vm7713 = vcmask 261120
  %7714 = vst.msk [vmem:[%s12] sm:$0xff] %vm7713, %v7711
  %7715 = vst.msk [vmem:[%s12 + $0x8] sm:$0xff] %vm7713, %v7712
  // Predicated region
  $region50: #{_lambda_.2} parent=0 // pred_check
    _
  $region51: #{_lambda_.2} parent=0 // pred_check_branch
    %7717 = sbr.rel (0) target = $region53
  $region52: #{_lambda_.2} parent=0 // pred_region
    _
  $region53: #{_lambda_.2} parent=0 // pred_fallthru
    _
  // Predicated region
  $region54: #{_lambda_.2} parent=0 // pred_check
    _
  $region55: #{_lambda_.2} parent=0 // pred_check_branch
    %7719 = sbr.rel (0) target = $region57
  $region56: #{_lambda_.2} parent=0 // pred_region
    _
  $region57: #{_lambda_.2} parent=0 // pred_fallthru
    _

</llo_original>
